<compile_context>
chip_gen: v7x
topology: tpu7x:2x2x1
jax: 0.10.0
libtpu: 0.0.40
codegen_flags: <defaults>
</compile_context>

<pallas_src>
import functools

import numpy as np
import jax
import jax.numpy as jnp
from jax import lax
from jax.experimental import pallas as pl
from jax.experimental.pallas import tpu as pltpu

EPS = 1e-5  # PyTorch nn.LayerNorm default


# ----------------------------- Pallas kernels ------------------------------

def _ln(x, g, b):
    mu = jnp.mean(x, axis=-1, keepdims=True)
    var = jnp.mean((x - mu) ** 2, axis=-1, keepdims=True)
    return (x - mu) * lax.rsqrt(var + EPS) * g + b


def mm_kernel(x_ref, w_ref, b_ref, o_ref, *, relu):
    # fused (rows, K) @ (K, Cout) + bias [+ ReLU]
    x = x_ref[...].astype(jnp.float32)
    y = jnp.dot(x, w_ref[...], preferred_element_type=jnp.float32) + b_ref[...]
    if relu:
        y = jnp.maximum(y, 0.0)
    o_ref[...] = y.astype(o_ref.dtype)


def mm_ln_kernel(x_ref, w_ref, b_ref, g_ref, bb_ref, o_ref, *, relu):
    # fused matmul + bias [+ ReLU] + LayerNorm over channels
    x = x_ref[...].astype(jnp.float32)
    y = jnp.dot(x, w_ref[...], preferred_element_type=jnp.float32) + b_ref[...]
    if relu:
        y = jnp.maximum(y, 0.0)
    o_ref[...] = _ln(y, g_ref[...], bb_ref[...]).astype(o_ref.dtype)


def dual_mm_kernel(a_ref, x_ref, wa_ref, wx_ref, b_ref, o_ref):
    # aggregate(concat(a, x)) == a @ Wa + x @ Wx + b   (concat never materialized)
    a = a_ref[...].astype(jnp.float32)
    x = x_ref[...].astype(jnp.float32)
    y = (jnp.dot(a, wa_ref[...], preferred_element_type=jnp.float32)
         + jnp.dot(x, wx_ref[...], preferred_element_type=jnp.float32)
         + b_ref[...])
    o_ref[...] = y.astype(o_ref.dtype)


def mse_sum_kernel(x_ref, y_ref, o_ref):
    # accumulate sum of squared differences across the (arbitrary) row-tile grid
    @pl.when(pl.program_id(0) == 0)
    def _():
        o_ref[...] = jnp.zeros_like(o_ref)

    d = x_ref[...].astype(jnp.float32) - y_ref[...].astype(jnp.float32)
    o_ref[...] += jnp.sum(d * d, keepdims=True)


# ----------------------------- kernel wrappers ------------------------------

def _row_tile(n, cap=256):
    """Largest row tile <= cap that divides n (and is sublane-friendly)."""
    if n <= cap:
        return n
    for tn in range(cap, 0, -1):
        if n % tn == 0 and tn % 8 == 0:
            return tn
    return n


def pallas_mm(x2d, w, b, *, relu=False, ln=None):
    N, K = x2d.shape
    Co = w.shape[1]
    tn = _row_tile(N)
    in_specs = [
        pl.BlockSpec((tn, K), lambda i: (i, 0)),
        pl.BlockSpec((K, Co), lambda i: (0, 0)),
        pl.BlockSpec((1, Co), lambda i: (0, 0)),
    ]
    args = [x2d, w, b.reshape(1, Co)]
    if ln is None:
        kern = functools.partial(mm_kernel, relu=relu)
    else:
        g, bb = ln
        kern = functools.partial(mm_ln_kernel, relu=relu)
        in_specs += [pl.BlockSpec((1, Co), lambda i: (0, 0)),
                     pl.BlockSpec((1, Co), lambda i: (0, 0))]
        args += [g.reshape(1, Co), bb.reshape(1, Co)]
    return pl.pallas_call(
        kern,
        out_shape=jax.ShapeDtypeStruct((N, Co), x2d.dtype),
        grid=(N // tn,),
        in_specs=in_specs,
        out_specs=pl.BlockSpec((tn, Co), lambda i: (i, 0)),
        compiler_params=pltpu.CompilerParams(dimension_semantics=("parallel",)),
    )(*args)


def pallas_dual_mm(a2d, x2d, wa, wx, b):
    N, Ca = a2d.shape
    Cx = x2d.shape[1]
    Co = wa.shape[1]
    tn = _row_tile(N)
    return pl.pallas_call(
        dual_mm_kernel,
        out_shape=jax.ShapeDtypeStruct((N, Co), a2d.dtype),
        grid=(N // tn,),
        in_specs=[pl.BlockSpec((tn, Ca), lambda i: (i, 0)),
                  pl.BlockSpec((tn, Cx), lambda i: (i, 0)),
                  pl.BlockSpec((Ca, Co), lambda i: (0, 0)),
                  pl.BlockSpec((Cx, Co), lambda i: (0, 0)),
                  pl.BlockSpec((1, Co), lambda i: (0, 0))],
        out_specs=pl.BlockSpec((tn, Co), lambda i: (i, 0)),
        compiler_params=pltpu.CompilerParams(dimension_semantics=("parallel",)),
    )(a2d, x2d, wa, wx, b.reshape(1, Co))


def pallas_mse(a2d, b2d):
    N, C = a2d.shape
    tn = _row_tile(N)
    s = pl.pallas_call(
        mse_sum_kernel,
        out_shape=jax.ShapeDtypeStruct((1, 1), jnp.float32),
        grid=(N // tn,),
        in_specs=[pl.BlockSpec((tn, C), lambda i: (i, 0)),
                  pl.BlockSpec((tn, C), lambda i: (i, 0))],
        out_specs=pl.BlockSpec((1, 1), lambda i: (0, 0)),
        compiler_params=pltpu.CompilerParams(dimension_semantics=("arbitrary",)),
    )(a2d, b2d)
    return s[0, 0] / (N * C)


# ----------------------------- conv lowerings (NHWC) -------------------------

def _im2col_s1(xp, kh, kw, ho, wo):
    cols = [xp[:, dy:dy + ho, dx:dx + wo, :] for dy in range(kh) for dx in range(kw)]
    return jnp.concatenate(cols, axis=-1)


def _im2col_s2(xp, kh, kw, ho, wo):
    cols = [xp[:, dy::2, dx::2, :][:, :ho, :wo, :] for dy in range(kh) for dx in range(kw)]
    return jnp.concatenate(cols, axis=-1)


def conv1x1(x, w2d, b, *, relu=False, ln=None):
    B, H, W, Ci = x.shape
    Co = w2d.shape[1]
    y = pallas_mm(x.reshape(-1, Ci), w2d, b, relu=relu, ln=ln)
    return y.reshape(B, H, W, Co)


def conv3x3(x, w2d, b, *, relu=False, ln=None):
    B, H, W, Ci = x.shape
    Co = w2d.shape[1]
    xp = jnp.pad(x, ((0, 0), (1, 1), (1, 1), (0, 0)))
    pat = _im2col_s1(xp, 3, 3, H, W).reshape(-1, 9 * Ci)
    y = pallas_mm(pat, w2d, b, relu=relu, ln=ln)
    return y.reshape(B, H, W, Co)


def conv4x4_s2(x, w2d, b, *, relu=False, ln=None):
    # Conv2d(k=4, s=2, p=1): halves spatial dims
    B, H, W, Ci = x.shape
    Co = w2d.shape[1]
    Ho, Wo = H // 2, W // 2
    xp = jnp.pad(x, ((0, 0), (1, 1), (1, 1), (0, 0)))
    pat = _im2col_s2(xp, 4, 4, Ho, Wo).reshape(-1, 16 * Ci)
    y = pallas_mm(pat, w2d, b, relu=relu, ln=ln)
    return y.reshape(B, Ho, Wo, Co)


def convT4x4_s2(x, w2d_eq, b, *, relu=False, ln=None):
    # ConvTranspose2d(k=4, s=2, p=1) == stride-1 conv with flipped kernel on the
    # stride-2 zero-dilated input padded by k-1-p = 2 on each side.
    B, H, W, Ci = x.shape
    Co = w2d_eq.shape[1]
    Ho, Wo = 2 * H, 2 * W
    xp = lax.pad(x, jnp.array(0.0, x.dtype),
                 ((0, 0, 0), (2, 2, 1), (2, 2, 1), (0, 0, 0)))
    pat = _im2col_s1(xp, 4, 4, Ho, Wo).reshape(-1, 16 * Ci)
    y = pallas_mm(pat, w2d_eq, b, relu=relu, ln=ln)
    return y.reshape(B, Ho, Wo, Co)


# ----------------------------- model blocks ----------------------------------

def transform_block(x, p):
    # 3x (conv3x3 + ReLU), then aggregate = Conv1x1(concat(z, x)) fused as dual matmul
    t = conv3x3(x, p["w1"], p["b1"], relu=True)
    t = conv3x3(t, p["w2"], p["b2"], relu=True)
    t = conv3x3(t, p["w3"], p["b3"], relu=True)
    # TODO(synk): Dropout2d before aggregate treated as identity (inference mode).
    B, H, W, C = x.shape
    y = pallas_dual_mm(t.reshape(-1, C), x.reshape(-1, C),
                       p["wagg_z"], p["wagg_x"], p["bagg"])
    return y.reshape(B, H, W, -1)


def simple_encoder_block(x, p):
    x = transform_block(x, p["transform"])
    # reduce (conv4x4 s2 + ReLU) with the trailing LayerNorm fused into the epilogue
    return conv4x4_s2(x, p["red_w"], p["red_b"], relu=True,
                      ln=(p["norm_g"], p["norm_b"]))


def simple_decoder_block(x, p):
    x = transform_block(x, p["transform"])
    # enlarge (ConvTranspose 4x4 s2 + ReLU) + fused LayerNorm
    return convT4x4_s2(x, p["enl_w"], p["enl_b"], relu=True,
                       ln=(p["norm_g"], p["norm_b"]))


def embed_block(x, p):
    # Conv1x1(3 -> hidden) + LayerNorm fused
    return conv1x1(x, p["w"], p["b"], ln=(p["norm_g"], p["norm_b"]))


def head_block(x, p):
    x = conv3x3(x, p["w1"], p["b1"], relu=True)
    x = conv3x3(x, p["w2"], p["b2"], relu=True, ln=(p["norm_g"], p["norm_b"]))
    return conv1x1(x, p["w3"], p["b3"])


def ae_paired_forward(x_nchw, params):
    x = jnp.transpose(x_nchw, (0, 2, 3, 1))   # NCHW -> NHWC (MSE is layout-invariant)
    losses = []

    # pair 0: encoder = [embed, enc0], decoder = [dec0, head]
    z_in = x
    z0 = simple_encoder_block(embed_block(z_in, params["embed"]),
                              params["pairs"][0]["enc"])
    x_hat = head_block(simple_decoder_block(z0, params["pairs"][0]["dec"]),
                       params["head"])
    losses.append(pallas_mse(z_in.reshape(-1, z_in.shape[-1]),
                             x_hat.reshape(-1, x_hat.shape[-1])))
    z = z0  # z.detach().clone(): no-op in pure forward

    # pairs 1..depth-1
    for i in range(1, len(params["pairs"])):
        zi = simple_encoder_block(z, params["pairs"][i]["enc"])
        x_hat = simple_decoder_block(zi, params["pairs"][i]["dec"])
        losses.append(pallas_mse(z.reshape(-1, z.shape[-1]),
                                 x_hat.reshape(-1, x_hat.shape[-1])))
        z = zi

    return jnp.stack(losses)


# ----------------------------- params -----------------------------------------

def _conv_w2d(key, cout, cin, kh, kw):
    # PyTorch Conv2d weight (Cout, Cin, kh, kw) -> (kh*kw*Cin, Cout) matching
    # im2col patch ordering [dy, dx, cin].
    w = jax.random.normal(key, (cout, cin, kh, kw), jnp.float32)
    w = w * (1.0 / np.sqrt(cin * kh * kw))
    return jnp.transpose(w, (2, 3, 1, 0)).reshape(kh * kw * cin, cout)


def _convT_w2d(key, cin, cout, kh, kw):
    # PyTorch ConvTranspose2d weight (Cin, Cout, kh, kw) -> equivalent forward-conv
    # weight: spatially flipped, laid out as (kh*kw*Cin, Cout).
    w = jax.random.normal(key, (cin, cout, kh, kw), jnp.float32)
    w = w * (1.0 / np.sqrt(cin * kh * kw))
    w = jnp.flip(w, axis=(2, 3))
    return jnp.transpose(w, (2, 3, 0, 1)).reshape(kh * kw * cin, cout)


def init_params(key, hidden_dim, depth):
    keys = iter(jax.random.split(key, 256))

    def nk():
        return next(keys)

    d = hidden_dim

    def transform_params(dim):
        wagg = _conv_w2d(nk(), dim, 2 * dim, 1, 1)        # aggregate: Conv1x1(2*dim -> dim)
        return dict(
            w1=_conv_w2d(nk(), dim, dim, 3, 3), b1=jnp.zeros((dim,), jnp.float32),
            w2=_conv_w2d(nk(), dim, dim, 3, 3), b2=jnp.zeros((dim,), jnp.float32),
            w3=_conv_w2d(nk(), dim, dim, 3, 3), b3=jnp.zeros((dim,), jnp.float32),
            wagg_z=wagg[:dim], wagg_x=wagg[dim:], bagg=jnp.zeros((dim,), jnp.float32),
        )

    def enc_params(dim):
        return dict(
            transform=transform_params(dim),
            red_w=_conv_w2d(nk(), dim, dim, 4, 4), red_b=jnp.zeros((dim,), jnp.float32),
            norm_g=jnp.ones((dim,), jnp.float32), norm_b=jnp.zeros((dim,), jnp.float32),
        )

    def dec_params(dim):
        return dict(
            transform=transform_params(dim),
            enl_w=_convT_w2d(nk(), dim, dim, 4, 4), enl_b=jnp.zeros((dim,), jnp.float32),
            norm_g=jnp.ones((dim,), jnp.float32), norm_b=jnp.zeros((dim,), jnp.float32),
        )

    return dict(
        embed=dict(w=_conv_w2d(nk(), d, 3, 1, 1), b=jnp.zeros((d,), jnp.float32),
                   norm_g=jnp.ones((d,), jnp.float32), norm_b=jnp.zeros((d,), jnp.float32)),
        head=dict(w1=_conv_w2d(nk(), d, d, 3, 3), b1=jnp.zeros((d,), jnp.float32),
                  w2=_conv_w2d(nk(), d // 2, d, 3, 3), b2=jnp.zeros((d // 2,), jnp.float32),
                  norm_g=jnp.ones((d // 2,), jnp.float32),
                  norm_b=jnp.zeros((d // 2,), jnp.float32),
                  w3=_conv_w2d(nk(), 3, d // 2, 1, 1), b3=jnp.zeros((3,), jnp.float32)),
        pairs=[dict(enc=enc_params(d), dec=dec_params(d)) for _ in range(depth)],
    )


# ----------------------------- main ---------------------------------------------

if __name__ == "__main__":
    B, hidden_dim, H, W, depth = 2, 16, 16, 16, 2

    key = jax.random.PRNGKey(0)
    kx, kp = jax.random.split(key)
    x = jax.random.normal(kx, (B, 3, H, W), jnp.float32)   # NCHW, like PyTorch input
    params = init_params(kp, hidden_dim, depth)

    losses = jax.jit(ae_paired_forward)(x, params)
    losses = jax.block_until_ready(losses)

    assert losses.shape == (depth,), losses.shape
    assert bool(jnp.all(jnp.isfinite(losses)))
    print("KERNEL_OK")
</pallas_src>

<mosaic_0001>
module attributes {stable_mosaic.version = 11 : i64} {
  func.func @mm_ln_kernel(%arg0: i32, %arg1: memref<256x3xf32, #tpu.memory_space<vmem>>, %arg2: memref<3x16xf32, #tpu.memory_space<vmem>>, %arg3: memref<1x16xf32, #tpu.memory_space<vmem>>, %arg4: memref<1x16xf32, #tpu.memory_space<vmem>>, %arg5: memref<1x16xf32, #tpu.memory_space<vmem>>, %arg6: memref<256x16xf32, #tpu.memory_space<vmem>>) attributes {dimension_semantics = [#tpu.dimension_semantics<parallel>], iteration_bounds = array<i64: 2>, scalar_prefetch = 0 : i64, scratch_operands = 0 : i64, tpu.core_type = #tpu.core_type<tc>, window_params = [{transform_indices = @transform_0, window_bounds = array<i64: 256, 3>}, {pipeline_mode = #tpu.pipeline_mode<synchronous>, transform_indices = @transform_1, window_bounds = array<i64: 3, 16>}, {pipeline_mode = #tpu.pipeline_mode<synchronous>, transform_indices = @transform_2, window_bounds = array<i64: 1, 16>}, {pipeline_mode = #tpu.pipeline_mode<synchronous>, transform_indices = @transform_3, window_bounds = array<i64: 1, 16>}, {pipeline_mode = #tpu.pipeline_mode<synchronous>, transform_indices = @transform_4, window_bounds = array<i64: 1, 16>}, {transform_indices = @transform_5, window_bounds = array<i64: 256, 16>}]} {
    %c0 = arith.constant 0 : index
    %c0_0 = arith.constant 0 : index
    %0 = vector.load %arg1[%c0, %c0_0] : memref<256x3xf32, #tpu.memory_space<vmem>>, vector<256x3xf32>
    %c0_1 = arith.constant 0 : index
    %c0_2 = arith.constant 0 : index
    %1 = vector.load %arg2[%c0_1, %c0_2] : memref<3x16xf32, #tpu.memory_space<vmem>>, vector<3x16xf32>
    %cst = arith.constant dense<0.000000e+00> : vector<256x16xf32>
    %2 = tpu.matmul %0, %1, %cst {dimension_numbers = #tpu.dot_dimension_numbers<[1], [0], [0], [1], [0, 0, 1, 1], [], []>} : vector<256x3xf32>, vector<3x16xf32>, vector<256x16xf32> -> vector<256x16xf32>
    %c0_3 = arith.constant 0 : index
    %c0_4 = arith.constant 0 : index
    %3 = vector.load %arg3[%c0_3, %c0_4] : memref<1x16xf32, #tpu.memory_space<vmem>>, vector<1x16xf32>
    %4 = vector.broadcast %3 : vector<1x16xf32> to vector<256x16xf32>
    %5 = arith.addf %2, %4 : vector<256x16xf32>
    %c0_5 = arith.constant 0 : index
    %c0_6 = arith.constant 0 : index
    %6 = vector.load %arg4[%c0_5, %c0_6] : memref<1x16xf32, #tpu.memory_space<vmem>>, vector<1x16xf32>
    %c0_7 = arith.constant 0 : index
    %c0_8 = arith.constant 0 : index
    %7 = vector.load %arg5[%c0_7, %c0_8] : memref<1x16xf32, #tpu.memory_space<vmem>>, vector<1x16xf32>
    %cst_9 = arith.constant dense<0.000000e+00> : vector<256xf32>
    %8 = vector.multi_reduction <add>, %5, %cst_9 [1] : vector<256x16xf32> to vector<256xf32>
    %9 = vector.shape_cast %8 : vector<256xf32> to vector<256x1xf32>
    %cst_10 = arith.constant 1.600000e+01 : f32
    %10 = vector.broadcast %cst_10 : f32 to vector<256x1xf32>
    %11 = arith.divf %9, %10 : vector<256x1xf32>
    %12 = vector.broadcast %11 : vector<256x1xf32> to vector<256x16xf32>
    %13 = arith.subf %5, %12 : vector<256x16xf32>
    %14 = arith.mulf %13, %13 : vector<256x16xf32>
    %cst_11 = arith.constant dense<0.000000e+00> : vector<256xf32>
    %15 = vector.multi_reduction <add>, %14, %cst_11 [1] : vector<256x16xf32> to vector<256xf32>
    %16 = vector.shape_cast %15 : vector<256xf32> to vector<256x1xf32>
    %cst_12 = arith.constant 1.600000e+01 : f32
    %17 = vector.broadcast %cst_12 : f32 to vector<256x1xf32>
    %18 = arith.divf %16, %17 : vector<256x1xf32>
    %19 = vector.broadcast %11 : vector<256x1xf32> to vector<256x16xf32>
    %20 = arith.subf %5, %19 : vector<256x16xf32>
    %cst_13 = arith.constant 9.99999974E-6 : f32
    %21 = vector.broadcast %cst_13 : f32 to vector<256x1xf32>
    %22 = arith.addf %18, %21 : vector<256x1xf32>
    %23 = math.rsqrt %22 : vector<256x1xf32>
    %24 = vector.broadcast %23 : vector<256x1xf32> to vector<256x16xf32>
    %25 = arith.mulf %20, %24 : vector<256x16xf32>
    %26 = vector.broadcast %6 : vector<1x16xf32> to vector<256x16xf32>
    %27 = arith.mulf %25, %26 : vector<256x16xf32>
    %28 = vector.broadcast %7 : vector<1x16xf32> to vector<256x16xf32>
    %29 = arith.addf %27, %28 : vector<256x16xf32>
    %c0_14 = arith.constant 0 : index
    %c0_15 = arith.constant 0 : index
    %30 = vector.load %arg6[%c0_14, %c0_15] : memref<256x16xf32, #tpu.memory_space<vmem>>, vector<256x16xf32>
    tpu.vector_store %arg6[%c0_14, %c0_15], %29 {strides = array<i32>} : memref<256x16xf32, #tpu.memory_space<vmem>>, vector<256x16xf32>,
    return
  }
  func.func @transform_0(%arg0: i32) -> (i32, i32) {
    %c0_i32 = arith.constant 0 : i32
    %c0_i32_0 = arith.constant 0 : i32
    return %arg0, %c0_i32 : i32, i32
  }
  func.func @transform_1(%arg0: i32) -> (i32, i32) {
    %c0_i32 = arith.constant 0 : i32
    %c0_i32_0 = arith.constant 0 : i32
    %c0_i32_1 = arith.constant 0 : i32
    return %c0_i32, %c0_i32_0 : i32, i32
  }
  func.func @transform_2(%arg0: i32) -> (i32, i32) {
    %c0_i32 = arith.constant 0 : i32
    %c0_i32_0 = arith.constant 0 : i32
    %c0_i32_1 = arith.constant 0 : i32
    return %c0_i32, %c0_i32_0 : i32, i32
  }
  func.func @transform_3(%arg0: i32) -> (i32, i32) {
    %c0_i32 = arith.constant 0 : i32
    %c0_i32_0 = arith.constant 0 : i32
    %c0_i32_1 = arith.constant 0 : i32
    return %c0_i32, %c0_i32_0 : i32, i32
  }
  func.func @transform_4(%arg0: i32) -> (i32, i32) {
    %c0_i32 = arith.constant 0 : i32
    %c0_i32_0 = arith.constant 0 : i32
    %c0_i32_1 = arith.constant 0 : i32
    return %c0_i32, %c0_i32_0 : i32, i32
  }
  func.func @transform_5(%arg0: i32) -> (i32, i32) {
    %c0_i32 = arith.constant 0 : i32
    %c0_i32_0 = arith.constant 0 : i32
    return %arg0, %c0_i32 : i32, i32
  }
}

module attributes {stable_mosaic.version = 11 : i64} {
  func.func @dual_mm_kernel(%arg0: i32, %arg1: memref<256x16xf32, #tpu.memory_space<vmem>>, %arg2: memref<256x16xf32, #tpu.memory_space<vmem>>, %arg3: memref<16x16xf32, #tpu.memory_space<vmem>>, %arg4: memref<16x16xf32, #tpu.memory_space<vmem>>, %arg5: memref<1x16xf32, #tpu.memory_space<vmem>>, %arg6: memref<256x16xf32, #tpu.memory_space<vmem>>) attributes {dimension_semantics = [#tpu.dimension_semantics<parallel>], iteration_bounds = array<i64: 2>, scalar_prefetch = 0 : i64, scratch_operands = 0 : i64, tpu.core_type = #tpu.core_type<tc>, window_params = [{transform_indices = @transform_0, window_bounds = array<i64: 256, 16>}, {transform_indices = @transform_1, window_bounds = array<i64: 256, 16>}, {pipeline_mode = #tpu.pipeline_mode<synchronous>, transform_indices = @transform_2, window_bounds = array<i64: 16, 16>}, {pipeline_mode = #tpu.pipeline_mode<synchronous>, transform_indices = @transform_3, window_bounds = array<i64: 16, 16>}, {pipeline_mode = #tpu.pipeline_mode<synchronous>, transform_indices = @transform_4, window_bounds = array<i64: 1, 16>}, {transform_indices = @transform_5, window_bounds = array<i64: 256, 16>}]} {
    %c0 = arith.constant 0 : index
    %c0_0 = arith.constant 0 : index
    %0 = vector.load %arg1[%c0, %c0_0] : memref<256x16xf32, #tpu.memory_space<vmem>>, vector<256x16xf32>
    %c0_1 = arith.constant 0 : index
    %c0_2 = arith.constant 0 : index
    %1 = vector.load %arg2[%c0_1, %c0_2] : memref<256x16xf32, #tpu.memory_space<vmem>>, vector<256x16xf32>
    %c0_3 = arith.constant 0 : index
    %c0_4 = arith.constant 0 : index
    %2 = vector.load %arg3[%c0_3, %c0_4] : memref<16x16xf32, #tpu.memory_space<vmem>>, vector<16x16xf32>
    %cst = arith.constant dense<0.000000e+00> : vector<256x16xf32>
    %3 = tpu.matmul %0, %2, %cst {dimension_numbers = #tpu.dot_dimension_numbers<[1], [0], [0], [1], [0, 0, 1, 1], [], []>} : vector<256x16xf32>, vector<16x16xf32>, vector<256x16xf32> -> vector<256x16xf32>
    %c0_5 = arith.constant 0 : index
    %c0_6 = arith.constant 0 : index
    %4 = vector.load %arg4[%c0_5, %c0_6] : memref<16x16xf32, #tpu.memory_space<vmem>>, vector<16x16xf32>
    %cst_7 = arith.constant dense<0.000000e+00> : vector<256x16xf32>
    %5 = tpu.matmul %1, %4, %cst_7 {dimension_numbers = #tpu.dot_dimension_numbers<[1], [0], [0], [1], [0, 0, 1, 1], [], []>} : vector<256x16xf32>, vector<16x16xf32>, vector<256x16xf32> -> vector<256x16xf32>
    %6 = arith.addf %3, %5 : vector<256x16xf32>
    %c0_8 = arith.constant 0 : index
    %c0_9 = arith.constant 0 : index
    %7 = vector.load %arg5[%c0_8, %c0_9] : memref<1x16xf32, #tpu.memory_space<vmem>>, vector<1x16xf32>
    %8 = vector.broadcast %7 : vector<1x16xf32> to vector<256x16xf32>
    %9 = arith.addf %6, %8 : vector<256x16xf32>
    %c0_10 = arith.constant 0 : index
    %c0_11 = arith.constant 0 : index
    %10 = vector.load %arg6[%c0_10, %c0_11] : memref<256x16xf32, #tpu.memory_space<vmem>>, vector<256x16xf32>
    tpu.vector_store %arg6[%c0_10, %c0_11], %9 {strides = array<i32>} : memref<256x16xf32, #tpu.memory_space<vmem>>, vector<256x16xf32>,
    return
  }
  func.func @transform_0(%arg0: i32) -> (i32, i32) {
    %c0_i32 = arith.constant 0 : i32
    %c0_i32_0 = arith.constant 0 : i32
    return %arg0, %c0_i32 : i32, i32
  }
  func.func @transform_1(%arg0: i32) -> (i32, i32) {
    %c0_i32 = arith.constant 0 : i32
    %c0_i32_0 = arith.constant 0 : i32
    return %arg0, %c0_i32 : i32, i32
  }
  func.func @transform_2(%arg0: i32) -> (i32, i32) {
    %c0_i32 = arith.constant 0 : i32
    %c0_i32_0 = arith.constant 0 : i32
    %c0_i32_1 = arith.constant 0 : i32
    return %c0_i32, %c0_i32_0 : i32, i32
  }
  func.func @transform_3(%arg0: i32) -> (i32, i32) {
    %c0_i32 = arith.constant 0 : i32
    %c0_i32_0 = arith.constant 0 : i32
    %c0_i32_1 = arith.constant 0 : i32
    return %c0_i32, %c0_i32_0 : i32, i32
  }
  func.func @transform_4(%arg0: i32) -> (i32, i32) {
    %c0_i32 = arith.constant 0 : i32
    %c0_i32_0 = arith.constant 0 : i32
    %c0_i32_1 = arith.constant 0 : i32
    return %c0_i32, %c0_i32_0 : i32, i32
  }
  func.func @transform_5(%arg0: i32) -> (i32, i32) {
    %c0_i32 = arith.constant 0 : i32
    %c0_i32_0 = arith.constant 0 : i32
    return %arg0, %c0_i32 : i32, i32
  }
}

module attributes {stable_mosaic.version = 11 : i64} {
  func.func @mm_kernel(%arg0: i32, %arg1: memref<256x144xf32, #tpu.memory_space<vmem>>, %arg2: memref<144x16xf32, #tpu.memory_space<vmem>>, %arg3: memref<1x16xf32, #tpu.memory_space<vmem>>, %arg4: memref<256x16xf32, #tpu.memory_space<vmem>>) attributes {dimension_semantics = [#tpu.dimension_semantics<parallel>], iteration_bounds = array<i64: 2>, scalar_prefetch = 0 : i64, scratch_operands = 0 : i64, tpu.core_type = #tpu.core_type<tc>, window_params = [{transform_indices = @transform_0, window_bounds = array<i64: 256, 144>}, {pipeline_mode = #tpu.pipeline_mode<synchronous>, transform_indices = @transform_1, window_bounds = array<i64: 144, 16>}, {pipeline_mode = #tpu.pipeline_mode<synchronous>, transform_indices = @transform_2, window_bounds = array<i64: 1, 16>}, {transform_indices = @transform_3, window_bounds = array<i64: 256, 16>}]} {
    %c0 = arith.constant 0 : index
    %c0_0 = arith.constant 0 : index
    %0 = vector.load %arg1[%c0, %c0_0] : memref<256x144xf32, #tpu.memory_space<vmem>>, vector<256x144xf32>
    %c0_1 = arith.constant 0 : index
    %c0_2 = arith.constant 0 : index
    %1 = vector.load %arg2[%c0_1, %c0_2] : memref<144x16xf32, #tpu.memory_space<vmem>>, vector<144x16xf32>
    %cst = arith.constant dense<0.000000e+00> : vector<256x16xf32>
    %2 = tpu.matmul %0, %1, %cst {dimension_numbers = #tpu.dot_dimension_numbers<[1], [0], [0], [1], [0, 0, 1, 1], [], []>} : vector<256x144xf32>, vector<144x16xf32>, vector<256x16xf32> -> vector<256x16xf32>
    %c0_3 = arith.constant 0 : index
    %c0_4 = arith.constant 0 : index
    %3 = vector.load %arg3[%c0_3, %c0_4] : memref<1x16xf32, #tpu.memory_space<vmem>>, vector<1x16xf32>
    %4 = vector.broadcast %3 : vector<1x16xf32> to vector<256x16xf32>
    %5 = arith.addf %2, %4 : vector<256x16xf32>
    %cst_5 = arith.constant 0.000000e+00 : f32
    %6 = vector.broadcast %cst_5 : f32 to vector<256x16xf32>
    %7 = arith.maximumf %5, %6 : vector<256x16xf32>
    %c0_6 = arith.constant 0 : index
    %c0_7 = arith.constant 0 : index
    %8 = vector.load %arg4[%c0_6, %c0_7] : memref<256x16xf32, #tpu.memory_space<vmem>>, vector<256x16xf32>
    tpu.vector_store %arg4[%c0_6, %c0_7], %7 {strides = array<i32>} : memref<256x16xf32, #tpu.memory_space<vmem>>, vector<256x16xf32>,
    return
  }
  func.func @transform_0(%arg0: i32) -> (i32, i32) {
    %c0_i32 = arith.constant 0 : i32
    %c0_i32_0 = arith.constant 0 : i32
    return %arg0, %c0_i32 : i32, i32
  }
  func.func @transform_1(%arg0: i32) -> (i32, i32) {
    %c0_i32 = arith.constant 0 : i32
    %c0_i32_0 = arith.constant 0 : i32
    %c0_i32_1 = arith.constant 0 : i32
    return %c0_i32, %c0_i32_0 : i32, i32
  }
  func.func @transform_2(%arg0: i32) -> (i32, i32) {
    %c0_i32 = arith.constant 0 : i32
    %c0_i32_0 = arith.constant 0 : i32
    %c0_i32_1 = arith.constant 0 : i32
    return %c0_i32, %c0_i32_0 : i32, i32
  }
  func.func @transform_3(%arg0: i32) -> (i32, i32) {
    %c0_i32 = arith.constant 0 : i32
    %c0_i32_0 = arith.constant 0 : i32
    return %arg0, %c0_i32 : i32, i32
  }
}

module attributes {stable_mosaic.version = 11 : i64} {
  func.func @mm_ln_kernel(%arg0: i32, %arg1: memref<128x256xf32, #tpu.memory_space<vmem>>, %arg2: memref<256x16xf32, #tpu.memory_space<vmem>>, %arg3: memref<1x16xf32, #tpu.memory_space<vmem>>, %arg4: memref<1x16xf32, #tpu.memory_space<vmem>>, %arg5: memref<1x16xf32, #tpu.memory_space<vmem>>, %arg6: memref<128x16xf32, #tpu.memory_space<vmem>>) attributes {dimension_semantics = [#tpu.dimension_semantics<parallel>], iteration_bounds = array<i64: 1>, scalar_prefetch = 0 : i64, scratch_operands = 0 : i64, tpu.core_type = #tpu.core_type<tc>, window_params = [{transform_indices = @transform_0, window_bounds = array<i64: 128, 256>}, {pipeline_mode = #tpu.pipeline_mode<synchronous>, transform_indices = @transform_1, window_bounds = array<i64: 256, 16>}, {pipeline_mode = #tpu.pipeline_mode<synchronous>, transform_indices = @transform_2, window_bounds = array<i64: 1, 16>}, {pipeline_mode = #tpu.pipeline_mode<synchronous>, transform_indices = @transform_3, window_bounds = array<i64: 1, 16>}, {pipeline_mode = #tpu.pipeline_mode<synchronous>, transform_indices = @transform_4, window_bounds = array<i64: 1, 16>}, {transform_indices = @transform_5, window_bounds = array<i64: 128, 16>}]} {
    %c0 = arith.constant 0 : index
    %c0_0 = arith.constant 0 : index
    %0 = vector.load %arg1[%c0, %c0_0] : memref<128x256xf32, #tpu.memory_space<vmem>>, vector<128x256xf32>
    %c0_1 = arith.constant 0 : index
    %c0_2 = arith.constant 0 : index
    %1 = vector.load %arg2[%c0_1, %c0_2] : memref<256x16xf32, #tpu.memory_space<vmem>>, vector<256x16xf32>
    %cst = arith.constant dense<0.000000e+00> : vector<128x16xf32>
    %2 = tpu.matmul %0, %1, %cst {dimension_numbers = #tpu.dot_dimension_numbers<[1], [0], [0], [1], [0, 0, 1, 1], [], []>} : vector<128x256xf32>, vector<256x16xf32>, vector<128x16xf32> -> vector<128x16xf32>
    %c0_3 = arith.constant 0 : index
    %c0_4 = arith.constant 0 : index
    %3 = vector.load %arg3[%c0_3, %c0_4] : memref<1x16xf32, #tpu.memory_space<vmem>>, vector<1x16xf32>
    %4 = vector.broadcast %3 : vector<1x16xf32> to vector<128x16xf32>
    %5 = arith.addf %2, %4 : vector<128x16xf32>
    %cst_5 = arith.constant 0.000000e+00 : f32
    %6 = vector.broadcast %cst_5 : f32 to vector<128x16xf32>
    %7 = arith.maximumf %5, %6 : vector<128x16xf32>
    %c0_6 = arith.constant 0 : index
    %c0_7 = arith.constant 0 : index
    %8 = vector.load %arg4[%c0_6, %c0_7] : memref<1x16xf32, #tpu.memory_space<vmem>>, vector<1x16xf32>
    %c0_8 = arith.constant 0 : index
    %c0_9 = arith.constant 0 : index
    %9 = vector.load %arg5[%c0_8, %c0_9] : memref<1x16xf32, #tpu.memory_space<vmem>>, vector<1x16xf32>
    %cst_10 = arith.constant dense<0.000000e+00> : vector<128xf32>
    %10 = vector.multi_reduction <add>, %7, %cst_10 [1] : vector<128x16xf32> to vector<128xf32>
    %11 = vector.shape_cast %10 : vector<128xf32> to vector<128x1xf32>
    %cst_11 = arith.constant 1.600000e+01 : f32
    %12 = vector.broadcast %cst_11 : f32 to vector<128x1xf32>
    %13 = arith.divf %11, %12 : vector<128x1xf32>
    %14 = vector.broadcast %13 : vector<128x1xf32> to vector<128x16xf32>
    %15 = arith.subf %7, %14 : vector<128x16xf32>
    %16 = arith.mulf %15, %15 : vector<128x16xf32>
    %cst_12 = arith.constant dense<0.000000e+00> : vector<128xf32>
    %17 = vector.multi_reduction <add>, %16, %cst_12 [1] : vector<128x16xf32> to vector<128xf32>
    %18 = vector.shape_cast %17 : vector<128xf32> to vector<128x1xf32>
    %cst_13 = arith.constant 1.600000e+01 : f32
    %19 = vector.broadcast %cst_13 : f32 to vector<128x1xf32>
    %20 = arith.divf %18, %19 : vector<128x1xf32>
    %21 = vector.broadcast %13 : vector<128x1xf32> to vector<128x16xf32>
    %22 = arith.subf %7, %21 : vector<128x16xf32>
    %cst_14 = arith.constant 9.99999974E-6 : f32
    %23 = vector.broadcast %cst_14 : f32 to vector<128x1xf32>
    %24 = arith.addf %20, %23 : vector<128x1xf32>
    %25 = math.rsqrt %24 : vector<128x1xf32>
    %26 = vector.broadcast %25 : vector<128x1xf32> to vector<128x16xf32>
    %27 = arith.mulf %22, %26 : vector<128x16xf32>
    %28 = vector.broadcast %8 : vector<1x16xf32> to vector<128x16xf32>
    %29 = arith.mulf %27, %28 : vector<128x16xf32>
    %30 = vector.broadcast %9 : vector<1x16xf32> to vector<128x16xf32>
    %31 = arith.addf %29, %30 : vector<128x16xf32>
    %c0_15 = arith.constant 0 : index
    %c0_16 = arith.constant 0 : index
    %32 = vector.load %arg6[%c0_15, %c0_16] : memref<128x16xf32, #tpu.memory_space<vmem>>, vector<128x16xf32>
    tpu.vector_store %arg6[%c0_15, %c0_16], %31 {strides = array<i32>} : memref<128x16xf32, #tpu.memory_space<vmem>>, vector<128x16xf32>,
    return
  }
  func.func @transform_0(%arg0: i32) -> (i32, i32) {
    %c0_i32 = arith.constant 0 : i32
    %c0_i32_0 = arith.constant 0 : i32
    return %arg0, %c0_i32 : i32, i32
  }
  func.func @transform_1(%arg0: i32) -> (i32, i32) {
    %c0_i32 = arith.constant 0 : i32
    %c0_i32_0 = arith.constant 0 : i32
    %c0_i32_1 = arith.constant 0 : i32
    return %c0_i32, %c0_i32_0 : i32, i32
  }
  func.func @transform_2(%arg0: i32) -> (i32, i32) {
    %c0_i32 = arith.constant 0 : i32
    %c0_i32_0 = arith.constant 0 : i32
    %c0_i32_1 = arith.constant 0 : i32
    return %c0_i32, %c0_i32_0 : i32, i32
  }
  func.func @transform_3(%arg0: i32) -> (i32, i32) {
    %c0_i32 = arith.constant 0 : i32
    %c0_i32_0 = arith.constant 0 : i32
    %c0_i32_1 = arith.constant 0 : i32
    return %c0_i32, %c0_i32_0 : i32, i32
  }
  func.func @transform_4(%arg0: i32) -> (i32, i32) {
    %c0_i32 = arith.constant 0 : i32
    %c0_i32_0 = arith.constant 0 : i32
    %c0_i32_1 = arith.constant 0 : i32
    return %c0_i32, %c0_i32_0 : i32, i32
  }
  func.func @transform_5(%arg0: i32) -> (i32, i32) {
    %c0_i32 = arith.constant 0 : i32
    %c0_i32_0 = arith.constant 0 : i32
    return %arg0, %c0_i32 : i32, i32
  }
}

module attributes {stable_mosaic.version = 11 : i64} {
  func.func @mm_kernel(%arg0: i32, %arg1: memref<128x144xf32, #tpu.memory_space<vmem>>, %arg2: memref<144x16xf32, #tpu.memory_space<vmem>>, %arg3: memref<1x16xf32, #tpu.memory_space<vmem>>, %arg4: memref<128x16xf32, #tpu.memory_space<vmem>>) attributes {dimension_semantics = [#tpu.dimension_semantics<parallel>], iteration_bounds = array<i64: 1>, scalar_prefetch = 0 : i64, scratch_operands = 0 : i64, tpu.core_type = #tpu.core_type<tc>, window_params = [{transform_indices = @transform_0, window_bounds = array<i64: 128, 144>}, {pipeline_mode = #tpu.pipeline_mode<synchronous>, transform_indices = @transform_1, window_bounds = array<i64: 144, 16>}, {pipeline_mode = #tpu.pipeline_mode<synchronous>, transform_indices = @transform_2, window_bounds = array<i64: 1, 16>}, {transform_indices = @transform_3, window_bounds = array<i64: 128, 16>}]} {
    %c0 = arith.constant 0 : index
    %c0_0 = arith.constant 0 : index
    %0 = vector.load %arg1[%c0, %c0_0] : memref<128x144xf32, #tpu.memory_space<vmem>>, vector<128x144xf32>
    %c0_1 = arith.constant 0 : index
    %c0_2 = arith.constant 0 : index
    %1 = vector.load %arg2[%c0_1, %c0_2] : memref<144x16xf32, #tpu.memory_space<vmem>>, vector<144x16xf32>
    %cst = arith.constant dense<0.000000e+00> : vector<128x16xf32>
    %2 = tpu.matmul %0, %1, %cst {dimension_numbers = #tpu.dot_dimension_numbers<[1], [0], [0], [1], [0, 0, 1, 1], [], []>} : vector<128x144xf32>, vector<144x16xf32>, vector<128x16xf32> -> vector<128x16xf32>
    %c0_3 = arith.constant 0 : index
    %c0_4 = arith.constant 0 : index
    %3 = vector.load %arg3[%c0_3, %c0_4] : memref<1x16xf32, #tpu.memory_space<vmem>>, vector<1x16xf32>
    %4 = vector.broadcast %3 : vector<1x16xf32> to vector<128x16xf32>
    %5 = arith.addf %2, %4 : vector<128x16xf32>
    %cst_5 = arith.constant 0.000000e+00 : f32
    %6 = vector.broadcast %cst_5 : f32 to vector<128x16xf32>
    %7 = arith.maximumf %5, %6 : vector<128x16xf32>
    %c0_6 = arith.constant 0 : index
    %c0_7 = arith.constant 0 : index
    %8 = vector.load %arg4[%c0_6, %c0_7] : memref<128x16xf32, #tpu.memory_space<vmem>>, vector<128x16xf32>
    tpu.vector_store %arg4[%c0_6, %c0_7], %7 {strides = array<i32>} : memref<128x16xf32, #tpu.memory_space<vmem>>, vector<128x16xf32>,
    return
  }
  func.func @transform_0(%arg0: i32) -> (i32, i32) {
    %c0_i32 = arith.constant 0 : i32
    %c0_i32_0 = arith.constant 0 : i32
    return %arg0, %c0_i32 : i32, i32
  }
  func.func @transform_1(%arg0: i32) -> (i32, i32) {
    %c0_i32 = arith.constant 0 : i32
    %c0_i32_0 = arith.constant 0 : i32
    %c0_i32_1 = arith.constant 0 : i32
    return %c0_i32, %c0_i32_0 : i32, i32
  }
  func.func @transform_2(%arg0: i32) -> (i32, i32) {
    %c0_i32 = arith.constant 0 : i32
    %c0_i32_0 = arith.constant 0 : i32
    %c0_i32_1 = arith.constant 0 : i32
    return %c0_i32, %c0_i32_0 : i32, i32
  }
  func.func @transform_3(%arg0: i32) -> (i32, i32) {
    %c0_i32 = arith.constant 0 : i32
    %c0_i32_0 = arith.constant 0 : i32
    return %arg0, %c0_i32 : i32, i32
  }
}

module attributes {stable_mosaic.version = 11 : i64} {
  func.func @dual_mm_kernel(%arg0: i32, %arg1: memref<128x16xf32, #tpu.memory_space<vmem>>, %arg2: memref<128x16xf32, #tpu.memory_space<vmem>>, %arg3: memref<16x16xf32, #tpu.memory_space<vmem>>, %arg4: memref<16x16xf32, #tpu.memory_space<vmem>>, %arg5: memref<1x16xf32, #tpu.memory_space<vmem>>, %arg6: memref<128x16xf32, #tpu.memory_space<vmem>>) attributes {dimension_semantics = [#tpu.dimension_semantics<parallel>], iteration_bounds = array<i64: 1>, scalar_prefetch = 0 : i64, scratch_operands = 0 : i64, tpu.core_type = #tpu.core_type<tc>, window_params = [{transform_indices = @transform_0, window_bounds = array<i64: 128, 16>}, {transform_indices = @transform_1, window_bounds = array<i64: 128, 16>}, {pipeline_mode = #tpu.pipeline_mode<synchronous>, transform_indices = @transform_2, window_bounds = array<i64: 16, 16>}, {pipeline_mode = #tpu.pipeline_mode<synchronous>, transform_indices = @transform_3, window_bounds = array<i64: 16, 16>}, {pipeline_mode = #tpu.pipeline_mode<synchronous>, transform_indices = @transform_4, window_bounds = array<i64: 1, 16>}, {transform_indices = @transform_5, window_bounds = array<i64: 128, 16>}]} {
    %c0 = arith.constant 0 : index
    %c0_0 = arith.constant 0 : index
    %0 = vector.load %arg1[%c0, %c0_0] : memref<128x16xf32, #tpu.memory_space<vmem>>, vector<128x16xf32>
    %c0_1 = arith.constant 0 : index
    %c0_2 = arith.constant 0 : index
    %1 = vector.load %arg2[%c0_1, %c0_2] : memref<128x16xf32, #tpu.memory_space<vmem>>, vector<128x16xf32>
    %c0_3 = arith.constant 0 : index
    %c0_4 = arith.constant 0 : index
    %2 = vector.load %arg3[%c0_3, %c0_4] : memref<16x16xf32, #tpu.memory_space<vmem>>, vector<16x16xf32>
    %cst = arith.constant dense<0.000000e+00> : vector<128x16xf32>
    %3 = tpu.matmul %0, %2, %cst {dimension_numbers = #tpu.dot_dimension_numbers<[1], [0], [0], [1], [0, 0, 1, 1], [], []>} : vector<128x16xf32>, vector<16x16xf32>, vector<128x16xf32> -> vector<128x16xf32>
    %c0_5 = arith.constant 0 : index
    %c0_6 = arith.constant 0 : index
    %4 = vector.load %arg4[%c0_5, %c0_6] : memref<16x16xf32, #tpu.memory_space<vmem>>, vector<16x16xf32>
    %cst_7 = arith.constant dense<0.000000e+00> : vector<128x16xf32>
    %5 = tpu.matmul %1, %4, %cst_7 {dimension_numbers = #tpu.dot_dimension_numbers<[1], [0], [0], [1], [0, 0, 1, 1], [], []>} : vector<128x16xf32>, vector<16x16xf32>, vector<128x16xf32> -> vector<128x16xf32>
    %6 = arith.addf %3, %5 : vector<128x16xf32>
    %c0_8 = arith.constant 0 : index
    %c0_9 = arith.constant 0 : index
    %7 = vector.load %arg5[%c0_8, %c0_9] : memref<1x16xf32, #tpu.memory_space<vmem>>, vector<1x16xf32>
    %8 = vector.broadcast %7 : vector<1x16xf32> to vector<128x16xf32>
    %9 = arith.addf %6, %8 : vector<128x16xf32>
    %c0_10 = arith.constant 0 : index
    %c0_11 = arith.constant 0 : index
    %10 = vector.load %arg6[%c0_10, %c0_11] : memref<128x16xf32, #tpu.memory_space<vmem>>, vector<128x16xf32>
    tpu.vector_store %arg6[%c0_10, %c0_11], %9 {strides = array<i32>} : memref<128x16xf32, #tpu.memory_space<vmem>>, vector<128x16xf32>,
    return
  }
  func.func @transform_0(%arg0: i32) -> (i32, i32) {
    %c0_i32 = arith.constant 0 : i32
    %c0_i32_0 = arith.constant 0 : i32
    return %arg0, %c0_i32 : i32, i32
  }
  func.func @transform_1(%arg0: i32) -> (i32, i32) {
    %c0_i32 = arith.constant 0 : i32
    %c0_i32_0 = arith.constant 0 : i32
    return %arg0, %c0_i32 : i32, i32
  }
  func.func @transform_2(%arg0: i32) -> (i32, i32) {
    %c0_i32 = arith.constant 0 : i32
    %c0_i32_0 = arith.constant 0 : i32
    %c0_i32_1 = arith.constant 0 : i32
    return %c0_i32, %c0_i32_0 : i32, i32
  }
  func.func @transform_3(%arg0: i32) -> (i32, i32) {
    %c0_i32 = arith.constant 0 : i32
    %c0_i32_0 = arith.constant 0 : i32
    %c0_i32_1 = arith.constant 0 : i32
    return %c0_i32, %c0_i32_0 : i32, i32
  }
  func.func @transform_4(%arg0: i32) -> (i32, i32) {
    %c0_i32 = arith.constant 0 : i32
    %c0_i32_0 = arith.constant 0 : i32
    %c0_i32_1 = arith.constant 0 : i32
    return %c0_i32, %c0_i32_0 : i32, i32
  }
  func.func @transform_5(%arg0: i32) -> (i32, i32) {
    %c0_i32 = arith.constant 0 : i32
    %c0_i32_0 = arith.constant 0 : i32
    return %arg0, %c0_i32 : i32, i32
  }
}

module attributes {stable_mosaic.version = 11 : i64} {
  func.func @mm_ln_kernel(%arg0: i32, %arg1: memref<32x256xf32, #tpu.memory_space<vmem>>, %arg2: memref<256x16xf32, #tpu.memory_space<vmem>>, %arg3: memref<1x16xf32, #tpu.memory_space<vmem>>, %arg4: memref<1x16xf32, #tpu.memory_space<vmem>>, %arg5: memref<1x16xf32, #tpu.memory_space<vmem>>, %arg6: memref<32x16xf32, #tpu.memory_space<vmem>>) attributes {dimension_semantics = [#tpu.dimension_semantics<parallel>], iteration_bounds = array<i64: 1>, scalar_prefetch = 0 : i64, scratch_operands = 0 : i64, tpu.core_type = #tpu.core_type<tc>, window_params = [{transform_indices = @transform_0, window_bounds = array<i64: 32, 256>}, {pipeline_mode = #tpu.pipeline_mode<synchronous>, transform_indices = @transform_1, window_bounds = array<i64: 256, 16>}, {pipeline_mode = #tpu.pipeline_mode<synchronous>, transform_indices = @transform_2, window_bounds = array<i64: 1, 16>}, {pipeline_mode = #tpu.pipeline_mode<synchronous>, transform_indices = @transform_3, window_bounds = array<i64: 1, 16>}, {pipeline_mode = #tpu.pipeline_mode<synchronous>, transform_indices = @transform_4, window_bounds = array<i64: 1, 16>}, {transform_indices = @transform_5, window_bounds = array<i64: 32, 16>}]} {
    %c0 = arith.constant 0 : index
    %c0_0 = arith.constant 0 : index
    %0 = vector.load %arg1[%c0, %c0_0] : memref<32x256xf32, #tpu.memory_space<vmem>>, vector<32x256xf32>
    %c0_1 = arith.constant 0 : index
    %c0_2 = arith.constant 0 : index
    %1 = vector.load %arg2[%c0_1, %c0_2] : memref<256x16xf32, #tpu.memory_space<vmem>>, vector<256x16xf32>
    %cst = arith.constant dense<0.000000e+00> : vector<32x16xf32>
    %2 = tpu.matmul %0, %1, %cst {dimension_numbers = #tpu.dot_dimension_numbers<[1], [0], [0], [1], [0, 0, 1, 1], [], []>} : vector<32x256xf32>, vector<256x16xf32>, vector<32x16xf32> -> vector<32x16xf32>
    %c0_3 = arith.constant 0 : index
    %c0_4 = arith.constant 0 : index
    %3 = vector.load %arg3[%c0_3, %c0_4] : memref<1x16xf32, #tpu.memory_space<vmem>>, vector<1x16xf32>
    %4 = vector.broadcast %3 : vector<1x16xf32> to vector<32x16xf32>
    %5 = arith.addf %2, %4 : vector<32x16xf32>
    %cst_5 = arith.constant 0.000000e+00 : f32
    %6 = vector.broadcast %cst_5 : f32 to vector<32x16xf32>
    %7 = arith.maximumf %5, %6 : vector<32x16xf32>
    %c0_6 = arith.constant 0 : index
    %c0_7 = arith.constant 0 : index
    %8 = vector.load %arg4[%c0_6, %c0_7] : memref<1x16xf32, #tpu.memory_space<vmem>>, vector<1x16xf32>
    %c0_8 = arith.constant 0 : index
    %c0_9 = arith.constant 0 : index
    %9 = vector.load %arg5[%c0_8, %c0_9] : memref<1x16xf32, #tpu.memory_space<vmem>>, vector<1x16xf32>
    %cst_10 = arith.constant dense<0.000000e+00> : vector<32xf32>
    %10 = vector.multi_reduction <add>, %7, %cst_10 [1] : vector<32x16xf32> to vector<32xf32>
    %11 = vector.shape_cast %10 : vector<32xf32> to vector<32x1xf32>
    %cst_11 = arith.constant 1.600000e+01 : f32
    %12 = vector.broadcast %cst_11 : f32 to vector<32x1xf32>
    %13 = arith.divf %11, %12 : vector<32x1xf32>
    %14 = vector.broadcast %13 : vector<32x1xf32> to vector<32x16xf32>
    %15 = arith.subf %7, %14 : vector<32x16xf32>
    %16 = arith.mulf %15, %15 : vector<32x16xf32>
    %cst_12 = arith.constant dense<0.000000e+00> : vector<32xf32>
    %17 = vector.multi_reduction <add>, %16, %cst_12 [1] : vector<32x16xf32> to vector<32xf32>
    %18 = vector.shape_cast %17 : vector<32xf32> to vector<32x1xf32>
    %cst_13 = arith.constant 1.600000e+01 : f32
    %19 = vector.broadcast %cst_13 : f32 to vector<32x1xf32>
    %20 = arith.divf %18, %19 : vector<32x1xf32>
    %21 = vector.broadcast %13 : vector<32x1xf32> to vector<32x16xf32>
    %22 = arith.subf %7, %21 : vector<32x16xf32>
    %cst_14 = arith.constant 9.99999974E-6 : f32
    %23 = vector.broadcast %cst_14 : f32 to vector<32x1xf32>
    %24 = arith.addf %20, %23 : vector<32x1xf32>
    %25 = math.rsqrt %24 : vector<32x1xf32>
    %26 = vector.broadcast %25 : vector<32x1xf32> to vector<32x16xf32>
    %27 = arith.mulf %22, %26 : vector<32x16xf32>
    %28 = vector.broadcast %8 : vector<1x16xf32> to vector<32x16xf32>
    %29 = arith.mulf %27, %28 : vector<32x16xf32>
    %30 = vector.broadcast %9 : vector<1x16xf32> to vector<32x16xf32>
    %31 = arith.addf %29, %30 : vector<32x16xf32>
    %c0_15 = arith.constant 0 : index
    %c0_16 = arith.constant 0 : index
    %32 = vector.load %arg6[%c0_15, %c0_16] : memref<32x16xf32, #tpu.memory_space<vmem>>, vector<32x16xf32>
    tpu.vector_store %arg6[%c0_15, %c0_16], %31 {strides = array<i32>} : memref<32x16xf32, #tpu.memory_space<vmem>>, vector<32x16xf32>,
    return
  }
  func.func @transform_0(%arg0: i32) -> (i32, i32) {
    %c0_i32 = arith.constant 0 : i32
    %c0_i32_0 = arith.constant 0 : i32
    return %arg0, %c0_i32 : i32, i32
  }
  func.func @transform_1(%arg0: i32) -> (i32, i32) {
    %c0_i32 = arith.constant 0 : i32
    %c0_i32_0 = arith.constant 0 : i32
    %c0_i32_1 = arith.constant 0 : i32
    return %c0_i32, %c0_i32_0 : i32, i32
  }
  func.func @transform_2(%arg0: i32) -> (i32, i32) {
    %c0_i32 = arith.constant 0 : i32
    %c0_i32_0 = arith.constant 0 : i32
    %c0_i32_1 = arith.constant 0 : i32
    return %c0_i32, %c0_i32_0 : i32, i32
  }
  func.func @transform_3(%arg0: i32) -> (i32, i32) {
    %c0_i32 = arith.constant 0 : i32
    %c0_i32_0 = arith.constant 0 : i32
    %c0_i32_1 = arith.constant 0 : i32
    return %c0_i32, %c0_i32_0 : i32, i32
  }
  func.func @transform_4(%arg0: i32) -> (i32, i32) {
    %c0_i32 = arith.constant 0 : i32
    %c0_i32_0 = arith.constant 0 : i32
    %c0_i32_1 = arith.constant 0 : i32
    return %c0_i32, %c0_i32_0 : i32, i32
  }
  func.func @transform_5(%arg0: i32) -> (i32, i32) {
    %c0_i32 = arith.constant 0 : i32
    %c0_i32_0 = arith.constant 0 : i32
    return %arg0, %c0_i32 : i32, i32
  }
}

module attributes {stable_mosaic.version = 11 : i64} {
  func.func @mm_kernel(%arg0: i32, %arg1: memref<32x144xf32, #tpu.memory_space<vmem>>, %arg2: memref<144x16xf32, #tpu.memory_space<vmem>>, %arg3: memref<1x16xf32, #tpu.memory_space<vmem>>, %arg4: memref<32x16xf32, #tpu.memory_space<vmem>>) attributes {dimension_semantics = [#tpu.dimension_semantics<parallel>], iteration_bounds = array<i64: 1>, scalar_prefetch = 0 : i64, scratch_operands = 0 : i64, tpu.core_type = #tpu.core_type<tc>, window_params = [{transform_indices = @transform_0, window_bounds = array<i64: 32, 144>}, {pipeline_mode = #tpu.pipeline_mode<synchronous>, transform_indices = @transform_1, window_bounds = array<i64: 144, 16>}, {pipeline_mode = #tpu.pipeline_mode<synchronous>, transform_indices = @transform_2, window_bounds = array<i64: 1, 16>}, {transform_indices = @transform_3, window_bounds = array<i64: 32, 16>}]} {
    %c0 = arith.constant 0 : index
    %c0_0 = arith.constant 0 : index
    %0 = vector.load %arg1[%c0, %c0_0] : memref<32x144xf32, #tpu.memory_space<vmem>>, vector<32x144xf32>
    %c0_1 = arith.constant 0 : index
    %c0_2 = arith.constant 0 : index
    %1 = vector.load %arg2[%c0_1, %c0_2] : memref<144x16xf32, #tpu.memory_space<vmem>>, vector<144x16xf32>
    %cst = arith.constant dense<0.000000e+00> : vector<32x16xf32>
    %2 = tpu.matmul %0, %1, %cst {dimension_numbers = #tpu.dot_dimension_numbers<[1], [0], [0], [1], [0, 0, 1, 1], [], []>} : vector<32x144xf32>, vector<144x16xf32>, vector<32x16xf32> -> vector<32x16xf32>
    %c0_3 = arith.constant 0 : index
    %c0_4 = arith.constant 0 : index
    %3 = vector.load %arg3[%c0_3, %c0_4] : memref<1x16xf32, #tpu.memory_space<vmem>>, vector<1x16xf32>
    %4 = vector.broadcast %3 : vector<1x16xf32> to vector<32x16xf32>
    %5 = arith.addf %2, %4 : vector<32x16xf32>
    %cst_5 = arith.constant 0.000000e+00 : f32
    %6 = vector.broadcast %cst_5 : f32 to vector<32x16xf32>
    %7 = arith.maximumf %5, %6 : vector<32x16xf32>
    %c0_6 = arith.constant 0 : index
    %c0_7 = arith.constant 0 : index
    %8 = vector.load %arg4[%c0_6, %c0_7] : memref<32x16xf32, #tpu.memory_space<vmem>>, vector<32x16xf32>
    tpu.vector_store %arg4[%c0_6, %c0_7], %7 {strides = array<i32>} : memref<32x16xf32, #tpu.memory_space<vmem>>, vector<32x16xf32>,
    return
  }
  func.func @transform_0(%arg0: i32) -> (i32, i32) {
    %c0_i32 = arith.constant 0 : i32
    %c0_i32_0 = arith.constant 0 : i32
    return %arg0, %c0_i32 : i32, i32
  }
  func.func @transform_1(%arg0: i32) -> (i32, i32) {
    %c0_i32 = arith.constant 0 : i32
    %c0_i32_0 = arith.constant 0 : i32
    %c0_i32_1 = arith.constant 0 : i32
    return %c0_i32, %c0_i32_0 : i32, i32
  }
  func.func @transform_2(%arg0: i32) -> (i32, i32) {
    %c0_i32 = arith.constant 0 : i32
    %c0_i32_0 = arith.constant 0 : i32
    %c0_i32_1 = arith.constant 0 : i32
    return %c0_i32, %c0_i32_0 : i32, i32
  }
  func.func @transform_3(%arg0: i32) -> (i32, i32) {
    %c0_i32 = arith.constant 0 : i32
    %c0_i32_0 = arith.constant 0 : i32
    return %arg0, %c0_i32 : i32, i32
  }
}

module attributes {stable_mosaic.version = 11 : i64} {
  func.func @dual_mm_kernel(%arg0: i32, %arg1: memref<32x16xf32, #tpu.memory_space<vmem>>, %arg2: memref<32x16xf32, #tpu.memory_space<vmem>>, %arg3: memref<16x16xf32, #tpu.memory_space<vmem>>, %arg4: memref<16x16xf32, #tpu.memory_space<vmem>>, %arg5: memref<1x16xf32, #tpu.memory_space<vmem>>, %arg6: memref<32x16xf32, #tpu.memory_space<vmem>>) attributes {dimension_semantics = [#tpu.dimension_semantics<parallel>], iteration_bounds = array<i64: 1>, scalar_prefetch = 0 : i64, scratch_operands = 0 : i64, tpu.core_type = #tpu.core_type<tc>, window_params = [{transform_indices = @transform_0, window_bounds = array<i64: 32, 16>}, {transform_indices = @transform_1, window_bounds = array<i64: 32, 16>}, {pipeline_mode = #tpu.pipeline_mode<synchronous>, transform_indices = @transform_2, window_bounds = array<i64: 16, 16>}, {pipeline_mode = #tpu.pipeline_mode<synchronous>, transform_indices = @transform_3, window_bounds = array<i64: 16, 16>}, {pipeline_mode = #tpu.pipeline_mode<synchronous>, transform_indices = @transform_4, window_bounds = array<i64: 1, 16>}, {transform_indices = @transform_5, window_bounds = array<i64: 32, 16>}]} {
    %c0 = arith.constant 0 : index
    %c0_0 = arith.constant 0 : index
    %0 = vector.load %arg1[%c0, %c0_0] : memref<32x16xf32, #tpu.memory_space<vmem>>, vector<32x16xf32>
    %c0_1 = arith.constant 0 : index
    %c0_2 = arith.constant 0 : index
    %1 = vector.load %arg2[%c0_1, %c0_2] : memref<32x16xf32, #tpu.memory_space<vmem>>, vector<32x16xf32>
    %c0_3 = arith.constant 0 : index
    %c0_4 = arith.constant 0 : index
    %2 = vector.load %arg3[%c0_3, %c0_4] : memref<16x16xf32, #tpu.memory_space<vmem>>, vector<16x16xf32>
    %cst = arith.constant dense<0.000000e+00> : vector<32x16xf32>
    %3 = tpu.matmul %0, %2, %cst {dimension_numbers = #tpu.dot_dimension_numbers<[1], [0], [0], [1], [0, 0, 1, 1], [], []>} : vector<32x16xf32>, vector<16x16xf32>, vector<32x16xf32> -> vector<32x16xf32>
    %c0_5 = arith.constant 0 : index
    %c0_6 = arith.constant 0 : index
    %4 = vector.load %arg4[%c0_5, %c0_6] : memref<16x16xf32, #tpu.memory_space<vmem>>, vector<16x16xf32>
    %cst_7 = arith.constant dense<0.000000e+00> : vector<32x16xf32>
    %5 = tpu.matmul %1, %4, %cst_7 {dimension_numbers = #tpu.dot_dimension_numbers<[1], [0], [0], [1], [0, 0, 1, 1], [], []>} : vector<32x16xf32>, vector<16x16xf32>, vector<32x16xf32> -> vector<32x16xf32>
    %6 = arith.addf %3, %5 : vector<32x16xf32>
    %c0_8 = arith.constant 0 : index
    %c0_9 = arith.constant 0 : index
    %7 = vector.load %arg5[%c0_8, %c0_9] : memref<1x16xf32, #tpu.memory_space<vmem>>, vector<1x16xf32>
    %8 = vector.broadcast %7 : vector<1x16xf32> to vector<32x16xf32>
    %9 = arith.addf %6, %8 : vector<32x16xf32>
    %c0_10 = arith.constant 0 : index
    %c0_11 = arith.constant 0 : index
    %10 = vector.load %arg6[%c0_10, %c0_11] : memref<32x16xf32, #tpu.memory_space<vmem>>, vector<32x16xf32>
    tpu.vector_store %arg6[%c0_10, %c0_11], %9 {strides = array<i32>} : memref<32x16xf32, #tpu.memory_space<vmem>>, vector<32x16xf32>,
    return
  }
  func.func @transform_0(%arg0: i32) -> (i32, i32) {
    %c0_i32 = arith.constant 0 : i32
    %c0_i32_0 = arith.constant 0 : i32
    return %arg0, %c0_i32 : i32, i32
  }
  func.func @transform_1(%arg0: i32) -> (i32, i32) {
    %c0_i32 = arith.constant 0 : i32
    %c0_i32_0 = arith.constant 0 : i32
    return %arg0, %c0_i32 : i32, i32
  }
  func.func @transform_2(%arg0: i32) -> (i32, i32) {
    %c0_i32 = arith.constant 0 : i32
    %c0_i32_0 = arith.constant 0 : i32
    %c0_i32_1 = arith.constant 0 : i32
    return %c0_i32, %c0_i32_0 : i32, i32
  }
  func.func @transform_3(%arg0: i32) -> (i32, i32) {
    %c0_i32 = arith.constant 0 : i32
    %c0_i32_0 = arith.constant 0 : i32
    %c0_i32_1 = arith.constant 0 : i32
    return %c0_i32, %c0_i32_0 : i32, i32
  }
  func.func @transform_4(%arg0: i32) -> (i32, i32) {
    %c0_i32 = arith.constant 0 : i32
    %c0_i32_0 = arith.constant 0 : i32
    %c0_i32_1 = arith.constant 0 : i32
    return %c0_i32, %c0_i32_0 : i32, i32
  }
  func.func @transform_5(%arg0: i32) -> (i32, i32) {
    %c0_i32 = arith.constant 0 : i32
    %c0_i32_0 = arith.constant 0 : i32
    return %arg0, %c0_i32 : i32, i32
  }
}

module attributes {stable_mosaic.version = 11 : i64} {
  func.func @mse_sum_kernel(%arg0: i32, %arg1: memref<128x16xf32, #tpu.memory_space<vmem>>, %arg2: memref<128x16xf32, #tpu.memory_space<vmem>>, %arg3: memref<1x1xf32, #tpu.memory_space<vmem>>) attributes {dimension_semantics = [#tpu.dimension_semantics<arbitrary>], iteration_bounds = array<i64: 1>, scalar_prefetch = 0 : i64, scratch_operands = 0 : i64, tpu.core_type = #tpu.core_type<tc>, window_params = [{transform_indices = @transform_0, window_bounds = array<i64: 128, 16>}, {transform_indices = @transform_1, window_bounds = array<i64: 128, 16>}, {pipeline_mode = #tpu.pipeline_mode<synchronous>, transform_indices = @transform_2, window_bounds = array<i64: 1, 1>}]} {
    %c0_i32 = arith.constant 0 : i32
    %0 = arith.cmpi eq, %arg0, %c0_i32 : i32
    %1 = arith.extui %0 : i1 to i32
    %c0_i32_0 = arith.constant 0 : i32
    %2 = arith.cmpi ne, %1, %c0_i32_0 : i32
    scf.if %2 {
      %cst_8 = arith.constant 0.000000e+00 : f32
      %15 = vector.broadcast %cst_8 : f32 to vector<1x1xf32>
      %c0_9 = arith.constant 0 : index
      %c0_10 = arith.constant 0 : index
      %16 = vector.load %arg3[%c0_9, %c0_10] : memref<1x1xf32, #tpu.memory_space<vmem>>, vector<1x1xf32>
      tpu.vector_store %arg3[%c0_9, %c0_10], %15 {strides = array<i32>} : memref<1x1xf32, #tpu.memory_space<vmem>>, vector<1x1xf32>,
    } else {
    }
    %c0 = arith.constant 0 : index
    %c0_1 = arith.constant 0 : index
    %3 = vector.load %arg1[%c0, %c0_1] : memref<128x16xf32, #tpu.memory_space<vmem>>, vector<128x16xf32>
    %c0_2 = arith.constant 0 : index
    %c0_3 = arith.constant 0 : index
    %4 = vector.load %arg2[%c0_2, %c0_3] : memref<128x16xf32, #tpu.memory_space<vmem>>, vector<128x16xf32>
    %5 = arith.subf %3, %4 : vector<128x16xf32>
    %c0_4 = arith.constant 0 : index
    %c0_5 = arith.constant 0 : index
    %6 = vector.load %arg3[%c0_4, %c0_5] : memref<1x1xf32, #tpu.memory_space<vmem>>, vector<1x1xf32>
    %7 = arith.mulf %5, %5 : vector<128x16xf32>
    %8 = vector.shape_cast %7 : vector<128x16xf32> to vector<1x128x16xf32>
    %cst = arith.constant dense<0.000000e+00> : vector<1xf32>
    %9 = vector.multi_reduction <add>, %8, %cst [1, 2] : vector<1x128x16xf32> to vector<1xf32>
    %10 = vector.shape_cast %9 : vector<1xf32> to vector<1x1x1xf32>
    %11 = vector.extract %10[0, 0, 0] : f32 from vector<1x1x1xf32>
    %12 = vector.broadcast %11 : f32 to vector<1x1xf32>
    %13 = arith.addf %6, %12 : vector<1x1xf32>
    %c0_6 = arith.constant 0 : index
    %c0_7 = arith.constant 0 : index
    %14 = vector.load %arg3[%c0_6, %c0_7] : memref<1x1xf32, #tpu.memory_space<vmem>>, vector<1x1xf32>
    tpu.vector_store %arg3[%c0_6, %c0_7], %13 {strides = array<i32>} : memref<1x1xf32, #tpu.memory_space<vmem>>, vector<1x1xf32>,
    return
  }
  func.func @transform_0(%arg0: i32) -> (i32, i32) {
    %c0_i32 = arith.constant 0 : i32
    %c0_i32_0 = arith.constant 0 : i32
    return %arg0, %c0_i32 : i32, i32
  }
  func.func @transform_1(%arg0: i32) -> (i32, i32) {
    %c0_i32 = arith.constant 0 : i32
    %c0_i32_0 = arith.constant 0 : i32
    return %arg0, %c0_i32 : i32, i32
  }
  func.func @transform_2(%arg0: i32) -> (i32, i32) {
    %c0_i32 = arith.constant 0 : i32
    %c0_i32_0 = arith.constant 0 : i32
    %c0_i32_1 = arith.constant 0 : i32
    return %c0_i32, %c0_i32_0 : i32, i32
  }
}

module attributes {stable_mosaic.version = 11 : i64} {
  func.func @mm_ln_kernel(%arg0: i32, %arg1: memref<256x256xf32, #tpu.memory_space<vmem>>, %arg2: memref<256x16xf32, #tpu.memory_space<vmem>>, %arg3: memref<1x16xf32, #tpu.memory_space<vmem>>, %arg4: memref<1x16xf32, #tpu.memory_space<vmem>>, %arg5: memref<1x16xf32, #tpu.memory_space<vmem>>, %arg6: memref<256x16xf32, #tpu.memory_space<vmem>>) attributes {dimension_semantics = [#tpu.dimension_semantics<parallel>], iteration_bounds = array<i64: 2>, scalar_prefetch = 0 : i64, scratch_operands = 0 : i64, tpu.core_type = #tpu.core_type<tc>, window_params = [{transform_indices = @transform_0, window_bounds = array<i64: 256, 256>}, {pipeline_mode = #tpu.pipeline_mode<synchronous>, transform_indices = @transform_1, window_bounds = array<i64: 256, 16>}, {pipeline_mode = #tpu.pipeline_mode<synchronous>, transform_indices = @transform_2, window_bounds = array<i64: 1, 16>}, {pipeline_mode = #tpu.pipeline_mode<synchronous>, transform_indices = @transform_3, window_bounds = array<i64: 1, 16>}, {pipeline_mode = #tpu.pipeline_mode<synchronous>, transform_indices = @transform_4, window_bounds = array<i64: 1, 16>}, {transform_indices = @transform_5, window_bounds = array<i64: 256, 16>}]} {
    %c0 = arith.constant 0 : index
    %c0_0 = arith.constant 0 : index
    %0 = vector.load %arg1[%c0, %c0_0] : memref<256x256xf32, #tpu.memory_space<vmem>>, vector<256x256xf32>
    %c0_1 = arith.constant 0 : index
    %c0_2 = arith.constant 0 : index
    %1 = vector.load %arg2[%c0_1, %c0_2] : memref<256x16xf32, #tpu.memory_space<vmem>>, vector<256x16xf32>
    %cst = arith.constant dense<0.000000e+00> : vector<256x16xf32>
    %2 = tpu.matmul %0, %1, %cst {dimension_numbers = #tpu.dot_dimension_numbers<[1], [0], [0], [1], [0, 0, 1, 1], [], []>} : vector<256x256xf32>, vector<256x16xf32>, vector<256x16xf32> -> vector<256x16xf32>
    %c0_3 = arith.constant 0 : index
    %c0_4 = arith.constant 0 : index
    %3 = vector.load %arg3[%c0_3, %c0_4] : memref<1x16xf32, #tpu.memory_space<vmem>>, vector<1x16xf32>
    %4 = vector.broadcast %3 : vector<1x16xf32> to vector<256x16xf32>
    %5 = arith.addf %2, %4 : vector<256x16xf32>
    %cst_5 = arith.constant 0.000000e+00 : f32
    %6 = vector.broadcast %cst_5 : f32 to vector<256x16xf32>
    %7 = arith.maximumf %5, %6 : vector<256x16xf32>
    %c0_6 = arith.constant 0 : index
    %c0_7 = arith.constant 0 : index
    %8 = vector.load %arg4[%c0_6, %c0_7] : memref<1x16xf32, #tpu.memory_space<vmem>>, vector<1x16xf32>
    %c0_8 = arith.constant 0 : index
    %c0_9 = arith.constant 0 : index
    %9 = vector.load %arg5[%c0_8, %c0_9] : memref<1x16xf32, #tpu.memory_space<vmem>>, vector<1x16xf32>
    %cst_10 = arith.constant dense<0.000000e+00> : vector<256xf32>
    %10 = vector.multi_reduction <add>, %7, %cst_10 [1] : vector<256x16xf32> to vector<256xf32>
    %11 = vector.shape_cast %10 : vector<256xf32> to vector<256x1xf32>
    %cst_11 = arith.constant 1.600000e+01 : f32
    %12 = vector.broadcast %cst_11 : f32 to vector<256x1xf32>
    %13 = arith.divf %11, %12 : vector<256x1xf32>
    %14 = vector.broadcast %13 : vector<256x1xf32> to vector<256x16xf32>
    %15 = arith.subf %7, %14 : vector<256x16xf32>
    %16 = arith.mulf %15, %15 : vector<256x16xf32>
    %cst_12 = arith.constant dense<0.000000e+00> : vector<256xf32>
    %17 = vector.multi_reduction <add>, %16, %cst_12 [1] : vector<256x16xf32> to vector<256xf32>
    %18 = vector.shape_cast %17 : vector<256xf32> to vector<256x1xf32>
    %cst_13 = arith.constant 1.600000e+01 : f32
    %19 = vector.broadcast %cst_13 : f32 to vector<256x1xf32>
    %20 = arith.divf %18, %19 : vector<256x1xf32>
    %21 = vector.broadcast %13 : vector<256x1xf32> to vector<256x16xf32>
    %22 = arith.subf %7, %21 : vector<256x16xf32>
    %cst_14 = arith.constant 9.99999974E-6 : f32
    %23 = vector.broadcast %cst_14 : f32 to vector<256x1xf32>
    %24 = arith.addf %20, %23 : vector<256x1xf32>
    %25 = math.rsqrt %24 : vector<256x1xf32>
    %26 = vector.broadcast %25 : vector<256x1xf32> to vector<256x16xf32>
    %27 = arith.mulf %22, %26 : vector<256x16xf32>
    %28 = vector.broadcast %8 : vector<1x16xf32> to vector<256x16xf32>
    %29 = arith.mulf %27, %28 : vector<256x16xf32>
    %30 = vector.broadcast %9 : vector<1x16xf32> to vector<256x16xf32>
    %31 = arith.addf %29, %30 : vector<256x16xf32>
    %c0_15 = arith.constant 0 : index
    %c0_16 = arith.constant 0 : index
    %32 = vector.load %arg6[%c0_15, %c0_16] : memref<256x16xf32, #tpu.memory_space<vmem>>, vector<256x16xf32>
    tpu.vector_store %arg6[%c0_15, %c0_16], %31 {strides = array<i32>} : memref<256x16xf32, #tpu.memory_space<vmem>>, vector<256x16xf32>,
    return
  }
  func.func @transform_0(%arg0: i32) -> (i32, i32) {
    %c0_i32 = arith.constant 0 : i32
    %c0_i32_0 = arith.constant 0 : i32
    return %arg0, %c0_i32 : i32, i32
  }
  func.func @transform_1(%arg0: i32) -> (i32, i32) {
    %c0_i32 = arith.constant 0 : i32
    %c0_i32_0 = arith.constant 0 : i32
    %c0_i32_1 = arith.constant 0 : i32
    return %c0_i32, %c0_i32_0 : i32, i32
  }
  func.func @transform_2(%arg0: i32) -> (i32, i32) {
    %c0_i32 = arith.constant 0 : i32
    %c0_i32_0 = arith.constant 0 : i32
    %c0_i32_1 = arith.constant 0 : i32
    return %c0_i32, %c0_i32_0 : i32, i32
  }
  func.func @transform_3(%arg0: i32) -> (i32, i32) {
    %c0_i32 = arith.constant 0 : i32
    %c0_i32_0 = arith.constant 0 : i32
    %c0_i32_1 = arith.constant 0 : i32
    return %c0_i32, %c0_i32_0 : i32, i32
  }
  func.func @transform_4(%arg0: i32) -> (i32, i32) {
    %c0_i32 = arith.constant 0 : i32
    %c0_i32_0 = arith.constant 0 : i32
    %c0_i32_1 = arith.constant 0 : i32
    return %c0_i32, %c0_i32_0 : i32, i32
  }
  func.func @transform_5(%arg0: i32) -> (i32, i32) {
    %c0_i32 = arith.constant 0 : i32
    %c0_i32_0 = arith.constant 0 : i32
    return %arg0, %c0_i32 : i32, i32
  }
}

module attributes {stable_mosaic.version = 11 : i64} {
  func.func @mm_ln_kernel(%arg0: i32, %arg1: memref<256x144xf32, #tpu.memory_space<vmem>>, %arg2: memref<144x8xf32, #tpu.memory_space<vmem>>, %arg3: memref<1x8xf32, #tpu.memory_space<vmem>>, %arg4: memref<1x8xf32, #tpu.memory_space<vmem>>, %arg5: memref<1x8xf32, #tpu.memory_space<vmem>>, %arg6: memref<256x8xf32, #tpu.memory_space<vmem>>) attributes {dimension_semantics = [#tpu.dimension_semantics<parallel>], iteration_bounds = array<i64: 2>, scalar_prefetch = 0 : i64, scratch_operands = 0 : i64, tpu.core_type = #tpu.core_type<tc>, window_params = [{transform_indices = @transform_0, window_bounds = array<i64: 256, 144>}, {pipeline_mode = #tpu.pipeline_mode<synchronous>, transform_indices = @transform_1, window_bounds = array<i64: 144, 8>}, {pipeline_mode = #tpu.pipeline_mode<synchronous>, transform_indices = @transform_2, window_bounds = array<i64: 1, 8>}, {pipeline_mode = #tpu.pipeline_mode<synchronous>, transform_indices = @transform_3, window_bounds = array<i64: 1, 8>}, {pipeline_mode = #tpu.pipeline_mode<synchronous>, transform_indices = @transform_4, window_bounds = array<i64: 1, 8>}, {transform_indices = @transform_5, window_bounds = array<i64: 256, 8>}]} {
    %c0 = arith.constant 0 : index
    %c0_0 = arith.constant 0 : index
    %0 = vector.load %arg1[%c0, %c0_0] : memref<256x144xf32, #tpu.memory_space<vmem>>, vector<256x144xf32>
    %c0_1 = arith.constant 0 : index
    %c0_2 = arith.constant 0 : index
    %1 = vector.load %arg2[%c0_1, %c0_2] : memref<144x8xf32, #tpu.memory_space<vmem>>, vector<144x8xf32>
    %cst = arith.constant dense<0.000000e+00> : vector<256x8xf32>
    %2 = tpu.matmul %0, %1, %cst {dimension_numbers = #tpu.dot_dimension_numbers<[1], [0], [0], [1], [0, 0, 1, 1], [], []>} : vector<256x144xf32>, vector<144x8xf32>, vector<256x8xf32> -> vector<256x8xf32>
    %c0_3 = arith.constant 0 : index
    %c0_4 = arith.constant 0 : index
    %3 = vector.load %arg3[%c0_3, %c0_4] : memref<1x8xf32, #tpu.memory_space<vmem>>, vector<1x8xf32>
    %4 = vector.broadcast %3 : vector<1x8xf32> to vector<256x8xf32>
    %5 = arith.addf %2, %4 : vector<256x8xf32>
    %cst_5 = arith.constant 0.000000e+00 : f32
    %6 = vector.broadcast %cst_5 : f32 to vector<256x8xf32>
    %7 = arith.maximumf %5, %6 : vector<256x8xf32>
    %c0_6 = arith.constant 0 : index
    %c0_7 = arith.constant 0 : index
    %8 = vector.load %arg4[%c0_6, %c0_7] : memref<1x8xf32, #tpu.memory_space<vmem>>, vector<1x8xf32>
    %c0_8 = arith.constant 0 : index
    %c0_9 = arith.constant 0 : index
    %9 = vector.load %arg5[%c0_8, %c0_9] : memref<1x8xf32, #tpu.memory_space<vmem>>, vector<1x8xf32>
    %cst_10 = arith.constant dense<0.000000e+00> : vector<256xf32>
    %10 = vector.multi_reduction <add>, %7, %cst_10 [1] : vector<256x8xf32> to vector<256xf32>
    %11 = vector.shape_cast %10 : vector<256xf32> to vector<256x1xf32>
    %cst_11 = arith.constant 8.000000e+00 : f32
    %12 = vector.broadcast %cst_11 : f32 to vector<256x1xf32>
    %13 = arith.divf %11, %12 : vector<256x1xf32>
    %14 = vector.broadcast %13 : vector<256x1xf32> to vector<256x8xf32>
    %15 = arith.subf %7, %14 : vector<256x8xf32>
    %16 = arith.mulf %15, %15 : vector<256x8xf32>
    %cst_12 = arith.constant dense<0.000000e+00> : vector<256xf32>
    %17 = vector.multi_reduction <add>, %16, %cst_12 [1] : vector<256x8xf32> to vector<256xf32>
    %18 = vector.shape_cast %17 : vector<256xf32> to vector<256x1xf32>
    %cst_13 = arith.constant 8.000000e+00 : f32
    %19 = vector.broadcast %cst_13 : f32 to vector<256x1xf32>
    %20 = arith.divf %18, %19 : vector<256x1xf32>
    %21 = vector.broadcast %13 : vector<256x1xf32> to vector<256x8xf32>
    %22 = arith.subf %7, %21 : vector<256x8xf32>
    %cst_14 = arith.constant 9.99999974E-6 : f32
    %23 = vector.broadcast %cst_14 : f32 to vector<256x1xf32>
    %24 = arith.addf %20, %23 : vector<256x1xf32>
    %25 = math.rsqrt %24 : vector<256x1xf32>
    %26 = vector.broadcast %25 : vector<256x1xf32> to vector<256x8xf32>
    %27 = arith.mulf %22, %26 : vector<256x8xf32>
    %28 = vector.broadcast %8 : vector<1x8xf32> to vector<256x8xf32>
    %29 = arith.mulf %27, %28 : vector<256x8xf32>
    %30 = vector.broadcast %9 : vector<1x8xf32> to vector<256x8xf32>
    %31 = arith.addf %29, %30 : vector<256x8xf32>
    %c0_15 = arith.constant 0 : index
    %c0_16 = arith.constant 0 : index
    %32 = vector.load %arg6[%c0_15, %c0_16] : memref<256x8xf32, #tpu.memory_space<vmem>>, vector<256x8xf32>
    tpu.vector_store %arg6[%c0_15, %c0_16], %31 {strides = array<i32>} : memref<256x8xf32, #tpu.memory_space<vmem>>, vector<256x8xf32>,
    return
  }
  func.func @transform_0(%arg0: i32) -> (i32, i32) {
    %c0_i32 = arith.constant 0 : i32
    %c0_i32_0 = arith.constant 0 : i32
    return %arg0, %c0_i32 : i32, i32
  }
  func.func @transform_1(%arg0: i32) -> (i32, i32) {
    %c0_i32 = arith.constant 0 : i32
    %c0_i32_0 = arith.constant 0 : i32
    %c0_i32_1 = arith.constant 0 : i32
    return %c0_i32, %c0_i32_0 : i32, i32
  }
  func.func @transform_2(%arg0: i32) -> (i32, i32) {
    %c0_i32 = arith.constant 0 : i32
    %c0_i32_0 = arith.constant 0 : i32
    %c0_i32_1 = arith.constant 0 : i32
    return %c0_i32, %c0_i32_0 : i32, i32
  }
  func.func @transform_3(%arg0: i32) -> (i32, i32) {
    %c0_i32 = arith.constant 0 : i32
    %c0_i32_0 = arith.constant 0 : i32
    %c0_i32_1 = arith.constant 0 : i32
    return %c0_i32, %c0_i32_0 : i32, i32
  }
  func.func @transform_4(%arg0: i32) -> (i32, i32) {
    %c0_i32 = arith.constant 0 : i32
    %c0_i32_0 = arith.constant 0 : i32
    %c0_i32_1 = arith.constant 0 : i32
    return %c0_i32, %c0_i32_0 : i32, i32
  }
  func.func @transform_5(%arg0: i32) -> (i32, i32) {
    %c0_i32 = arith.constant 0 : i32
    %c0_i32_0 = arith.constant 0 : i32
    return %arg0, %c0_i32 : i32, i32
  }
}

module attributes {stable_mosaic.version = 11 : i64} {
  func.func @mm_kernel(%arg0: i32, %arg1: memref<256x8xf32, #tpu.memory_space<vmem>>, %arg2: memref<8x3xf32, #tpu.memory_space<vmem>>, %arg3: memref<1x3xf32, #tpu.memory_space<vmem>>, %arg4: memref<256x3xf32, #tpu.memory_space<vmem>>) attributes {dimension_semantics = [#tpu.dimension_semantics<parallel>], iteration_bounds = array<i64: 2>, scalar_prefetch = 0 : i64, scratch_operands = 0 : i64, tpu.core_type = #tpu.core_type<tc>, window_params = [{transform_indices = @transform_0, window_bounds = array<i64: 256, 8>}, {pipeline_mode = #tpu.pipeline_mode<synchronous>, transform_indices = @transform_1, window_bounds = array<i64: 8, 3>}, {pipeline_mode = #tpu.pipeline_mode<synchronous>, transform_indices = @transform_2, window_bounds = array<i64: 1, 3>}, {transform_indices = @transform_3, window_bounds = array<i64: 256, 3>}]} {
    %c0 = arith.constant 0 : index
    %c0_0 = arith.constant 0 : index
    %0 = vector.load %arg1[%c0, %c0_0] : memref<256x8xf32, #tpu.memory_space<vmem>>, vector<256x8xf32>
    %c0_1 = arith.constant 0 : index
    %c0_2 = arith.constant 0 : index
    %1 = vector.load %arg2[%c0_1, %c0_2] : memref<8x3xf32, #tpu.memory_space<vmem>>, vector<8x3xf32>
    %cst = arith.constant dense<0.000000e+00> : vector<256x3xf32>
    %2 = tpu.matmul %0, %1, %cst {dimension_numbers = #tpu.dot_dimension_numbers<[1], [0], [0], [1], [0, 0, 1, 1], [], []>} : vector<256x8xf32>, vector<8x3xf32>, vector<256x3xf32> -> vector<256x3xf32>
    %c0_3 = arith.constant 0 : index
    %c0_4 = arith.constant 0 : index
    %3 = vector.load %arg3[%c0_3, %c0_4] : memref<1x3xf32, #tpu.memory_space<vmem>>, vector<1x3xf32>
    %4 = vector.broadcast %3 : vector<1x3xf32> to vector<256x3xf32>
    %5 = arith.addf %2, %4 : vector<256x3xf32>
    %c0_5 = arith.constant 0 : index
    %c0_6 = arith.constant 0 : index
    %6 = vector.load %arg4[%c0_5, %c0_6] : memref<256x3xf32, #tpu.memory_space<vmem>>, vector<256x3xf32>
    tpu.vector_store %arg4[%c0_5, %c0_6], %5 {strides = array<i32>} : memref<256x3xf32, #tpu.memory_space<vmem>>, vector<256x3xf32>,
    return
  }
  func.func @transform_0(%arg0: i32) -> (i32, i32) {
    %c0_i32 = arith.constant 0 : i32
    %c0_i32_0 = arith.constant 0 : i32
    return %arg0, %c0_i32 : i32, i32
  }
  func.func @transform_1(%arg0: i32) -> (i32, i32) {
    %c0_i32 = arith.constant 0 : i32
    %c0_i32_0 = arith.constant 0 : i32
    %c0_i32_1 = arith.constant 0 : i32
    return %c0_i32, %c0_i32_0 : i32, i32
  }
  func.func @transform_2(%arg0: i32) -> (i32, i32) {
    %c0_i32 = arith.constant 0 : i32
    %c0_i32_0 = arith.constant 0 : i32
    %c0_i32_1 = arith.constant 0 : i32
    return %c0_i32, %c0_i32_0 : i32, i32
  }
  func.func @transform_3(%arg0: i32) -> (i32, i32) {
    %c0_i32 = arith.constant 0 : i32
    %c0_i32_0 = arith.constant 0 : i32
    return %arg0, %c0_i32 : i32, i32
  }
}

module attributes {stable_mosaic.version = 11 : i64} {
  func.func @mse_sum_kernel(%arg0: i32, %arg1: memref<256x3xf32, #tpu.memory_space<vmem>>, %arg2: memref<256x3xf32, #tpu.memory_space<vmem>>, %arg3: memref<1x1xf32, #tpu.memory_space<vmem>>) attributes {dimension_semantics = [#tpu.dimension_semantics<arbitrary>], iteration_bounds = array<i64: 2>, scalar_prefetch = 0 : i64, scratch_operands = 0 : i64, tpu.core_type = #tpu.core_type<tc>, window_params = [{transform_indices = @transform_0, window_bounds = array<i64: 256, 3>}, {transform_indices = @transform_1, window_bounds = array<i64: 256, 3>}, {pipeline_mode = #tpu.pipeline_mode<synchronous>, transform_indices = @transform_2, window_bounds = array<i64: 1, 1>}]} {
    %c0_i32 = arith.constant 0 : i32
    %0 = arith.cmpi eq, %arg0, %c0_i32 : i32
    %1 = arith.extui %0 : i1 to i32
    %c0_i32_0 = arith.constant 0 : i32
    %2 = arith.cmpi ne, %1, %c0_i32_0 : i32
    scf.if %2 {
      %cst_8 = arith.constant 0.000000e+00 : f32
      %15 = vector.broadcast %cst_8 : f32 to vector<1x1xf32>
      %c0_9 = arith.constant 0 : index
      %c0_10 = arith.constant 0 : index
      %16 = vector.load %arg3[%c0_9, %c0_10] : memref<1x1xf32, #tpu.memory_space<vmem>>, vector<1x1xf32>
      tpu.vector_store %arg3[%c0_9, %c0_10], %15 {strides = array<i32>} : memref<1x1xf32, #tpu.memory_space<vmem>>, vector<1x1xf32>,
    } else {
    }
    %c0 = arith.constant 0 : index
    %c0_1 = arith.constant 0 : index
    %3 = vector.load %arg1[%c0, %c0_1] : memref<256x3xf32, #tpu.memory_space<vmem>>, vector<256x3xf32>
    %c0_2 = arith.constant 0 : index
    %c0_3 = arith.constant 0 : index
    %4 = vector.load %arg2[%c0_2, %c0_3] : memref<256x3xf32, #tpu.memory_space<vmem>>, vector<256x3xf32>
    %5 = arith.subf %3, %4 : vector<256x3xf32>
    %c0_4 = arith.constant 0 : index
    %c0_5 = arith.constant 0 : index
    %6 = vector.load %arg3[%c0_4, %c0_5] : memref<1x1xf32, #tpu.memory_space<vmem>>, vector<1x1xf32>
    %7 = arith.mulf %5, %5 : vector<256x3xf32>
    %8 = vector.shape_cast %7 : vector<256x3xf32> to vector<1x256x3xf32>
    %cst = arith.constant dense<0.000000e+00> : vector<1xf32>
    %9 = vector.multi_reduction <add>, %8, %cst [1, 2] : vector<1x256x3xf32> to vector<1xf32>
    %10 = vector.shape_cast %9 : vector<1xf32> to vector<1x1x1xf32>
    %11 = vector.extract %10[0, 0, 0] : f32 from vector<1x1x1xf32>
    %12 = vector.broadcast %11 : f32 to vector<1x1xf32>
    %13 = arith.addf %6, %12 : vector<1x1xf32>
    %c0_6 = arith.constant 0 : index
    %c0_7 = arith.constant 0 : index
    %14 = vector.load %arg3[%c0_6, %c0_7] : memref<1x1xf32, #tpu.memory_space<vmem>>, vector<1x1xf32>
    tpu.vector_store %arg3[%c0_6, %c0_7], %13 {strides = array<i32>} : memref<1x1xf32, #tpu.memory_space<vmem>>, vector<1x1xf32>,
    return
  }
  func.func @transform_0(%arg0: i32) -> (i32, i32) {
    %c0_i32 = arith.constant 0 : i32
    %c0_i32_0 = arith.constant 0 : i32
    return %arg0, %c0_i32 : i32, i32
  }
  func.func @transform_1(%arg0: i32) -> (i32, i32) {
    %c0_i32 = arith.constant 0 : i32
    %c0_i32_0 = arith.constant 0 : i32
    return %arg0, %c0_i32 : i32, i32
  }
  func.func @transform_2(%arg0: i32) -> (i32, i32) {
    %c0_i32 = arith.constant 0 : i32
    %c0_i32_0 = arith.constant 0 : i32
    %c0_i32_1 = arith.constant 0 : i32
    return %c0_i32, %c0_i32_0 : i32, i32
  }
}

</mosaic_0001>

<llo_original>
// kernel: ae_paired_forward.26
$region0: #{ae_paired_forward.26}
  #allocation0 [shape = 'u32[]', space=smem, size = 0x4, offset = 0x4, fixed_abs, tag = 'smem constant byte address 0x4 - core index']
  #allocation1 [shape = 'u32[144,128]{1,0:T(1,128)}', space=vmem, size = 0x12000, scoped, tag = 'internal scratch']
  %s0 = inlined_call_operand.vmem [shape: f32[512,3], index: 0, kind: input, shape index: {}]
  %s1 = inlined_call_operand.vmem [shape: f32[3,16], index: 1, kind: input, shape index: {}]
  %s2 = inlined_call_operand.vmem [shape: f32[1,16], index: 2, kind: input, shape index: {}]
  %s3 = inlined_call_operand.vmem [shape: f32[1,16], index: 3, kind: input, shape index: {}]
  %s4 = inlined_call_operand.vmem [shape: f32[1,16], index: 4, kind: input, shape index: {}]
  %s5 = inlined_call_operand.vmem [shape: f32[512,16], index: 5, kind: output, shape index: {}]
  %s6 = sld [smem:[#allocation0]]
  $region53: #{ae_paired_forward.26} parent=0
    _
  %s8 = ssub.s32 1, %s6
  %s9 = scalar_select 0, %s8, %s6
  loop: start=0, step=1, limit=4
  $region2: #{ae_paired_forward.26} parent=0 // loop_pre_header
    _
  $region3: #{ae_paired_forward.26} parent=0 // loop_header
    %s11 = sphi 0, %s15
    %p12 = scmp.ge.s32.totalorder %s11, 4
    %s21 = sphi 0, %s23
    %s24 = sphi 0, %s21
    %s25 = sphi 0, %s24
    %s41 = sphi 0, %s25
    %s45 = sphi 0, %s45
    %s47 = sphi 0, %s45
    %s48 = sphi 0, %s47
    %s62 = sphi 0, %s48
    %s66 = sphi 0, %s66
    %s68 = sphi 0, %s66
    %s69 = sphi 0, %s68
    %s83 = sphi 0, %s69
    %s87 = sphi 0, %s87
    %s89 = sphi 0, %s87
    %s90 = sphi 0, %s89
    %s104 = sphi 0, %s90
    %s108 = sphi 0, %s108
    %s110 = sphi 0, %s108
    %s111 = sphi 0, %s110
    %s125 = sphi 0, %s111
    %s131 = sphi 0, %s133
    %s134 = sphi 0, %s131
    %s135 = sphi 0, %s134
    %s151 = sphi 0, %s135
  $region4: #{ae_paired_forward.26} parent=0 // loop_header_branch
    %14 = sbr.rel (%p12) target = $region8
  $region5: #{ae_paired_forward.26} parent=0 // loop_body
    %s16 = ssub.s32 %s11, 1
    %s17 = ssub.s32 %s11, 2
    %s18 = sadd.s32 %s11, 1
    %s19 = ssub.s32 %s11, %s18
    %p20 = scmp.eq.s32.totalorder %s19, 0
    %s22 = sadd.s32 %s21, 1
    %s23 = scalar_select %p20, %s21, %s22
    %p26 = pneg %p20
    %p27 = scmp.eq.s32.totalorder %s11, 1
    %p28 = por %p26, %p27
    %p29 = scmp.ne.s32.totalorder %s21, %s24
    %p30 = scmp.eq.s32.totalorder %s11, 0
    %p31 = por %p29, %p30
    %p32 = scmp.ne.s32.totalorder %s21, %s24
    %p33 = scmp.eq.s32.totalorder %s16, 1
    %p34 = por %p32, %p33
    %p35 = scmp.ne.s32.totalorder %s24, %s25
    %p36 = scmp.eq.s32.totalorder %s16, 0
    %p37 = por %p35, %p36
    %p38 = scmp.ne.s32.totalorder %s24, %s25
    %p39 = scmp.eq.s32.totalorder %s17, 1
    %p40 = por %p38, %p39
    %p42 = scmp.ne.s32.totalorder %s25, %s41
    %p43 = scmp.eq.s32.totalorder %s17, 0
    %p44 = por %p42, %p43
    %s46 = sadd.s32 %s45, 1
    %p49 = scmp.eq.s32.totalorder %s11, 1
    %p50 = scmp.ne.s32.totalorder %s45, %s47
    %p51 = scmp.eq.s32.totalorder %s11, 0
    %p52 = por %p50, %p51
    %p53 = scmp.ne.s32.totalorder %s45, %s47
    %p54 = scmp.eq.s32.totalorder %s16, 1
    %p55 = por %p53, %p54
    %p56 = scmp.ne.s32.totalorder %s47, %s48
    %p57 = scmp.eq.s32.totalorder %s16, 0
    %p58 = por %p56, %p57
    %p59 = scmp.ne.s32.totalorder %s47, %s48
    %p60 = scmp.eq.s32.totalorder %s17, 1
    %p61 = por %p59, %p60
    %p63 = scmp.ne.s32.totalorder %s48, %s62
    %p64 = scmp.eq.s32.totalorder %s17, 0
    %p65 = por %p63, %p64
    %s67 = sadd.s32 %s66, 1
    %p70 = scmp.eq.s32.totalorder %s11, 1
    %p71 = scmp.ne.s32.totalorder %s66, %s68
    %p72 = scmp.eq.s32.totalorder %s11, 0
    %p73 = por %p71, %p72
    %p74 = scmp.ne.s32.totalorder %s66, %s68
    %p75 = scmp.eq.s32.totalorder %s16, 1
    %p76 = por %p74, %p75
    %p77 = scmp.ne.s32.totalorder %s68, %s69
    %p78 = scmp.eq.s32.totalorder %s16, 0
    %p79 = por %p77, %p78
    %p80 = scmp.ne.s32.totalorder %s68, %s69
    %p81 = scmp.eq.s32.totalorder %s17, 1
    %p82 = por %p80, %p81
    %p84 = scmp.ne.s32.totalorder %s69, %s83
    %p85 = scmp.eq.s32.totalorder %s17, 0
    %p86 = por %p84, %p85
    %s88 = sadd.s32 %s87, 1
    %p91 = scmp.eq.s32.totalorder %s11, 1
    %p92 = scmp.ne.s32.totalorder %s87, %s89
    %p93 = scmp.eq.s32.totalorder %s11, 0
    %p94 = por %p92, %p93
    %p95 = scmp.ne.s32.totalorder %s87, %s89
    %p96 = scmp.eq.s32.totalorder %s16, 1
    %p97 = por %p95, %p96
    %p98 = scmp.ne.s32.totalorder %s89, %s90
    %p99 = scmp.eq.s32.totalorder %s16, 0
    %p100 = por %p98, %p99
    %p101 = scmp.ne.s32.totalorder %s89, %s90
    %p102 = scmp.eq.s32.totalorder %s17, 1
    %p103 = por %p101, %p102
    %p105 = scmp.ne.s32.totalorder %s90, %s104
    %p106 = scmp.eq.s32.totalorder %s17, 0
    %p107 = por %p105, %p106
    %s109 = sadd.s32 %s108, 1
    %p112 = scmp.eq.s32.totalorder %s11, 1
    %p113 = scmp.ne.s32.totalorder %s108, %s110
    %p114 = scmp.eq.s32.totalorder %s11, 0
    %p115 = por %p113, %p114
    %p116 = scmp.ne.s32.totalorder %s108, %s110
    %p117 = scmp.eq.s32.totalorder %s16, 1
    %p118 = por %p116, %p117
    %p119 = scmp.ne.s32.totalorder %s110, %s111
    %p120 = scmp.eq.s32.totalorder %s16, 0
    %p121 = por %p119, %p120
    %p122 = scmp.ne.s32.totalorder %s110, %s111
    %p123 = scmp.eq.s32.totalorder %s17, 1
    %p124 = por %p122, %p123
    %p126 = scmp.ne.s32.totalorder %s111, %s125
    %p127 = scmp.eq.s32.totalorder %s17, 0
    %p128 = por %p126, %p127
    %s129 = ssub.s32 %s11, %s18
    %p130 = scmp.eq.s32.totalorder %s129, 0
    %s132 = sadd.s32 %s131, 1
    %s133 = scalar_select %p130, %s131, %s132
    %p136 = pneg %p130
    %p137 = scmp.eq.s32.totalorder %s11, 1
    %p138 = por %p136, %p137
    %p139 = scmp.ne.s32.totalorder %s131, %s134
    %p140 = scmp.eq.s32.totalorder %s11, 0
    %p141 = por %p139, %p140
    %p142 = scmp.ne.s32.totalorder %s131, %s134
    %p143 = scmp.eq.s32.totalorder %s16, 1
    %p144 = por %p142, %p143
    %p145 = scmp.ne.s32.totalorder %s134, %s135
    %p146 = scmp.eq.s32.totalorder %s16, 0
    %p147 = por %p145, %p146
    %p148 = scmp.ne.s32.totalorder %s134, %s135
    %p149 = scmp.eq.s32.totalorder %s17, 1
    %p150 = por %p148, %p149
    %p152 = scmp.ne.s32.totalorder %s135, %s151
    %p153 = scmp.eq.s32.totalorder %s17, 0
    %p154 = por %p152, %p153
    %p155 = scmp.le.s32.totalorder 1, %s11
    %p156 = scmp.lt.s32.totalorder %s11, 3
    %p157 = pnand %p155, %p156
    %p158 = pneg %p157
    // Predicated region
    $region9: #{ae_paired_forward.26} parent=5 // pred_check
      _
    $region10: #{ae_paired_forward.26} parent=5 // pred_check_branch
      %160 = sbr.rel (%p157) target = $region12
    $region11: #{ae_paired_forward.26} parent=5 // pred_region
      %s161 = ssub.s32 %s11, 1
      // Predicated region
      $region13: #{ae_paired_forward.26} parent=11 // pred_check
        %p162 = pneg %p58
      $region14: #{ae_paired_forward.26} parent=11 // pred_check_branch
        %164 = sbr.rel (%p162) target = $region16
      $region15: #{ae_paired_forward.26} parent=11 // pred_region
        _
      $region16: #{ae_paired_forward.26} parent=11 // pred_fallthru
        _
      // Predicated region
      $region17: #{ae_paired_forward.26} parent=11 // pred_check
        %p165 = pneg %p79
      $region18: #{ae_paired_forward.26} parent=11 // pred_check_branch
        %167 = sbr.rel (%p165) target = $region20
      $region19: #{ae_paired_forward.26} parent=11 // pred_region
        _
      $region20: #{ae_paired_forward.26} parent=11 // pred_fallthru
        _
      // Predicated region
      $region21: #{ae_paired_forward.26} parent=11 // pred_check
        %p168 = pneg %p100
      $region22: #{ae_paired_forward.26} parent=11 // pred_check_branch
        %170 = sbr.rel (%p168) target = $region24
      $region23: #{ae_paired_forward.26} parent=11 // pred_region
        _
      $region24: #{ae_paired_forward.26} parent=11 // pred_fallthru
        _
      // Predicated region
      $region25: #{ae_paired_forward.26} parent=11 // pred_check
        %p171 = pneg %p121
      $region26: #{ae_paired_forward.26} parent=11 // pred_check_branch
        %173 = sbr.rel (%p171) target = $region28
      $region27: #{ae_paired_forward.26} parent=11 // pred_region
        _
      $region28: #{ae_paired_forward.26} parent=11 // pred_fallthru
        _
    $region12: #{ae_paired_forward.26} parent=5 // pred_fallthru
      _
    %p174 = scmp.lt.s32.totalorder %s11, 2
    // Predicated region
    $region29: #{ae_paired_forward.26} parent=5 // pred_check
      %p175 = pneg %p174
    $region30: #{ae_paired_forward.26} parent=5 // pred_check_branch
      %177 = sbr.rel (%p175) target = $region32
    $region31: #{ae_paired_forward.26} parent=5 // pred_region
      // Predicated region
      $region33: #{ae_paired_forward.26} parent=31 // pred_check
        %p178 = pneg %p31
      $region34: #{ae_paired_forward.26} parent=31 // pred_check_branch
        %180 = sbr.rel (%p178) target = $region36
      $region35: #{ae_paired_forward.26} parent=31 // pred_region
        %s181 = smul.u32 32, %s11
        %p182 = scmp.lt.s32.totalorder %s181, 63
        %s183 = scalar_select %p182, %s181, 63
        %s184 = smul.addr %s183, 8
        %s185 = scalar_lea.vmem %s0, %s184
        %s186 = smul.u32 32, %s11
      $region36: #{ae_paired_forward.26} parent=31 // pred_fallthru
        _
    $region32: #{ae_paired_forward.26} parent=5 // pred_fallthru
      _
    %p187 = scmp.le.s32.totalorder 1, %s11
    %p188 = scmp.lt.s32.totalorder %s11, 3
    %p189 = pnand %p187, %p188
    %p190 = pneg %p189
    // Predicated region
    $region37: #{ae_paired_forward.26} parent=5 // pred_check
      _
    $region38: #{ae_paired_forward.26} parent=5 // pred_check_branch
      %192 = sbr.rel (%p189) target = $region40
    $region39: #{ae_paired_forward.26} parent=5 // pred_region
      %s193 = ssub.s32 %s11, 1
      %s194 = smul.u32 32, %s16
      %p195 = scmp.lt.s32.totalorder %s194, 63
      %s196 = scalar_select %p195, %s194, 63
      %s197 = smul.addr %s196, 8
      %s198 = scalar_lea.vmem %s0, %s197
      %p199 = pneg %p37
      %p200 = pneg %p34
      %p201 = pneg %p58
      %p202 = pneg %p55
      %p203 = pneg %p79
      %p204 = pneg %p76
      %p205 = pneg %p100
      %p206 = pneg %p97
      %p207 = pneg %p121
      %p208 = pneg %p118
      %p209 = pneg %p147
      %p210 = pneg %p144
      %s211 = smul.u32 32, %s16
      %p212 = scmp.lt.s32.totalorder %s211, 63
      %s213 = scalar_select %p212, %s211, 63
      %s214 = smul.addr %s213, 8
      %s215 = scalar_lea.vmem %s5, %s214
      %s216 = smul.u32 32, %s16
      %p217 = scmp.lt.s32.totalorder %s216, 63
      %s218 = scalar_select %p217, %s216, 63
      %s219 = smul.addr %s218, 8
      %s220 = scalar_lea.vmem %s0, %s219
      %s221 = smul.u32 32, %s16
      %s222 = smul.u32 32, %s16
      %p223 = scmp.lt.s32.totalorder %s222, 63
      %s224 = scalar_select %p223, %s222, 63
      %s225 = smul.addr %s224, 8
      %s226 = scalar_lea.vmem %s5, %s225
      %s227 = smul.u32 32, %s16
      %v228 = vld [vmem:[%s220] sm:$0xff]
      %v229 = vld [vmem:[%s220 + $0x8] sm:$0xff]
      %v230 = vld [vmem:[%s220 + $0x10] sm:$0xff]
      %v231 = vld [vmem:[%s220 + $0x18] sm:$0xff]
      %v232 = vld [vmem:[%s220 + $0x20] sm:$0xff]
      %v233 = vld [vmem:[%s220 + $0x28] sm:$0xff]
      %v234 = vld [vmem:[%s220 + $0x30] sm:$0xff]
      %v235 = vld [vmem:[%s220 + $0x38] sm:$0xff]
      %v236 = vld [vmem:[%s220 + $0x40] sm:$0xff]
      %v237 = vld [vmem:[%s220 + $0x48] sm:$0xff]
      %v238 = vld [vmem:[%s220 + $0x50] sm:$0xff]
      %v239 = vld [vmem:[%s220 + $0x58] sm:$0xff]
      %v240 = vld [vmem:[%s220 + $0x60] sm:$0xff]
      %v241 = vld [vmem:[%s220 + $0x68] sm:$0xff]
      %v242 = vld [vmem:[%s220 + $0x70] sm:$0xff]
      %v243 = vld [vmem:[%s220 + $0x78] sm:$0xff]
      %v244 = vld [vmem:[%s220 + $0x80] sm:$0xff]
      %v245 = vld [vmem:[%s220 + $0x88] sm:$0xff]
      %v246 = vld [vmem:[%s220 + $0x90] sm:$0xff]
      %v247 = vld [vmem:[%s220 + $0x98] sm:$0xff]
      %v248 = vld [vmem:[%s220 + $0xa0] sm:$0xff]
      %v249 = vld [vmem:[%s220 + $0xa8] sm:$0xff]
      %v250 = vld [vmem:[%s220 + $0xb0] sm:$0xff]
      %v251 = vld [vmem:[%s220 + $0xb8] sm:$0xff]
      %v252 = vld [vmem:[%s220 + $0xc0] sm:$0xff]
      %v253 = vld [vmem:[%s220 + $0xc8] sm:$0xff]
      %v254 = vld [vmem:[%s220 + $0xd0] sm:$0xff]
      %v255 = vld [vmem:[%s220 + $0xd8] sm:$0xff]
      %v256 = vld [vmem:[%s220 + $0xe0] sm:$0xff]
      %v257 = vld [vmem:[%s220 + $0xe8] sm:$0xff]
      %v258 = vld [vmem:[%s220 + $0xf0] sm:$0xff]
      %v259 = vld [vmem:[%s220 + $0xf8] sm:$0xff]
      %v260 = vld [vmem:[%s1] sm:$0x7]
      %v261 = vld [vmem:[%s2] sm:$0x1]
      %v263 = vlaneseq
      %v264 = vshrl.u32 %v263, 7
      %v265 = vsub.s32 0, %v264
      %v266 = vrot.slane %v261, %v265
      %vm268 = vcmask 23552
      %v270 = vsel %vm268, %v228, 0
      %v273 = vsel %vm268, %v229, 0
      %v276 = vsel %vm268, %v230, 0
      %v279 = vsel %vm268, %v231, 0
      %v282 = vsel %vm268, %v232, 0
      %v285 = vsel %vm268, %v233, 0
      %v288 = vsel %vm268, %v234, 0
      %v291 = vsel %vm268, %v235, 0
      %v294 = vsel %vm268, %v236, 0
      %v297 = vsel %vm268, %v237, 0
      %v300 = vsel %vm268, %v238, 0
      %v303 = vsel %vm268, %v239, 0
      %v306 = vsel %vm268, %v240, 0
      %v309 = vsel %vm268, %v241, 0
      %v312 = vsel %vm268, %v242, 0
      %v315 = vsel %vm268, %v243, 0
      %v318 = vsel %vm268, %v244, 0
      %v321 = vsel %vm268, %v245, 0
      %v324 = vsel %vm268, %v246, 0
      %v327 = vsel %vm268, %v247, 0
      %v330 = vsel %vm268, %v248, 0
      %v333 = vsel %vm268, %v249, 0
      %v336 = vsel %vm268, %v250, 0
      %v339 = vsel %vm268, %v251, 0
      %v342 = vsel %vm268, %v252, 0
      %v345 = vsel %vm268, %v253, 0
      %v348 = vsel %vm268, %v254, 0
      %v351 = vsel %vm268, %v255, 0
      %v354 = vsel %vm268, %v256, 0
      %v357 = vsel %vm268, %v257, 0
      %v360 = vsel %vm268, %v258, 0
      %v363 = vsel %vm268, %v259, 0
      %vm365 = vcmask 1042432
      %v367 = vsel %vm365, %v260, 0
      %369 = vmatprep.subr.mxu0 0.0
      %370 = vmatpush1.msra.mxu0 %v367
      %371 = vmatprep.subr.mxu0 0.0
      %372 = vmatpush1.msra.mxu0 0.0
      %373 = vmatprep.subr.mxu0 0.0
      %374 = vmatpush1.msra.mxu0 0.0
      %375 = vmatprep.subr.mxu0 0.0
      %376 = vmatpush1.msra.mxu0 0.0
      %377 = vmatprep.subr.mxu0 0.0
      %378 = vmatpush1.msra.mxu0 0.0
      %379 = vmatprep.subr.mxu0 0.0
      %380 = vmatpush1.msra.mxu0 0.0
      %381 = vmatprep.subr.mxu0 0.0
      %382 = vmatpush1.msra.mxu0 0.0
      %383 = vmatprep.subr.mxu0 0.0
      %384 = vmatpush1.msra.mxu0 0.0
      %385 = vmatprep.subr.mxu0 0.0
      %386 = vmatpush1.msra.mxu0 0.0
      %387 = vmatprep.subr.mxu0 0.0
      %388 = vmatpush1.msra.mxu0 0.0
      %389 = vmatprep.subr.mxu0 0.0
      %390 = vmatpush1.msra.mxu0 0.0
      %391 = vmatprep.subr.mxu0 0.0
      %392 = vmatpush1.msra.mxu0 0.0
      %393 = vmatprep.subr.mxu0 0.0
      %394 = vmatpush1.msra.mxu0 0.0
      %395 = vmatprep.subr.mxu0 0.0
      %396 = vmatpush1.msra.mxu0 0.0
      %397 = vmatprep.subr.mxu0 0.0
      %398 = vmatpush1.msra.mxu0 0.0
      %399 = vmatprep.subr.mxu0 0.0
      %400 = vmatpush1.msra.mxu0 0.0
      %401 = vmatprep.subr.mxu0 0.0
      %402 = vmatpush1.msra.mxu0 0.0
      %403 = vmatprep.subr.mxu0 0.0
      %404 = vmatpush1.msra.mxu0 0.0
      %405 = vmatprep.subr.mxu0 0.0
      %406 = vmatpush1.msra.mxu0 0.0
      %407 = vmatprep.subr.mxu0 0.0
      %408 = vmatpush1.msra.mxu0 0.0
      %409 = vmatprep.subr.mxu0 0.0
      %410 = vmatpush1.msra.mxu0 0.0
      %411 = vmatprep.subr.mxu0 0.0
      %412 = vmatpush1.msra.mxu0 0.0
      %413 = vmatprep.subr.mxu0 0.0
      %414 = vmatpush1.msra.mxu0 0.0
      %415 = vmatprep.subr.mxu0 0.0
      %416 = vmatpush1.msra.mxu0 0.0
      %417 = vmatprep.subr.mxu0 0.0
      %418 = vmatpush1.msra.mxu0 0.0
      %419 = vmatprep.subr.mxu0 0.0
      %420 = vmatpush1.msra.mxu0 0.0
      %421 = vmatprep.subr.mxu0 0.0
      %422 = vmatpush1.msra.mxu0 0.0
      %423 = vmatprep.subr.mxu0 0.0
      %424 = vmatpush1.msra.mxu0 0.0
      %425 = vmatprep.subr.mxu0 0.0
      %426 = vmatpush1.msra.mxu0 0.0
      %427 = vmatprep.subr.mxu0 0.0
      %428 = vmatpush1.msra.mxu0 0.0
      %429 = vmatprep.subr.mxu0 0.0
      %430 = vmatpush1.msra.mxu0 0.0
      %431 = vmatprep.subr.mxu0 0.0
      %432 = vmatpush1.msra.mxu0 0.0
      %433 = vmatprep.mubr.f32.mxu0 0.0
      %434 = vmatmul.mubr.f32.gmra.mrb[0].mxu0 %v270
      %v435 = vpop.f32.mrb[0].mxu0
      %v436 = vadd.f32 %v266, %v435
      %v437 = vpop.f32.mrb[0].mxu0
      %438 = vmatprep.mubr.f32.mxu0 0.0
      %439 = vmatmul.mubr.f32.gmra.mrb[0].mxu0 %v273
      %v440 = vpop.f32.mrb[0].mxu0
      %v441 = vadd.f32 %v266, %v440
      %v442 = vpop.f32.mrb[0].mxu0
      %443 = vmatprep.mubr.f32.mxu0 0.0
      %444 = vmatmul.mubr.f32.gmra.mrb[0].mxu0 %v276
      %v445 = vpop.f32.mrb[0].mxu0
      %v446 = vadd.f32 %v266, %v445
      %v447 = vpop.f32.mrb[0].mxu0
      %448 = vmatprep.mubr.f32.mxu0 0.0
      %449 = vmatmul.mubr.f32.gmra.mrb[0].mxu0 %v279
      %v450 = vpop.f32.mrb[0].mxu0
      %v451 = vadd.f32 %v266, %v450
      %v452 = vpop.f32.mrb[0].mxu0
      %453 = vmatprep.mubr.f32.mxu0 0.0
      %454 = vmatmul.mubr.f32.gmra.mrb[0].mxu0 %v282
      %v455 = vpop.f32.mrb[0].mxu0
      %v456 = vadd.f32 %v266, %v455
      %v457 = vpop.f32.mrb[0].mxu0
      %458 = vmatprep.mubr.f32.mxu0 0.0
      %459 = vmatmul.mubr.f32.gmra.mrb[0].mxu0 %v285
      %v460 = vpop.f32.mrb[0].mxu0
      %v461 = vadd.f32 %v266, %v460
      %v462 = vpop.f32.mrb[0].mxu0
      %463 = vmatprep.mubr.f32.mxu0 0.0
      %464 = vmatmul.mubr.f32.gmra.mrb[0].mxu0 %v288
      %v465 = vpop.f32.mrb[0].mxu0
      %v466 = vadd.f32 %v266, %v465
      %v467 = vpop.f32.mrb[0].mxu0
      %468 = vmatprep.mubr.f32.mxu0 0.0
      %469 = vmatmul.mubr.f32.gmra.mrb[0].mxu0 %v291
      %v470 = vpop.f32.mrb[0].mxu0
      %v471 = vadd.f32 %v266, %v470
      %v472 = vpop.f32.mrb[0].mxu0
      %473 = vmatprep.mubr.f32.mxu0 0.0
      %474 = vmatmul.mubr.f32.gmra.mrb[0].mxu0 %v294
      %v475 = vpop.f32.mrb[0].mxu0
      %v476 = vadd.f32 %v266, %v475
      %v477 = vpop.f32.mrb[0].mxu0
      %478 = vmatprep.mubr.f32.mxu0 0.0
      %479 = vmatmul.mubr.f32.gmra.mrb[0].mxu0 %v297
      %v480 = vpop.f32.mrb[0].mxu0
      %v481 = vadd.f32 %v266, %v480
      %v482 = vpop.f32.mrb[0].mxu0
      %483 = vmatprep.mubr.f32.mxu0 0.0
      %484 = vmatmul.mubr.f32.gmra.mrb[0].mxu0 %v300
      %v485 = vpop.f32.mrb[0].mxu0
      %v486 = vadd.f32 %v266, %v485
      %v487 = vpop.f32.mrb[0].mxu0
      %488 = vmatprep.mubr.f32.mxu0 0.0
      %489 = vmatmul.mubr.f32.gmra.mrb[0].mxu0 %v303
      %v490 = vpop.f32.mrb[0].mxu0
      %v491 = vadd.f32 %v266, %v490
      %v492 = vpop.f32.mrb[0].mxu0
      %493 = vmatprep.mubr.f32.mxu0 0.0
      %494 = vmatmul.mubr.f32.gmra.mrb[0].mxu0 %v306
      %v495 = vpop.f32.mrb[0].mxu0
      %v496 = vadd.f32 %v266, %v495
      %v497 = vpop.f32.mrb[0].mxu0
      %498 = vmatprep.mubr.f32.mxu0 0.0
      %499 = vmatmul.mubr.f32.gmra.mrb[0].mxu0 %v309
      %v500 = vpop.f32.mrb[0].mxu0
      %v501 = vadd.f32 %v266, %v500
      %v502 = vpop.f32.mrb[0].mxu0
      %503 = vmatprep.mubr.f32.mxu0 0.0
      %504 = vmatmul.mubr.f32.gmra.mrb[0].mxu0 %v312
      %v505 = vpop.f32.mrb[0].mxu0
      %v506 = vadd.f32 %v266, %v505
      %v507 = vpop.f32.mrb[0].mxu0
      %508 = vmatprep.mubr.f32.mxu0 0.0
      %509 = vmatmul.mubr.f32.gmra.mrb[0].mxu0 %v315
      %v510 = vpop.f32.mrb[0].mxu0
      %v511 = vadd.f32 %v266, %v510
      %v512 = vpop.f32.mrb[0].mxu0
      %513 = vmatprep.mubr.f32.mxu0 0.0
      %514 = vmatmul.mubr.f32.gmra.mrb[0].mxu0 %v318
      %v515 = vpop.f32.mrb[0].mxu0
      %v516 = vadd.f32 %v266, %v515
      %v517 = vpop.f32.mrb[0].mxu0
      %518 = vmatprep.mubr.f32.mxu0 0.0
      %519 = vmatmul.mubr.f32.gmra.mrb[0].mxu0 %v321
      %v520 = vpop.f32.mrb[0].mxu0
      %v521 = vadd.f32 %v266, %v520
      %v522 = vpop.f32.mrb[0].mxu0
      %523 = vmatprep.mubr.f32.mxu0 0.0
      %524 = vmatmul.mubr.f32.gmra.mrb[0].mxu0 %v324
      %v525 = vpop.f32.mrb[0].mxu0
      %v526 = vadd.f32 %v266, %v525
      %v527 = vpop.f32.mrb[0].mxu0
      %528 = vmatprep.mubr.f32.mxu0 0.0
      %529 = vmatmul.mubr.f32.gmra.mrb[0].mxu0 %v327
      %v530 = vpop.f32.mrb[0].mxu0
      %v531 = vadd.f32 %v266, %v530
      %v532 = vpop.f32.mrb[0].mxu0
      %533 = vmatprep.mubr.f32.mxu0 0.0
      %534 = vmatmul.mubr.f32.gmra.mrb[0].mxu0 %v330
      %v535 = vpop.f32.mrb[0].mxu0
      %v536 = vadd.f32 %v266, %v535
      %v537 = vpop.f32.mrb[0].mxu0
      %538 = vmatprep.mubr.f32.mxu0 0.0
      %539 = vmatmul.mubr.f32.gmra.mrb[0].mxu0 %v333
      %v540 = vpop.f32.mrb[0].mxu0
      %v541 = vadd.f32 %v266, %v540
      %v542 = vpop.f32.mrb[0].mxu0
      %543 = vmatprep.mubr.f32.mxu0 0.0
      %544 = vmatmul.mubr.f32.gmra.mrb[0].mxu0 %v336
      %v545 = vpop.f32.mrb[0].mxu0
      %v546 = vadd.f32 %v266, %v545
      %v547 = vpop.f32.mrb[0].mxu0
      %548 = vmatprep.mubr.f32.mxu0 0.0
      %549 = vmatmul.mubr.f32.gmra.mrb[0].mxu0 %v339
      %v550 = vpop.f32.mrb[0].mxu0
      %v551 = vadd.f32 %v266, %v550
      %v552 = vpop.f32.mrb[0].mxu0
      %553 = vmatprep.mubr.f32.mxu0 0.0
      %554 = vmatmul.mubr.f32.gmra.mrb[0].mxu0 %v342
      %v555 = vpop.f32.mrb[0].mxu0
      %v556 = vadd.f32 %v266, %v555
      %v557 = vpop.f32.mrb[0].mxu0
      %558 = vmatprep.mubr.f32.mxu0 0.0
      %559 = vmatmul.mubr.f32.gmra.mrb[0].mxu0 %v345
      %v560 = vpop.f32.mrb[0].mxu0
      %v561 = vadd.f32 %v266, %v560
      %v562 = vpop.f32.mrb[0].mxu0
      %563 = vmatprep.mubr.f32.mxu0 0.0
      %564 = vmatmul.mubr.f32.gmra.mrb[0].mxu0 %v348
      %v565 = vpop.f32.mrb[0].mxu0
      %v566 = vadd.f32 %v266, %v565
      %v567 = vpop.f32.mrb[0].mxu0
      %568 = vmatprep.mubr.f32.mxu0 0.0
      %569 = vmatmul.mubr.f32.gmra.mrb[0].mxu0 %v351
      %v570 = vpop.f32.mrb[0].mxu0
      %v571 = vadd.f32 %v266, %v570
      %v572 = vpop.f32.mrb[0].mxu0
      %573 = vmatprep.mubr.f32.mxu0 0.0
      %574 = vmatmul.mubr.f32.gmra.mrb[0].mxu0 %v354
      %v575 = vpop.f32.mrb[0].mxu0
      %v576 = vadd.f32 %v266, %v575
      %v577 = vpop.f32.mrb[0].mxu0
      %578 = vmatprep.mubr.f32.mxu0 0.0
      %579 = vmatmul.mubr.f32.gmra.mrb[0].mxu0 %v357
      %v580 = vpop.f32.mrb[0].mxu0
      %v581 = vadd.f32 %v266, %v580
      %v582 = vpop.f32.mrb[0].mxu0
      %583 = vmatprep.mubr.f32.mxu0 0.0
      %584 = vmatmul.mubr.f32.gmra.mrb[0].mxu0 %v360
      %v585 = vpop.f32.mrb[0].mxu0
      %v586 = vadd.f32 %v266, %v585
      %v587 = vpop.f32.mrb[0].mxu0
      %588 = vmatprep.mubr.f32.mxu0 0.0
      %589 = vmatmul.mubr.f32.gmra.mrb[0].mxu0 %v363
      %v590 = vpop.f32.mrb[0].mxu0
      %v591 = vadd.f32 %v266, %v590
      %v592 = vpop.f32.mrb[0].mxu0
      %593 = vdwg.mxu0
      %v594 = vld [vmem:[%s3] sm:$0x1]
      %v595 = vld [vmem:[%s4] sm:$0x1]
      %vm596 = vcmask 130048
      %v597 = vsel %vm596, %v436, 0.0
      %598 = vadd.xlane.f32.xlu0 %v597
      %v599 = vpop.xlane.xlu0 %598
      %v600 = vsel %vm596, %v441, 0.0
      %601 = vadd.xlane.f32.xlu0 %v600
      %v602 = vpop.xlane.xlu0 %601
      %v603 = vsel %vm596, %v446, 0.0
      %604 = vadd.xlane.f32.xlu0 %v603
      %v605 = vpop.xlane.xlu0 %604
      %v606 = vsel %vm596, %v451, 0.0
      %607 = vadd.xlane.f32.xlu0 %v606
      %v608 = vpop.xlane.xlu0 %607
      %v609 = vsel %vm596, %v456, 0.0
      %610 = vadd.xlane.f32.xlu0 %v609
      %v611 = vpop.xlane.xlu0 %610
      %v612 = vsel %vm596, %v461, 0.0
      %613 = vadd.xlane.f32.xlu0 %v612
      %v614 = vpop.xlane.xlu0 %613
      %v615 = vsel %vm596, %v466, 0.0
      %616 = vadd.xlane.f32.xlu0 %v615
      %v617 = vpop.xlane.xlu0 %616
      %v618 = vsel %vm596, %v471, 0.0
      %619 = vadd.xlane.f32.xlu0 %v618
      %v620 = vpop.xlane.xlu0 %619
      %v621 = vsel %vm596, %v476, 0.0
      %622 = vadd.xlane.f32.xlu0 %v621
      %v623 = vpop.xlane.xlu0 %622
      %v624 = vsel %vm596, %v481, 0.0
      %625 = vadd.xlane.f32.xlu0 %v624
      %v626 = vpop.xlane.xlu0 %625
      %v627 = vsel %vm596, %v486, 0.0
      %628 = vadd.xlane.f32.xlu0 %v627
      %v629 = vpop.xlane.xlu0 %628
      %v630 = vsel %vm596, %v491, 0.0
      %631 = vadd.xlane.f32.xlu0 %v630
      %v632 = vpop.xlane.xlu0 %631
      %v633 = vsel %vm596, %v496, 0.0
      %634 = vadd.xlane.f32.xlu0 %v633
      %v635 = vpop.xlane.xlu0 %634
      %v636 = vsel %vm596, %v501, 0.0
      %637 = vadd.xlane.f32.xlu0 %v636
      %v638 = vpop.xlane.xlu0 %637
      %v639 = vsel %vm596, %v506, 0.0
      %640 = vadd.xlane.f32.xlu0 %v639
      %v641 = vpop.xlane.xlu0 %640
      %v642 = vsel %vm596, %v511, 0.0
      %643 = vadd.xlane.f32.xlu0 %v642
      %v644 = vpop.xlane.xlu0 %643
      %v645 = vsel %vm596, %v516, 0.0
      %646 = vadd.xlane.f32.xlu0 %v645
      %v647 = vpop.xlane.xlu0 %646
      %v648 = vsel %vm596, %v521, 0.0
      %649 = vadd.xlane.f32.xlu0 %v648
      %v650 = vpop.xlane.xlu0 %649
      %v651 = vsel %vm596, %v526, 0.0
      %652 = vadd.xlane.f32.xlu0 %v651
      %v653 = vpop.xlane.xlu0 %652
      %v654 = vsel %vm596, %v531, 0.0
      %655 = vadd.xlane.f32.xlu0 %v654
      %v656 = vpop.xlane.xlu0 %655
      %v657 = vsel %vm596, %v536, 0.0
      %658 = vadd.xlane.f32.xlu0 %v657
      %v659 = vpop.xlane.xlu0 %658
      %v660 = vsel %vm596, %v541, 0.0
      %661 = vadd.xlane.f32.xlu0 %v660
      %v662 = vpop.xlane.xlu0 %661
      %v663 = vsel %vm596, %v546, 0.0
      %664 = vadd.xlane.f32.xlu0 %v663
      %v665 = vpop.xlane.xlu0 %664
      %v666 = vsel %vm596, %v551, 0.0
      %667 = vadd.xlane.f32.xlu0 %v666
      %v668 = vpop.xlane.xlu0 %667
      %v669 = vsel %vm596, %v556, 0.0
      %670 = vadd.xlane.f32.xlu0 %v669
      %v671 = vpop.xlane.xlu0 %670
      %v672 = vsel %vm596, %v561, 0.0
      %673 = vadd.xlane.f32.xlu0 %v672
      %v674 = vpop.xlane.xlu0 %673
      %v675 = vsel %vm596, %v566, 0.0
      %676 = vadd.xlane.f32.xlu0 %v675
      %v677 = vpop.xlane.xlu0 %676
      %v678 = vsel %vm596, %v571, 0.0
      %679 = vadd.xlane.f32.xlu0 %v678
      %v680 = vpop.xlane.xlu0 %679
      %v681 = vsel %vm596, %v576, 0.0
      %682 = vadd.xlane.f32.xlu0 %v681
      %v683 = vpop.xlane.xlu0 %682
      %v684 = vsel %vm596, %v581, 0.0
      %685 = vadd.xlane.f32.xlu0 %v684
      %v686 = vpop.xlane.xlu0 %685
      %v687 = vsel %vm596, %v586, 0.0
      %688 = vadd.xlane.f32.xlu0 %v687
      %v689 = vpop.xlane.xlu0 %688
      %v690 = vsel %vm596, %v591, 0.0
      %691 = vadd.xlane.f32.xlu0 %v690
      %v692 = vpop.xlane.xlu0 %691
      %v693 = vrcp.pop 16.0
      %v694 = vmul.f32 %v599, %v693
      %v695 = vmul.f32 %v602, %v693
      %v696 = vmul.f32 %v605, %v693
      %v697 = vmul.f32 %v608, %v693
      %v698 = vmul.f32 %v611, %v693
      %v699 = vmul.f32 %v614, %v693
      %v700 = vmul.f32 %v617, %v693
      %v701 = vmul.f32 %v620, %v693
      %v702 = vmul.f32 %v623, %v693
      %v703 = vmul.f32 %v626, %v693
      %v704 = vmul.f32 %v629, %v693
      %v705 = vmul.f32 %v632, %v693
      %v706 = vmul.f32 %v635, %v693
      %v707 = vmul.f32 %v638, %v693
      %v708 = vmul.f32 %v641, %v693
      %v709 = vmul.f32 %v644, %v693
      %v710 = vmul.f32 %v647, %v693
      %v711 = vmul.f32 %v650, %v693
      %v712 = vmul.f32 %v653, %v693
      %v713 = vmul.f32 %v656, %v693
      %v714 = vmul.f32 %v659, %v693
      %v715 = vmul.f32 %v662, %v693
      %v716 = vmul.f32 %v665, %v693
      %v717 = vmul.f32 %v668, %v693
      %v718 = vmul.f32 %v671, %v693
      %v719 = vmul.f32 %v674, %v693
      %v720 = vmul.f32 %v677, %v693
      %v721 = vmul.f32 %v680, %v693
      %v722 = vmul.f32 %v683, %v693
      %v723 = vmul.f32 %v686, %v693
      %v724 = vmul.f32 %v689, %v693
      %v725 = vmul.f32 %v692, %v693
      %v726 = vsub.f32 %v436, %v694
      %v727 = vsub.f32 %v441, %v695
      %v728 = vsub.f32 %v446, %v696
      %v729 = vsub.f32 %v451, %v697
      %v730 = vsub.f32 %v456, %v698
      %v731 = vsub.f32 %v461, %v699
      %v732 = vsub.f32 %v466, %v700
      %v733 = vsub.f32 %v471, %v701
      %v734 = vsub.f32 %v476, %v702
      %v735 = vsub.f32 %v481, %v703
      %v736 = vsub.f32 %v486, %v704
      %v737 = vsub.f32 %v491, %v705
      %v738 = vsub.f32 %v496, %v706
      %v739 = vsub.f32 %v501, %v707
      %v740 = vsub.f32 %v506, %v708
      %v741 = vsub.f32 %v511, %v709
      %v742 = vsub.f32 %v516, %v710
      %v743 = vsub.f32 %v521, %v711
      %v744 = vsub.f32 %v526, %v712
      %v745 = vsub.f32 %v531, %v713
      %v746 = vsub.f32 %v536, %v714
      %v747 = vsub.f32 %v541, %v715
      %v748 = vsub.f32 %v546, %v716
      %v749 = vsub.f32 %v551, %v717
      %v750 = vsub.f32 %v556, %v718
      %v751 = vsub.f32 %v561, %v719
      %v752 = vsub.f32 %v566, %v720
      %v753 = vsub.f32 %v571, %v721
      %v754 = vsub.f32 %v576, %v722
      %v755 = vsub.f32 %v581, %v723
      %v756 = vsub.f32 %v586, %v724
      %v757 = vsub.f32 %v591, %v725
      %v758 = vmul.f32 %v726, %v726
      %v759 = vmul.f32 %v727, %v727
      %v760 = vmul.f32 %v728, %v728
      %v761 = vmul.f32 %v729, %v729
      %v762 = vmul.f32 %v730, %v730
      %v763 = vmul.f32 %v731, %v731
      %v764 = vmul.f32 %v732, %v732
      %v765 = vmul.f32 %v733, %v733
      %v766 = vmul.f32 %v734, %v734
      %v767 = vmul.f32 %v735, %v735
      %v768 = vmul.f32 %v736, %v736
      %v769 = vmul.f32 %v737, %v737
      %v770 = vmul.f32 %v738, %v738
      %v771 = vmul.f32 %v739, %v739
      %v772 = vmul.f32 %v740, %v740
      %v773 = vmul.f32 %v741, %v741
      %v774 = vmul.f32 %v742, %v742
      %v775 = vmul.f32 %v743, %v743
      %v776 = vmul.f32 %v744, %v744
      %v777 = vmul.f32 %v745, %v745
      %v778 = vmul.f32 %v746, %v746
      %v779 = vmul.f32 %v747, %v747
      %v780 = vmul.f32 %v748, %v748
      %v781 = vmul.f32 %v749, %v749
      %v782 = vmul.f32 %v750, %v750
      %v783 = vmul.f32 %v751, %v751
      %v784 = vmul.f32 %v752, %v752
      %v785 = vmul.f32 %v753, %v753
      %v786 = vmul.f32 %v754, %v754
      %v787 = vmul.f32 %v755, %v755
      %v788 = vmul.f32 %v756, %v756
      %v789 = vmul.f32 %v757, %v757
      %v790 = vsel %vm596, %v758, 0.0
      %791 = vadd.xlane.f32.xlu0 %v790
      %v792 = vpop.xlane.xlu0 %791
      %v793 = vsel %vm596, %v759, 0.0
      %794 = vadd.xlane.f32.xlu0 %v793
      %v795 = vpop.xlane.xlu0 %794
      %v796 = vsel %vm596, %v760, 0.0
      %797 = vadd.xlane.f32.xlu0 %v796
      %v798 = vpop.xlane.xlu0 %797
      %v799 = vsel %vm596, %v761, 0.0
      %800 = vadd.xlane.f32.xlu0 %v799
      %v801 = vpop.xlane.xlu0 %800
      %v802 = vsel %vm596, %v762, 0.0
      %803 = vadd.xlane.f32.xlu0 %v802
      %v804 = vpop.xlane.xlu0 %803
      %v805 = vsel %vm596, %v763, 0.0
      %806 = vadd.xlane.f32.xlu0 %v805
      %v807 = vpop.xlane.xlu0 %806
      %v808 = vsel %vm596, %v764, 0.0
      %809 = vadd.xlane.f32.xlu0 %v808
      %v810 = vpop.xlane.xlu0 %809
      %v811 = vsel %vm596, %v765, 0.0
      %812 = vadd.xlane.f32.xlu0 %v811
      %v813 = vpop.xlane.xlu0 %812
      %v814 = vsel %vm596, %v766, 0.0
      %815 = vadd.xlane.f32.xlu0 %v814
      %v816 = vpop.xlane.xlu0 %815
      %v817 = vsel %vm596, %v767, 0.0
      %818 = vadd.xlane.f32.xlu0 %v817
      %v819 = vpop.xlane.xlu0 %818
      %v820 = vsel %vm596, %v768, 0.0
      %821 = vadd.xlane.f32.xlu0 %v820
      %v822 = vpop.xlane.xlu0 %821
      %v823 = vsel %vm596, %v769, 0.0
      %824 = vadd.xlane.f32.xlu0 %v823
      %v825 = vpop.xlane.xlu0 %824
      %v826 = vsel %vm596, %v770, 0.0
      %827 = vadd.xlane.f32.xlu0 %v826
      %v828 = vpop.xlane.xlu0 %827
      %v829 = vsel %vm596, %v771, 0.0
      %830 = vadd.xlane.f32.xlu0 %v829
      %v831 = vpop.xlane.xlu0 %830
      %v832 = vsel %vm596, %v772, 0.0
      %833 = vadd.xlane.f32.xlu0 %v832
      %v834 = vpop.xlane.xlu0 %833
      %v835 = vsel %vm596, %v773, 0.0
      %836 = vadd.xlane.f32.xlu0 %v835
      %v837 = vpop.xlane.xlu0 %836
      %v838 = vsel %vm596, %v774, 0.0
      %839 = vadd.xlane.f32.xlu0 %v838
      %v840 = vpop.xlane.xlu0 %839
      %v841 = vsel %vm596, %v775, 0.0
      %842 = vadd.xlane.f32.xlu0 %v841
      %v843 = vpop.xlane.xlu0 %842
      %v844 = vsel %vm596, %v776, 0.0
      %845 = vadd.xlane.f32.xlu0 %v844
      %v846 = vpop.xlane.xlu0 %845
      %v847 = vsel %vm596, %v777, 0.0
      %848 = vadd.xlane.f32.xlu0 %v847
      %v849 = vpop.xlane.xlu0 %848
      %v850 = vsel %vm596, %v778, 0.0
      %851 = vadd.xlane.f32.xlu0 %v850
      %v852 = vpop.xlane.xlu0 %851
      %v853 = vsel %vm596, %v779, 0.0
      %854 = vadd.xlane.f32.xlu0 %v853
      %v855 = vpop.xlane.xlu0 %854
      %v856 = vsel %vm596, %v780, 0.0
      %857 = vadd.xlane.f32.xlu0 %v856
      %v858 = vpop.xlane.xlu0 %857
      %v859 = vsel %vm596, %v781, 0.0
      %860 = vadd.xlane.f32.xlu0 %v859
      %v861 = vpop.xlane.xlu0 %860
      %v862 = vsel %vm596, %v782, 0.0
      %863 = vadd.xlane.f32.xlu0 %v862
      %v864 = vpop.xlane.xlu0 %863
      %v865 = vsel %vm596, %v783, 0.0
      %866 = vadd.xlane.f32.xlu0 %v865
      %v867 = vpop.xlane.xlu0 %866
      %v868 = vsel %vm596, %v784, 0.0
      %869 = vadd.xlane.f32.xlu0 %v868
      %v870 = vpop.xlane.xlu0 %869
      %v871 = vsel %vm596, %v785, 0.0
      %872 = vadd.xlane.f32.xlu0 %v871
      %v873 = vpop.xlane.xlu0 %872
      %v874 = vsel %vm596, %v786, 0.0
      %875 = vadd.xlane.f32.xlu0 %v874
      %v876 = vpop.xlane.xlu0 %875
      %v877 = vsel %vm596, %v787, 0.0
      %878 = vadd.xlane.f32.xlu0 %v877
      %v879 = vpop.xlane.xlu0 %878
      %v880 = vsel %vm596, %v788, 0.0
      %881 = vadd.xlane.f32.xlu0 %v880
      %v882 = vpop.xlane.xlu0 %881
      %v883 = vsel %vm596, %v789, 0.0
      %884 = vadd.xlane.f32.xlu0 %v883
      %v885 = vpop.xlane.xlu0 %884
      %v886 = vmul.f32 %v792, %v693
      %v887 = vmul.f32 %v795, %v693
      %v888 = vmul.f32 %v798, %v693
      %v889 = vmul.f32 %v801, %v693
      %v890 = vmul.f32 %v804, %v693
      %v891 = vmul.f32 %v807, %v693
      %v892 = vmul.f32 %v810, %v693
      %v893 = vmul.f32 %v813, %v693
      %v894 = vmul.f32 %v816, %v693
      %v895 = vmul.f32 %v819, %v693
      %v896 = vmul.f32 %v822, %v693
      %v897 = vmul.f32 %v825, %v693
      %v898 = vmul.f32 %v828, %v693
      %v899 = vmul.f32 %v831, %v693
      %v900 = vmul.f32 %v834, %v693
      %v901 = vmul.f32 %v837, %v693
      %v902 = vmul.f32 %v840, %v693
      %v903 = vmul.f32 %v843, %v693
      %v904 = vmul.f32 %v846, %v693
      %v905 = vmul.f32 %v849, %v693
      %v906 = vmul.f32 %v852, %v693
      %v907 = vmul.f32 %v855, %v693
      %v908 = vmul.f32 %v858, %v693
      %v909 = vmul.f32 %v861, %v693
      %v910 = vmul.f32 %v864, %v693
      %v911 = vmul.f32 %v867, %v693
      %v912 = vmul.f32 %v870, %v693
      %v913 = vmul.f32 %v873, %v693
      %v914 = vmul.f32 %v876, %v693
      %v915 = vmul.f32 %v879, %v693
      %v916 = vmul.f32 %v882, %v693
      %v917 = vmul.f32 %v885, %v693
      %v918 = vadd.f32 %v886, 1e-05
      %v919 = vadd.f32 %v887, 1e-05
      %v920 = vadd.f32 %v888, 1e-05
      %v921 = vadd.f32 %v889, 1e-05
      %v922 = vadd.f32 %v890, 1e-05
      %v923 = vadd.f32 %v891, 1e-05
      %v924 = vadd.f32 %v892, 1e-05
      %v925 = vadd.f32 %v893, 1e-05
      %v926 = vadd.f32 %v894, 1e-05
      %v927 = vadd.f32 %v895, 1e-05
      %v928 = vadd.f32 %v896, 1e-05
      %v929 = vadd.f32 %v897, 1e-05
      %v930 = vadd.f32 %v898, 1e-05
      %v931 = vadd.f32 %v899, 1e-05
      %v932 = vadd.f32 %v900, 1e-05
      %v933 = vadd.f32 %v901, 1e-05
      %v934 = vadd.f32 %v902, 1e-05
      %v935 = vadd.f32 %v903, 1e-05
      %v936 = vadd.f32 %v904, 1e-05
      %v937 = vadd.f32 %v905, 1e-05
      %v938 = vadd.f32 %v906, 1e-05
      %v939 = vadd.f32 %v907, 1e-05
      %v940 = vadd.f32 %v908, 1e-05
      %v941 = vadd.f32 %v909, 1e-05
      %v942 = vadd.f32 %v910, 1e-05
      %v943 = vadd.f32 %v911, 1e-05
      %v944 = vadd.f32 %v912, 1e-05
      %v945 = vadd.f32 %v913, 1e-05
      %v946 = vadd.f32 %v914, 1e-05
      %v947 = vadd.f32 %v915, 1e-05
      %v948 = vadd.f32 %v916, 1e-05
      %v949 = vadd.f32 %v917, 1e-05
      %v950 = vrsqrt.pop %v918
      %v951 = vrsqrt.pop %v919
      %v952 = vrsqrt.pop %v920
      %v953 = vrsqrt.pop %v921
      %v954 = vrsqrt.pop %v922
      %v955 = vrsqrt.pop %v923
      %v956 = vrsqrt.pop %v924
      %v957 = vrsqrt.pop %v925
      %v958 = vrsqrt.pop %v926
      %v959 = vrsqrt.pop %v927
      %v960 = vrsqrt.pop %v928
      %v961 = vrsqrt.pop %v929
      %v962 = vrsqrt.pop %v930
      %v963 = vrsqrt.pop %v931
      %v964 = vrsqrt.pop %v932
      %v965 = vrsqrt.pop %v933
      %v966 = vrsqrt.pop %v934
      %v967 = vrsqrt.pop %v935
      %v968 = vrsqrt.pop %v936
      %v969 = vrsqrt.pop %v937
      %v970 = vrsqrt.pop %v938
      %v971 = vrsqrt.pop %v939
      %v972 = vrsqrt.pop %v940
      %v973 = vrsqrt.pop %v941
      %v974 = vrsqrt.pop %v942
      %v975 = vrsqrt.pop %v943
      %v976 = vrsqrt.pop %v944
      %v977 = vrsqrt.pop %v945
      %v978 = vrsqrt.pop %v946
      %v979 = vrsqrt.pop %v947
      %v980 = vrsqrt.pop %v948
      %v981 = vrsqrt.pop %v949
      %v982 = vmul.f32 %v726, %v950
      %v983 = vmul.f32 %v727, %v951
      %v984 = vmul.f32 %v728, %v952
      %v985 = vmul.f32 %v729, %v953
      %v986 = vmul.f32 %v730, %v954
      %v987 = vmul.f32 %v731, %v955
      %v988 = vmul.f32 %v732, %v956
      %v989 = vmul.f32 %v733, %v957
      %v990 = vmul.f32 %v734, %v958
      %v991 = vmul.f32 %v735, %v959
      %v992 = vmul.f32 %v736, %v960
      %v993 = vmul.f32 %v737, %v961
      %v994 = vmul.f32 %v738, %v962
      %v995 = vmul.f32 %v739, %v963
      %v996 = vmul.f32 %v740, %v964
      %v997 = vmul.f32 %v741, %v965
      %v998 = vmul.f32 %v742, %v966
      %v999 = vmul.f32 %v743, %v967
      %v1000 = vmul.f32 %v744, %v968
      %v1001 = vmul.f32 %v745, %v969
      %v1002 = vmul.f32 %v746, %v970
      %v1003 = vmul.f32 %v747, %v971
      %v1004 = vmul.f32 %v748, %v972
      %v1005 = vmul.f32 %v749, %v973
      %v1006 = vmul.f32 %v750, %v974
      %v1007 = vmul.f32 %v751, %v975
      %v1008 = vmul.f32 %v752, %v976
      %v1009 = vmul.f32 %v753, %v977
      %v1010 = vmul.f32 %v754, %v978
      %v1011 = vmul.f32 %v755, %v979
      %v1012 = vmul.f32 %v756, %v980
      %v1013 = vmul.f32 %v757, %v981
      %v1015 = vlaneseq
      %v1016 = vshrl.u32 %v1015, 7
      %v1017 = vsub.s32 0, %v1016
      %v1018 = vrot.slane %v594, %v1017
      %v1020 = vmul.f32 %v982, %v1018
      %v1021 = vmul.f32 %v983, %v1018
      %v1022 = vmul.f32 %v984, %v1018
      %v1023 = vmul.f32 %v985, %v1018
      %v1024 = vmul.f32 %v986, %v1018
      %v1025 = vmul.f32 %v987, %v1018
      %v1026 = vmul.f32 %v988, %v1018
      %v1027 = vmul.f32 %v989, %v1018
      %v1028 = vmul.f32 %v990, %v1018
      %v1029 = vmul.f32 %v991, %v1018
      %v1030 = vmul.f32 %v992, %v1018
      %v1031 = vmul.f32 %v993, %v1018
      %v1032 = vmul.f32 %v994, %v1018
      %v1033 = vmul.f32 %v995, %v1018
      %v1034 = vmul.f32 %v996, %v1018
      %v1035 = vmul.f32 %v997, %v1018
      %v1036 = vmul.f32 %v998, %v1018
      %v1037 = vmul.f32 %v999, %v1018
      %v1038 = vmul.f32 %v1000, %v1018
      %v1039 = vmul.f32 %v1001, %v1018
      %v1040 = vmul.f32 %v1002, %v1018
      %v1041 = vmul.f32 %v1003, %v1018
      %v1042 = vmul.f32 %v1004, %v1018
      %v1043 = vmul.f32 %v1005, %v1018
      %v1044 = vmul.f32 %v1006, %v1018
      %v1045 = vmul.f32 %v1007, %v1018
      %v1046 = vmul.f32 %v1008, %v1018
      %v1047 = vmul.f32 %v1009, %v1018
      %v1048 = vmul.f32 %v1010, %v1018
      %v1049 = vmul.f32 %v1011, %v1018
      %v1050 = vmul.f32 %v1012, %v1018
      %v1051 = vmul.f32 %v1013, %v1018
      %v1053 = vlaneseq
      %v1054 = vshrl.u32 %v1053, 7
      %v1055 = vsub.s32 0, %v1054
      %v1056 = vrot.slane %v595, %v1055
      %v1058 = vadd.f32 %v1020, %v1056
      %v1059 = vadd.f32 %v1021, %v1056
      %v1060 = vadd.f32 %v1022, %v1056
      %v1061 = vadd.f32 %v1023, %v1056
      %v1062 = vadd.f32 %v1024, %v1056
      %v1063 = vadd.f32 %v1025, %v1056
      %v1064 = vadd.f32 %v1026, %v1056
      %v1065 = vadd.f32 %v1027, %v1056
      %v1066 = vadd.f32 %v1028, %v1056
      %v1067 = vadd.f32 %v1029, %v1056
      %v1068 = vadd.f32 %v1030, %v1056
      %v1069 = vadd.f32 %v1031, %v1056
      %v1070 = vadd.f32 %v1032, %v1056
      %v1071 = vadd.f32 %v1033, %v1056
      %v1072 = vadd.f32 %v1034, %v1056
      %v1073 = vadd.f32 %v1035, %v1056
      %v1074 = vadd.f32 %v1036, %v1056
      %v1075 = vadd.f32 %v1037, %v1056
      %v1076 = vadd.f32 %v1038, %v1056
      %v1077 = vadd.f32 %v1039, %v1056
      %v1078 = vadd.f32 %v1040, %v1056
      %v1079 = vadd.f32 %v1041, %v1056
      %v1080 = vadd.f32 %v1042, %v1056
      %v1081 = vadd.f32 %v1043, %v1056
      %v1082 = vadd.f32 %v1044, %v1056
      %v1083 = vadd.f32 %v1045, %v1056
      %v1084 = vadd.f32 %v1046, %v1056
      %v1085 = vadd.f32 %v1047, %v1056
      %v1086 = vadd.f32 %v1048, %v1056
      %v1087 = vadd.f32 %v1049, %v1056
      %v1088 = vadd.f32 %v1050, %v1056
      %v1089 = vadd.f32 %v1051, %v1056
      %1090 = vst.msk [vmem:[%s226] sm:$0xff] %vm596, %v1058
      %1091 = vst.msk [vmem:[%s226 + $0x8] sm:$0xff] %vm596, %v1059
      %1092 = vst.msk [vmem:[%s226 + $0x10] sm:$0xff] %vm596, %v1060
      %1093 = vst.msk [vmem:[%s226 + $0x18] sm:$0xff] %vm596, %v1061
      %1094 = vst.msk [vmem:[%s226 + $0x20] sm:$0xff] %vm596, %v1062
      %1095 = vst.msk [vmem:[%s226 + $0x28] sm:$0xff] %vm596, %v1063
      %1096 = vst.msk [vmem:[%s226 + $0x30] sm:$0xff] %vm596, %v1064
      %1097 = vst.msk [vmem:[%s226 + $0x38] sm:$0xff] %vm596, %v1065
      %1098 = vst.msk [vmem:[%s226 + $0x40] sm:$0xff] %vm596, %v1066
      %1099 = vst.msk [vmem:[%s226 + $0x48] sm:$0xff] %vm596, %v1067
      %1100 = vst.msk [vmem:[%s226 + $0x50] sm:$0xff] %vm596, %v1068
      %1101 = vst.msk [vmem:[%s226 + $0x58] sm:$0xff] %vm596, %v1069
      %1102 = vst.msk [vmem:[%s226 + $0x60] sm:$0xff] %vm596, %v1070
      %1103 = vst.msk [vmem:[%s226 + $0x68] sm:$0xff] %vm596, %v1071
      %1104 = vst.msk [vmem:[%s226 + $0x70] sm:$0xff] %vm596, %v1072
      %1105 = vst.msk [vmem:[%s226 + $0x78] sm:$0xff] %vm596, %v1073
      %1106 = vst.msk [vmem:[%s226 + $0x80] sm:$0xff] %vm596, %v1074
      %1107 = vst.msk [vmem:[%s226 + $0x88] sm:$0xff] %vm596, %v1075
      %1108 = vst.msk [vmem:[%s226 + $0x90] sm:$0xff] %vm596, %v1076
      %1109 = vst.msk [vmem:[%s226 + $0x98] sm:$0xff] %vm596, %v1077
      %1110 = vst.msk [vmem:[%s226 + $0xa0] sm:$0xff] %vm596, %v1078
      %1111 = vst.msk [vmem:[%s226 + $0xa8] sm:$0xff] %vm596, %v1079
      %1112 = vst.msk [vmem:[%s226 + $0xb0] sm:$0xff] %vm596, %v1080
      %1113 = vst.msk [vmem:[%s226 + $0xb8] sm:$0xff] %vm596, %v1081
      %1114 = vst.msk [vmem:[%s226 + $0xc0] sm:$0xff] %vm596, %v1082
      %1115 = vst.msk [vmem:[%s226 + $0xc8] sm:$0xff] %vm596, %v1083
      %1116 = vst.msk [vmem:[%s226 + $0xd0] sm:$0xff] %vm596, %v1084
      %1117 = vst.msk [vmem:[%s226 + $0xd8] sm:$0xff] %vm596, %v1085
      %1118 = vst.msk [vmem:[%s226 + $0xe0] sm:$0xff] %vm596, %v1086
      %1119 = vst.msk [vmem:[%s226 + $0xe8] sm:$0xff] %vm596, %v1087
      %1120 = vst.msk [vmem:[%s226 + $0xf0] sm:$0xff] %vm596, %v1088
      %1121 = vst.msk [vmem:[%s226 + $0xf8] sm:$0xff] %vm596, %v1089
      %s1122 = smul.u32 32, %s16
      %p1123 = scmp.lt.s32.totalorder %s1122, 63
      %s1124 = scalar_select %p1123, %s1122, 63
      %s1125 = smul.addr %s1124, 8
      %s1126 = scalar_lea.vmem %s5, %s1125
      // Predicated region
      $region41: #{ae_paired_forward.26} parent=39 // pred_check
        %p1127 = pneg %p144
      $region42: #{ae_paired_forward.26} parent=39 // pred_check_branch
        %1129 = sbr.rel (%p1127) target = $region44
      $region43: #{ae_paired_forward.26} parent=39 // pred_region
        %s1130 = smul.u32 32, %s16
      $region44: #{ae_paired_forward.26} parent=39 // pred_fallthru
        _
    $region40: #{ae_paired_forward.26} parent=5 // pred_fallthru
      _
    %p1131 = scmp.le.s32.totalorder 2, %s11
    // Predicated region
    $region45: #{ae_paired_forward.26} parent=5 // pred_check
      %p1132 = pneg %p1131
    $region46: #{ae_paired_forward.26} parent=5 // pred_check_branch
      %1134 = sbr.rel (%p1132) target = $region48
    $region47: #{ae_paired_forward.26} parent=5 // pred_region
      %s1135 = ssub.s32 %s11, 2
      // Predicated region
      $region49: #{ae_paired_forward.26} parent=47 // pred_check
        %p1136 = pneg %p150
      $region50: #{ae_paired_forward.26} parent=47 // pred_check_branch
        %1138 = sbr.rel (%p1136) target = $region52
      $region51: #{ae_paired_forward.26} parent=47 // pred_region
        %s1139 = smul.u32 32, %s17
        %p1140 = scmp.lt.s32.totalorder %s1139, 63
        %s1141 = scalar_select %p1140, %s1139, 63
        %s1142 = smul.addr %s1141, 8
        %s1143 = scalar_lea.vmem %s5, %s1142
      $region52: #{ae_paired_forward.26} parent=47 // pred_fallthru
        _
    $region48: #{ae_paired_forward.26} parent=5 // pred_fallthru
      _
  $region6: #{ae_paired_forward.26} parent=0 // loop_footer
    %s15 = sadd.s32 1, %s11
  $region7: #{ae_paired_forward.26} parent=0 // loop_footer_branch
    %10 = sbr.rel target = $region3
  $region8: #{ae_paired_forward.26} parent=0 // loop_exit
    _

// kernel: ae_paired_forward.30
$region0: #{ae_paired_forward.30}
  #allocation0 [shape = 'u32[]', space=smem, size = 0x4, offset = 0x4, fixed_abs, tag = 'smem constant byte address 0x4 - core index']
  #allocation1 [shape = 'u32[144,128]{1,0:T(1,128)}', space=vmem, size = 0x12000, scoped, tag = 'internal scratch']
  %s0 = inlined_call_operand.vmem [shape: f32[512,16], index: 0, kind: input, shape index: {}]
  %s1 = inlined_call_operand.vmem [shape: f32[512,16], index: 1, kind: input, shape index: {}]
  %s2 = inlined_call_operand.vmem [shape: f32[16,16], index: 2, kind: input, shape index: {}]
  %s3 = inlined_call_operand.vmem [shape: f32[16,16], index: 3, kind: input, shape index: {}]
  %s4 = inlined_call_operand.vmem [shape: f32[1,16], index: 4, kind: input, shape index: {}]
  %s5 = inlined_call_operand.vmem [shape: f32[512,16], index: 5, kind: output, shape index: {}]
  %s6 = sld [smem:[#allocation0]]
  $region53: #{ae_paired_forward.30} parent=0
    _
  %s8 = ssub.s32 1, %s6
  %s9 = scalar_select 0, %s8, %s6
  loop: start=0, step=1, limit=4
  $region2: #{ae_paired_forward.30} parent=0 // loop_pre_header
    _
  $region3: #{ae_paired_forward.30} parent=0 // loop_header
    %s11 = sphi 0, %s15
    %p12 = scmp.ge.s32.totalorder %s11, 4
    %s21 = sphi 0, %s23
    %s24 = sphi 0, %s21
    %s25 = sphi 0, %s24
    %s41 = sphi 0, %s25
    %s47 = sphi 0, %s49
    %s50 = sphi 0, %s47
    %s51 = sphi 0, %s50
    %s67 = sphi 0, %s51
    %s71 = sphi 0, %s71
    %s73 = sphi 0, %s71
    %s74 = sphi 0, %s73
    %s88 = sphi 0, %s74
    %s92 = sphi 0, %s92
    %s94 = sphi 0, %s92
    %s95 = sphi 0, %s94
    %s109 = sphi 0, %s95
    %s113 = sphi 0, %s113
    %s115 = sphi 0, %s113
    %s116 = sphi 0, %s115
    %s130 = sphi 0, %s116
    %s136 = sphi 0, %s138
    %s139 = sphi 0, %s136
    %s140 = sphi 0, %s139
    %s156 = sphi 0, %s140
  $region4: #{ae_paired_forward.30} parent=0 // loop_header_branch
    %14 = sbr.rel (%p12) target = $region8
  $region5: #{ae_paired_forward.30} parent=0 // loop_body
    %s16 = ssub.s32 %s11, 1
    %s17 = ssub.s32 %s11, 2
    %s18 = sadd.s32 %s11, 1
    %s19 = ssub.s32 %s11, %s18
    %p20 = scmp.eq.s32.totalorder %s19, 0
    %s22 = sadd.s32 %s21, 1
    %s23 = scalar_select %p20, %s21, %s22
    %p26 = pneg %p20
    %p27 = scmp.eq.s32.totalorder %s11, 1
    %p28 = por %p26, %p27
    %p29 = scmp.ne.s32.totalorder %s21, %s24
    %p30 = scmp.eq.s32.totalorder %s11, 0
    %p31 = por %p29, %p30
    %p32 = scmp.ne.s32.totalorder %s21, %s24
    %p33 = scmp.eq.s32.totalorder %s16, 1
    %p34 = por %p32, %p33
    %p35 = scmp.ne.s32.totalorder %s24, %s25
    %p36 = scmp.eq.s32.totalorder %s16, 0
    %p37 = por %p35, %p36
    %p38 = scmp.ne.s32.totalorder %s24, %s25
    %p39 = scmp.eq.s32.totalorder %s17, 1
    %p40 = por %p38, %p39
    %p42 = scmp.ne.s32.totalorder %s25, %s41
    %p43 = scmp.eq.s32.totalorder %s17, 0
    %p44 = por %p42, %p43
    %s45 = ssub.s32 %s11, %s18
    %p46 = scmp.eq.s32.totalorder %s45, 0
    %s48 = sadd.s32 %s47, 1
    %s49 = scalar_select %p46, %s47, %s48
    %p52 = pneg %p46
    %p53 = scmp.eq.s32.totalorder %s11, 1
    %p54 = por %p52, %p53
    %p55 = scmp.ne.s32.totalorder %s47, %s50
    %p56 = scmp.eq.s32.totalorder %s11, 0
    %p57 = por %p55, %p56
    %p58 = scmp.ne.s32.totalorder %s47, %s50
    %p59 = scmp.eq.s32.totalorder %s16, 1
    %p60 = por %p58, %p59
    %p61 = scmp.ne.s32.totalorder %s50, %s51
    %p62 = scmp.eq.s32.totalorder %s16, 0
    %p63 = por %p61, %p62
    %p64 = scmp.ne.s32.totalorder %s50, %s51
    %p65 = scmp.eq.s32.totalorder %s17, 1
    %p66 = por %p64, %p65
    %p68 = scmp.ne.s32.totalorder %s51, %s67
    %p69 = scmp.eq.s32.totalorder %s17, 0
    %p70 = por %p68, %p69
    %s72 = sadd.s32 %s71, 1
    %p75 = scmp.eq.s32.totalorder %s11, 1
    %p76 = scmp.ne.s32.totalorder %s71, %s73
    %p77 = scmp.eq.s32.totalorder %s11, 0
    %p78 = por %p76, %p77
    %p79 = scmp.ne.s32.totalorder %s71, %s73
    %p80 = scmp.eq.s32.totalorder %s16, 1
    %p81 = por %p79, %p80
    %p82 = scmp.ne.s32.totalorder %s73, %s74
    %p83 = scmp.eq.s32.totalorder %s16, 0
    %p84 = por %p82, %p83
    %p85 = scmp.ne.s32.totalorder %s73, %s74
    %p86 = scmp.eq.s32.totalorder %s17, 1
    %p87 = por %p85, %p86
    %p89 = scmp.ne.s32.totalorder %s74, %s88
    %p90 = scmp.eq.s32.totalorder %s17, 0
    %p91 = por %p89, %p90
    %s93 = sadd.s32 %s92, 1
    %p96 = scmp.eq.s32.totalorder %s11, 1
    %p97 = scmp.ne.s32.totalorder %s92, %s94
    %p98 = scmp.eq.s32.totalorder %s11, 0
    %p99 = por %p97, %p98
    %p100 = scmp.ne.s32.totalorder %s92, %s94
    %p101 = scmp.eq.s32.totalorder %s16, 1
    %p102 = por %p100, %p101
    %p103 = scmp.ne.s32.totalorder %s94, %s95
    %p104 = scmp.eq.s32.totalorder %s16, 0
    %p105 = por %p103, %p104
    %p106 = scmp.ne.s32.totalorder %s94, %s95
    %p107 = scmp.eq.s32.totalorder %s17, 1
    %p108 = por %p106, %p107
    %p110 = scmp.ne.s32.totalorder %s95, %s109
    %p111 = scmp.eq.s32.totalorder %s17, 0
    %p112 = por %p110, %p111
    %s114 = sadd.s32 %s113, 1
    %p117 = scmp.eq.s32.totalorder %s11, 1
    %p118 = scmp.ne.s32.totalorder %s113, %s115
    %p119 = scmp.eq.s32.totalorder %s11, 0
    %p120 = por %p118, %p119
    %p121 = scmp.ne.s32.totalorder %s113, %s115
    %p122 = scmp.eq.s32.totalorder %s16, 1
    %p123 = por %p121, %p122
    %p124 = scmp.ne.s32.totalorder %s115, %s116
    %p125 = scmp.eq.s32.totalorder %s16, 0
    %p126 = por %p124, %p125
    %p127 = scmp.ne.s32.totalorder %s115, %s116
    %p128 = scmp.eq.s32.totalorder %s17, 1
    %p129 = por %p127, %p128
    %p131 = scmp.ne.s32.totalorder %s116, %s130
    %p132 = scmp.eq.s32.totalorder %s17, 0
    %p133 = por %p131, %p132
    %s134 = ssub.s32 %s11, %s18
    %p135 = scmp.eq.s32.totalorder %s134, 0
    %s137 = sadd.s32 %s136, 1
    %s138 = scalar_select %p135, %s136, %s137
    %p141 = pneg %p135
    %p142 = scmp.eq.s32.totalorder %s11, 1
    %p143 = por %p141, %p142
    %p144 = scmp.ne.s32.totalorder %s136, %s139
    %p145 = scmp.eq.s32.totalorder %s11, 0
    %p146 = por %p144, %p145
    %p147 = scmp.ne.s32.totalorder %s136, %s139
    %p148 = scmp.eq.s32.totalorder %s16, 1
    %p149 = por %p147, %p148
    %p150 = scmp.ne.s32.totalorder %s139, %s140
    %p151 = scmp.eq.s32.totalorder %s16, 0
    %p152 = por %p150, %p151
    %p153 = scmp.ne.s32.totalorder %s139, %s140
    %p154 = scmp.eq.s32.totalorder %s17, 1
    %p155 = por %p153, %p154
    %p157 = scmp.ne.s32.totalorder %s140, %s156
    %p158 = scmp.eq.s32.totalorder %s17, 0
    %p159 = por %p157, %p158
    %p160 = scmp.le.s32.totalorder 1, %s11
    %p161 = scmp.lt.s32.totalorder %s11, 3
    %p162 = pnand %p160, %p161
    %p163 = pneg %p162
    // Predicated region
    $region9: #{ae_paired_forward.30} parent=5 // pred_check
      _
    $region10: #{ae_paired_forward.30} parent=5 // pred_check_branch
      %165 = sbr.rel (%p162) target = $region12
    $region11: #{ae_paired_forward.30} parent=5 // pred_region
      %s166 = ssub.s32 %s11, 1
      // Predicated region
      $region13: #{ae_paired_forward.30} parent=11 // pred_check
        %p167 = pneg %p84
      $region14: #{ae_paired_forward.30} parent=11 // pred_check_branch
        %169 = sbr.rel (%p167) target = $region16
      $region15: #{ae_paired_forward.30} parent=11 // pred_region
        _
      $region16: #{ae_paired_forward.30} parent=11 // pred_fallthru
        _
      // Predicated region
      $region17: #{ae_paired_forward.30} parent=11 // pred_check
        %p170 = pneg %p105
      $region18: #{ae_paired_forward.30} parent=11 // pred_check_branch
        %172 = sbr.rel (%p170) target = $region20
      $region19: #{ae_paired_forward.30} parent=11 // pred_region
        _
      $region20: #{ae_paired_forward.30} parent=11 // pred_fallthru
        _
      // Predicated region
      $region21: #{ae_paired_forward.30} parent=11 // pred_check
        %p173 = pneg %p126
      $region22: #{ae_paired_forward.30} parent=11 // pred_check_branch
        %175 = sbr.rel (%p173) target = $region24
      $region23: #{ae_paired_forward.30} parent=11 // pred_region
        _
      $region24: #{ae_paired_forward.30} parent=11 // pred_fallthru
        _
    $region12: #{ae_paired_forward.30} parent=5 // pred_fallthru
      _
    %p176 = scmp.lt.s32.totalorder %s11, 2
    // Predicated region
    $region25: #{ae_paired_forward.30} parent=5 // pred_check
      %p177 = pneg %p176
    $region26: #{ae_paired_forward.30} parent=5 // pred_check_branch
      %179 = sbr.rel (%p177) target = $region28
    $region27: #{ae_paired_forward.30} parent=5 // pred_region
      // Predicated region
      $region29: #{ae_paired_forward.30} parent=27 // pred_check
        %p180 = pneg %p31
      $region30: #{ae_paired_forward.30} parent=27 // pred_check_branch
        %182 = sbr.rel (%p180) target = $region32
      $region31: #{ae_paired_forward.30} parent=27 // pred_region
        %s183 = smul.u32 32, %s11
        %p184 = scmp.lt.s32.totalorder %s183, 63
        %s185 = scalar_select %p184, %s183, 63
        %s186 = smul.addr %s185, 8
        %s187 = scalar_lea.vmem %s0, %s186
        %s188 = smul.u32 32, %s11
      $region32: #{ae_paired_forward.30} parent=27 // pred_fallthru
        _
      // Predicated region
      $region33: #{ae_paired_forward.30} parent=27 // pred_check
        %p189 = pneg %p57
      $region34: #{ae_paired_forward.30} parent=27 // pred_check_branch
        %191 = sbr.rel (%p189) target = $region36
      $region35: #{ae_paired_forward.30} parent=27 // pred_region
        %s192 = smul.u32 32, %s11
        %p193 = scmp.lt.s32.totalorder %s192, 63
        %s194 = scalar_select %p193, %s192, 63
        %s195 = smul.addr %s194, 8
        %s196 = scalar_lea.vmem %s1, %s195
        %s197 = smul.u32 32, %s11
      $region36: #{ae_paired_forward.30} parent=27 // pred_fallthru
        _
    $region28: #{ae_paired_forward.30} parent=5 // pred_fallthru
      _
    %p198 = scmp.le.s32.totalorder 1, %s11
    %p199 = scmp.lt.s32.totalorder %s11, 3
    %p200 = pnand %p198, %p199
    %p201 = pneg %p200
    // Predicated region
    $region37: #{ae_paired_forward.30} parent=5 // pred_check
      _
    $region38: #{ae_paired_forward.30} parent=5 // pred_check_branch
      %203 = sbr.rel (%p200) target = $region40
    $region39: #{ae_paired_forward.30} parent=5 // pred_region
      %s204 = ssub.s32 %s11, 1
      %s205 = smul.u32 32, %s16
      %p206 = scmp.lt.s32.totalorder %s205, 63
      %s207 = scalar_select %p206, %s205, 63
      %s208 = smul.addr %s207, 8
      %s209 = scalar_lea.vmem %s0, %s208
      %p210 = pneg %p37
      %p211 = pneg %p34
      %s212 = smul.u32 32, %s16
      %p213 = scmp.lt.s32.totalorder %s212, 63
      %s214 = scalar_select %p213, %s212, 63
      %s215 = smul.addr %s214, 8
      %s216 = scalar_lea.vmem %s1, %s215
      %p217 = pneg %p63
      %p218 = pneg %p60
      %p219 = pneg %p84
      %p220 = pneg %p81
      %p221 = pneg %p105
      %p222 = pneg %p102
      %p223 = pneg %p126
      %p224 = pneg %p123
      %p225 = pneg %p152
      %p226 = pneg %p149
      %s227 = smul.u32 32, %s16
      %p228 = scmp.lt.s32.totalorder %s227, 63
      %s229 = scalar_select %p228, %s227, 63
      %s230 = smul.addr %s229, 8
      %s231 = scalar_lea.vmem %s5, %s230
      %s232 = smul.u32 32, %s16
      %p233 = scmp.lt.s32.totalorder %s232, 63
      %s234 = scalar_select %p233, %s232, 63
      %s235 = smul.addr %s234, 8
      %s236 = scalar_lea.vmem %s0, %s235
      %s237 = smul.u32 32, %s16
      %s238 = smul.u32 32, %s16
      %p239 = scmp.lt.s32.totalorder %s238, 63
      %s240 = scalar_select %p239, %s238, 63
      %s241 = smul.addr %s240, 8
      %s242 = scalar_lea.vmem %s1, %s241
      %s243 = smul.u32 32, %s16
      %s244 = smul.u32 32, %s16
      %p245 = scmp.lt.s32.totalorder %s244, 63
      %s246 = scalar_select %p245, %s244, 63
      %s247 = smul.addr %s246, 8
      %s248 = scalar_lea.vmem %s5, %s247
      %s249 = smul.u32 32, %s16
      %v250 = vld [vmem:[%s236] sm:$0xff]
      %v251 = vld [vmem:[%s236 + $0x8] sm:$0xff]
      %v252 = vld [vmem:[%s236 + $0x10] sm:$0xff]
      %v253 = vld [vmem:[%s236 + $0x18] sm:$0xff]
      %v254 = vld [vmem:[%s236 + $0x20] sm:$0xff]
      %v255 = vld [vmem:[%s236 + $0x28] sm:$0xff]
      %v256 = vld [vmem:[%s236 + $0x30] sm:$0xff]
      %v257 = vld [vmem:[%s236 + $0x38] sm:$0xff]
      %v258 = vld [vmem:[%s236 + $0x40] sm:$0xff]
      %v259 = vld [vmem:[%s236 + $0x48] sm:$0xff]
      %v260 = vld [vmem:[%s236 + $0x50] sm:$0xff]
      %v261 = vld [vmem:[%s236 + $0x58] sm:$0xff]
      %v262 = vld [vmem:[%s236 + $0x60] sm:$0xff]
      %v263 = vld [vmem:[%s236 + $0x68] sm:$0xff]
      %v264 = vld [vmem:[%s236 + $0x70] sm:$0xff]
      %v265 = vld [vmem:[%s236 + $0x78] sm:$0xff]
      %v266 = vld [vmem:[%s236 + $0x80] sm:$0xff]
      %v267 = vld [vmem:[%s236 + $0x88] sm:$0xff]
      %v268 = vld [vmem:[%s236 + $0x90] sm:$0xff]
      %v269 = vld [vmem:[%s236 + $0x98] sm:$0xff]
      %v270 = vld [vmem:[%s236 + $0xa0] sm:$0xff]
      %v271 = vld [vmem:[%s236 + $0xa8] sm:$0xff]
      %v272 = vld [vmem:[%s236 + $0xb0] sm:$0xff]
      %v273 = vld [vmem:[%s236 + $0xb8] sm:$0xff]
      %v274 = vld [vmem:[%s236 + $0xc0] sm:$0xff]
      %v275 = vld [vmem:[%s236 + $0xc8] sm:$0xff]
      %v276 = vld [vmem:[%s236 + $0xd0] sm:$0xff]
      %v277 = vld [vmem:[%s236 + $0xd8] sm:$0xff]
      %v278 = vld [vmem:[%s236 + $0xe0] sm:$0xff]
      %v279 = vld [vmem:[%s236 + $0xe8] sm:$0xff]
      %v280 = vld [vmem:[%s236 + $0xf0] sm:$0xff]
      %v281 = vld [vmem:[%s236 + $0xf8] sm:$0xff]
      %v282 = vld [vmem:[%s242] sm:$0xff]
      %v283 = vld [vmem:[%s242 + $0x8] sm:$0xff]
      %v284 = vld [vmem:[%s242 + $0x10] sm:$0xff]
      %v285 = vld [vmem:[%s242 + $0x18] sm:$0xff]
      %v286 = vld [vmem:[%s242 + $0x20] sm:$0xff]
      %v287 = vld [vmem:[%s242 + $0x28] sm:$0xff]
      %v288 = vld [vmem:[%s242 + $0x30] sm:$0xff]
      %v289 = vld [vmem:[%s242 + $0x38] sm:$0xff]
      %v290 = vld [vmem:[%s242 + $0x40] sm:$0xff]
      %v291 = vld [vmem:[%s242 + $0x48] sm:$0xff]
      %v292 = vld [vmem:[%s242 + $0x50] sm:$0xff]
      %v293 = vld [vmem:[%s242 + $0x58] sm:$0xff]
      %v294 = vld [vmem:[%s242 + $0x60] sm:$0xff]
      %v295 = vld [vmem:[%s242 + $0x68] sm:$0xff]
      %v296 = vld [vmem:[%s242 + $0x70] sm:$0xff]
      %v297 = vld [vmem:[%s242 + $0x78] sm:$0xff]
      %v298 = vld [vmem:[%s242 + $0x80] sm:$0xff]
      %v299 = vld [vmem:[%s242 + $0x88] sm:$0xff]
      %v300 = vld [vmem:[%s242 + $0x90] sm:$0xff]
      %v301 = vld [vmem:[%s242 + $0x98] sm:$0xff]
      %v302 = vld [vmem:[%s242 + $0xa0] sm:$0xff]
      %v303 = vld [vmem:[%s242 + $0xa8] sm:$0xff]
      %v304 = vld [vmem:[%s242 + $0xb0] sm:$0xff]
      %v305 = vld [vmem:[%s242 + $0xb8] sm:$0xff]
      %v306 = vld [vmem:[%s242 + $0xc0] sm:$0xff]
      %v307 = vld [vmem:[%s242 + $0xc8] sm:$0xff]
      %v308 = vld [vmem:[%s242 + $0xd0] sm:$0xff]
      %v309 = vld [vmem:[%s242 + $0xd8] sm:$0xff]
      %v310 = vld [vmem:[%s242 + $0xe0] sm:$0xff]
      %v311 = vld [vmem:[%s242 + $0xe8] sm:$0xff]
      %v312 = vld [vmem:[%s242 + $0xf0] sm:$0xff]
      %v313 = vld [vmem:[%s242 + $0xf8] sm:$0xff]
      %v314 = vld [vmem:[%s2] sm:$0xff]
      %v315 = vld [vmem:[%s2 + $0x8] sm:$0xff]
      %v316 = vld [vmem:[%s3] sm:$0xff]
      %v317 = vld [vmem:[%s3 + $0x8] sm:$0xff]
      %vm318 = vcmask 130048
      %v320 = vsel %vm318, %v282, 0
      %v323 = vsel %vm318, %v283, 0
      %v326 = vsel %vm318, %v284, 0
      %v329 = vsel %vm318, %v285, 0
      %v332 = vsel %vm318, %v286, 0
      %v335 = vsel %vm318, %v287, 0
      %v338 = vsel %vm318, %v288, 0
      %v341 = vsel %vm318, %v289, 0
      %v344 = vsel %vm318, %v290, 0
      %v347 = vsel %vm318, %v291, 0
      %v350 = vsel %vm318, %v292, 0
      %v353 = vsel %vm318, %v293, 0
      %v356 = vsel %vm318, %v294, 0
      %v359 = vsel %vm318, %v295, 0
      %v362 = vsel %vm318, %v296, 0
      %v365 = vsel %vm318, %v297, 0
      %v368 = vsel %vm318, %v298, 0
      %v371 = vsel %vm318, %v299, 0
      %v374 = vsel %vm318, %v300, 0
      %v377 = vsel %vm318, %v301, 0
      %v380 = vsel %vm318, %v302, 0
      %v383 = vsel %vm318, %v303, 0
      %v386 = vsel %vm318, %v304, 0
      %v389 = vsel %vm318, %v305, 0
      %v392 = vsel %vm318, %v306, 0
      %v395 = vsel %vm318, %v307, 0
      %v398 = vsel %vm318, %v308, 0
      %v401 = vsel %vm318, %v309, 0
      %v404 = vsel %vm318, %v310, 0
      %v407 = vsel %vm318, %v311, 0
      %v410 = vsel %vm318, %v312, 0
      %v413 = vsel %vm318, %v313, 0
      %415 = vmatprep.subr.mxu0 0.0
      %416 = vmatpush1.msra.mxu0 %v316
      %417 = vmatprep.subr.mxu0 0.0
      %418 = vmatpush1.msra.mxu0 %v317
      %419 = vmatprep.subr.mxu0 0.0
      %420 = vmatpush1.msra.mxu0 0.0
      %421 = vmatprep.subr.mxu0 0.0
      %422 = vmatpush1.msra.mxu0 0.0
      %423 = vmatprep.subr.mxu0 0.0
      %424 = vmatpush1.msra.mxu0 0.0
      %425 = vmatprep.subr.mxu0 0.0
      %426 = vmatpush1.msra.mxu0 0.0
      %427 = vmatprep.subr.mxu0 0.0
      %428 = vmatpush1.msra.mxu0 0.0
      %429 = vmatprep.subr.mxu0 0.0
      %430 = vmatpush1.msra.mxu0 0.0
      %431 = vmatprep.subr.mxu0 0.0
      %432 = vmatpush1.msra.mxu0 0.0
      %433 = vmatprep.subr.mxu0 0.0
      %434 = vmatpush1.msra.mxu0 0.0
      %435 = vmatprep.subr.mxu0 0.0
      %436 = vmatpush1.msra.mxu0 0.0
      %437 = vmatprep.subr.mxu0 0.0
      %438 = vmatpush1.msra.mxu0 0.0
      %439 = vmatprep.subr.mxu0 0.0
      %440 = vmatpush1.msra.mxu0 0.0
      %441 = vmatprep.subr.mxu0 0.0
      %442 = vmatpush1.msra.mxu0 0.0
      %443 = vmatprep.subr.mxu0 0.0
      %444 = vmatpush1.msra.mxu0 0.0
      %445 = vmatprep.subr.mxu0 0.0
      %446 = vmatpush1.msra.mxu0 0.0
      %447 = vmatprep.subr.mxu0 0.0
      %448 = vmatpush1.msra.mxu0 0.0
      %449 = vmatprep.subr.mxu0 0.0
      %450 = vmatpush1.msra.mxu0 0.0
      %451 = vmatprep.subr.mxu0 0.0
      %452 = vmatpush1.msra.mxu0 0.0
      %453 = vmatprep.subr.mxu0 0.0
      %454 = vmatpush1.msra.mxu0 0.0
      %455 = vmatprep.subr.mxu0 0.0
      %456 = vmatpush1.msra.mxu0 0.0
      %457 = vmatprep.subr.mxu0 0.0
      %458 = vmatpush1.msra.mxu0 0.0
      %459 = vmatprep.subr.mxu0 0.0
      %460 = vmatpush1.msra.mxu0 0.0
      %461 = vmatprep.subr.mxu0 0.0
      %462 = vmatpush1.msra.mxu0 0.0
      %463 = vmatprep.subr.mxu0 0.0
      %464 = vmatpush1.msra.mxu0 0.0
      %465 = vmatprep.subr.mxu0 0.0
      %466 = vmatpush1.msra.mxu0 0.0
      %467 = vmatprep.subr.mxu0 0.0
      %468 = vmatpush1.msra.mxu0 0.0
      %469 = vmatprep.subr.mxu0 0.0
      %470 = vmatpush1.msra.mxu0 0.0
      %471 = vmatprep.subr.mxu0 0.0
      %472 = vmatpush1.msra.mxu0 0.0
      %473 = vmatprep.subr.mxu0 0.0
      %474 = vmatpush1.msra.mxu0 0.0
      %475 = vmatprep.subr.mxu0 0.0
      %476 = vmatpush1.msra.mxu0 0.0
      %477 = vmatprep.subr.mxu0 0.0
      %478 = vmatpush1.msra.mxu0 0.0
      %479 = vmatprep.mubr.f32.mxu0 0.0
      %480 = vmatmul.mubr.f32.gmra.mrb[0].mxu0 %v320
      %v481 = vpop.f32.mrb[0].mxu0
      %v482 = vadd.f32 0.0, %v481
      %v483 = vpop.f32.mrb[0].mxu0
      %484 = vmatprep.mubr.f32.mxu0 0.0
      %485 = vmatmul.mubr.f32.gmra.mrb[0].mxu0 %v323
      %v486 = vpop.f32.mrb[0].mxu0
      %v487 = vadd.f32 0.0, %v486
      %v488 = vpop.f32.mrb[0].mxu0
      %489 = vmatprep.mubr.f32.mxu0 0.0
      %490 = vmatmul.mubr.f32.gmra.mrb[0].mxu0 %v326
      %v491 = vpop.f32.mrb[0].mxu0
      %v492 = vadd.f32 0.0, %v491
      %v493 = vpop.f32.mrb[0].mxu0
      %494 = vmatprep.mubr.f32.mxu0 0.0
      %495 = vmatmul.mubr.f32.gmra.mrb[0].mxu0 %v329
      %v496 = vpop.f32.mrb[0].mxu0
      %v497 = vadd.f32 0.0, %v496
      %v498 = vpop.f32.mrb[0].mxu0
      %499 = vmatprep.mubr.f32.mxu0 0.0
      %500 = vmatmul.mubr.f32.gmra.mrb[0].mxu0 %v332
      %v501 = vpop.f32.mrb[0].mxu0
      %v502 = vadd.f32 0.0, %v501
      %v503 = vpop.f32.mrb[0].mxu0
      %504 = vmatprep.mubr.f32.mxu0 0.0
      %505 = vmatmul.mubr.f32.gmra.mrb[0].mxu0 %v335
      %v506 = vpop.f32.mrb[0].mxu0
      %v507 = vadd.f32 0.0, %v506
      %v508 = vpop.f32.mrb[0].mxu0
      %509 = vmatprep.mubr.f32.mxu0 0.0
      %510 = vmatmul.mubr.f32.gmra.mrb[0].mxu0 %v338
      %v511 = vpop.f32.mrb[0].mxu0
      %v512 = vadd.f32 0.0, %v511
      %v513 = vpop.f32.mrb[0].mxu0
      %514 = vmatprep.mubr.f32.mxu0 0.0
      %515 = vmatmul.mubr.f32.gmra.mrb[0].mxu0 %v341
      %v516 = vpop.f32.mrb[0].mxu0
      %v517 = vadd.f32 0.0, %v516
      %v518 = vpop.f32.mrb[0].mxu0
      %519 = vmatprep.mubr.f32.mxu0 0.0
      %520 = vmatmul.mubr.f32.gmra.mrb[0].mxu0 %v344
      %v521 = vpop.f32.mrb[0].mxu0
      %v522 = vadd.f32 0.0, %v521
      %v523 = vpop.f32.mrb[0].mxu0
      %524 = vmatprep.mubr.f32.mxu0 0.0
      %525 = vmatmul.mubr.f32.gmra.mrb[0].mxu0 %v347
      %v526 = vpop.f32.mrb[0].mxu0
      %v527 = vadd.f32 0.0, %v526
      %v528 = vpop.f32.mrb[0].mxu0
      %529 = vmatprep.mubr.f32.mxu0 0.0
      %530 = vmatmul.mubr.f32.gmra.mrb[0].mxu0 %v350
      %v531 = vpop.f32.mrb[0].mxu0
      %v532 = vadd.f32 0.0, %v531
      %v533 = vpop.f32.mrb[0].mxu0
      %534 = vmatprep.mubr.f32.mxu0 0.0
      %535 = vmatmul.mubr.f32.gmra.mrb[0].mxu0 %v353
      %v536 = vpop.f32.mrb[0].mxu0
      %v537 = vadd.f32 0.0, %v536
      %v538 = vpop.f32.mrb[0].mxu0
      %539 = vmatprep.mubr.f32.mxu0 0.0
      %540 = vmatmul.mubr.f32.gmra.mrb[0].mxu0 %v356
      %v541 = vpop.f32.mrb[0].mxu0
      %v542 = vadd.f32 0.0, %v541
      %v543 = vpop.f32.mrb[0].mxu0
      %544 = vmatprep.mubr.f32.mxu0 0.0
      %545 = vmatmul.mubr.f32.gmra.mrb[0].mxu0 %v359
      %v546 = vpop.f32.mrb[0].mxu0
      %v547 = vadd.f32 0.0, %v546
      %v548 = vpop.f32.mrb[0].mxu0
      %549 = vmatprep.mubr.f32.mxu0 0.0
      %550 = vmatmul.mubr.f32.gmra.mrb[0].mxu0 %v362
      %v551 = vpop.f32.mrb[0].mxu0
      %v552 = vadd.f32 0.0, %v551
      %v553 = vpop.f32.mrb[0].mxu0
      %554 = vmatprep.mubr.f32.mxu0 0.0
      %555 = vmatmul.mubr.f32.gmra.mrb[0].mxu0 %v365
      %v556 = vpop.f32.mrb[0].mxu0
      %v557 = vadd.f32 0.0, %v556
      %v558 = vpop.f32.mrb[0].mxu0
      %559 = vmatprep.mubr.f32.mxu0 0.0
      %560 = vmatmul.mubr.f32.gmra.mrb[0].mxu0 %v368
      %v561 = vpop.f32.mrb[0].mxu0
      %v562 = vadd.f32 0.0, %v561
      %v563 = vpop.f32.mrb[0].mxu0
      %564 = vmatprep.mubr.f32.mxu0 0.0
      %565 = vmatmul.mubr.f32.gmra.mrb[0].mxu0 %v371
      %v566 = vpop.f32.mrb[0].mxu0
      %v567 = vadd.f32 0.0, %v566
      %v568 = vpop.f32.mrb[0].mxu0
      %569 = vmatprep.mubr.f32.mxu0 0.0
      %570 = vmatmul.mubr.f32.gmra.mrb[0].mxu0 %v374
      %v571 = vpop.f32.mrb[0].mxu0
      %v572 = vadd.f32 0.0, %v571
      %v573 = vpop.f32.mrb[0].mxu0
      %574 = vmatprep.mubr.f32.mxu0 0.0
      %575 = vmatmul.mubr.f32.gmra.mrb[0].mxu0 %v377
      %v576 = vpop.f32.mrb[0].mxu0
      %v577 = vadd.f32 0.0, %v576
      %v578 = vpop.f32.mrb[0].mxu0
      %579 = vmatprep.mubr.f32.mxu0 0.0
      %580 = vmatmul.mubr.f32.gmra.mrb[0].mxu0 %v380
      %v581 = vpop.f32.mrb[0].mxu0
      %v582 = vadd.f32 0.0, %v581
      %v583 = vpop.f32.mrb[0].mxu0
      %584 = vmatprep.mubr.f32.mxu0 0.0
      %585 = vmatmul.mubr.f32.gmra.mrb[0].mxu0 %v383
      %v586 = vpop.f32.mrb[0].mxu0
      %v587 = vadd.f32 0.0, %v586
      %v588 = vpop.f32.mrb[0].mxu0
      %589 = vmatprep.mubr.f32.mxu0 0.0
      %590 = vmatmul.mubr.f32.gmra.mrb[0].mxu0 %v386
      %v591 = vpop.f32.mrb[0].mxu0
      %v592 = vadd.f32 0.0, %v591
      %v593 = vpop.f32.mrb[0].mxu0
      %594 = vmatprep.mubr.f32.mxu0 0.0
      %595 = vmatmul.mubr.f32.gmra.mrb[0].mxu0 %v389
      %v596 = vpop.f32.mrb[0].mxu0
      %v597 = vadd.f32 0.0, %v596
      %v598 = vpop.f32.mrb[0].mxu0
      %599 = vmatprep.mubr.f32.mxu0 0.0
      %600 = vmatmul.mubr.f32.gmra.mrb[0].mxu0 %v392
      %v601 = vpop.f32.mrb[0].mxu0
      %v602 = vadd.f32 0.0, %v601
      %v603 = vpop.f32.mrb[0].mxu0
      %604 = vmatprep.mubr.f32.mxu0 0.0
      %605 = vmatmul.mubr.f32.gmra.mrb[0].mxu0 %v395
      %v606 = vpop.f32.mrb[0].mxu0
      %v607 = vadd.f32 0.0, %v606
      %v608 = vpop.f32.mrb[0].mxu0
      %609 = vmatprep.mubr.f32.mxu0 0.0
      %610 = vmatmul.mubr.f32.gmra.mrb[0].mxu0 %v398
      %v611 = vpop.f32.mrb[0].mxu0
      %v612 = vadd.f32 0.0, %v611
      %v613 = vpop.f32.mrb[0].mxu0
      %614 = vmatprep.mubr.f32.mxu0 0.0
      %615 = vmatmul.mubr.f32.gmra.mrb[0].mxu0 %v401
      %v616 = vpop.f32.mrb[0].mxu0
      %v617 = vadd.f32 0.0, %v616
      %v618 = vpop.f32.mrb[0].mxu0
      %619 = vmatprep.mubr.f32.mxu0 0.0
      %620 = vmatmul.mubr.f32.gmra.mrb[0].mxu0 %v404
      %v621 = vpop.f32.mrb[0].mxu0
      %v622 = vadd.f32 0.0, %v621
      %v623 = vpop.f32.mrb[0].mxu0
      %624 = vmatprep.mubr.f32.mxu0 0.0
      %625 = vmatmul.mubr.f32.gmra.mrb[0].mxu0 %v407
      %v626 = vpop.f32.mrb[0].mxu0
      %v627 = vadd.f32 0.0, %v626
      %v628 = vpop.f32.mrb[0].mxu0
      %629 = vmatprep.mubr.f32.mxu0 0.0
      %630 = vmatmul.mubr.f32.gmra.mrb[0].mxu0 %v410
      %v631 = vpop.f32.mrb[0].mxu0
      %v632 = vadd.f32 0.0, %v631
      %v633 = vpop.f32.mrb[0].mxu0
      %634 = vmatprep.mubr.f32.mxu0 0.0
      %635 = vmatmul.mubr.f32.gmra.mrb[0].mxu0 %v413
      %v636 = vpop.f32.mrb[0].mxu0
      %v637 = vadd.f32 0.0, %v636
      %v638 = vpop.f32.mrb[0].mxu0
      %639 = vdwg.mxu0
      %v641 = vsel %vm318, %v250, 0
      %v644 = vsel %vm318, %v251, 0
      %v647 = vsel %vm318, %v252, 0
      %v650 = vsel %vm318, %v253, 0
      %v653 = vsel %vm318, %v254, 0
      %v656 = vsel %vm318, %v255, 0
      %v659 = vsel %vm318, %v256, 0
      %v662 = vsel %vm318, %v257, 0
      %v665 = vsel %vm318, %v258, 0
      %v668 = vsel %vm318, %v259, 0
      %v671 = vsel %vm318, %v260, 0
      %v674 = vsel %vm318, %v261, 0
      %v677 = vsel %vm318, %v262, 0
      %v680 = vsel %vm318, %v263, 0
      %v683 = vsel %vm318, %v264, 0
      %v686 = vsel %vm318, %v265, 0
      %v689 = vsel %vm318, %v266, 0
      %v692 = vsel %vm318, %v267, 0
      %v695 = vsel %vm318, %v268, 0
      %v698 = vsel %vm318, %v269, 0
      %v701 = vsel %vm318, %v270, 0
      %v704 = vsel %vm318, %v271, 0
      %v707 = vsel %vm318, %v272, 0
      %v710 = vsel %vm318, %v273, 0
      %v713 = vsel %vm318, %v274, 0
      %v716 = vsel %vm318, %v275, 0
      %v719 = vsel %vm318, %v276, 0
      %v722 = vsel %vm318, %v277, 0
      %v725 = vsel %vm318, %v278, 0
      %v728 = vsel %vm318, %v279, 0
      %v731 = vsel %vm318, %v280, 0
      %v734 = vsel %vm318, %v281, 0
      %736 = vmatprep.subr.mxu0 0.0
      %737 = vmatpush1.msra.mxu0 %v314
      %738 = vmatprep.subr.mxu0 0.0
      %739 = vmatpush1.msra.mxu0 %v315
      %740 = vmatprep.subr.mxu0 0.0
      %741 = vmatpush1.msra.mxu0 0.0
      %742 = vmatprep.subr.mxu0 0.0
      %743 = vmatpush1.msra.mxu0 0.0
      %744 = vmatprep.subr.mxu0 0.0
      %745 = vmatpush1.msra.mxu0 0.0
      %746 = vmatprep.subr.mxu0 0.0
      %747 = vmatpush1.msra.mxu0 0.0
      %748 = vmatprep.subr.mxu0 0.0
      %749 = vmatpush1.msra.mxu0 0.0
      %750 = vmatprep.subr.mxu0 0.0
      %751 = vmatpush1.msra.mxu0 0.0
      %752 = vmatprep.subr.mxu0 0.0
      %753 = vmatpush1.msra.mxu0 0.0
      %754 = vmatprep.subr.mxu0 0.0
      %755 = vmatpush1.msra.mxu0 0.0
      %756 = vmatprep.subr.mxu0 0.0
      %757 = vmatpush1.msra.mxu0 0.0
      %758 = vmatprep.subr.mxu0 0.0
      %759 = vmatpush1.msra.mxu0 0.0
      %760 = vmatprep.subr.mxu0 0.0
      %761 = vmatpush1.msra.mxu0 0.0
      %762 = vmatprep.subr.mxu0 0.0
      %763 = vmatpush1.msra.mxu0 0.0
      %764 = vmatprep.subr.mxu0 0.0
      %765 = vmatpush1.msra.mxu0 0.0
      %766 = vmatprep.subr.mxu0 0.0
      %767 = vmatpush1.msra.mxu0 0.0
      %768 = vmatprep.subr.mxu0 0.0
      %769 = vmatpush1.msra.mxu0 0.0
      %770 = vmatprep.subr.mxu0 0.0
      %771 = vmatpush1.msra.mxu0 0.0
      %772 = vmatprep.subr.mxu0 0.0
      %773 = vmatpush1.msra.mxu0 0.0
      %774 = vmatprep.subr.mxu0 0.0
      %775 = vmatpush1.msra.mxu0 0.0
      %776 = vmatprep.subr.mxu0 0.0
      %777 = vmatpush1.msra.mxu0 0.0
      %778 = vmatprep.subr.mxu0 0.0
      %779 = vmatpush1.msra.mxu0 0.0
      %780 = vmatprep.subr.mxu0 0.0
      %781 = vmatpush1.msra.mxu0 0.0
      %782 = vmatprep.subr.mxu0 0.0
      %783 = vmatpush1.msra.mxu0 0.0
      %784 = vmatprep.subr.mxu0 0.0
      %785 = vmatpush1.msra.mxu0 0.0
      %786 = vmatprep.subr.mxu0 0.0
      %787 = vmatpush1.msra.mxu0 0.0
      %788 = vmatprep.subr.mxu0 0.0
      %789 = vmatpush1.msra.mxu0 0.0
      %790 = vmatprep.subr.mxu0 0.0
      %791 = vmatpush1.msra.mxu0 0.0
      %792 = vmatprep.subr.mxu0 0.0
      %793 = vmatpush1.msra.mxu0 0.0
      %794 = vmatprep.subr.mxu0 0.0
      %795 = vmatpush1.msra.mxu0 0.0
      %796 = vmatprep.subr.mxu0 0.0
      %797 = vmatpush1.msra.mxu0 0.0
      %798 = vmatprep.subr.mxu0 0.0
      %799 = vmatpush1.msra.mxu0 0.0
      %800 = vmatprep.mubr.f32.mxu0 0.0
      %801 = vmatmul.mubr.f32.gmra.mrb[0].mxu0 %v641
      %v802 = vpop.f32.mrb[0].mxu0
      %v803 = vadd.f32 %v482, %v802
      %v804 = vpop.f32.mrb[0].mxu0
      %805 = vmatprep.mubr.f32.mxu0 0.0
      %806 = vmatmul.mubr.f32.gmra.mrb[0].mxu0 %v644
      %v807 = vpop.f32.mrb[0].mxu0
      %v808 = vadd.f32 %v487, %v807
      %v809 = vpop.f32.mrb[0].mxu0
      %810 = vmatprep.mubr.f32.mxu0 0.0
      %811 = vmatmul.mubr.f32.gmra.mrb[0].mxu0 %v647
      %v812 = vpop.f32.mrb[0].mxu0
      %v813 = vadd.f32 %v492, %v812
      %v814 = vpop.f32.mrb[0].mxu0
      %815 = vmatprep.mubr.f32.mxu0 0.0
      %816 = vmatmul.mubr.f32.gmra.mrb[0].mxu0 %v650
      %v817 = vpop.f32.mrb[0].mxu0
      %v818 = vadd.f32 %v497, %v817
      %v819 = vpop.f32.mrb[0].mxu0
      %820 = vmatprep.mubr.f32.mxu0 0.0
      %821 = vmatmul.mubr.f32.gmra.mrb[0].mxu0 %v653
      %v822 = vpop.f32.mrb[0].mxu0
      %v823 = vadd.f32 %v502, %v822
      %v824 = vpop.f32.mrb[0].mxu0
      %825 = vmatprep.mubr.f32.mxu0 0.0
      %826 = vmatmul.mubr.f32.gmra.mrb[0].mxu0 %v656
      %v827 = vpop.f32.mrb[0].mxu0
      %v828 = vadd.f32 %v507, %v827
      %v829 = vpop.f32.mrb[0].mxu0
      %830 = vmatprep.mubr.f32.mxu0 0.0
      %831 = vmatmul.mubr.f32.gmra.mrb[0].mxu0 %v659
      %v832 = vpop.f32.mrb[0].mxu0
      %v833 = vadd.f32 %v512, %v832
      %v834 = vpop.f32.mrb[0].mxu0
      %835 = vmatprep.mubr.f32.mxu0 0.0
      %836 = vmatmul.mubr.f32.gmra.mrb[0].mxu0 %v662
      %v837 = vpop.f32.mrb[0].mxu0
      %v838 = vadd.f32 %v517, %v837
      %v839 = vpop.f32.mrb[0].mxu0
      %840 = vmatprep.mubr.f32.mxu0 0.0
      %841 = vmatmul.mubr.f32.gmra.mrb[0].mxu0 %v665
      %v842 = vpop.f32.mrb[0].mxu0
      %v843 = vadd.f32 %v522, %v842
      %v844 = vpop.f32.mrb[0].mxu0
      %845 = vmatprep.mubr.f32.mxu0 0.0
      %846 = vmatmul.mubr.f32.gmra.mrb[0].mxu0 %v668
      %v847 = vpop.f32.mrb[0].mxu0
      %v848 = vadd.f32 %v527, %v847
      %v849 = vpop.f32.mrb[0].mxu0
      %850 = vmatprep.mubr.f32.mxu0 0.0
      %851 = vmatmul.mubr.f32.gmra.mrb[0].mxu0 %v671
      %v852 = vpop.f32.mrb[0].mxu0
      %v853 = vadd.f32 %v532, %v852
      %v854 = vpop.f32.mrb[0].mxu0
      %855 = vmatprep.mubr.f32.mxu0 0.0
      %856 = vmatmul.mubr.f32.gmra.mrb[0].mxu0 %v674
      %v857 = vpop.f32.mrb[0].mxu0
      %v858 = vadd.f32 %v537, %v857
      %v859 = vpop.f32.mrb[0].mxu0
      %860 = vmatprep.mubr.f32.mxu0 0.0
      %861 = vmatmul.mubr.f32.gmra.mrb[0].mxu0 %v677
      %v862 = vpop.f32.mrb[0].mxu0
      %v863 = vadd.f32 %v542, %v862
      %v864 = vpop.f32.mrb[0].mxu0
      %865 = vmatprep.mubr.f32.mxu0 0.0
      %866 = vmatmul.mubr.f32.gmra.mrb[0].mxu0 %v680
      %v867 = vpop.f32.mrb[0].mxu0
      %v868 = vadd.f32 %v547, %v867
      %v869 = vpop.f32.mrb[0].mxu0
      %870 = vmatprep.mubr.f32.mxu0 0.0
      %871 = vmatmul.mubr.f32.gmra.mrb[0].mxu0 %v683
      %v872 = vpop.f32.mrb[0].mxu0
      %v873 = vadd.f32 %v552, %v872
      %v874 = vpop.f32.mrb[0].mxu0
      %875 = vmatprep.mubr.f32.mxu0 0.0
      %876 = vmatmul.mubr.f32.gmra.mrb[0].mxu0 %v686
      %v877 = vpop.f32.mrb[0].mxu0
      %v878 = vadd.f32 %v557, %v877
      %v879 = vpop.f32.mrb[0].mxu0
      %880 = vmatprep.mubr.f32.mxu0 0.0
      %881 = vmatmul.mubr.f32.gmra.mrb[0].mxu0 %v689
      %v882 = vpop.f32.mrb[0].mxu0
      %v883 = vadd.f32 %v562, %v882
      %v884 = vpop.f32.mrb[0].mxu0
      %885 = vmatprep.mubr.f32.mxu0 0.0
      %886 = vmatmul.mubr.f32.gmra.mrb[0].mxu0 %v692
      %v887 = vpop.f32.mrb[0].mxu0
      %v888 = vadd.f32 %v567, %v887
      %v889 = vpop.f32.mrb[0].mxu0
      %890 = vmatprep.mubr.f32.mxu0 0.0
      %891 = vmatmul.mubr.f32.gmra.mrb[0].mxu0 %v695
      %v892 = vpop.f32.mrb[0].mxu0
      %v893 = vadd.f32 %v572, %v892
      %v894 = vpop.f32.mrb[0].mxu0
      %895 = vmatprep.mubr.f32.mxu0 0.0
      %896 = vmatmul.mubr.f32.gmra.mrb[0].mxu0 %v698
      %v897 = vpop.f32.mrb[0].mxu0
      %v898 = vadd.f32 %v577, %v897
      %v899 = vpop.f32.mrb[0].mxu0
      %900 = vmatprep.mubr.f32.mxu0 0.0
      %901 = vmatmul.mubr.f32.gmra.mrb[0].mxu0 %v701
      %v902 = vpop.f32.mrb[0].mxu0
      %v903 = vadd.f32 %v582, %v902
      %v904 = vpop.f32.mrb[0].mxu0
      %905 = vmatprep.mubr.f32.mxu0 0.0
      %906 = vmatmul.mubr.f32.gmra.mrb[0].mxu0 %v704
      %v907 = vpop.f32.mrb[0].mxu0
      %v908 = vadd.f32 %v587, %v907
      %v909 = vpop.f32.mrb[0].mxu0
      %910 = vmatprep.mubr.f32.mxu0 0.0
      %911 = vmatmul.mubr.f32.gmra.mrb[0].mxu0 %v707
      %v912 = vpop.f32.mrb[0].mxu0
      %v913 = vadd.f32 %v592, %v912
      %v914 = vpop.f32.mrb[0].mxu0
      %915 = vmatprep.mubr.f32.mxu0 0.0
      %916 = vmatmul.mubr.f32.gmra.mrb[0].mxu0 %v710
      %v917 = vpop.f32.mrb[0].mxu0
      %v918 = vadd.f32 %v597, %v917
      %v919 = vpop.f32.mrb[0].mxu0
      %920 = vmatprep.mubr.f32.mxu0 0.0
      %921 = vmatmul.mubr.f32.gmra.mrb[0].mxu0 %v713
      %v922 = vpop.f32.mrb[0].mxu0
      %v923 = vadd.f32 %v602, %v922
      %v924 = vpop.f32.mrb[0].mxu0
      %925 = vmatprep.mubr.f32.mxu0 0.0
      %926 = vmatmul.mubr.f32.gmra.mrb[0].mxu0 %v716
      %v927 = vpop.f32.mrb[0].mxu0
      %v928 = vadd.f32 %v607, %v927
      %v929 = vpop.f32.mrb[0].mxu0
      %930 = vmatprep.mubr.f32.mxu0 0.0
      %931 = vmatmul.mubr.f32.gmra.mrb[0].mxu0 %v719
      %v932 = vpop.f32.mrb[0].mxu0
      %v933 = vadd.f32 %v612, %v932
      %v934 = vpop.f32.mrb[0].mxu0
      %935 = vmatprep.mubr.f32.mxu0 0.0
      %936 = vmatmul.mubr.f32.gmra.mrb[0].mxu0 %v722
      %v937 = vpop.f32.mrb[0].mxu0
      %v938 = vadd.f32 %v617, %v937
      %v939 = vpop.f32.mrb[0].mxu0
      %940 = vmatprep.mubr.f32.mxu0 0.0
      %941 = vmatmul.mubr.f32.gmra.mrb[0].mxu0 %v725
      %v942 = vpop.f32.mrb[0].mxu0
      %v943 = vadd.f32 %v622, %v942
      %v944 = vpop.f32.mrb[0].mxu0
      %945 = vmatprep.mubr.f32.mxu0 0.0
      %946 = vmatmul.mubr.f32.gmra.mrb[0].mxu0 %v728
      %v947 = vpop.f32.mrb[0].mxu0
      %v948 = vadd.f32 %v627, %v947
      %v949 = vpop.f32.mrb[0].mxu0
      %950 = vmatprep.mubr.f32.mxu0 0.0
      %951 = vmatmul.mubr.f32.gmra.mrb[0].mxu0 %v731
      %v952 = vpop.f32.mrb[0].mxu0
      %v953 = vadd.f32 %v632, %v952
      %v954 = vpop.f32.mrb[0].mxu0
      %955 = vmatprep.mubr.f32.mxu0 0.0
      %956 = vmatmul.mubr.f32.gmra.mrb[0].mxu0 %v734
      %v957 = vpop.f32.mrb[0].mxu0
      %v958 = vadd.f32 %v637, %v957
      %v959 = vpop.f32.mrb[0].mxu0
      %960 = vdwg.mxu0
      %v961 = vld [vmem:[%s4] sm:$0x1]
      %v963 = vlaneseq
      %v964 = vshrl.u32 %v963, 7
      %v965 = vsub.s32 0, %v964
      %v966 = vrot.slane %v961, %v965
      %v968 = vadd.f32 %v803, %v966
      %v969 = vadd.f32 %v808, %v966
      %v970 = vadd.f32 %v813, %v966
      %v971 = vadd.f32 %v818, %v966
      %v972 = vadd.f32 %v823, %v966
      %v973 = vadd.f32 %v828, %v966
      %v974 = vadd.f32 %v833, %v966
      %v975 = vadd.f32 %v838, %v966
      %v976 = vadd.f32 %v843, %v966
      %v977 = vadd.f32 %v848, %v966
      %v978 = vadd.f32 %v853, %v966
      %v979 = vadd.f32 %v858, %v966
      %v980 = vadd.f32 %v863, %v966
      %v981 = vadd.f32 %v868, %v966
      %v982 = vadd.f32 %v873, %v966
      %v983 = vadd.f32 %v878, %v966
      %v984 = vadd.f32 %v883, %v966
      %v985 = vadd.f32 %v888, %v966
      %v986 = vadd.f32 %v893, %v966
      %v987 = vadd.f32 %v898, %v966
      %v988 = vadd.f32 %v903, %v966
      %v989 = vadd.f32 %v908, %v966
      %v990 = vadd.f32 %v913, %v966
      %v991 = vadd.f32 %v918, %v966
      %v992 = vadd.f32 %v923, %v966
      %v993 = vadd.f32 %v928, %v966
      %v994 = vadd.f32 %v933, %v966
      %v995 = vadd.f32 %v938, %v966
      %v996 = vadd.f32 %v943, %v966
      %v997 = vadd.f32 %v948, %v966
      %v998 = vadd.f32 %v953, %v966
      %v999 = vadd.f32 %v958, %v966
      %1000 = vst.msk [vmem:[%s248] sm:$0xff] %vm318, %v968
      %1001 = vst.msk [vmem:[%s248 + $0x8] sm:$0xff] %vm318, %v969
      %1002 = vst.msk [vmem:[%s248 + $0x10] sm:$0xff] %vm318, %v970
      %1003 = vst.msk [vmem:[%s248 + $0x18] sm:$0xff] %vm318, %v971
      %1004 = vst.msk [vmem:[%s248 + $0x20] sm:$0xff] %vm318, %v972
      %1005 = vst.msk [vmem:[%s248 + $0x28] sm:$0xff] %vm318, %v973
      %1006 = vst.msk [vmem:[%s248 + $0x30] sm:$0xff] %vm318, %v974
      %1007 = vst.msk [vmem:[%s248 + $0x38] sm:$0xff] %vm318, %v975
      %1008 = vst.msk [vmem:[%s248 + $0x40] sm:$0xff] %vm318, %v976
      %1009 = vst.msk [vmem:[%s248 + $0x48] sm:$0xff] %vm318, %v977
      %1010 = vst.msk [vmem:[%s248 + $0x50] sm:$0xff] %vm318, %v978
      %1011 = vst.msk [vmem:[%s248 + $0x58] sm:$0xff] %vm318, %v979
      %1012 = vst.msk [vmem:[%s248 + $0x60] sm:$0xff] %vm318, %v980
      %1013 = vst.msk [vmem:[%s248 + $0x68] sm:$0xff] %vm318, %v981
      %1014 = vst.msk [vmem:[%s248 + $0x70] sm:$0xff] %vm318, %v982
      %1015 = vst.msk [vmem:[%s248 + $0x78] sm:$0xff] %vm318, %v983
      %1016 = vst.msk [vmem:[%s248 + $0x80] sm:$0xff] %vm318, %v984
      %1017 = vst.msk [vmem:[%s248 + $0x88] sm:$0xff] %vm318, %v985
      %1018 = vst.msk [vmem:[%s248 + $0x90] sm:$0xff] %vm318, %v986
      %1019 = vst.msk [vmem:[%s248 + $0x98] sm:$0xff] %vm318, %v987
      %1020 = vst.msk [vmem:[%s248 + $0xa0] sm:$0xff] %vm318, %v988
      %1021 = vst.msk [vmem:[%s248 + $0xa8] sm:$0xff] %vm318, %v989
      %1022 = vst.msk [vmem:[%s248 + $0xb0] sm:$0xff] %vm318, %v990
      %1023 = vst.msk [vmem:[%s248 + $0xb8] sm:$0xff] %vm318, %v991
      %1024 = vst.msk [vmem:[%s248 + $0xc0] sm:$0xff] %vm318, %v992
      %1025 = vst.msk [vmem:[%s248 + $0xc8] sm:$0xff] %vm318, %v993
      %1026 = vst.msk [vmem:[%s248 + $0xd0] sm:$0xff] %vm318, %v994
      %1027 = vst.msk [vmem:[%s248 + $0xd8] sm:$0xff] %vm318, %v995
      %1028 = vst.msk [vmem:[%s248 + $0xe0] sm:$0xff] %vm318, %v996
      %1029 = vst.msk [vmem:[%s248 + $0xe8] sm:$0xff] %vm318, %v997
      %1030 = vst.msk [vmem:[%s248 + $0xf0] sm:$0xff] %vm318, %v998
      %1031 = vst.msk [vmem:[%s248 + $0xf8] sm:$0xff] %vm318, %v999
      %s1032 = smul.u32 32, %s16
      %p1033 = scmp.lt.s32.totalorder %s1032, 63
      %s1034 = scalar_select %p1033, %s1032, 63
      %s1035 = smul.addr %s1034, 8
      %s1036 = scalar_lea.vmem %s5, %s1035
      // Predicated region
      $region41: #{ae_paired_forward.30} parent=39 // pred_check
        %p1037 = pneg %p149
      $region42: #{ae_paired_forward.30} parent=39 // pred_check_branch
        %1039 = sbr.rel (%p1037) target = $region44
      $region43: #{ae_paired_forward.30} parent=39 // pred_region
        %s1040 = smul.u32 32, %s16
      $region44: #{ae_paired_forward.30} parent=39 // pred_fallthru
        _
    $region40: #{ae_paired_forward.30} parent=5 // pred_fallthru
      _
    %p1041 = scmp.le.s32.totalorder 2, %s11
    // Predicated region
    $region45: #{ae_paired_forward.30} parent=5 // pred_check
      %p1042 = pneg %p1041
    $region46: #{ae_paired_forward.30} parent=5 // pred_check_branch
      %1044 = sbr.rel (%p1042) target = $region48
    $region47: #{ae_paired_forward.30} parent=5 // pred_region
      %s1045 = ssub.s32 %s11, 2
      // Predicated region
      $region49: #{ae_paired_forward.30} parent=47 // pred_check
        %p1046 = pneg %p155
      $region50: #{ae_paired_forward.30} parent=47 // pred_check_branch
        %1048 = sbr.rel (%p1046) target = $region52
      $region51: #{ae_paired_forward.30} parent=47 // pred_region
        %s1049 = smul.u32 32, %s17
        %p1050 = scmp.lt.s32.totalorder %s1049, 63
        %s1051 = scalar_select %p1050, %s1049, 63
        %s1052 = smul.addr %s1051, 8
        %s1053 = scalar_lea.vmem %s5, %s1052
      $region52: #{ae_paired_forward.30} parent=47 // pred_fallthru
        _
    $region48: #{ae_paired_forward.30} parent=5 // pred_fallthru
      _
  $region6: #{ae_paired_forward.30} parent=0 // loop_footer
    %s15 = sadd.s32 1, %s11
  $region7: #{ae_paired_forward.30} parent=0 // loop_footer_branch
    %10 = sbr.rel target = $region3
  $region8: #{ae_paired_forward.30} parent=0 // loop_exit
    _

// kernel: ae_paired_forward.27
$region0: #{ae_paired_forward.27}
  #allocation0 [shape = 'u32[]', space=smem, size = 0x4, offset = 0x4, fixed_abs, tag = 'smem constant byte address 0x4 - core index']
  #allocation1 [shape = 'u32[144,128]{1,0:T(1,128)}', space=vmem, size = 0x12000, scoped, tag = 'internal scratch']
  %s0 = inlined_call_operand.vmem [shape: f32[512,144], index: 0, kind: input, shape index: {}]
  %s1 = inlined_call_operand.vmem [shape: f32[144,16], index: 1, kind: input, shape index: {}]
  %s2 = inlined_call_operand.vmem [shape: f32[1,16], index: 2, kind: input, shape index: {}]
  %s3 = inlined_call_operand.vmem [shape: f32[512,16], index: 3, kind: output, shape index: {}]
  %s4 = sld [smem:[#allocation0]]
  $region45: #{ae_paired_forward.27} parent=0
    _
  %s6 = ssub.s32 1, %s4
  %s7 = scalar_select 0, %s6, %s4
  loop: start=0, step=1, limit=4
  $region2: #{ae_paired_forward.27} parent=0 // loop_pre_header
    _
  $region3: #{ae_paired_forward.27} parent=0 // loop_header
    %s9 = sphi 0, %s13
    %p10 = scmp.ge.s32.totalorder %s9, 4
    %s19 = sphi 0, %s21
    %s22 = sphi 0, %s19
    %s23 = sphi 0, %s22
    %s39 = sphi 0, %s23
    %s43 = sphi 0, %s43
    %s45 = sphi 0, %s43
    %s46 = sphi 0, %s45
    %s60 = sphi 0, %s46
    %s64 = sphi 0, %s64
    %s66 = sphi 0, %s64
    %s67 = sphi 0, %s66
    %s81 = sphi 0, %s67
    %s87 = sphi 0, %s89
    %s90 = sphi 0, %s87
    %s91 = sphi 0, %s90
    %s107 = sphi 0, %s91
  $region4: #{ae_paired_forward.27} parent=0 // loop_header_branch
    %12 = sbr.rel (%p10) target = $region8
  $region5: #{ae_paired_forward.27} parent=0 // loop_body
    %s14 = ssub.s32 %s9, 1
    %s15 = ssub.s32 %s9, 2
    %s16 = sadd.s32 %s9, 1
    %s17 = ssub.s32 %s9, %s16
    %p18 = scmp.eq.s32.totalorder %s17, 0
    %s20 = sadd.s32 %s19, 1
    %s21 = scalar_select %p18, %s19, %s20
    %p24 = pneg %p18
    %p25 = scmp.eq.s32.totalorder %s9, 1
    %p26 = por %p24, %p25
    %p27 = scmp.ne.s32.totalorder %s19, %s22
    %p28 = scmp.eq.s32.totalorder %s9, 0
    %p29 = por %p27, %p28
    %p30 = scmp.ne.s32.totalorder %s19, %s22
    %p31 = scmp.eq.s32.totalorder %s14, 1
    %p32 = por %p30, %p31
    %p33 = scmp.ne.s32.totalorder %s22, %s23
    %p34 = scmp.eq.s32.totalorder %s14, 0
    %p35 = por %p33, %p34
    %p36 = scmp.ne.s32.totalorder %s22, %s23
    %p37 = scmp.eq.s32.totalorder %s15, 1
    %p38 = por %p36, %p37
    %p40 = scmp.ne.s32.totalorder %s23, %s39
    %p41 = scmp.eq.s32.totalorder %s15, 0
    %p42 = por %p40, %p41
    %s44 = sadd.s32 %s43, 1
    %p47 = scmp.eq.s32.totalorder %s9, 1
    %p48 = scmp.ne.s32.totalorder %s43, %s45
    %p49 = scmp.eq.s32.totalorder %s9, 0
    %p50 = por %p48, %p49
    %p51 = scmp.ne.s32.totalorder %s43, %s45
    %p52 = scmp.eq.s32.totalorder %s14, 1
    %p53 = por %p51, %p52
    %p54 = scmp.ne.s32.totalorder %s45, %s46
    %p55 = scmp.eq.s32.totalorder %s14, 0
    %p56 = por %p54, %p55
    %p57 = scmp.ne.s32.totalorder %s45, %s46
    %p58 = scmp.eq.s32.totalorder %s15, 1
    %p59 = por %p57, %p58
    %p61 = scmp.ne.s32.totalorder %s46, %s60
    %p62 = scmp.eq.s32.totalorder %s15, 0
    %p63 = por %p61, %p62
    %s65 = sadd.s32 %s64, 1
    %p68 = scmp.eq.s32.totalorder %s9, 1
    %p69 = scmp.ne.s32.totalorder %s64, %s66
    %p70 = scmp.eq.s32.totalorder %s9, 0
    %p71 = por %p69, %p70
    %p72 = scmp.ne.s32.totalorder %s64, %s66
    %p73 = scmp.eq.s32.totalorder %s14, 1
    %p74 = por %p72, %p73
    %p75 = scmp.ne.s32.totalorder %s66, %s67
    %p76 = scmp.eq.s32.totalorder %s14, 0
    %p77 = por %p75, %p76
    %p78 = scmp.ne.s32.totalorder %s66, %s67
    %p79 = scmp.eq.s32.totalorder %s15, 1
    %p80 = por %p78, %p79
    %p82 = scmp.ne.s32.totalorder %s67, %s81
    %p83 = scmp.eq.s32.totalorder %s15, 0
    %p84 = por %p82, %p83
    %s85 = ssub.s32 %s9, %s16
    %p86 = scmp.eq.s32.totalorder %s85, 0
    %s88 = sadd.s32 %s87, 1
    %s89 = scalar_select %p86, %s87, %s88
    %p92 = pneg %p86
    %p93 = scmp.eq.s32.totalorder %s9, 1
    %p94 = por %p92, %p93
    %p95 = scmp.ne.s32.totalorder %s87, %s90
    %p96 = scmp.eq.s32.totalorder %s9, 0
    %p97 = por %p95, %p96
    %p98 = scmp.ne.s32.totalorder %s87, %s90
    %p99 = scmp.eq.s32.totalorder %s14, 1
    %p100 = por %p98, %p99
    %p101 = scmp.ne.s32.totalorder %s90, %s91
    %p102 = scmp.eq.s32.totalorder %s14, 0
    %p103 = por %p101, %p102
    %p104 = scmp.ne.s32.totalorder %s90, %s91
    %p105 = scmp.eq.s32.totalorder %s15, 1
    %p106 = por %p104, %p105
    %p108 = scmp.ne.s32.totalorder %s91, %s107
    %p109 = scmp.eq.s32.totalorder %s15, 0
    %p110 = por %p108, %p109
    %p111 = scmp.le.s32.totalorder 1, %s9
    %p112 = scmp.lt.s32.totalorder %s9, 3
    %p113 = pnand %p111, %p112
    %p114 = pneg %p113
    // Predicated region
    $region9: #{ae_paired_forward.27} parent=5 // pred_check
      _
    $region10: #{ae_paired_forward.27} parent=5 // pred_check_branch
      %116 = sbr.rel (%p113) target = $region12
    $region11: #{ae_paired_forward.27} parent=5 // pred_region
      %s117 = ssub.s32 %s9, 1
      // Predicated region
      $region13: #{ae_paired_forward.27} parent=11 // pred_check
        %p118 = pneg %p56
      $region14: #{ae_paired_forward.27} parent=11 // pred_check_branch
        %120 = sbr.rel (%p118) target = $region16
      $region15: #{ae_paired_forward.27} parent=11 // pred_region
        _
      $region16: #{ae_paired_forward.27} parent=11 // pred_fallthru
        _
      // Predicated region
      $region17: #{ae_paired_forward.27} parent=11 // pred_check
        %p121 = pneg %p77
      $region18: #{ae_paired_forward.27} parent=11 // pred_check_branch
        %123 = sbr.rel (%p121) target = $region20
      $region19: #{ae_paired_forward.27} parent=11 // pred_region
        _
      $region20: #{ae_paired_forward.27} parent=11 // pred_fallthru
        _
    $region12: #{ae_paired_forward.27} parent=5 // pred_fallthru
      _
    %p124 = scmp.lt.s32.totalorder %s9, 2
    // Predicated region
    $region21: #{ae_paired_forward.27} parent=5 // pred_check
      %p125 = pneg %p124
    $region22: #{ae_paired_forward.27} parent=5 // pred_check_branch
      %127 = sbr.rel (%p125) target = $region24
    $region23: #{ae_paired_forward.27} parent=5 // pred_region
      // Predicated region
      $region25: #{ae_paired_forward.27} parent=23 // pred_check
        %p128 = pneg %p29
      $region26: #{ae_paired_forward.27} parent=23 // pred_check_branch
        %130 = sbr.rel (%p128) target = $region28
      $region27: #{ae_paired_forward.27} parent=23 // pred_region
        %s131 = smul.u32 32, %s9
        %p132 = scmp.lt.s32.totalorder %s131, 63
        %s133 = scalar_select %p132, %s131, 63
        %s134 = smul.addr %s133, 2
        %s135 = smul.addr %s134, 8
        %s136 = scalar_lea.vmem %s0, %s135
        %s137 = smul.u32 32, %s9
      $region28: #{ae_paired_forward.27} parent=23 // pred_fallthru
        _
    $region24: #{ae_paired_forward.27} parent=5 // pred_fallthru
      _
    %p138 = scmp.le.s32.totalorder 1, %s9
    %p139 = scmp.lt.s32.totalorder %s9, 3
    %p140 = pnand %p138, %p139
    %p141 = pneg %p140
    // Predicated region
    $region29: #{ae_paired_forward.27} parent=5 // pred_check
      _
    $region30: #{ae_paired_forward.27} parent=5 // pred_check_branch
      %143 = sbr.rel (%p140) target = $region32
    $region31: #{ae_paired_forward.27} parent=5 // pred_region
      %s144 = ssub.s32 %s9, 1
      %s145 = smul.u32 32, %s14
      %p146 = scmp.lt.s32.totalorder %s145, 63
      %s147 = scalar_select %p146, %s145, 63
      %s148 = smul.addr %s147, 2
      %s149 = smul.addr %s148, 8
      %s150 = scalar_lea.vmem %s0, %s149
      %p151 = pneg %p35
      %p152 = pneg %p32
      %p153 = pneg %p56
      %p154 = pneg %p53
      %p155 = pneg %p77
      %p156 = pneg %p74
      %p157 = pneg %p103
      %p158 = pneg %p100
      %s159 = smul.u32 32, %s14
      %p160 = scmp.lt.s32.totalorder %s159, 63
      %s161 = scalar_select %p160, %s159, 63
      %s162 = smul.addr %s161, 8
      %s163 = scalar_lea.vmem %s3, %s162
      %s164 = smul.u32 32, %s14
      %p165 = scmp.lt.s32.totalorder %s164, 63
      %s166 = scalar_select %p165, %s164, 63
      %s167 = smul.addr %s166, 2
      %s168 = smul.addr %s167, 8
      %s169 = scalar_lea.vmem %s0, %s168
      %s170 = smul.u32 32, %s14
      %s171 = smul.u32 32, %s14
      %p172 = scmp.lt.s32.totalorder %s171, 63
      %s173 = scalar_select %p172, %s171, 63
      %s174 = smul.addr %s173, 8
      %s175 = scalar_lea.vmem %s3, %s174
      %s176 = smul.u32 32, %s14
      %v177 = vld [vmem:[%s169] sm:$0xff]
      %v178 = vld [vmem:[%s169 + $0x8] sm:$0xff]
      %v179 = vld [vmem:[%s169 + $0x10] sm:$0xff]
      %v180 = vld [vmem:[%s169 + $0x18] sm:$0xff]
      %v181 = vld [vmem:[%s169 + $0x20] sm:$0xff]
      %v182 = vld [vmem:[%s169 + $0x28] sm:$0xff]
      %v183 = vld [vmem:[%s169 + $0x30] sm:$0xff]
      %v184 = vld [vmem:[%s169 + $0x38] sm:$0xff]
      %v185 = vld [vmem:[%s169 + $0x40] sm:$0xff]
      %v186 = vld [vmem:[%s169 + $0x48] sm:$0xff]
      %v187 = vld [vmem:[%s169 + $0x50] sm:$0xff]
      %v188 = vld [vmem:[%s169 + $0x58] sm:$0xff]
      %v189 = vld [vmem:[%s169 + $0x60] sm:$0xff]
      %v190 = vld [vmem:[%s169 + $0x68] sm:$0xff]
      %v191 = vld [vmem:[%s169 + $0x70] sm:$0xff]
      %v192 = vld [vmem:[%s169 + $0x78] sm:$0xff]
      %v193 = vld [vmem:[%s169 + $0x80] sm:$0xff]
      %v194 = vld [vmem:[%s169 + $0x88] sm:$0xff]
      %v195 = vld [vmem:[%s169 + $0x90] sm:$0xff]
      %v196 = vld [vmem:[%s169 + $0x98] sm:$0xff]
      %v197 = vld [vmem:[%s169 + $0xa0] sm:$0xff]
      %v198 = vld [vmem:[%s169 + $0xa8] sm:$0xff]
      %v199 = vld [vmem:[%s169 + $0xb0] sm:$0xff]
      %v200 = vld [vmem:[%s169 + $0xb8] sm:$0xff]
      %v201 = vld [vmem:[%s169 + $0xc0] sm:$0xff]
      %v202 = vld [vmem:[%s169 + $0xc8] sm:$0xff]
      %v203 = vld [vmem:[%s169 + $0xd0] sm:$0xff]
      %v204 = vld [vmem:[%s169 + $0xd8] sm:$0xff]
      %v205 = vld [vmem:[%s169 + $0xe0] sm:$0xff]
      %v206 = vld [vmem:[%s169 + $0xe8] sm:$0xff]
      %v207 = vld [vmem:[%s169 + $0xf0] sm:$0xff]
      %v208 = vld [vmem:[%s169 + $0xf8] sm:$0xff]
      %v209 = vld [vmem:[%s169 + $0x100] sm:$0xff]
      %v210 = vld [vmem:[%s169 + $0x108] sm:$0xff]
      %v211 = vld [vmem:[%s169 + $0x110] sm:$0xff]
      %v212 = vld [vmem:[%s169 + $0x118] sm:$0xff]
      %v213 = vld [vmem:[%s169 + $0x120] sm:$0xff]
      %v214 = vld [vmem:[%s169 + $0x128] sm:$0xff]
      %v215 = vld [vmem:[%s169 + $0x130] sm:$0xff]
      %v216 = vld [vmem:[%s169 + $0x138] sm:$0xff]
      %v217 = vld [vmem:[%s169 + $0x140] sm:$0xff]
      %v218 = vld [vmem:[%s169 + $0x148] sm:$0xff]
      %v219 = vld [vmem:[%s169 + $0x150] sm:$0xff]
      %v220 = vld [vmem:[%s169 + $0x158] sm:$0xff]
      %v221 = vld [vmem:[%s169 + $0x160] sm:$0xff]
      %v222 = vld [vmem:[%s169 + $0x168] sm:$0xff]
      %v223 = vld [vmem:[%s169 + $0x170] sm:$0xff]
      %v224 = vld [vmem:[%s169 + $0x178] sm:$0xff]
      %v225 = vld [vmem:[%s169 + $0x180] sm:$0xff]
      %v226 = vld [vmem:[%s169 + $0x188] sm:$0xff]
      %v227 = vld [vmem:[%s169 + $0x190] sm:$0xff]
      %v228 = vld [vmem:[%s169 + $0x198] sm:$0xff]
      %v229 = vld [vmem:[%s169 + $0x1a0] sm:$0xff]
      %v230 = vld [vmem:[%s169 + $0x1a8] sm:$0xff]
      %v231 = vld [vmem:[%s169 + $0x1b0] sm:$0xff]
      %v232 = vld [vmem:[%s169 + $0x1b8] sm:$0xff]
      %v233 = vld [vmem:[%s169 + $0x1c0] sm:$0xff]
      %v234 = vld [vmem:[%s169 + $0x1c8] sm:$0xff]
      %v235 = vld [vmem:[%s169 + $0x1d0] sm:$0xff]
      %v236 = vld [vmem:[%s169 + $0x1d8] sm:$0xff]
      %v237 = vld [vmem:[%s169 + $0x1e0] sm:$0xff]
      %v238 = vld [vmem:[%s169 + $0x1e8] sm:$0xff]
      %v239 = vld [vmem:[%s169 + $0x1f0] sm:$0xff]
      %v240 = vld [vmem:[%s169 + $0x1f8] sm:$0xff]
      %v241 = vld [vmem:[%s1] sm:$0xff]
      %v242 = vld [vmem:[%s1 + $0x8] sm:$0xff]
      %v243 = vld [vmem:[%s1 + $0x10] sm:$0xff]
      %v244 = vld [vmem:[%s1 + $0x18] sm:$0xff]
      %v245 = vld [vmem:[%s1 + $0x20] sm:$0xff]
      %v246 = vld [vmem:[%s1 + $0x28] sm:$0xff]
      %v247 = vld [vmem:[%s1 + $0x30] sm:$0xff]
      %v248 = vld [vmem:[%s1 + $0x38] sm:$0xff]
      %v249 = vld [vmem:[%s1 + $0x40] sm:$0xff]
      %v250 = vld [vmem:[%s1 + $0x48] sm:$0xff]
      %v251 = vld [vmem:[%s1 + $0x50] sm:$0xff]
      %v252 = vld [vmem:[%s1 + $0x58] sm:$0xff]
      %v253 = vld [vmem:[%s1 + $0x60] sm:$0xff]
      %v254 = vld [vmem:[%s1 + $0x68] sm:$0xff]
      %v255 = vld [vmem:[%s1 + $0x70] sm:$0xff]
      %v256 = vld [vmem:[%s1 + $0x78] sm:$0xff]
      %v257 = vld [vmem:[%s1 + $0x80] sm:$0xff]
      %v258 = vld [vmem:[%s1 + $0x88] sm:$0xff]
      %v259 = vld [vmem:[%s2] sm:$0x1]
      %v261 = vlaneseq
      %v262 = vshrl.u32 %v261, 7
      %v263 = vsub.s32 0, %v262
      %v264 = vrot.slane %v259, %v263
      %vm266 = vcmask 130048
      %v268 = vsel %vm266, %v178, 0
      %v271 = vsel %vm266, %v180, 0
      %v274 = vsel %vm266, %v182, 0
      %v277 = vsel %vm266, %v184, 0
      %v280 = vsel %vm266, %v186, 0
      %v283 = vsel %vm266, %v188, 0
      %v286 = vsel %vm266, %v190, 0
      %v289 = vsel %vm266, %v192, 0
      %v292 = vsel %vm266, %v194, 0
      %v295 = vsel %vm266, %v196, 0
      %v298 = vsel %vm266, %v198, 0
      %v301 = vsel %vm266, %v200, 0
      %v304 = vsel %vm266, %v202, 0
      %v307 = vsel %vm266, %v204, 0
      %v310 = vsel %vm266, %v206, 0
      %v313 = vsel %vm266, %v208, 0
      %v316 = vsel %vm266, %v210, 0
      %v319 = vsel %vm266, %v212, 0
      %v322 = vsel %vm266, %v214, 0
      %v325 = vsel %vm266, %v216, 0
      %v328 = vsel %vm266, %v218, 0
      %v331 = vsel %vm266, %v220, 0
      %v334 = vsel %vm266, %v222, 0
      %v337 = vsel %vm266, %v224, 0
      %v340 = vsel %vm266, %v226, 0
      %v343 = vsel %vm266, %v228, 0
      %v346 = vsel %vm266, %v230, 0
      %v349 = vsel %vm266, %v232, 0
      %v352 = vsel %vm266, %v234, 0
      %v355 = vsel %vm266, %v236, 0
      %v358 = vsel %vm266, %v238, 0
      %v361 = vsel %vm266, %v240, 0
      %363 = vmatprep.subr.mxu0 0.0
      %364 = vmatpush1.msra.mxu0 %v241
      %365 = vmatprep.subr.mxu0 0.0
      %366 = vmatpush1.msra.mxu0 %v242
      %367 = vmatprep.subr.mxu0 0.0
      %368 = vmatpush1.msra.mxu0 %v243
      %369 = vmatprep.subr.mxu0 0.0
      %370 = vmatpush1.msra.mxu0 %v244
      %371 = vmatprep.subr.mxu0 0.0
      %372 = vmatpush1.msra.mxu0 %v245
      %373 = vmatprep.subr.mxu0 0.0
      %374 = vmatpush1.msra.mxu0 %v246
      %375 = vmatprep.subr.mxu0 0.0
      %376 = vmatpush1.msra.mxu0 %v247
      %377 = vmatprep.subr.mxu0 0.0
      %378 = vmatpush1.msra.mxu0 %v248
      %379 = vmatprep.subr.mxu0 0.0
      %380 = vmatpush1.msra.mxu0 %v249
      %381 = vmatprep.subr.mxu0 0.0
      %382 = vmatpush1.msra.mxu0 %v250
      %383 = vmatprep.subr.mxu0 0.0
      %384 = vmatpush1.msra.mxu0 %v251
      %385 = vmatprep.subr.mxu0 0.0
      %386 = vmatpush1.msra.mxu0 %v252
      %387 = vmatprep.subr.mxu0 0.0
      %388 = vmatpush1.msra.mxu0 %v253
      %389 = vmatprep.subr.mxu0 0.0
      %390 = vmatpush1.msra.mxu0 %v254
      %391 = vmatprep.subr.mxu0 0.0
      %392 = vmatpush1.msra.mxu0 %v255
      %393 = vmatprep.subr.mxu0 0.0
      %394 = vmatpush1.msra.mxu0 %v256
      %395 = vmatprep.subr.mxu0 0.0
      %396 = vmatpush1.msra.mxu0 %v257
      %397 = vmatprep.subr.mxu0 0.0
      %398 = vmatpush1.msra.mxu0 %v258
      %399 = vmatprep.subr.mxu0 0.0
      %400 = vmatpush1.msra.mxu0 0.0
      %401 = vmatprep.subr.mxu0 0.0
      %402 = vmatpush1.msra.mxu0 0.0
      %403 = vmatprep.subr.mxu0 0.0
      %404 = vmatpush1.msra.mxu0 0.0
      %405 = vmatprep.subr.mxu0 0.0
      %406 = vmatpush1.msra.mxu0 0.0
      %407 = vmatprep.subr.mxu0 0.0
      %408 = vmatpush1.msra.mxu0 0.0
      %409 = vmatprep.subr.mxu0 0.0
      %410 = vmatpush1.msra.mxu0 0.0
      %411 = vmatprep.subr.mxu0 0.0
      %412 = vmatpush1.msra.mxu0 0.0
      %413 = vmatprep.subr.mxu0 0.0
      %414 = vmatpush1.msra.mxu0 0.0
      %415 = vmatprep.subr.mxu0 0.0
      %416 = vmatpush1.msra.mxu0 0.0
      %417 = vmatprep.subr.mxu0 0.0
      %418 = vmatpush1.msra.mxu0 0.0
      %419 = vmatprep.subr.mxu0 0.0
      %420 = vmatpush1.msra.mxu0 0.0
      %421 = vmatprep.subr.mxu0 0.0
      %422 = vmatpush1.msra.mxu0 0.0
      %423 = vmatprep.subr.mxu0 0.0
      %424 = vmatpush1.msra.mxu0 0.0
      %425 = vmatprep.subr.mxu0 0.0
      %426 = vmatpush1.msra.mxu0 0.0
      %427 = vmatprep.mubr.f32.mxu0 %v268
      %428 = vmatmul.mubr.f32.gmra.mrb[0].mxu0 %v177
      %v429 = vpop.f32.mrb[0].mxu0
      %v430 = vadd.f32 %v264, %v429
      %v431 = vpop.f32.mrb[0].mxu0
      %432 = vmatprep.mubr.f32.mxu0 %v271
      %433 = vmatmul.mubr.f32.gmra.mrb[0].mxu0 %v179
      %v434 = vpop.f32.mrb[0].mxu0
      %v435 = vadd.f32 %v264, %v434
      %v436 = vpop.f32.mrb[0].mxu0
      %437 = vmatprep.mubr.f32.mxu0 %v274
      %438 = vmatmul.mubr.f32.gmra.mrb[0].mxu0 %v181
      %v439 = vpop.f32.mrb[0].mxu0
      %v440 = vadd.f32 %v264, %v439
      %v441 = vpop.f32.mrb[0].mxu0
      %442 = vmatprep.mubr.f32.mxu0 %v277
      %443 = vmatmul.mubr.f32.gmra.mrb[0].mxu0 %v183
      %v444 = vpop.f32.mrb[0].mxu0
      %v445 = vadd.f32 %v264, %v444
      %v446 = vpop.f32.mrb[0].mxu0
      %447 = vmatprep.mubr.f32.mxu0 %v280
      %448 = vmatmul.mubr.f32.gmra.mrb[0].mxu0 %v185
      %v449 = vpop.f32.mrb[0].mxu0
      %v450 = vadd.f32 %v264, %v449
      %v451 = vpop.f32.mrb[0].mxu0
      %452 = vmatprep.mubr.f32.mxu0 %v283
      %453 = vmatmul.mubr.f32.gmra.mrb[0].mxu0 %v187
      %v454 = vpop.f32.mrb[0].mxu0
      %v455 = vadd.f32 %v264, %v454
      %v456 = vpop.f32.mrb[0].mxu0
      %457 = vmatprep.mubr.f32.mxu0 %v286
      %458 = vmatmul.mubr.f32.gmra.mrb[0].mxu0 %v189
      %v459 = vpop.f32.mrb[0].mxu0
      %v460 = vadd.f32 %v264, %v459
      %v461 = vpop.f32.mrb[0].mxu0
      %462 = vmatprep.mubr.f32.mxu0 %v289
      %463 = vmatmul.mubr.f32.gmra.mrb[0].mxu0 %v191
      %v464 = vpop.f32.mrb[0].mxu0
      %v465 = vadd.f32 %v264, %v464
      %v466 = vpop.f32.mrb[0].mxu0
      %467 = vmatprep.mubr.f32.mxu0 %v292
      %468 = vmatmul.mubr.f32.gmra.mrb[0].mxu0 %v193
      %v469 = vpop.f32.mrb[0].mxu0
      %v470 = vadd.f32 %v264, %v469
      %v471 = vpop.f32.mrb[0].mxu0
      %472 = vmatprep.mubr.f32.mxu0 %v295
      %473 = vmatmul.mubr.f32.gmra.mrb[0].mxu0 %v195
      %v474 = vpop.f32.mrb[0].mxu0
      %v475 = vadd.f32 %v264, %v474
      %v476 = vpop.f32.mrb[0].mxu0
      %477 = vmatprep.mubr.f32.mxu0 %v298
      %478 = vmatmul.mubr.f32.gmra.mrb[0].mxu0 %v197
      %v479 = vpop.f32.mrb[0].mxu0
      %v480 = vadd.f32 %v264, %v479
      %v481 = vpop.f32.mrb[0].mxu0
      %482 = vmatprep.mubr.f32.mxu0 %v301
      %483 = vmatmul.mubr.f32.gmra.mrb[0].mxu0 %v199
      %v484 = vpop.f32.mrb[0].mxu0
      %v485 = vadd.f32 %v264, %v484
      %v486 = vpop.f32.mrb[0].mxu0
      %487 = vmatprep.mubr.f32.mxu0 %v304
      %488 = vmatmul.mubr.f32.gmra.mrb[0].mxu0 %v201
      %v489 = vpop.f32.mrb[0].mxu0
      %v490 = vadd.f32 %v264, %v489
      %v491 = vpop.f32.mrb[0].mxu0
      %492 = vmatprep.mubr.f32.mxu0 %v307
      %493 = vmatmul.mubr.f32.gmra.mrb[0].mxu0 %v203
      %v494 = vpop.f32.mrb[0].mxu0
      %v495 = vadd.f32 %v264, %v494
      %v496 = vpop.f32.mrb[0].mxu0
      %497 = vmatprep.mubr.f32.mxu0 %v310
      %498 = vmatmul.mubr.f32.gmra.mrb[0].mxu0 %v205
      %v499 = vpop.f32.mrb[0].mxu0
      %v500 = vadd.f32 %v264, %v499
      %v501 = vpop.f32.mrb[0].mxu0
      %502 = vmatprep.mubr.f32.mxu0 %v313
      %503 = vmatmul.mubr.f32.gmra.mrb[0].mxu0 %v207
      %v504 = vpop.f32.mrb[0].mxu0
      %v505 = vadd.f32 %v264, %v504
      %v506 = vpop.f32.mrb[0].mxu0
      %507 = vmatprep.mubr.f32.mxu0 %v316
      %508 = vmatmul.mubr.f32.gmra.mrb[0].mxu0 %v209
      %v509 = vpop.f32.mrb[0].mxu0
      %v510 = vadd.f32 %v264, %v509
      %v511 = vpop.f32.mrb[0].mxu0
      %512 = vmatprep.mubr.f32.mxu0 %v319
      %513 = vmatmul.mubr.f32.gmra.mrb[0].mxu0 %v211
      %v514 = vpop.f32.mrb[0].mxu0
      %v515 = vadd.f32 %v264, %v514
      %v516 = vpop.f32.mrb[0].mxu0
      %517 = vmatprep.mubr.f32.mxu0 %v322
      %518 = vmatmul.mubr.f32.gmra.mrb[0].mxu0 %v213
      %v519 = vpop.f32.mrb[0].mxu0
      %v520 = vadd.f32 %v264, %v519
      %v521 = vpop.f32.mrb[0].mxu0
      %522 = vmatprep.mubr.f32.mxu0 %v325
      %523 = vmatmul.mubr.f32.gmra.mrb[0].mxu0 %v215
      %v524 = vpop.f32.mrb[0].mxu0
      %v525 = vadd.f32 %v264, %v524
      %v526 = vpop.f32.mrb[0].mxu0
      %527 = vmatprep.mubr.f32.mxu0 %v328
      %528 = vmatmul.mubr.f32.gmra.mrb[0].mxu0 %v217
      %v529 = vpop.f32.mrb[0].mxu0
      %v530 = vadd.f32 %v264, %v529
      %v531 = vpop.f32.mrb[0].mxu0
      %532 = vmatprep.mubr.f32.mxu0 %v331
      %533 = vmatmul.mubr.f32.gmra.mrb[0].mxu0 %v219
      %v534 = vpop.f32.mrb[0].mxu0
      %v535 = vadd.f32 %v264, %v534
      %v536 = vpop.f32.mrb[0].mxu0
      %537 = vmatprep.mubr.f32.mxu0 %v334
      %538 = vmatmul.mubr.f32.gmra.mrb[0].mxu0 %v221
      %v539 = vpop.f32.mrb[0].mxu0
      %v540 = vadd.f32 %v264, %v539
      %v541 = vpop.f32.mrb[0].mxu0
      %542 = vmatprep.mubr.f32.mxu0 %v337
      %543 = vmatmul.mubr.f32.gmra.mrb[0].mxu0 %v223
      %v544 = vpop.f32.mrb[0].mxu0
      %v545 = vadd.f32 %v264, %v544
      %v546 = vpop.f32.mrb[0].mxu0
      %547 = vmatprep.mubr.f32.mxu0 %v340
      %548 = vmatmul.mubr.f32.gmra.mrb[0].mxu0 %v225
      %v549 = vpop.f32.mrb[0].mxu0
      %v550 = vadd.f32 %v264, %v549
      %v551 = vpop.f32.mrb[0].mxu0
      %552 = vmatprep.mubr.f32.mxu0 %v343
      %553 = vmatmul.mubr.f32.gmra.mrb[0].mxu0 %v227
      %v554 = vpop.f32.mrb[0].mxu0
      %v555 = vadd.f32 %v264, %v554
      %v556 = vpop.f32.mrb[0].mxu0
      %557 = vmatprep.mubr.f32.mxu0 %v346
      %558 = vmatmul.mubr.f32.gmra.mrb[0].mxu0 %v229
      %v559 = vpop.f32.mrb[0].mxu0
      %v560 = vadd.f32 %v264, %v559
      %v561 = vpop.f32.mrb[0].mxu0
      %562 = vmatprep.mubr.f32.mxu0 %v349
      %563 = vmatmul.mubr.f32.gmra.mrb[0].mxu0 %v231
      %v564 = vpop.f32.mrb[0].mxu0
      %v565 = vadd.f32 %v264, %v564
      %v566 = vpop.f32.mrb[0].mxu0
      %567 = vmatprep.mubr.f32.mxu0 %v352
      %568 = vmatmul.mubr.f32.gmra.mrb[0].mxu0 %v233
      %v569 = vpop.f32.mrb[0].mxu0
      %v570 = vadd.f32 %v264, %v569
      %v571 = vpop.f32.mrb[0].mxu0
      %572 = vmatprep.mubr.f32.mxu0 %v355
      %573 = vmatmul.mubr.f32.gmra.mrb[0].mxu0 %v235
      %v574 = vpop.f32.mrb[0].mxu0
      %v575 = vadd.f32 %v264, %v574
      %v576 = vpop.f32.mrb[0].mxu0
      %577 = vmatprep.mubr.f32.mxu0 %v358
      %578 = vmatmul.mubr.f32.gmra.mrb[0].mxu0 %v237
      %v579 = vpop.f32.mrb[0].mxu0
      %v580 = vadd.f32 %v264, %v579
      %v581 = vpop.f32.mrb[0].mxu0
      %582 = vmatprep.mubr.f32.mxu0 %v361
      %583 = vmatmul.mubr.f32.gmra.mrb[0].mxu0 %v239
      %v584 = vpop.f32.mrb[0].mxu0
      %v585 = vadd.f32 %v264, %v584
      %v586 = vpop.f32.mrb[0].mxu0
      %587 = vdwg.mxu0
      %v588 = vmax.f32 %v430, 0.0
      %v589 = vmax.f32 %v435, 0.0
      %v590 = vmax.f32 %v440, 0.0
      %v591 = vmax.f32 %v445, 0.0
      %v592 = vmax.f32 %v450, 0.0
      %v593 = vmax.f32 %v455, 0.0
      %v594 = vmax.f32 %v460, 0.0
      %v595 = vmax.f32 %v465, 0.0
      %v596 = vmax.f32 %v470, 0.0
      %v597 = vmax.f32 %v475, 0.0
      %v598 = vmax.f32 %v480, 0.0
      %v599 = vmax.f32 %v485, 0.0
      %v600 = vmax.f32 %v490, 0.0
      %v601 = vmax.f32 %v495, 0.0
      %v602 = vmax.f32 %v500, 0.0
      %v603 = vmax.f32 %v505, 0.0
      %v604 = vmax.f32 %v510, 0.0
      %v605 = vmax.f32 %v515, 0.0
      %v606 = vmax.f32 %v520, 0.0
      %v607 = vmax.f32 %v525, 0.0
      %v608 = vmax.f32 %v530, 0.0
      %v609 = vmax.f32 %v535, 0.0
      %v610 = vmax.f32 %v540, 0.0
      %v611 = vmax.f32 %v545, 0.0
      %v612 = vmax.f32 %v550, 0.0
      %v613 = vmax.f32 %v555, 0.0
      %v614 = vmax.f32 %v560, 0.0
      %v615 = vmax.f32 %v565, 0.0
      %v616 = vmax.f32 %v570, 0.0
      %v617 = vmax.f32 %v575, 0.0
      %v618 = vmax.f32 %v580, 0.0
      %v619 = vmax.f32 %v585, 0.0
      %620 = vst.msk [vmem:[%s175] sm:$0xff] %vm266, %v588
      %621 = vst.msk [vmem:[%s175 + $0x8] sm:$0xff] %vm266, %v589
      %622 = vst.msk [vmem:[%s175 + $0x10] sm:$0xff] %vm266, %v590
      %623 = vst.msk [vmem:[%s175 + $0x18] sm:$0xff] %vm266, %v591
      %624 = vst.msk [vmem:[%s175 + $0x20] sm:$0xff] %vm266, %v592
      %625 = vst.msk [vmem:[%s175 + $0x28] sm:$0xff] %vm266, %v593
      %626 = vst.msk [vmem:[%s175 + $0x30] sm:$0xff] %vm266, %v594
      %627 = vst.msk [vmem:[%s175 + $0x38] sm:$0xff] %vm266, %v595
      %628 = vst.msk [vmem:[%s175 + $0x40] sm:$0xff] %vm266, %v596
      %629 = vst.msk [vmem:[%s175 + $0x48] sm:$0xff] %vm266, %v597
      %630 = vst.msk [vmem:[%s175 + $0x50] sm:$0xff] %vm266, %v598
      %631 = vst.msk [vmem:[%s175 + $0x58] sm:$0xff] %vm266, %v599
      %632 = vst.msk [vmem:[%s175 + $0x60] sm:$0xff] %vm266, %v600
      %633 = vst.msk [vmem:[%s175 + $0x68] sm:$0xff] %vm266, %v601
      %634 = vst.msk [vmem:[%s175 + $0x70] sm:$0xff] %vm266, %v602
      %635 = vst.msk [vmem:[%s175 + $0x78] sm:$0xff] %vm266, %v603
      %636 = vst.msk [vmem:[%s175 + $0x80] sm:$0xff] %vm266, %v604
      %637 = vst.msk [vmem:[%s175 + $0x88] sm:$0xff] %vm266, %v605
      %638 = vst.msk [vmem:[%s175 + $0x90] sm:$0xff] %vm266, %v606
      %639 = vst.msk [vmem:[%s175 + $0x98] sm:$0xff] %vm266, %v607
      %640 = vst.msk [vmem:[%s175 + $0xa0] sm:$0xff] %vm266, %v608
      %641 = vst.msk [vmem:[%s175 + $0xa8] sm:$0xff] %vm266, %v609
      %642 = vst.msk [vmem:[%s175 + $0xb0] sm:$0xff] %vm266, %v610
      %643 = vst.msk [vmem:[%s175 + $0xb8] sm:$0xff] %vm266, %v611
      %644 = vst.msk [vmem:[%s175 + $0xc0] sm:$0xff] %vm266, %v612
      %645 = vst.msk [vmem:[%s175 + $0xc8] sm:$0xff] %vm266, %v613
      %646 = vst.msk [vmem:[%s175 + $0xd0] sm:$0xff] %vm266, %v614
      %647 = vst.msk [vmem:[%s175 + $0xd8] sm:$0xff] %vm266, %v615
      %648 = vst.msk [vmem:[%s175 + $0xe0] sm:$0xff] %vm266, %v616
      %649 = vst.msk [vmem:[%s175 + $0xe8] sm:$0xff] %vm266, %v617
      %650 = vst.msk [vmem:[%s175 + $0xf0] sm:$0xff] %vm266, %v618
      %651 = vst.msk [vmem:[%s175 + $0xf8] sm:$0xff] %vm266, %v619
      %s652 = smul.u32 32, %s14
      %p653 = scmp.lt.s32.totalorder %s652, 63
      %s654 = scalar_select %p653, %s652, 63
      %s655 = smul.addr %s654, 8
      %s656 = scalar_lea.vmem %s3, %s655
      // Predicated region
      $region33: #{ae_paired_forward.27} parent=31 // pred_check
        %p657 = pneg %p100
      $region34: #{ae_paired_forward.27} parent=31 // pred_check_branch
        %659 = sbr.rel (%p657) target = $region36
      $region35: #{ae_paired_forward.27} parent=31 // pred_region
        %s660 = smul.u32 32, %s14
      $region36: #{ae_paired_forward.27} parent=31 // pred_fallthru
        _
    $region32: #{ae_paired_forward.27} parent=5 // pred_fallthru
      _
    %p661 = scmp.le.s32.totalorder 2, %s9
    // Predicated region
    $region37: #{ae_paired_forward.27} parent=5 // pred_check
      %p662 = pneg %p661
    $region38: #{ae_paired_forward.27} parent=5 // pred_check_branch
      %664 = sbr.rel (%p662) target = $region40
    $region39: #{ae_paired_forward.27} parent=5 // pred_region
      %s665 = ssub.s32 %s9, 2
      // Predicated region
      $region41: #{ae_paired_forward.27} parent=39 // pred_check
        %p666 = pneg %p106
      $region42: #{ae_paired_forward.27} parent=39 // pred_check_branch
        %668 = sbr.rel (%p666) target = $region44
      $region43: #{ae_paired_forward.27} parent=39 // pred_region
        %s669 = smul.u32 32, %s15
        %p670 = scmp.lt.s32.totalorder %s669, 63
        %s671 = scalar_select %p670, %s669, 63
        %s672 = smul.addr %s671, 8
        %s673 = scalar_lea.vmem %s3, %s672
      $region44: #{ae_paired_forward.27} parent=39 // pred_fallthru
        _
    $region40: #{ae_paired_forward.27} parent=5 // pred_fallthru
      _
  $region6: #{ae_paired_forward.27} parent=0 // loop_footer
    %s13 = sadd.s32 1, %s9
  $region7: #{ae_paired_forward.27} parent=0 // loop_footer_branch
    %8 = sbr.rel target = $region3
  $region8: #{ae_paired_forward.27} parent=0 // loop_exit
    _

// kernel: ae_paired_forward.31
$region0: #{ae_paired_forward.31}
  #allocation0 [shape = 'u32[]', space=smem, size = 0x4, offset = 0x4, fixed_abs, tag = 'smem constant byte address 0x4 - core index']
  #allocation1 [shape = 'u32[144,128]{1,0:T(1,128)}', space=vmem, size = 0x12000, scoped, tag = 'internal scratch']
  %s0 = inlined_call_operand.vmem [shape: f32[128,256], index: 0, kind: input, shape index: {}]
  %s1 = inlined_call_operand.vmem [shape: f32[256,16], index: 1, kind: input, shape index: {}]
  %s2 = inlined_call_operand.vmem [shape: f32[1,16], index: 2, kind: input, shape index: {}]
  %s3 = inlined_call_operand.vmem [shape: f32[1,16], index: 3, kind: input, shape index: {}]
  %s4 = inlined_call_operand.vmem [shape: f32[1,16], index: 4, kind: input, shape index: {}]
  %s5 = inlined_call_operand.vmem [shape: f32[128,16], index: 5, kind: output, shape index: {}]
  %s6 = sld [smem:[#allocation0]]
  $region30: #{ae_paired_forward.31} parent=0
    _
  %s8 = ssub.s32 1, %s6
  %s9 = scalar_select 0, %s8, %s6
  // Predicated region
  $region2: #{ae_paired_forward.31} parent=0 // pred_check
    _
  $region3: #{ae_paired_forward.31} parent=0 // pred_check_branch
    %11 = sbr.rel (0) target = $region5
  $region4: #{ae_paired_forward.31} parent=0 // pred_region
    _
  $region5: #{ae_paired_forward.31} parent=0 // pred_fallthru
    _
  // Predicated region
  $region6: #{ae_paired_forward.31} parent=0 // pred_check
    _
  $region7: #{ae_paired_forward.31} parent=0 // pred_check_branch
    %13 = sbr.rel (0) target = $region9
  $region8: #{ae_paired_forward.31} parent=0 // pred_region
    _
  $region9: #{ae_paired_forward.31} parent=0 // pred_fallthru
    _
  // Predicated region
  $region10: #{ae_paired_forward.31} parent=0 // pred_check
    _
  $region11: #{ae_paired_forward.31} parent=0 // pred_check_branch
    %15 = sbr.rel (0) target = $region13
  $region12: #{ae_paired_forward.31} parent=0 // pred_region
    _
  $region13: #{ae_paired_forward.31} parent=0 // pred_fallthru
    _
  // Predicated region
  $region14: #{ae_paired_forward.31} parent=0 // pred_check
    _
  $region15: #{ae_paired_forward.31} parent=0 // pred_check_branch
    %17 = sbr.rel (0) target = $region17
  $region16: #{ae_paired_forward.31} parent=0 // pred_region
    _
  $region17: #{ae_paired_forward.31} parent=0 // pred_fallthru
    _
  // Predicated region
  $region18: #{ae_paired_forward.31} parent=0 // pred_check
    _
  $region19: #{ae_paired_forward.31} parent=0 // pred_check_branch
    %19 = sbr.rel (0) target = $region21
  $region20: #{ae_paired_forward.31} parent=0 // pred_region
    _
  $region21: #{ae_paired_forward.31} parent=0 // pred_fallthru
    _
  %v20 = vld [vmem:[%s0] sm:$0xff]
  %v21 = vld [vmem:[%s0 + $0x8] sm:$0xff]
  %v22 = vld [vmem:[%s0 + $0x10] sm:$0xff]
  %v23 = vld [vmem:[%s0 + $0x18] sm:$0xff]
  %v24 = vld [vmem:[%s0 + $0x20] sm:$0xff]
  %v25 = vld [vmem:[%s0 + $0x28] sm:$0xff]
  %v26 = vld [vmem:[%s0 + $0x30] sm:$0xff]
  %v27 = vld [vmem:[%s0 + $0x38] sm:$0xff]
  %v28 = vld [vmem:[%s0 + $0x40] sm:$0xff]
  %v29 = vld [vmem:[%s0 + $0x48] sm:$0xff]
  %v30 = vld [vmem:[%s0 + $0x50] sm:$0xff]
  %v31 = vld [vmem:[%s0 + $0x58] sm:$0xff]
  %v32 = vld [vmem:[%s0 + $0x60] sm:$0xff]
  %v33 = vld [vmem:[%s0 + $0x68] sm:$0xff]
  %v34 = vld [vmem:[%s0 + $0x70] sm:$0xff]
  %v35 = vld [vmem:[%s0 + $0x78] sm:$0xff]
  %v36 = vld [vmem:[%s0 + $0x80] sm:$0xff]
  %v37 = vld [vmem:[%s0 + $0x88] sm:$0xff]
  %v38 = vld [vmem:[%s0 + $0x90] sm:$0xff]
  %v39 = vld [vmem:[%s0 + $0x98] sm:$0xff]
  %v40 = vld [vmem:[%s0 + $0xa0] sm:$0xff]
  %v41 = vld [vmem:[%s0 + $0xa8] sm:$0xff]
  %v42 = vld [vmem:[%s0 + $0xb0] sm:$0xff]
  %v43 = vld [vmem:[%s0 + $0xb8] sm:$0xff]
  %v44 = vld [vmem:[%s0 + $0xc0] sm:$0xff]
  %v45 = vld [vmem:[%s0 + $0xc8] sm:$0xff]
  %v46 = vld [vmem:[%s0 + $0xd0] sm:$0xff]
  %v47 = vld [vmem:[%s0 + $0xd8] sm:$0xff]
  %v48 = vld [vmem:[%s0 + $0xe0] sm:$0xff]
  %v49 = vld [vmem:[%s0 + $0xe8] sm:$0xff]
  %v50 = vld [vmem:[%s0 + $0xf0] sm:$0xff]
  %v51 = vld [vmem:[%s0 + $0xf8] sm:$0xff]
  %v52 = vld [vmem:[%s1] sm:$0xff]
  %v53 = vld [vmem:[%s1 + $0x8] sm:$0xff]
  %v54 = vld [vmem:[%s1 + $0x10] sm:$0xff]
  %v55 = vld [vmem:[%s1 + $0x18] sm:$0xff]
  %v56 = vld [vmem:[%s1 + $0x20] sm:$0xff]
  %v57 = vld [vmem:[%s1 + $0x28] sm:$0xff]
  %v58 = vld [vmem:[%s1 + $0x30] sm:$0xff]
  %v59 = vld [vmem:[%s1 + $0x38] sm:$0xff]
  %v60 = vld [vmem:[%s1 + $0x40] sm:$0xff]
  %v61 = vld [vmem:[%s1 + $0x48] sm:$0xff]
  %v62 = vld [vmem:[%s1 + $0x50] sm:$0xff]
  %v63 = vld [vmem:[%s1 + $0x58] sm:$0xff]
  %v64 = vld [vmem:[%s1 + $0x60] sm:$0xff]
  %v65 = vld [vmem:[%s1 + $0x68] sm:$0xff]
  %v66 = vld [vmem:[%s1 + $0x70] sm:$0xff]
  %v67 = vld [vmem:[%s1 + $0x78] sm:$0xff]
  %v68 = vld [vmem:[%s1 + $0x80] sm:$0xff]
  %v69 = vld [vmem:[%s1 + $0x88] sm:$0xff]
  %v70 = vld [vmem:[%s1 + $0x90] sm:$0xff]
  %v71 = vld [vmem:[%s1 + $0x98] sm:$0xff]
  %v72 = vld [vmem:[%s1 + $0xa0] sm:$0xff]
  %v73 = vld [vmem:[%s1 + $0xa8] sm:$0xff]
  %v74 = vld [vmem:[%s1 + $0xb0] sm:$0xff]
  %v75 = vld [vmem:[%s1 + $0xb8] sm:$0xff]
  %v76 = vld [vmem:[%s1 + $0xc0] sm:$0xff]
  %v77 = vld [vmem:[%s1 + $0xc8] sm:$0xff]
  %v78 = vld [vmem:[%s1 + $0xd0] sm:$0xff]
  %v79 = vld [vmem:[%s1 + $0xd8] sm:$0xff]
  %v80 = vld [vmem:[%s1 + $0xe0] sm:$0xff]
  %v81 = vld [vmem:[%s1 + $0xe8] sm:$0xff]
  %v82 = vld [vmem:[%s1 + $0xf0] sm:$0xff]
  %v83 = vld [vmem:[%s1 + $0xf8] sm:$0xff]
  %v84 = vld [vmem:[%s2] sm:$0x1]
  %v86 = vlaneseq
  %v87 = vshrl.u32 %v86, 7
  %v88 = vsub.s32 0, %v87
  %v89 = vrot.slane %v84, %v88
  %91 = vmatprep.subr.mxu0 0.0
  %92 = vmatpush1.msra.mxu0 %v52
  %93 = vmatprep.subr.mxu0 0.0
  %94 = vmatpush1.msra.mxu0 %v53
  %95 = vmatprep.subr.mxu0 0.0
  %96 = vmatpush1.msra.mxu0 %v54
  %97 = vmatprep.subr.mxu0 0.0
  %98 = vmatpush1.msra.mxu0 %v55
  %99 = vmatprep.subr.mxu0 0.0
  %100 = vmatpush1.msra.mxu0 %v56
  %101 = vmatprep.subr.mxu0 0.0
  %102 = vmatpush1.msra.mxu0 %v57
  %103 = vmatprep.subr.mxu0 0.0
  %104 = vmatpush1.msra.mxu0 %v58
  %105 = vmatprep.subr.mxu0 0.0
  %106 = vmatpush1.msra.mxu0 %v59
  %107 = vmatprep.subr.mxu0 0.0
  %108 = vmatpush1.msra.mxu0 %v60
  %109 = vmatprep.subr.mxu0 0.0
  %110 = vmatpush1.msra.mxu0 %v61
  %111 = vmatprep.subr.mxu0 0.0
  %112 = vmatpush1.msra.mxu0 %v62
  %113 = vmatprep.subr.mxu0 0.0
  %114 = vmatpush1.msra.mxu0 %v63
  %115 = vmatprep.subr.mxu0 0.0
  %116 = vmatpush1.msra.mxu0 %v64
  %117 = vmatprep.subr.mxu0 0.0
  %118 = vmatpush1.msra.mxu0 %v65
  %119 = vmatprep.subr.mxu0 0.0
  %120 = vmatpush1.msra.mxu0 %v66
  %121 = vmatprep.subr.mxu0 0.0
  %122 = vmatpush1.msra.mxu0 %v67
  %123 = vmatprep.subr.mxu0 0.0
  %124 = vmatpush1.msra.mxu0 %v68
  %125 = vmatprep.subr.mxu0 0.0
  %126 = vmatpush1.msra.mxu0 %v69
  %127 = vmatprep.subr.mxu0 0.0
  %128 = vmatpush1.msra.mxu0 %v70
  %129 = vmatprep.subr.mxu0 0.0
  %130 = vmatpush1.msra.mxu0 %v71
  %131 = vmatprep.subr.mxu0 0.0
  %132 = vmatpush1.msra.mxu0 %v72
  %133 = vmatprep.subr.mxu0 0.0
  %134 = vmatpush1.msra.mxu0 %v73
  %135 = vmatprep.subr.mxu0 0.0
  %136 = vmatpush1.msra.mxu0 %v74
  %137 = vmatprep.subr.mxu0 0.0
  %138 = vmatpush1.msra.mxu0 %v75
  %139 = vmatprep.subr.mxu0 0.0
  %140 = vmatpush1.msra.mxu0 %v76
  %141 = vmatprep.subr.mxu0 0.0
  %142 = vmatpush1.msra.mxu0 %v77
  %143 = vmatprep.subr.mxu0 0.0
  %144 = vmatpush1.msra.mxu0 %v78
  %145 = vmatprep.subr.mxu0 0.0
  %146 = vmatpush1.msra.mxu0 %v79
  %147 = vmatprep.subr.mxu0 0.0
  %148 = vmatpush1.msra.mxu0 %v80
  %149 = vmatprep.subr.mxu0 0.0
  %150 = vmatpush1.msra.mxu0 %v81
  %151 = vmatprep.subr.mxu0 0.0
  %152 = vmatpush1.msra.mxu0 %v82
  %153 = vmatprep.subr.mxu0 0.0
  %154 = vmatpush1.msra.mxu0 %v83
  %155 = vmatprep.mubr.f32.mxu0 %v21
  %156 = vmatmul.mubr.f32.gmra.mrb[0].mxu0 %v20
  %v157 = vpop.f32.mrb[0].mxu0
  %v158 = vadd.f32 %v89, %v157
  %v159 = vpop.f32.mrb[0].mxu0
  %160 = vmatprep.mubr.f32.mxu0 %v23
  %161 = vmatmul.mubr.f32.gmra.mrb[0].mxu0 %v22
  %v162 = vpop.f32.mrb[0].mxu0
  %v163 = vadd.f32 %v89, %v162
  %v164 = vpop.f32.mrb[0].mxu0
  %165 = vmatprep.mubr.f32.mxu0 %v25
  %166 = vmatmul.mubr.f32.gmra.mrb[0].mxu0 %v24
  %v167 = vpop.f32.mrb[0].mxu0
  %v168 = vadd.f32 %v89, %v167
  %v169 = vpop.f32.mrb[0].mxu0
  %170 = vmatprep.mubr.f32.mxu0 %v27
  %171 = vmatmul.mubr.f32.gmra.mrb[0].mxu0 %v26
  %v172 = vpop.f32.mrb[0].mxu0
  %v173 = vadd.f32 %v89, %v172
  %v174 = vpop.f32.mrb[0].mxu0
  %175 = vmatprep.mubr.f32.mxu0 %v29
  %176 = vmatmul.mubr.f32.gmra.mrb[0].mxu0 %v28
  %v177 = vpop.f32.mrb[0].mxu0
  %v178 = vadd.f32 %v89, %v177
  %v179 = vpop.f32.mrb[0].mxu0
  %180 = vmatprep.mubr.f32.mxu0 %v31
  %181 = vmatmul.mubr.f32.gmra.mrb[0].mxu0 %v30
  %v182 = vpop.f32.mrb[0].mxu0
  %v183 = vadd.f32 %v89, %v182
  %v184 = vpop.f32.mrb[0].mxu0
  %185 = vmatprep.mubr.f32.mxu0 %v33
  %186 = vmatmul.mubr.f32.gmra.mrb[0].mxu0 %v32
  %v187 = vpop.f32.mrb[0].mxu0
  %v188 = vadd.f32 %v89, %v187
  %v189 = vpop.f32.mrb[0].mxu0
  %190 = vmatprep.mubr.f32.mxu0 %v35
  %191 = vmatmul.mubr.f32.gmra.mrb[0].mxu0 %v34
  %v192 = vpop.f32.mrb[0].mxu0
  %v193 = vadd.f32 %v89, %v192
  %v194 = vpop.f32.mrb[0].mxu0
  %195 = vmatprep.mubr.f32.mxu0 %v37
  %196 = vmatmul.mubr.f32.gmra.mrb[0].mxu0 %v36
  %v197 = vpop.f32.mrb[0].mxu0
  %v198 = vadd.f32 %v89, %v197
  %v199 = vpop.f32.mrb[0].mxu0
  %200 = vmatprep.mubr.f32.mxu0 %v39
  %201 = vmatmul.mubr.f32.gmra.mrb[0].mxu0 %v38
  %v202 = vpop.f32.mrb[0].mxu0
  %v203 = vadd.f32 %v89, %v202
  %v204 = vpop.f32.mrb[0].mxu0
  %205 = vmatprep.mubr.f32.mxu0 %v41
  %206 = vmatmul.mubr.f32.gmra.mrb[0].mxu0 %v40
  %v207 = vpop.f32.mrb[0].mxu0
  %v208 = vadd.f32 %v89, %v207
  %v209 = vpop.f32.mrb[0].mxu0
  %210 = vmatprep.mubr.f32.mxu0 %v43
  %211 = vmatmul.mubr.f32.gmra.mrb[0].mxu0 %v42
  %v212 = vpop.f32.mrb[0].mxu0
  %v213 = vadd.f32 %v89, %v212
  %v214 = vpop.f32.mrb[0].mxu0
  %215 = vmatprep.mubr.f32.mxu0 %v45
  %216 = vmatmul.mubr.f32.gmra.mrb[0].mxu0 %v44
  %v217 = vpop.f32.mrb[0].mxu0
  %v218 = vadd.f32 %v89, %v217
  %v219 = vpop.f32.mrb[0].mxu0
  %220 = vmatprep.mubr.f32.mxu0 %v47
  %221 = vmatmul.mubr.f32.gmra.mrb[0].mxu0 %v46
  %v222 = vpop.f32.mrb[0].mxu0
  %v223 = vadd.f32 %v89, %v222
  %v224 = vpop.f32.mrb[0].mxu0
  %225 = vmatprep.mubr.f32.mxu0 %v49
  %226 = vmatmul.mubr.f32.gmra.mrb[0].mxu0 %v48
  %v227 = vpop.f32.mrb[0].mxu0
  %v228 = vadd.f32 %v89, %v227
  %v229 = vpop.f32.mrb[0].mxu0
  %230 = vmatprep.mubr.f32.mxu0 %v51
  %231 = vmatmul.mubr.f32.gmra.mrb[0].mxu0 %v50
  %v232 = vpop.f32.mrb[0].mxu0
  %v233 = vadd.f32 %v89, %v232
  %v234 = vpop.f32.mrb[0].mxu0
  %235 = vdwg.mxu0
  %v236 = vmax.f32 %v158, 0.0
  %v237 = vmax.f32 %v163, 0.0
  %v238 = vmax.f32 %v168, 0.0
  %v239 = vmax.f32 %v173, 0.0
  %v240 = vmax.f32 %v178, 0.0
  %v241 = vmax.f32 %v183, 0.0
  %v242 = vmax.f32 %v188, 0.0
  %v243 = vmax.f32 %v193, 0.0
  %v244 = vmax.f32 %v198, 0.0
  %v245 = vmax.f32 %v203, 0.0
  %v246 = vmax.f32 %v208, 0.0
  %v247 = vmax.f32 %v213, 0.0
  %v248 = vmax.f32 %v218, 0.0
  %v249 = vmax.f32 %v223, 0.0
  %v250 = vmax.f32 %v228, 0.0
  %v251 = vmax.f32 %v233, 0.0
  %v252 = vld [vmem:[%s3] sm:$0x1]
  %v253 = vld [vmem:[%s4] sm:$0x1]
  %vm254 = vcmask 130048
  %v255 = vsel %vm254, %v236, 0.0
  %256 = vadd.xlane.f32.xlu0 %v255
  %v257 = vpop.xlane.xlu0 %256
  %v258 = vsel %vm254, %v237, 0.0
  %259 = vadd.xlane.f32.xlu0 %v258
  %v260 = vpop.xlane.xlu0 %259
  %v261 = vsel %vm254, %v238, 0.0
  %262 = vadd.xlane.f32.xlu0 %v261
  %v263 = vpop.xlane.xlu0 %262
  %v264 = vsel %vm254, %v239, 0.0
  %265 = vadd.xlane.f32.xlu0 %v264
  %v266 = vpop.xlane.xlu0 %265
  %v267 = vsel %vm254, %v240, 0.0
  %268 = vadd.xlane.f32.xlu0 %v267
  %v269 = vpop.xlane.xlu0 %268
  %v270 = vsel %vm254, %v241, 0.0
  %271 = vadd.xlane.f32.xlu0 %v270
  %v272 = vpop.xlane.xlu0 %271
  %v273 = vsel %vm254, %v242, 0.0
  %274 = vadd.xlane.f32.xlu0 %v273
  %v275 = vpop.xlane.xlu0 %274
  %v276 = vsel %vm254, %v243, 0.0
  %277 = vadd.xlane.f32.xlu0 %v276
  %v278 = vpop.xlane.xlu0 %277
  %v279 = vsel %vm254, %v244, 0.0
  %280 = vadd.xlane.f32.xlu0 %v279
  %v281 = vpop.xlane.xlu0 %280
  %v282 = vsel %vm254, %v245, 0.0
  %283 = vadd.xlane.f32.xlu0 %v282
  %v284 = vpop.xlane.xlu0 %283
  %v285 = vsel %vm254, %v246, 0.0
  %286 = vadd.xlane.f32.xlu0 %v285
  %v287 = vpop.xlane.xlu0 %286
  %v288 = vsel %vm254, %v247, 0.0
  %289 = vadd.xlane.f32.xlu0 %v288
  %v290 = vpop.xlane.xlu0 %289
  %v291 = vsel %vm254, %v248, 0.0
  %292 = vadd.xlane.f32.xlu0 %v291
  %v293 = vpop.xlane.xlu0 %292
  %v294 = vsel %vm254, %v249, 0.0
  %295 = vadd.xlane.f32.xlu0 %v294
  %v296 = vpop.xlane.xlu0 %295
  %v297 = vsel %vm254, %v250, 0.0
  %298 = vadd.xlane.f32.xlu0 %v297
  %v299 = vpop.xlane.xlu0 %298
  %v300 = vsel %vm254, %v251, 0.0
  %301 = vadd.xlane.f32.xlu0 %v300
  %v302 = vpop.xlane.xlu0 %301
  %v303 = vrcp.pop 16.0
  %v304 = vmul.f32 %v257, %v303
  %v305 = vmul.f32 %v260, %v303
  %v306 = vmul.f32 %v263, %v303
  %v307 = vmul.f32 %v266, %v303
  %v308 = vmul.f32 %v269, %v303
  %v309 = vmul.f32 %v272, %v303
  %v310 = vmul.f32 %v275, %v303
  %v311 = vmul.f32 %v278, %v303
  %v312 = vmul.f32 %v281, %v303
  %v313 = vmul.f32 %v284, %v303
  %v314 = vmul.f32 %v287, %v303
  %v315 = vmul.f32 %v290, %v303
  %v316 = vmul.f32 %v293, %v303
  %v317 = vmul.f32 %v296, %v303
  %v318 = vmul.f32 %v299, %v303
  %v319 = vmul.f32 %v302, %v303
  %v320 = vsub.f32 %v236, %v304
  %v321 = vsub.f32 %v237, %v305
  %v322 = vsub.f32 %v238, %v306
  %v323 = vsub.f32 %v239, %v307
  %v324 = vsub.f32 %v240, %v308
  %v325 = vsub.f32 %v241, %v309
  %v326 = vsub.f32 %v242, %v310
  %v327 = vsub.f32 %v243, %v311
  %v328 = vsub.f32 %v244, %v312
  %v329 = vsub.f32 %v245, %v313
  %v330 = vsub.f32 %v246, %v314
  %v331 = vsub.f32 %v247, %v315
  %v332 = vsub.f32 %v248, %v316
  %v333 = vsub.f32 %v249, %v317
  %v334 = vsub.f32 %v250, %v318
  %v335 = vsub.f32 %v251, %v319
  %v336 = vmul.f32 %v320, %v320
  %v337 = vmul.f32 %v321, %v321
  %v338 = vmul.f32 %v322, %v322
  %v339 = vmul.f32 %v323, %v323
  %v340 = vmul.f32 %v324, %v324
  %v341 = vmul.f32 %v325, %v325
  %v342 = vmul.f32 %v326, %v326
  %v343 = vmul.f32 %v327, %v327
  %v344 = vmul.f32 %v328, %v328
  %v345 = vmul.f32 %v329, %v329
  %v346 = vmul.f32 %v330, %v330
  %v347 = vmul.f32 %v331, %v331
  %v348 = vmul.f32 %v332, %v332
  %v349 = vmul.f32 %v333, %v333
  %v350 = vmul.f32 %v334, %v334
  %v351 = vmul.f32 %v335, %v335
  %v352 = vsel %vm254, %v336, 0.0
  %353 = vadd.xlane.f32.xlu0 %v352
  %v354 = vpop.xlane.xlu0 %353
  %v355 = vsel %vm254, %v337, 0.0
  %356 = vadd.xlane.f32.xlu0 %v355
  %v357 = vpop.xlane.xlu0 %356
  %v358 = vsel %vm254, %v338, 0.0
  %359 = vadd.xlane.f32.xlu0 %v358
  %v360 = vpop.xlane.xlu0 %359
  %v361 = vsel %vm254, %v339, 0.0
  %362 = vadd.xlane.f32.xlu0 %v361
  %v363 = vpop.xlane.xlu0 %362
  %v364 = vsel %vm254, %v340, 0.0
  %365 = vadd.xlane.f32.xlu0 %v364
  %v366 = vpop.xlane.xlu0 %365
  %v367 = vsel %vm254, %v341, 0.0
  %368 = vadd.xlane.f32.xlu0 %v367
  %v369 = vpop.xlane.xlu0 %368
  %v370 = vsel %vm254, %v342, 0.0
  %371 = vadd.xlane.f32.xlu0 %v370
  %v372 = vpop.xlane.xlu0 %371
  %v373 = vsel %vm254, %v343, 0.0
  %374 = vadd.xlane.f32.xlu0 %v373
  %v375 = vpop.xlane.xlu0 %374
  %v376 = vsel %vm254, %v344, 0.0
  %377 = vadd.xlane.f32.xlu0 %v376
  %v378 = vpop.xlane.xlu0 %377
  %v379 = vsel %vm254, %v345, 0.0
  %380 = vadd.xlane.f32.xlu0 %v379
  %v381 = vpop.xlane.xlu0 %380
  %v382 = vsel %vm254, %v346, 0.0
  %383 = vadd.xlane.f32.xlu0 %v382
  %v384 = vpop.xlane.xlu0 %383
  %v385 = vsel %vm254, %v347, 0.0
  %386 = vadd.xlane.f32.xlu0 %v385
  %v387 = vpop.xlane.xlu0 %386
  %v388 = vsel %vm254, %v348, 0.0
  %389 = vadd.xlane.f32.xlu0 %v388
  %v390 = vpop.xlane.xlu0 %389
  %v391 = vsel %vm254, %v349, 0.0
  %392 = vadd.xlane.f32.xlu0 %v391
  %v393 = vpop.xlane.xlu0 %392
  %v394 = vsel %vm254, %v350, 0.0
  %395 = vadd.xlane.f32.xlu0 %v394
  %v396 = vpop.xlane.xlu0 %395
  %v397 = vsel %vm254, %v351, 0.0
  %398 = vadd.xlane.f32.xlu0 %v397
  %v399 = vpop.xlane.xlu0 %398
  %v400 = vmul.f32 %v354, %v303
  %v401 = vmul.f32 %v357, %v303
  %v402 = vmul.f32 %v360, %v303
  %v403 = vmul.f32 %v363, %v303
  %v404 = vmul.f32 %v366, %v303
  %v405 = vmul.f32 %v369, %v303
  %v406 = vmul.f32 %v372, %v303
  %v407 = vmul.f32 %v375, %v303
  %v408 = vmul.f32 %v378, %v303
  %v409 = vmul.f32 %v381, %v303
  %v410 = vmul.f32 %v384, %v303
  %v411 = vmul.f32 %v387, %v303
  %v412 = vmul.f32 %v390, %v303
  %v413 = vmul.f32 %v393, %v303
  %v414 = vmul.f32 %v396, %v303
  %v415 = vmul.f32 %v399, %v303
  %v416 = vadd.f32 %v400, 1e-05
  %v417 = vadd.f32 %v401, 1e-05
  %v418 = vadd.f32 %v402, 1e-05
  %v419 = vadd.f32 %v403, 1e-05
  %v420 = vadd.f32 %v404, 1e-05
  %v421 = vadd.f32 %v405, 1e-05
  %v422 = vadd.f32 %v406, 1e-05
  %v423 = vadd.f32 %v407, 1e-05
  %v424 = vadd.f32 %v408, 1e-05
  %v425 = vadd.f32 %v409, 1e-05
  %v426 = vadd.f32 %v410, 1e-05
  %v427 = vadd.f32 %v411, 1e-05
  %v428 = vadd.f32 %v412, 1e-05
  %v429 = vadd.f32 %v413, 1e-05
  %v430 = vadd.f32 %v414, 1e-05
  %v431 = vadd.f32 %v415, 1e-05
  %v432 = vrsqrt.pop %v416
  %v433 = vrsqrt.pop %v417
  %v434 = vrsqrt.pop %v418
  %v435 = vrsqrt.pop %v419
  %v436 = vrsqrt.pop %v420
  %v437 = vrsqrt.pop %v421
  %v438 = vrsqrt.pop %v422
  %v439 = vrsqrt.pop %v423
  %v440 = vrsqrt.pop %v424
  %v441 = vrsqrt.pop %v425
  %v442 = vrsqrt.pop %v426
  %v443 = vrsqrt.pop %v427
  %v444 = vrsqrt.pop %v428
  %v445 = vrsqrt.pop %v429
  %v446 = vrsqrt.pop %v430
  %v447 = vrsqrt.pop %v431
  %v448 = vmul.f32 %v320, %v432
  %v449 = vmul.f32 %v321, %v433
  %v450 = vmul.f32 %v322, %v434
  %v451 = vmul.f32 %v323, %v435
  %v452 = vmul.f32 %v324, %v436
  %v453 = vmul.f32 %v325, %v437
  %v454 = vmul.f32 %v326, %v438
  %v455 = vmul.f32 %v327, %v439
  %v456 = vmul.f32 %v328, %v440
  %v457 = vmul.f32 %v329, %v441
  %v458 = vmul.f32 %v330, %v442
  %v459 = vmul.f32 %v331, %v443
  %v460 = vmul.f32 %v332, %v444
  %v461 = vmul.f32 %v333, %v445
  %v462 = vmul.f32 %v334, %v446
  %v463 = vmul.f32 %v335, %v447
  %v465 = vlaneseq
  %v466 = vshrl.u32 %v465, 7
  %v467 = vsub.s32 0, %v466
  %v468 = vrot.slane %v252, %v467
  %v470 = vmul.f32 %v448, %v468
  %v471 = vmul.f32 %v449, %v468
  %v472 = vmul.f32 %v450, %v468
  %v473 = vmul.f32 %v451, %v468
  %v474 = vmul.f32 %v452, %v468
  %v475 = vmul.f32 %v453, %v468
  %v476 = vmul.f32 %v454, %v468
  %v477 = vmul.f32 %v455, %v468
  %v478 = vmul.f32 %v456, %v468
  %v479 = vmul.f32 %v457, %v468
  %v480 = vmul.f32 %v458, %v468
  %v481 = vmul.f32 %v459, %v468
  %v482 = vmul.f32 %v460, %v468
  %v483 = vmul.f32 %v461, %v468
  %v484 = vmul.f32 %v462, %v468
  %v485 = vmul.f32 %v463, %v468
  %v487 = vlaneseq
  %v488 = vshrl.u32 %v487, 7
  %v489 = vsub.s32 0, %v488
  %v490 = vrot.slane %v253, %v489
  %v492 = vadd.f32 %v470, %v490
  %v493 = vadd.f32 %v471, %v490
  %v494 = vadd.f32 %v472, %v490
  %v495 = vadd.f32 %v473, %v490
  %v496 = vadd.f32 %v474, %v490
  %v497 = vadd.f32 %v475, %v490
  %v498 = vadd.f32 %v476, %v490
  %v499 = vadd.f32 %v477, %v490
  %v500 = vadd.f32 %v478, %v490
  %v501 = vadd.f32 %v479, %v490
  %v502 = vadd.f32 %v480, %v490
  %v503 = vadd.f32 %v481, %v490
  %v504 = vadd.f32 %v482, %v490
  %v505 = vadd.f32 %v483, %v490
  %v506 = vadd.f32 %v484, %v490
  %v507 = vadd.f32 %v485, %v490
  %508 = vst.msk [vmem:[%s5] sm:$0xff] %vm254, %v492
  %509 = vst.msk [vmem:[%s5 + $0x8] sm:$0xff] %vm254, %v493
  %510 = vst.msk [vmem:[%s5 + $0x10] sm:$0xff] %vm254, %v494
  %511 = vst.msk [vmem:[%s5 + $0x18] sm:$0xff] %vm254, %v495
  %512 = vst.msk [vmem:[%s5 + $0x20] sm:$0xff] %vm254, %v496
  %513 = vst.msk [vmem:[%s5 + $0x28] sm:$0xff] %vm254, %v497
  %514 = vst.msk [vmem:[%s5 + $0x30] sm:$0xff] %vm254, %v498
  %515 = vst.msk [vmem:[%s5 + $0x38] sm:$0xff] %vm254, %v499
  %516 = vst.msk [vmem:[%s5 + $0x40] sm:$0xff] %vm254, %v500
  %517 = vst.msk [vmem:[%s5 + $0x48] sm:$0xff] %vm254, %v501
  %518 = vst.msk [vmem:[%s5 + $0x50] sm:$0xff] %vm254, %v502
  %519 = vst.msk [vmem:[%s5 + $0x58] sm:$0xff] %vm254, %v503
  %520 = vst.msk [vmem:[%s5 + $0x60] sm:$0xff] %vm254, %v504
  %521 = vst.msk [vmem:[%s5 + $0x68] sm:$0xff] %vm254, %v505
  %522 = vst.msk [vmem:[%s5 + $0x70] sm:$0xff] %vm254, %v506
  %523 = vst.msk [vmem:[%s5 + $0x78] sm:$0xff] %vm254, %v507
  // Predicated region
  $region22: #{ae_paired_forward.31} parent=0 // pred_check
    _
  $region23: #{ae_paired_forward.31} parent=0 // pred_check_branch
    %525 = sbr.rel (0) target = $region25
  $region24: #{ae_paired_forward.31} parent=0 // pred_region
    _
  $region25: #{ae_paired_forward.31} parent=0 // pred_fallthru
    _
  // Predicated region
  $region26: #{ae_paired_forward.31} parent=0 // pred_check
    _
  $region27: #{ae_paired_forward.31} parent=0 // pred_check_branch
    %527 = sbr.rel (0) target = $region29
  $region28: #{ae_paired_forward.31} parent=0 // pred_region
    _
  $region29: #{ae_paired_forward.31} parent=0 // pred_fallthru
    _

// kernel: ae_paired_forward.41
$region0: #{ae_paired_forward.41}
  #allocation0 [shape = 'u32[]', space=smem, size = 0x4, offset = 0x4, fixed_abs, tag = 'smem constant byte address 0x4 - core index']
  #allocation1 [shape = 'u32[144,128]{1,0:T(1,128)}', space=vmem, size = 0x12000, scoped, tag = 'internal scratch']
  %s0 = inlined_call_operand.vmem [shape: f32[128,144], index: 0, kind: input, shape index: {}]
  %s1 = inlined_call_operand.vmem [shape: f32[144,16], index: 1, kind: input, shape index: {}]
  %s2 = inlined_call_operand.vmem [shape: f32[1,16], index: 2, kind: input, shape index: {}]
  %s3 = inlined_call_operand.vmem [shape: f32[128,16], index: 3, kind: output, shape index: {}]
  %s4 = sld [smem:[#allocation0]]
  $region22: #{ae_paired_forward.41} parent=0
    _
  %s6 = ssub.s32 1, %s4
  %s7 = scalar_select 0, %s6, %s4
  // Predicated region
  $region2: #{ae_paired_forward.41} parent=0 // pred_check
    _
  $region3: #{ae_paired_forward.41} parent=0 // pred_check_branch
    %9 = sbr.rel (0) target = $region5
  $region4: #{ae_paired_forward.41} parent=0 // pred_region
    _
  $region5: #{ae_paired_forward.41} parent=0 // pred_fallthru
    _
  // Predicated region
  $region6: #{ae_paired_forward.41} parent=0 // pred_check
    _
  $region7: #{ae_paired_forward.41} parent=0 // pred_check_branch
    %11 = sbr.rel (0) target = $region9
  $region8: #{ae_paired_forward.41} parent=0 // pred_region
    _
  $region9: #{ae_paired_forward.41} parent=0 // pred_fallthru
    _
  // Predicated region
  $region10: #{ae_paired_forward.41} parent=0 // pred_check
    _
  $region11: #{ae_paired_forward.41} parent=0 // pred_check_branch
    %13 = sbr.rel (0) target = $region13
  $region12: #{ae_paired_forward.41} parent=0 // pred_region
    _
  $region13: #{ae_paired_forward.41} parent=0 // pred_fallthru
    _
  %v14 = vld [vmem:[%s0] sm:$0xff]
  %v15 = vld [vmem:[%s0 + $0x8] sm:$0xff]
  %v16 = vld [vmem:[%s0 + $0x10] sm:$0xff]
  %v17 = vld [vmem:[%s0 + $0x18] sm:$0xff]
  %v18 = vld [vmem:[%s0 + $0x20] sm:$0xff]
  %v19 = vld [vmem:[%s0 + $0x28] sm:$0xff]
  %v20 = vld [vmem:[%s0 + $0x30] sm:$0xff]
  %v21 = vld [vmem:[%s0 + $0x38] sm:$0xff]
  %v22 = vld [vmem:[%s0 + $0x40] sm:$0xff]
  %v23 = vld [vmem:[%s0 + $0x48] sm:$0xff]
  %v24 = vld [vmem:[%s0 + $0x50] sm:$0xff]
  %v25 = vld [vmem:[%s0 + $0x58] sm:$0xff]
  %v26 = vld [vmem:[%s0 + $0x60] sm:$0xff]
  %v27 = vld [vmem:[%s0 + $0x68] sm:$0xff]
  %v28 = vld [vmem:[%s0 + $0x70] sm:$0xff]
  %v29 = vld [vmem:[%s0 + $0x78] sm:$0xff]
  %v30 = vld [vmem:[%s0 + $0x80] sm:$0xff]
  %v31 = vld [vmem:[%s0 + $0x88] sm:$0xff]
  %v32 = vld [vmem:[%s0 + $0x90] sm:$0xff]
  %v33 = vld [vmem:[%s0 + $0x98] sm:$0xff]
  %v34 = vld [vmem:[%s0 + $0xa0] sm:$0xff]
  %v35 = vld [vmem:[%s0 + $0xa8] sm:$0xff]
  %v36 = vld [vmem:[%s0 + $0xb0] sm:$0xff]
  %v37 = vld [vmem:[%s0 + $0xb8] sm:$0xff]
  %v38 = vld [vmem:[%s0 + $0xc0] sm:$0xff]
  %v39 = vld [vmem:[%s0 + $0xc8] sm:$0xff]
  %v40 = vld [vmem:[%s0 + $0xd0] sm:$0xff]
  %v41 = vld [vmem:[%s0 + $0xd8] sm:$0xff]
  %v42 = vld [vmem:[%s0 + $0xe0] sm:$0xff]
  %v43 = vld [vmem:[%s0 + $0xe8] sm:$0xff]
  %v44 = vld [vmem:[%s0 + $0xf0] sm:$0xff]
  %v45 = vld [vmem:[%s0 + $0xf8] sm:$0xff]
  %v46 = vld [vmem:[%s1] sm:$0xff]
  %v47 = vld [vmem:[%s1 + $0x8] sm:$0xff]
  %v48 = vld [vmem:[%s1 + $0x10] sm:$0xff]
  %v49 = vld [vmem:[%s1 + $0x18] sm:$0xff]
  %v50 = vld [vmem:[%s1 + $0x20] sm:$0xff]
  %v51 = vld [vmem:[%s1 + $0x28] sm:$0xff]
  %v52 = vld [vmem:[%s1 + $0x30] sm:$0xff]
  %v53 = vld [vmem:[%s1 + $0x38] sm:$0xff]
  %v54 = vld [vmem:[%s1 + $0x40] sm:$0xff]
  %v55 = vld [vmem:[%s1 + $0x48] sm:$0xff]
  %v56 = vld [vmem:[%s1 + $0x50] sm:$0xff]
  %v57 = vld [vmem:[%s1 + $0x58] sm:$0xff]
  %v58 = vld [vmem:[%s1 + $0x60] sm:$0xff]
  %v59 = vld [vmem:[%s1 + $0x68] sm:$0xff]
  %v60 = vld [vmem:[%s1 + $0x70] sm:$0xff]
  %v61 = vld [vmem:[%s1 + $0x78] sm:$0xff]
  %v62 = vld [vmem:[%s1 + $0x80] sm:$0xff]
  %v63 = vld [vmem:[%s1 + $0x88] sm:$0xff]
  %v64 = vld [vmem:[%s2] sm:$0x1]
  %v66 = vlaneseq
  %v67 = vshrl.u32 %v66, 7
  %v68 = vsub.s32 0, %v67
  %v69 = vrot.slane %v64, %v68
  %vm71 = vcmask 130048
  %v73 = vsel %vm71, %v15, 0
  %v76 = vsel %vm71, %v17, 0
  %v79 = vsel %vm71, %v19, 0
  %v82 = vsel %vm71, %v21, 0
  %v85 = vsel %vm71, %v23, 0
  %v88 = vsel %vm71, %v25, 0
  %v91 = vsel %vm71, %v27, 0
  %v94 = vsel %vm71, %v29, 0
  %v97 = vsel %vm71, %v31, 0
  %v100 = vsel %vm71, %v33, 0
  %v103 = vsel %vm71, %v35, 0
  %v106 = vsel %vm71, %v37, 0
  %v109 = vsel %vm71, %v39, 0
  %v112 = vsel %vm71, %v41, 0
  %v115 = vsel %vm71, %v43, 0
  %v118 = vsel %vm71, %v45, 0
  %120 = vmatprep.subr.mxu0 0.0
  %121 = vmatpush1.msra.mxu0 %v46
  %122 = vmatprep.subr.mxu0 0.0
  %123 = vmatpush1.msra.mxu0 %v47
  %124 = vmatprep.subr.mxu0 0.0
  %125 = vmatpush1.msra.mxu0 %v48
  %126 = vmatprep.subr.mxu0 0.0
  %127 = vmatpush1.msra.mxu0 %v49
  %128 = vmatprep.subr.mxu0 0.0
  %129 = vmatpush1.msra.mxu0 %v50
  %130 = vmatprep.subr.mxu0 0.0
  %131 = vmatpush1.msra.mxu0 %v51
  %132 = vmatprep.subr.mxu0 0.0
  %133 = vmatpush1.msra.mxu0 %v52
  %134 = vmatprep.subr.mxu0 0.0
  %135 = vmatpush1.msra.mxu0 %v53
  %136 = vmatprep.subr.mxu0 0.0
  %137 = vmatpush1.msra.mxu0 %v54
  %138 = vmatprep.subr.mxu0 0.0
  %139 = vmatpush1.msra.mxu0 %v55
  %140 = vmatprep.subr.mxu0 0.0
  %141 = vmatpush1.msra.mxu0 %v56
  %142 = vmatprep.subr.mxu0 0.0
  %143 = vmatpush1.msra.mxu0 %v57
  %144 = vmatprep.subr.mxu0 0.0
  %145 = vmatpush1.msra.mxu0 %v58
  %146 = vmatprep.subr.mxu0 0.0
  %147 = vmatpush1.msra.mxu0 %v59
  %148 = vmatprep.subr.mxu0 0.0
  %149 = vmatpush1.msra.mxu0 %v60
  %150 = vmatprep.subr.mxu0 0.0
  %151 = vmatpush1.msra.mxu0 %v61
  %152 = vmatprep.subr.mxu0 0.0
  %153 = vmatpush1.msra.mxu0 %v62
  %154 = vmatprep.subr.mxu0 0.0
  %155 = vmatpush1.msra.mxu0 %v63
  %156 = vmatprep.subr.mxu0 0.0
  %157 = vmatpush1.msra.mxu0 0.0
  %158 = vmatprep.subr.mxu0 0.0
  %159 = vmatpush1.msra.mxu0 0.0
  %160 = vmatprep.subr.mxu0 0.0
  %161 = vmatpush1.msra.mxu0 0.0
  %162 = vmatprep.subr.mxu0 0.0
  %163 = vmatpush1.msra.mxu0 0.0
  %164 = vmatprep.subr.mxu0 0.0
  %165 = vmatpush1.msra.mxu0 0.0
  %166 = vmatprep.subr.mxu0 0.0
  %167 = vmatpush1.msra.mxu0 0.0
  %168 = vmatprep.subr.mxu0 0.0
  %169 = vmatpush1.msra.mxu0 0.0
  %170 = vmatprep.subr.mxu0 0.0
  %171 = vmatpush1.msra.mxu0 0.0
  %172 = vmatprep.subr.mxu0 0.0
  %173 = vmatpush1.msra.mxu0 0.0
  %174 = vmatprep.subr.mxu0 0.0
  %175 = vmatpush1.msra.mxu0 0.0
  %176 = vmatprep.subr.mxu0 0.0
  %177 = vmatpush1.msra.mxu0 0.0
  %178 = vmatprep.subr.mxu0 0.0
  %179 = vmatpush1.msra.mxu0 0.0
  %180 = vmatprep.subr.mxu0 0.0
  %181 = vmatpush1.msra.mxu0 0.0
  %182 = vmatprep.subr.mxu0 0.0
  %183 = vmatpush1.msra.mxu0 0.0
  %184 = vmatprep.mubr.f32.mxu0 %v73
  %185 = vmatmul.mubr.f32.gmra.mrb[0].mxu0 %v14
  %v186 = vpop.f32.mrb[0].mxu0
  %v187 = vadd.f32 %v69, %v186
  %v188 = vpop.f32.mrb[0].mxu0
  %189 = vmatprep.mubr.f32.mxu0 %v76
  %190 = vmatmul.mubr.f32.gmra.mrb[0].mxu0 %v16
  %v191 = vpop.f32.mrb[0].mxu0
  %v192 = vadd.f32 %v69, %v191
  %v193 = vpop.f32.mrb[0].mxu0
  %194 = vmatprep.mubr.f32.mxu0 %v79
  %195 = vmatmul.mubr.f32.gmra.mrb[0].mxu0 %v18
  %v196 = vpop.f32.mrb[0].mxu0
  %v197 = vadd.f32 %v69, %v196
  %v198 = vpop.f32.mrb[0].mxu0
  %199 = vmatprep.mubr.f32.mxu0 %v82
  %200 = vmatmul.mubr.f32.gmra.mrb[0].mxu0 %v20
  %v201 = vpop.f32.mrb[0].mxu0
  %v202 = vadd.f32 %v69, %v201
  %v203 = vpop.f32.mrb[0].mxu0
  %204 = vmatprep.mubr.f32.mxu0 %v85
  %205 = vmatmul.mubr.f32.gmra.mrb[0].mxu0 %v22
  %v206 = vpop.f32.mrb[0].mxu0
  %v207 = vadd.f32 %v69, %v206
  %v208 = vpop.f32.mrb[0].mxu0
  %209 = vmatprep.mubr.f32.mxu0 %v88
  %210 = vmatmul.mubr.f32.gmra.mrb[0].mxu0 %v24
  %v211 = vpop.f32.mrb[0].mxu0
  %v212 = vadd.f32 %v69, %v211
  %v213 = vpop.f32.mrb[0].mxu0
  %214 = vmatprep.mubr.f32.mxu0 %v91
  %215 = vmatmul.mubr.f32.gmra.mrb[0].mxu0 %v26
  %v216 = vpop.f32.mrb[0].mxu0
  %v217 = vadd.f32 %v69, %v216
  %v218 = vpop.f32.mrb[0].mxu0
  %219 = vmatprep.mubr.f32.mxu0 %v94
  %220 = vmatmul.mubr.f32.gmra.mrb[0].mxu0 %v28
  %v221 = vpop.f32.mrb[0].mxu0
  %v222 = vadd.f32 %v69, %v221
  %v223 = vpop.f32.mrb[0].mxu0
  %224 = vmatprep.mubr.f32.mxu0 %v97
  %225 = vmatmul.mubr.f32.gmra.mrb[0].mxu0 %v30
  %v226 = vpop.f32.mrb[0].mxu0
  %v227 = vadd.f32 %v69, %v226
  %v228 = vpop.f32.mrb[0].mxu0
  %229 = vmatprep.mubr.f32.mxu0 %v100
  %230 = vmatmul.mubr.f32.gmra.mrb[0].mxu0 %v32
  %v231 = vpop.f32.mrb[0].mxu0
  %v232 = vadd.f32 %v69, %v231
  %v233 = vpop.f32.mrb[0].mxu0
  %234 = vmatprep.mubr.f32.mxu0 %v103
  %235 = vmatmul.mubr.f32.gmra.mrb[0].mxu0 %v34
  %v236 = vpop.f32.mrb[0].mxu0
  %v237 = vadd.f32 %v69, %v236
  %v238 = vpop.f32.mrb[0].mxu0
  %239 = vmatprep.mubr.f32.mxu0 %v106
  %240 = vmatmul.mubr.f32.gmra.mrb[0].mxu0 %v36
  %v241 = vpop.f32.mrb[0].mxu0
  %v242 = vadd.f32 %v69, %v241
  %v243 = vpop.f32.mrb[0].mxu0
  %244 = vmatprep.mubr.f32.mxu0 %v109
  %245 = vmatmul.mubr.f32.gmra.mrb[0].mxu0 %v38
  %v246 = vpop.f32.mrb[0].mxu0
  %v247 = vadd.f32 %v69, %v246
  %v248 = vpop.f32.mrb[0].mxu0
  %249 = vmatprep.mubr.f32.mxu0 %v112
  %250 = vmatmul.mubr.f32.gmra.mrb[0].mxu0 %v40
  %v251 = vpop.f32.mrb[0].mxu0
  %v252 = vadd.f32 %v69, %v251
  %v253 = vpop.f32.mrb[0].mxu0
  %254 = vmatprep.mubr.f32.mxu0 %v115
  %255 = vmatmul.mubr.f32.gmra.mrb[0].mxu0 %v42
  %v256 = vpop.f32.mrb[0].mxu0
  %v257 = vadd.f32 %v69, %v256
  %v258 = vpop.f32.mrb[0].mxu0
  %259 = vmatprep.mubr.f32.mxu0 %v118
  %260 = vmatmul.mubr.f32.gmra.mrb[0].mxu0 %v44
  %v261 = vpop.f32.mrb[0].mxu0
  %v262 = vadd.f32 %v69, %v261
  %v263 = vpop.f32.mrb[0].mxu0
  %264 = vdwg.mxu0
  %v265 = vmax.f32 %v187, 0.0
  %v266 = vmax.f32 %v192, 0.0
  %v267 = vmax.f32 %v197, 0.0
  %v268 = vmax.f32 %v202, 0.0
  %v269 = vmax.f32 %v207, 0.0
  %v270 = vmax.f32 %v212, 0.0
  %v271 = vmax.f32 %v217, 0.0
  %v272 = vmax.f32 %v222, 0.0
  %v273 = vmax.f32 %v227, 0.0
  %v274 = vmax.f32 %v232, 0.0
  %v275 = vmax.f32 %v237, 0.0
  %v276 = vmax.f32 %v242, 0.0
  %v277 = vmax.f32 %v247, 0.0
  %v278 = vmax.f32 %v252, 0.0
  %v279 = vmax.f32 %v257, 0.0
  %v280 = vmax.f32 %v262, 0.0
  %281 = vst.msk [vmem:[%s3] sm:$0xff] %vm71, %v265
  %282 = vst.msk [vmem:[%s3 + $0x8] sm:$0xff] %vm71, %v266
  %283 = vst.msk [vmem:[%s3 + $0x10] sm:$0xff] %vm71, %v267
  %284 = vst.msk [vmem:[%s3 + $0x18] sm:$0xff] %vm71, %v268
  %285 = vst.msk [vmem:[%s3 + $0x20] sm:$0xff] %vm71, %v269
  %286 = vst.msk [vmem:[%s3 + $0x28] sm:$0xff] %vm71, %v270
  %287 = vst.msk [vmem:[%s3 + $0x30] sm:$0xff] %vm71, %v271
  %288 = vst.msk [vmem:[%s3 + $0x38] sm:$0xff] %vm71, %v272
  %289 = vst.msk [vmem:[%s3 + $0x40] sm:$0xff] %vm71, %v273
  %290 = vst.msk [vmem:[%s3 + $0x48] sm:$0xff] %vm71, %v274
  %291 = vst.msk [vmem:[%s3 + $0x50] sm:$0xff] %vm71, %v275
  %292 = vst.msk [vmem:[%s3 + $0x58] sm:$0xff] %vm71, %v276
  %293 = vst.msk [vmem:[%s3 + $0x60] sm:$0xff] %vm71, %v277
  %294 = vst.msk [vmem:[%s3 + $0x68] sm:$0xff] %vm71, %v278
  %295 = vst.msk [vmem:[%s3 + $0x70] sm:$0xff] %vm71, %v279
  %296 = vst.msk [vmem:[%s3 + $0x78] sm:$0xff] %vm71, %v280
  // Predicated region
  $region14: #{ae_paired_forward.41} parent=0 // pred_check
    _
  $region15: #{ae_paired_forward.41} parent=0 // pred_check_branch
    %298 = sbr.rel (0) target = $region17
  $region16: #{ae_paired_forward.41} parent=0 // pred_region
    _
  $region17: #{ae_paired_forward.41} parent=0 // pred_fallthru
    _
  // Predicated region
  $region18: #{ae_paired_forward.41} parent=0 // pred_check
    _
  $region19: #{ae_paired_forward.41} parent=0 // pred_check_branch
    %300 = sbr.rel (0) target = $region21
  $region20: #{ae_paired_forward.41} parent=0 // pred_region
    _
  $region21: #{ae_paired_forward.41} parent=0 // pred_fallthru
    _

// kernel: ae_paired_forward.44
$region0: #{ae_paired_forward.44}
  #allocation0 [shape = 'u32[]', space=smem, size = 0x4, offset = 0x4, fixed_abs, tag = 'smem constant byte address 0x4 - core index']
  #allocation1 [shape = 'u32[144,128]{1,0:T(1,128)}', space=vmem, size = 0x12000, scoped, tag = 'internal scratch']
  %s0 = inlined_call_operand.vmem [shape: f32[128,16], index: 0, kind: input, shape index: {}]
  %s1 = inlined_call_operand.vmem [shape: f32[128,16], index: 1, kind: input, shape index: {}]
  %s2 = inlined_call_operand.vmem [shape: f32[16,16], index: 2, kind: input, shape index: {}]
  %s3 = inlined_call_operand.vmem [shape: f32[16,16], index: 3, kind: input, shape index: {}]
  %s4 = inlined_call_operand.vmem [shape: f32[1,16], index: 4, kind: input, shape index: {}]
  %s5 = inlined_call_operand.vmem [shape: f32[128,16], index: 5, kind: output, shape index: {}]
  %s6 = sld [smem:[#allocation0]]
  $region30: #{ae_paired_forward.44} parent=0
    _
  %s8 = ssub.s32 1, %s6
  %s9 = scalar_select 0, %s8, %s6
  // Predicated region
  $region2: #{ae_paired_forward.44} parent=0 // pred_check
    _
  $region3: #{ae_paired_forward.44} parent=0 // pred_check_branch
    %11 = sbr.rel (0) target = $region5
  $region4: #{ae_paired_forward.44} parent=0 // pred_region
    _
  $region5: #{ae_paired_forward.44} parent=0 // pred_fallthru
    _
  // Predicated region
  $region6: #{ae_paired_forward.44} parent=0 // pred_check
    _
  $region7: #{ae_paired_forward.44} parent=0 // pred_check_branch
    %13 = sbr.rel (0) target = $region9
  $region8: #{ae_paired_forward.44} parent=0 // pred_region
    _
  $region9: #{ae_paired_forward.44} parent=0 // pred_fallthru
    _
  // Predicated region
  $region10: #{ae_paired_forward.44} parent=0 // pred_check
    _
  $region11: #{ae_paired_forward.44} parent=0 // pred_check_branch
    %15 = sbr.rel (0) target = $region13
  $region12: #{ae_paired_forward.44} parent=0 // pred_region
    _
  $region13: #{ae_paired_forward.44} parent=0 // pred_fallthru
    _
  // Predicated region
  $region14: #{ae_paired_forward.44} parent=0 // pred_check
    _
  $region15: #{ae_paired_forward.44} parent=0 // pred_check_branch
    %17 = sbr.rel (0) target = $region17
  $region16: #{ae_paired_forward.44} parent=0 // pred_region
    _
  $region17: #{ae_paired_forward.44} parent=0 // pred_fallthru
    _
  // Predicated region
  $region18: #{ae_paired_forward.44} parent=0 // pred_check
    _
  $region19: #{ae_paired_forward.44} parent=0 // pred_check_branch
    %19 = sbr.rel (0) target = $region21
  $region20: #{ae_paired_forward.44} parent=0 // pred_region
    _
  $region21: #{ae_paired_forward.44} parent=0 // pred_fallthru
    _
  %v20 = vld [vmem:[%s0] sm:$0xff]
  %v21 = vld [vmem:[%s0 + $0x8] sm:$0xff]
  %v22 = vld [vmem:[%s0 + $0x10] sm:$0xff]
  %v23 = vld [vmem:[%s0 + $0x18] sm:$0xff]
  %v24 = vld [vmem:[%s0 + $0x20] sm:$0xff]
  %v25 = vld [vmem:[%s0 + $0x28] sm:$0xff]
  %v26 = vld [vmem:[%s0 + $0x30] sm:$0xff]
  %v27 = vld [vmem:[%s0 + $0x38] sm:$0xff]
  %v28 = vld [vmem:[%s0 + $0x40] sm:$0xff]
  %v29 = vld [vmem:[%s0 + $0x48] sm:$0xff]
  %v30 = vld [vmem:[%s0 + $0x50] sm:$0xff]
  %v31 = vld [vmem:[%s0 + $0x58] sm:$0xff]
  %v32 = vld [vmem:[%s0 + $0x60] sm:$0xff]
  %v33 = vld [vmem:[%s0 + $0x68] sm:$0xff]
  %v34 = vld [vmem:[%s0 + $0x70] sm:$0xff]
  %v35 = vld [vmem:[%s0 + $0x78] sm:$0xff]
  %v36 = vld [vmem:[%s1] sm:$0xff]
  %v37 = vld [vmem:[%s1 + $0x8] sm:$0xff]
  %v38 = vld [vmem:[%s1 + $0x10] sm:$0xff]
  %v39 = vld [vmem:[%s1 + $0x18] sm:$0xff]
  %v40 = vld [vmem:[%s1 + $0x20] sm:$0xff]
  %v41 = vld [vmem:[%s1 + $0x28] sm:$0xff]
  %v42 = vld [vmem:[%s1 + $0x30] sm:$0xff]
  %v43 = vld [vmem:[%s1 + $0x38] sm:$0xff]
  %v44 = vld [vmem:[%s1 + $0x40] sm:$0xff]
  %v45 = vld [vmem:[%s1 + $0x48] sm:$0xff]
  %v46 = vld [vmem:[%s1 + $0x50] sm:$0xff]
  %v47 = vld [vmem:[%s1 + $0x58] sm:$0xff]
  %v48 = vld [vmem:[%s1 + $0x60] sm:$0xff]
  %v49 = vld [vmem:[%s1 + $0x68] sm:$0xff]
  %v50 = vld [vmem:[%s1 + $0x70] sm:$0xff]
  %v51 = vld [vmem:[%s1 + $0x78] sm:$0xff]
  %v52 = vld [vmem:[%s2] sm:$0xff]
  %v53 = vld [vmem:[%s2 + $0x8] sm:$0xff]
  %v54 = vld [vmem:[%s3] sm:$0xff]
  %v55 = vld [vmem:[%s3 + $0x8] sm:$0xff]
  %vm56 = vcmask 130048
  %v58 = vsel %vm56, %v36, 0
  %v61 = vsel %vm56, %v37, 0
  %v64 = vsel %vm56, %v38, 0
  %v67 = vsel %vm56, %v39, 0
  %v70 = vsel %vm56, %v40, 0
  %v73 = vsel %vm56, %v41, 0
  %v76 = vsel %vm56, %v42, 0
  %v79 = vsel %vm56, %v43, 0
  %v82 = vsel %vm56, %v44, 0
  %v85 = vsel %vm56, %v45, 0
  %v88 = vsel %vm56, %v46, 0
  %v91 = vsel %vm56, %v47, 0
  %v94 = vsel %vm56, %v48, 0
  %v97 = vsel %vm56, %v49, 0
  %v100 = vsel %vm56, %v50, 0
  %v103 = vsel %vm56, %v51, 0
  %105 = vmatprep.subr.mxu0 0.0
  %106 = vmatpush1.msra.mxu0 %v54
  %107 = vmatprep.subr.mxu0 0.0
  %108 = vmatpush1.msra.mxu0 %v55
  %109 = vmatprep.subr.mxu0 0.0
  %110 = vmatpush1.msra.mxu0 0.0
  %111 = vmatprep.subr.mxu0 0.0
  %112 = vmatpush1.msra.mxu0 0.0
  %113 = vmatprep.subr.mxu0 0.0
  %114 = vmatpush1.msra.mxu0 0.0
  %115 = vmatprep.subr.mxu0 0.0
  %116 = vmatpush1.msra.mxu0 0.0
  %117 = vmatprep.subr.mxu0 0.0
  %118 = vmatpush1.msra.mxu0 0.0
  %119 = vmatprep.subr.mxu0 0.0
  %120 = vmatpush1.msra.mxu0 0.0
  %121 = vmatprep.subr.mxu0 0.0
  %122 = vmatpush1.msra.mxu0 0.0
  %123 = vmatprep.subr.mxu0 0.0
  %124 = vmatpush1.msra.mxu0 0.0
  %125 = vmatprep.subr.mxu0 0.0
  %126 = vmatpush1.msra.mxu0 0.0
  %127 = vmatprep.subr.mxu0 0.0
  %128 = vmatpush1.msra.mxu0 0.0
  %129 = vmatprep.subr.mxu0 0.0
  %130 = vmatpush1.msra.mxu0 0.0
  %131 = vmatprep.subr.mxu0 0.0
  %132 = vmatpush1.msra.mxu0 0.0
  %133 = vmatprep.subr.mxu0 0.0
  %134 = vmatpush1.msra.mxu0 0.0
  %135 = vmatprep.subr.mxu0 0.0
  %136 = vmatpush1.msra.mxu0 0.0
  %137 = vmatprep.subr.mxu0 0.0
  %138 = vmatpush1.msra.mxu0 0.0
  %139 = vmatprep.subr.mxu0 0.0
  %140 = vmatpush1.msra.mxu0 0.0
  %141 = vmatprep.subr.mxu0 0.0
  %142 = vmatpush1.msra.mxu0 0.0
  %143 = vmatprep.subr.mxu0 0.0
  %144 = vmatpush1.msra.mxu0 0.0
  %145 = vmatprep.subr.mxu0 0.0
  %146 = vmatpush1.msra.mxu0 0.0
  %147 = vmatprep.subr.mxu0 0.0
  %148 = vmatpush1.msra.mxu0 0.0
  %149 = vmatprep.subr.mxu0 0.0
  %150 = vmatpush1.msra.mxu0 0.0
  %151 = vmatprep.subr.mxu0 0.0
  %152 = vmatpush1.msra.mxu0 0.0
  %153 = vmatprep.subr.mxu0 0.0
  %154 = vmatpush1.msra.mxu0 0.0
  %155 = vmatprep.subr.mxu0 0.0
  %156 = vmatpush1.msra.mxu0 0.0
  %157 = vmatprep.subr.mxu0 0.0
  %158 = vmatpush1.msra.mxu0 0.0
  %159 = vmatprep.subr.mxu0 0.0
  %160 = vmatpush1.msra.mxu0 0.0
  %161 = vmatprep.subr.mxu0 0.0
  %162 = vmatpush1.msra.mxu0 0.0
  %163 = vmatprep.subr.mxu0 0.0
  %164 = vmatpush1.msra.mxu0 0.0
  %165 = vmatprep.subr.mxu0 0.0
  %166 = vmatpush1.msra.mxu0 0.0
  %167 = vmatprep.subr.mxu0 0.0
  %168 = vmatpush1.msra.mxu0 0.0
  %169 = vmatprep.mubr.f32.mxu0 0.0
  %170 = vmatmul.mubr.f32.gmra.mrb[0].mxu0 %v58
  %v171 = vpop.f32.mrb[0].mxu0
  %v172 = vadd.f32 0.0, %v171
  %v173 = vpop.f32.mrb[0].mxu0
  %174 = vmatprep.mubr.f32.mxu0 0.0
  %175 = vmatmul.mubr.f32.gmra.mrb[0].mxu0 %v61
  %v176 = vpop.f32.mrb[0].mxu0
  %v177 = vadd.f32 0.0, %v176
  %v178 = vpop.f32.mrb[0].mxu0
  %179 = vmatprep.mubr.f32.mxu0 0.0
  %180 = vmatmul.mubr.f32.gmra.mrb[0].mxu0 %v64
  %v181 = vpop.f32.mrb[0].mxu0
  %v182 = vadd.f32 0.0, %v181
  %v183 = vpop.f32.mrb[0].mxu0
  %184 = vmatprep.mubr.f32.mxu0 0.0
  %185 = vmatmul.mubr.f32.gmra.mrb[0].mxu0 %v67
  %v186 = vpop.f32.mrb[0].mxu0
  %v187 = vadd.f32 0.0, %v186
  %v188 = vpop.f32.mrb[0].mxu0
  %189 = vmatprep.mubr.f32.mxu0 0.0
  %190 = vmatmul.mubr.f32.gmra.mrb[0].mxu0 %v70
  %v191 = vpop.f32.mrb[0].mxu0
  %v192 = vadd.f32 0.0, %v191
  %v193 = vpop.f32.mrb[0].mxu0
  %194 = vmatprep.mubr.f32.mxu0 0.0
  %195 = vmatmul.mubr.f32.gmra.mrb[0].mxu0 %v73
  %v196 = vpop.f32.mrb[0].mxu0
  %v197 = vadd.f32 0.0, %v196
  %v198 = vpop.f32.mrb[0].mxu0
  %199 = vmatprep.mubr.f32.mxu0 0.0
  %200 = vmatmul.mubr.f32.gmra.mrb[0].mxu0 %v76
  %v201 = vpop.f32.mrb[0].mxu0
  %v202 = vadd.f32 0.0, %v201
  %v203 = vpop.f32.mrb[0].mxu0
  %204 = vmatprep.mubr.f32.mxu0 0.0
  %205 = vmatmul.mubr.f32.gmra.mrb[0].mxu0 %v79
  %v206 = vpop.f32.mrb[0].mxu0
  %v207 = vadd.f32 0.0, %v206
  %v208 = vpop.f32.mrb[0].mxu0
  %209 = vmatprep.mubr.f32.mxu0 0.0
  %210 = vmatmul.mubr.f32.gmra.mrb[0].mxu0 %v82
  %v211 = vpop.f32.mrb[0].mxu0
  %v212 = vadd.f32 0.0, %v211
  %v213 = vpop.f32.mrb[0].mxu0
  %214 = vmatprep.mubr.f32.mxu0 0.0
  %215 = vmatmul.mubr.f32.gmra.mrb[0].mxu0 %v85
  %v216 = vpop.f32.mrb[0].mxu0
  %v217 = vadd.f32 0.0, %v216
  %v218 = vpop.f32.mrb[0].mxu0
  %219 = vmatprep.mubr.f32.mxu0 0.0
  %220 = vmatmul.mubr.f32.gmra.mrb[0].mxu0 %v88
  %v221 = vpop.f32.mrb[0].mxu0
  %v222 = vadd.f32 0.0, %v221
  %v223 = vpop.f32.mrb[0].mxu0
  %224 = vmatprep.mubr.f32.mxu0 0.0
  %225 = vmatmul.mubr.f32.gmra.mrb[0].mxu0 %v91
  %v226 = vpop.f32.mrb[0].mxu0
  %v227 = vadd.f32 0.0, %v226
  %v228 = vpop.f32.mrb[0].mxu0
  %229 = vmatprep.mubr.f32.mxu0 0.0
  %230 = vmatmul.mubr.f32.gmra.mrb[0].mxu0 %v94
  %v231 = vpop.f32.mrb[0].mxu0
  %v232 = vadd.f32 0.0, %v231
  %v233 = vpop.f32.mrb[0].mxu0
  %234 = vmatprep.mubr.f32.mxu0 0.0
  %235 = vmatmul.mubr.f32.gmra.mrb[0].mxu0 %v97
  %v236 = vpop.f32.mrb[0].mxu0
  %v237 = vadd.f32 0.0, %v236
  %v238 = vpop.f32.mrb[0].mxu0
  %239 = vmatprep.mubr.f32.mxu0 0.0
  %240 = vmatmul.mubr.f32.gmra.mrb[0].mxu0 %v100
  %v241 = vpop.f32.mrb[0].mxu0
  %v242 = vadd.f32 0.0, %v241
  %v243 = vpop.f32.mrb[0].mxu0
  %244 = vmatprep.mubr.f32.mxu0 0.0
  %245 = vmatmul.mubr.f32.gmra.mrb[0].mxu0 %v103
  %v246 = vpop.f32.mrb[0].mxu0
  %v247 = vadd.f32 0.0, %v246
  %v248 = vpop.f32.mrb[0].mxu0
  %249 = vdwg.mxu0
  %v251 = vsel %vm56, %v20, 0
  %v254 = vsel %vm56, %v21, 0
  %v257 = vsel %vm56, %v22, 0
  %v260 = vsel %vm56, %v23, 0
  %v263 = vsel %vm56, %v24, 0
  %v266 = vsel %vm56, %v25, 0
  %v269 = vsel %vm56, %v26, 0
  %v272 = vsel %vm56, %v27, 0
  %v275 = vsel %vm56, %v28, 0
  %v278 = vsel %vm56, %v29, 0
  %v281 = vsel %vm56, %v30, 0
  %v284 = vsel %vm56, %v31, 0
  %v287 = vsel %vm56, %v32, 0
  %v290 = vsel %vm56, %v33, 0
  %v293 = vsel %vm56, %v34, 0
  %v296 = vsel %vm56, %v35, 0
  %298 = vmatprep.subr.mxu0 0.0
  %299 = vmatpush1.msra.mxu0 %v52
  %300 = vmatprep.subr.mxu0 0.0
  %301 = vmatpush1.msra.mxu0 %v53
  %302 = vmatprep.subr.mxu0 0.0
  %303 = vmatpush1.msra.mxu0 0.0
  %304 = vmatprep.subr.mxu0 0.0
  %305 = vmatpush1.msra.mxu0 0.0
  %306 = vmatprep.subr.mxu0 0.0
  %307 = vmatpush1.msra.mxu0 0.0
  %308 = vmatprep.subr.mxu0 0.0
  %309 = vmatpush1.msra.mxu0 0.0
  %310 = vmatprep.subr.mxu0 0.0
  %311 = vmatpush1.msra.mxu0 0.0
  %312 = vmatprep.subr.mxu0 0.0
  %313 = vmatpush1.msra.mxu0 0.0
  %314 = vmatprep.subr.mxu0 0.0
  %315 = vmatpush1.msra.mxu0 0.0
  %316 = vmatprep.subr.mxu0 0.0
  %317 = vmatpush1.msra.mxu0 0.0
  %318 = vmatprep.subr.mxu0 0.0
  %319 = vmatpush1.msra.mxu0 0.0
  %320 = vmatprep.subr.mxu0 0.0
  %321 = vmatpush1.msra.mxu0 0.0
  %322 = vmatprep.subr.mxu0 0.0
  %323 = vmatpush1.msra.mxu0 0.0
  %324 = vmatprep.subr.mxu0 0.0
  %325 = vmatpush1.msra.mxu0 0.0
  %326 = vmatprep.subr.mxu0 0.0
  %327 = vmatpush1.msra.mxu0 0.0
  %328 = vmatprep.subr.mxu0 0.0
  %329 = vmatpush1.msra.mxu0 0.0
  %330 = vmatprep.subr.mxu0 0.0
  %331 = vmatpush1.msra.mxu0 0.0
  %332 = vmatprep.subr.mxu0 0.0
  %333 = vmatpush1.msra.mxu0 0.0
  %334 = vmatprep.subr.mxu0 0.0
  %335 = vmatpush1.msra.mxu0 0.0
  %336 = vmatprep.subr.mxu0 0.0
  %337 = vmatpush1.msra.mxu0 0.0
  %338 = vmatprep.subr.mxu0 0.0
  %339 = vmatpush1.msra.mxu0 0.0
  %340 = vmatprep.subr.mxu0 0.0
  %341 = vmatpush1.msra.mxu0 0.0
  %342 = vmatprep.subr.mxu0 0.0
  %343 = vmatpush1.msra.mxu0 0.0
  %344 = vmatprep.subr.mxu0 0.0
  %345 = vmatpush1.msra.mxu0 0.0
  %346 = vmatprep.subr.mxu0 0.0
  %347 = vmatpush1.msra.mxu0 0.0
  %348 = vmatprep.subr.mxu0 0.0
  %349 = vmatpush1.msra.mxu0 0.0
  %350 = vmatprep.subr.mxu0 0.0
  %351 = vmatpush1.msra.mxu0 0.0
  %352 = vmatprep.subr.mxu0 0.0
  %353 = vmatpush1.msra.mxu0 0.0
  %354 = vmatprep.subr.mxu0 0.0
  %355 = vmatpush1.msra.mxu0 0.0
  %356 = vmatprep.subr.mxu0 0.0
  %357 = vmatpush1.msra.mxu0 0.0
  %358 = vmatprep.subr.mxu0 0.0
  %359 = vmatpush1.msra.mxu0 0.0
  %360 = vmatprep.subr.mxu0 0.0
  %361 = vmatpush1.msra.mxu0 0.0
  %362 = vmatprep.mubr.f32.mxu0 0.0
  %363 = vmatmul.mubr.f32.gmra.mrb[0].mxu0 %v251
  %v364 = vpop.f32.mrb[0].mxu0
  %v365 = vadd.f32 %v172, %v364
  %v366 = vpop.f32.mrb[0].mxu0
  %367 = vmatprep.mubr.f32.mxu0 0.0
  %368 = vmatmul.mubr.f32.gmra.mrb[0].mxu0 %v254
  %v369 = vpop.f32.mrb[0].mxu0
  %v370 = vadd.f32 %v177, %v369
  %v371 = vpop.f32.mrb[0].mxu0
  %372 = vmatprep.mubr.f32.mxu0 0.0
  %373 = vmatmul.mubr.f32.gmra.mrb[0].mxu0 %v257
  %v374 = vpop.f32.mrb[0].mxu0
  %v375 = vadd.f32 %v182, %v374
  %v376 = vpop.f32.mrb[0].mxu0
  %377 = vmatprep.mubr.f32.mxu0 0.0
  %378 = vmatmul.mubr.f32.gmra.mrb[0].mxu0 %v260
  %v379 = vpop.f32.mrb[0].mxu0
  %v380 = vadd.f32 %v187, %v379
  %v381 = vpop.f32.mrb[0].mxu0
  %382 = vmatprep.mubr.f32.mxu0 0.0
  %383 = vmatmul.mubr.f32.gmra.mrb[0].mxu0 %v263
  %v384 = vpop.f32.mrb[0].mxu0
  %v385 = vadd.f32 %v192, %v384
  %v386 = vpop.f32.mrb[0].mxu0
  %387 = vmatprep.mubr.f32.mxu0 0.0
  %388 = vmatmul.mubr.f32.gmra.mrb[0].mxu0 %v266
  %v389 = vpop.f32.mrb[0].mxu0
  %v390 = vadd.f32 %v197, %v389
  %v391 = vpop.f32.mrb[0].mxu0
  %392 = vmatprep.mubr.f32.mxu0 0.0
  %393 = vmatmul.mubr.f32.gmra.mrb[0].mxu0 %v269
  %v394 = vpop.f32.mrb[0].mxu0
  %v395 = vadd.f32 %v202, %v394
  %v396 = vpop.f32.mrb[0].mxu0
  %397 = vmatprep.mubr.f32.mxu0 0.0
  %398 = vmatmul.mubr.f32.gmra.mrb[0].mxu0 %v272
  %v399 = vpop.f32.mrb[0].mxu0
  %v400 = vadd.f32 %v207, %v399
  %v401 = vpop.f32.mrb[0].mxu0
  %402 = vmatprep.mubr.f32.mxu0 0.0
  %403 = vmatmul.mubr.f32.gmra.mrb[0].mxu0 %v275
  %v404 = vpop.f32.mrb[0].mxu0
  %v405 = vadd.f32 %v212, %v404
  %v406 = vpop.f32.mrb[0].mxu0
  %407 = vmatprep.mubr.f32.mxu0 0.0
  %408 = vmatmul.mubr.f32.gmra.mrb[0].mxu0 %v278
  %v409 = vpop.f32.mrb[0].mxu0
  %v410 = vadd.f32 %v217, %v409
  %v411 = vpop.f32.mrb[0].mxu0
  %412 = vmatprep.mubr.f32.mxu0 0.0
  %413 = vmatmul.mubr.f32.gmra.mrb[0].mxu0 %v281
  %v414 = vpop.f32.mrb[0].mxu0
  %v415 = vadd.f32 %v222, %v414
  %v416 = vpop.f32.mrb[0].mxu0
  %417 = vmatprep.mubr.f32.mxu0 0.0
  %418 = vmatmul.mubr.f32.gmra.mrb[0].mxu0 %v284
  %v419 = vpop.f32.mrb[0].mxu0
  %v420 = vadd.f32 %v227, %v419
  %v421 = vpop.f32.mrb[0].mxu0
  %422 = vmatprep.mubr.f32.mxu0 0.0
  %423 = vmatmul.mubr.f32.gmra.mrb[0].mxu0 %v287
  %v424 = vpop.f32.mrb[0].mxu0
  %v425 = vadd.f32 %v232, %v424
  %v426 = vpop.f32.mrb[0].mxu0
  %427 = vmatprep.mubr.f32.mxu0 0.0
  %428 = vmatmul.mubr.f32.gmra.mrb[0].mxu0 %v290
  %v429 = vpop.f32.mrb[0].mxu0
  %v430 = vadd.f32 %v237, %v429
  %v431 = vpop.f32.mrb[0].mxu0
  %432 = vmatprep.mubr.f32.mxu0 0.0
  %433 = vmatmul.mubr.f32.gmra.mrb[0].mxu0 %v293
  %v434 = vpop.f32.mrb[0].mxu0
  %v435 = vadd.f32 %v242, %v434
  %v436 = vpop.f32.mrb[0].mxu0
  %437 = vmatprep.mubr.f32.mxu0 0.0
  %438 = vmatmul.mubr.f32.gmra.mrb[0].mxu0 %v296
  %v439 = vpop.f32.mrb[0].mxu0
  %v440 = vadd.f32 %v247, %v439
  %v441 = vpop.f32.mrb[0].mxu0
  %442 = vdwg.mxu0
  %v443 = vld [vmem:[%s4] sm:$0x1]
  %v445 = vlaneseq
  %v446 = vshrl.u32 %v445, 7
  %v447 = vsub.s32 0, %v446
  %v448 = vrot.slane %v443, %v447
  %v450 = vadd.f32 %v365, %v448
  %v451 = vadd.f32 %v370, %v448
  %v452 = vadd.f32 %v375, %v448
  %v453 = vadd.f32 %v380, %v448
  %v454 = vadd.f32 %v385, %v448
  %v455 = vadd.f32 %v390, %v448
  %v456 = vadd.f32 %v395, %v448
  %v457 = vadd.f32 %v400, %v448
  %v458 = vadd.f32 %v405, %v448
  %v459 = vadd.f32 %v410, %v448
  %v460 = vadd.f32 %v415, %v448
  %v461 = vadd.f32 %v420, %v448
  %v462 = vadd.f32 %v425, %v448
  %v463 = vadd.f32 %v430, %v448
  %v464 = vadd.f32 %v435, %v448
  %v465 = vadd.f32 %v440, %v448
  %466 = vst.msk [vmem:[%s5] sm:$0xff] %vm56, %v450
  %467 = vst.msk [vmem:[%s5 + $0x8] sm:$0xff] %vm56, %v451
  %468 = vst.msk [vmem:[%s5 + $0x10] sm:$0xff] %vm56, %v452
  %469 = vst.msk [vmem:[%s5 + $0x18] sm:$0xff] %vm56, %v453
  %470 = vst.msk [vmem:[%s5 + $0x20] sm:$0xff] %vm56, %v454
  %471 = vst.msk [vmem:[%s5 + $0x28] sm:$0xff] %vm56, %v455
  %472 = vst.msk [vmem:[%s5 + $0x30] sm:$0xff] %vm56, %v456
  %473 = vst.msk [vmem:[%s5 + $0x38] sm:$0xff] %vm56, %v457
  %474 = vst.msk [vmem:[%s5 + $0x40] sm:$0xff] %vm56, %v458
  %475 = vst.msk [vmem:[%s5 + $0x48] sm:$0xff] %vm56, %v459
  %476 = vst.msk [vmem:[%s5 + $0x50] sm:$0xff] %vm56, %v460
  %477 = vst.msk [vmem:[%s5 + $0x58] sm:$0xff] %vm56, %v461
  %478 = vst.msk [vmem:[%s5 + $0x60] sm:$0xff] %vm56, %v462
  %479 = vst.msk [vmem:[%s5 + $0x68] sm:$0xff] %vm56, %v463
  %480 = vst.msk [vmem:[%s5 + $0x70] sm:$0xff] %vm56, %v464
  %481 = vst.msk [vmem:[%s5 + $0x78] sm:$0xff] %vm56, %v465
  // Predicated region
  $region22: #{ae_paired_forward.44} parent=0 // pred_check
    _
  $region23: #{ae_paired_forward.44} parent=0 // pred_check_branch
    %483 = sbr.rel (0) target = $region25
  $region24: #{ae_paired_forward.44} parent=0 // pred_region
    _
  $region25: #{ae_paired_forward.44} parent=0 // pred_fallthru
    _
  // Predicated region
  $region26: #{ae_paired_forward.44} parent=0 // pred_check
    _
  $region27: #{ae_paired_forward.44} parent=0 // pred_check_branch
    %485 = sbr.rel (0) target = $region29
  $region28: #{ae_paired_forward.44} parent=0 // pred_region
    _
  $region29: #{ae_paired_forward.44} parent=0 // pred_fallthru
    _

// kernel: ae_paired_forward.45
$region0: #{ae_paired_forward.45}
  #allocation0 [shape = 'u32[]', space=smem, size = 0x4, offset = 0x4, fixed_abs, tag = 'smem constant byte address 0x4 - core index']
  #allocation1 [shape = 'u32[144,128]{1,0:T(1,128)}', space=vmem, size = 0x12000, scoped, tag = 'internal scratch']
  %s0 = inlined_call_operand.vmem [shape: f32[32,256], index: 0, kind: input, shape index: {}]
  %s1 = inlined_call_operand.vmem [shape: f32[256,16], index: 1, kind: input, shape index: {}]
  %s2 = inlined_call_operand.vmem [shape: f32[1,16], index: 2, kind: input, shape index: {}]
  %s3 = inlined_call_operand.vmem [shape: f32[1,16], index: 3, kind: input, shape index: {}]
  %s4 = inlined_call_operand.vmem [shape: f32[1,16], index: 4, kind: input, shape index: {}]
  %s5 = inlined_call_operand.vmem [shape: f32[32,16], index: 5, kind: output, shape index: {}]
  %s6 = sld [smem:[#allocation0]]
  $region30: #{ae_paired_forward.45} parent=0
    _
  %s8 = ssub.s32 1, %s6
  %s9 = scalar_select 0, %s8, %s6
  // Predicated region
  $region2: #{ae_paired_forward.45} parent=0 // pred_check
    _
  $region3: #{ae_paired_forward.45} parent=0 // pred_check_branch
    %11 = sbr.rel (0) target = $region5
  $region4: #{ae_paired_forward.45} parent=0 // pred_region
    _
  $region5: #{ae_paired_forward.45} parent=0 // pred_fallthru
    _
  // Predicated region
  $region6: #{ae_paired_forward.45} parent=0 // pred_check
    _
  $region7: #{ae_paired_forward.45} parent=0 // pred_check_branch
    %13 = sbr.rel (0) target = $region9
  $region8: #{ae_paired_forward.45} parent=0 // pred_region
    _
  $region9: #{ae_paired_forward.45} parent=0 // pred_fallthru
    _
  // Predicated region
  $region10: #{ae_paired_forward.45} parent=0 // pred_check
    _
  $region11: #{ae_paired_forward.45} parent=0 // pred_check_branch
    %15 = sbr.rel (0) target = $region13
  $region12: #{ae_paired_forward.45} parent=0 // pred_region
    _
  $region13: #{ae_paired_forward.45} parent=0 // pred_fallthru
    _
  // Predicated region
  $region14: #{ae_paired_forward.45} parent=0 // pred_check
    _
  $region15: #{ae_paired_forward.45} parent=0 // pred_check_branch
    %17 = sbr.rel (0) target = $region17
  $region16: #{ae_paired_forward.45} parent=0 // pred_region
    _
  $region17: #{ae_paired_forward.45} parent=0 // pred_fallthru
    _
  // Predicated region
  $region18: #{ae_paired_forward.45} parent=0 // pred_check
    _
  $region19: #{ae_paired_forward.45} parent=0 // pred_check_branch
    %19 = sbr.rel (0) target = $region21
  $region20: #{ae_paired_forward.45} parent=0 // pred_region
    _
  $region21: #{ae_paired_forward.45} parent=0 // pred_fallthru
    _
  %v20 = vld [vmem:[%s0] sm:$0xff]
  %v21 = vld [vmem:[%s0 + $0x8] sm:$0xff]
  %v22 = vld [vmem:[%s0 + $0x10] sm:$0xff]
  %v23 = vld [vmem:[%s0 + $0x18] sm:$0xff]
  %v24 = vld [vmem:[%s0 + $0x20] sm:$0xff]
  %v25 = vld [vmem:[%s0 + $0x28] sm:$0xff]
  %v26 = vld [vmem:[%s0 + $0x30] sm:$0xff]
  %v27 = vld [vmem:[%s0 + $0x38] sm:$0xff]
  %v28 = vld [vmem:[%s1] sm:$0xff]
  %v29 = vld [vmem:[%s1 + $0x8] sm:$0xff]
  %v30 = vld [vmem:[%s1 + $0x10] sm:$0xff]
  %v31 = vld [vmem:[%s1 + $0x18] sm:$0xff]
  %v32 = vld [vmem:[%s1 + $0x20] sm:$0xff]
  %v33 = vld [vmem:[%s1 + $0x28] sm:$0xff]
  %v34 = vld [vmem:[%s1 + $0x30] sm:$0xff]
  %v35 = vld [vmem:[%s1 + $0x38] sm:$0xff]
  %v36 = vld [vmem:[%s1 + $0x40] sm:$0xff]
  %v37 = vld [vmem:[%s1 + $0x48] sm:$0xff]
  %v38 = vld [vmem:[%s1 + $0x50] sm:$0xff]
  %v39 = vld [vmem:[%s1 + $0x58] sm:$0xff]
  %v40 = vld [vmem:[%s1 + $0x60] sm:$0xff]
  %v41 = vld [vmem:[%s1 + $0x68] sm:$0xff]
  %v42 = vld [vmem:[%s1 + $0x70] sm:$0xff]
  %v43 = vld [vmem:[%s1 + $0x78] sm:$0xff]
  %v44 = vld [vmem:[%s1 + $0x80] sm:$0xff]
  %v45 = vld [vmem:[%s1 + $0x88] sm:$0xff]
  %v46 = vld [vmem:[%s1 + $0x90] sm:$0xff]
  %v47 = vld [vmem:[%s1 + $0x98] sm:$0xff]
  %v48 = vld [vmem:[%s1 + $0xa0] sm:$0xff]
  %v49 = vld [vmem:[%s1 + $0xa8] sm:$0xff]
  %v50 = vld [vmem:[%s1 + $0xb0] sm:$0xff]
  %v51 = vld [vmem:[%s1 + $0xb8] sm:$0xff]
  %v52 = vld [vmem:[%s1 + $0xc0] sm:$0xff]
  %v53 = vld [vmem:[%s1 + $0xc8] sm:$0xff]
  %v54 = vld [vmem:[%s1 + $0xd0] sm:$0xff]
  %v55 = vld [vmem:[%s1 + $0xd8] sm:$0xff]
  %v56 = vld [vmem:[%s1 + $0xe0] sm:$0xff]
  %v57 = vld [vmem:[%s1 + $0xe8] sm:$0xff]
  %v58 = vld [vmem:[%s1 + $0xf0] sm:$0xff]
  %v59 = vld [vmem:[%s1 + $0xf8] sm:$0xff]
  %v60 = vld [vmem:[%s2] sm:$0x1]
  %v62 = vlaneseq
  %v63 = vshrl.u32 %v62, 7
  %v64 = vsub.s32 0, %v63
  %v65 = vrot.slane %v60, %v64
  %67 = vmatprep.subr.mxu0 0.0
  %68 = vmatpush1.msra.mxu0 %v28
  %69 = vmatprep.subr.mxu0 0.0
  %70 = vmatpush1.msra.mxu0 %v29
  %71 = vmatprep.subr.mxu0 0.0
  %72 = vmatpush1.msra.mxu0 %v30
  %73 = vmatprep.subr.mxu0 0.0
  %74 = vmatpush1.msra.mxu0 %v31
  %75 = vmatprep.subr.mxu0 0.0
  %76 = vmatpush1.msra.mxu0 %v32
  %77 = vmatprep.subr.mxu0 0.0
  %78 = vmatpush1.msra.mxu0 %v33
  %79 = vmatprep.subr.mxu0 0.0
  %80 = vmatpush1.msra.mxu0 %v34
  %81 = vmatprep.subr.mxu0 0.0
  %82 = vmatpush1.msra.mxu0 %v35
  %83 = vmatprep.subr.mxu0 0.0
  %84 = vmatpush1.msra.mxu0 %v36
  %85 = vmatprep.subr.mxu0 0.0
  %86 = vmatpush1.msra.mxu0 %v37
  %87 = vmatprep.subr.mxu0 0.0
  %88 = vmatpush1.msra.mxu0 %v38
  %89 = vmatprep.subr.mxu0 0.0
  %90 = vmatpush1.msra.mxu0 %v39
  %91 = vmatprep.subr.mxu0 0.0
  %92 = vmatpush1.msra.mxu0 %v40
  %93 = vmatprep.subr.mxu0 0.0
  %94 = vmatpush1.msra.mxu0 %v41
  %95 = vmatprep.subr.mxu0 0.0
  %96 = vmatpush1.msra.mxu0 %v42
  %97 = vmatprep.subr.mxu0 0.0
  %98 = vmatpush1.msra.mxu0 %v43
  %99 = vmatprep.subr.mxu0 0.0
  %100 = vmatpush1.msra.mxu0 %v44
  %101 = vmatprep.subr.mxu0 0.0
  %102 = vmatpush1.msra.mxu0 %v45
  %103 = vmatprep.subr.mxu0 0.0
  %104 = vmatpush1.msra.mxu0 %v46
  %105 = vmatprep.subr.mxu0 0.0
  %106 = vmatpush1.msra.mxu0 %v47
  %107 = vmatprep.subr.mxu0 0.0
  %108 = vmatpush1.msra.mxu0 %v48
  %109 = vmatprep.subr.mxu0 0.0
  %110 = vmatpush1.msra.mxu0 %v49
  %111 = vmatprep.subr.mxu0 0.0
  %112 = vmatpush1.msra.mxu0 %v50
  %113 = vmatprep.subr.mxu0 0.0
  %114 = vmatpush1.msra.mxu0 %v51
  %115 = vmatprep.subr.mxu0 0.0
  %116 = vmatpush1.msra.mxu0 %v52
  %117 = vmatprep.subr.mxu0 0.0
  %118 = vmatpush1.msra.mxu0 %v53
  %119 = vmatprep.subr.mxu0 0.0
  %120 = vmatpush1.msra.mxu0 %v54
  %121 = vmatprep.subr.mxu0 0.0
  %122 = vmatpush1.msra.mxu0 %v55
  %123 = vmatprep.subr.mxu0 0.0
  %124 = vmatpush1.msra.mxu0 %v56
  %125 = vmatprep.subr.mxu0 0.0
  %126 = vmatpush1.msra.mxu0 %v57
  %127 = vmatprep.subr.mxu0 0.0
  %128 = vmatpush1.msra.mxu0 %v58
  %129 = vmatprep.subr.mxu0 0.0
  %130 = vmatpush1.msra.mxu0 %v59
  %131 = vmatprep.mubr.f32.mxu0 %v21
  %132 = vmatmul.mubr.f32.gmra.mrb[0].mxu0 %v20
  %v133 = vpop.f32.mrb[0].mxu0
  %v134 = vadd.f32 %v65, %v133
  %v135 = vpop.f32.mrb[0].mxu0
  %136 = vmatprep.mubr.f32.mxu0 %v23
  %137 = vmatmul.mubr.f32.gmra.mrb[0].mxu0 %v22
  %v138 = vpop.f32.mrb[0].mxu0
  %v139 = vadd.f32 %v65, %v138
  %v140 = vpop.f32.mrb[0].mxu0
  %141 = vmatprep.mubr.f32.mxu0 %v25
  %142 = vmatmul.mubr.f32.gmra.mrb[0].mxu0 %v24
  %v143 = vpop.f32.mrb[0].mxu0
  %v144 = vadd.f32 %v65, %v143
  %v145 = vpop.f32.mrb[0].mxu0
  %146 = vmatprep.mubr.f32.mxu0 %v27
  %147 = vmatmul.mubr.f32.gmra.mrb[0].mxu0 %v26
  %v148 = vpop.f32.mrb[0].mxu0
  %v149 = vadd.f32 %v65, %v148
  %v150 = vpop.f32.mrb[0].mxu0
  %151 = vdwg.mxu0
  %v152 = vmax.f32 %v134, 0.0
  %v153 = vmax.f32 %v139, 0.0
  %v154 = vmax.f32 %v144, 0.0
  %v155 = vmax.f32 %v149, 0.0
  %v156 = vld [vmem:[%s3] sm:$0x1]
  %v157 = vld [vmem:[%s4] sm:$0x1]
  %vm158 = vcmask 130048
  %v159 = vsel %vm158, %v152, 0.0
  %160 = vadd.xlane.f32.xlu0 %v159
  %v161 = vpop.xlane.xlu0 %160
  %v162 = vsel %vm158, %v153, 0.0
  %163 = vadd.xlane.f32.xlu0 %v162
  %v164 = vpop.xlane.xlu0 %163
  %v165 = vsel %vm158, %v154, 0.0
  %166 = vadd.xlane.f32.xlu0 %v165
  %v167 = vpop.xlane.xlu0 %166
  %v168 = vsel %vm158, %v155, 0.0
  %169 = vadd.xlane.f32.xlu0 %v168
  %v170 = vpop.xlane.xlu0 %169
  %v171 = vrcp.pop 16.0
  %v172 = vmul.f32 %v161, %v171
  %v173 = vmul.f32 %v164, %v171
  %v174 = vmul.f32 %v167, %v171
  %v175 = vmul.f32 %v170, %v171
  %v176 = vsub.f32 %v152, %v172
  %v177 = vsub.f32 %v153, %v173
  %v178 = vsub.f32 %v154, %v174
  %v179 = vsub.f32 %v155, %v175
  %v180 = vmul.f32 %v176, %v176
  %v181 = vmul.f32 %v177, %v177
  %v182 = vmul.f32 %v178, %v178
  %v183 = vmul.f32 %v179, %v179
  %v184 = vsel %vm158, %v180, 0.0
  %185 = vadd.xlane.f32.xlu0 %v184
  %v186 = vpop.xlane.xlu0 %185
  %v187 = vsel %vm158, %v181, 0.0
  %188 = vadd.xlane.f32.xlu0 %v187
  %v189 = vpop.xlane.xlu0 %188
  %v190 = vsel %vm158, %v182, 0.0
  %191 = vadd.xlane.f32.xlu0 %v190
  %v192 = vpop.xlane.xlu0 %191
  %v193 = vsel %vm158, %v183, 0.0
  %194 = vadd.xlane.f32.xlu0 %v193
  %v195 = vpop.xlane.xlu0 %194
  %v196 = vmul.f32 %v186, %v171
  %v197 = vmul.f32 %v189, %v171
  %v198 = vmul.f32 %v192, %v171
  %v199 = vmul.f32 %v195, %v171
  %v200 = vadd.f32 %v196, 1e-05
  %v201 = vadd.f32 %v197, 1e-05
  %v202 = vadd.f32 %v198, 1e-05
  %v203 = vadd.f32 %v199, 1e-05
  %v204 = vrsqrt.pop %v200
  %v205 = vrsqrt.pop %v201
  %v206 = vrsqrt.pop %v202
  %v207 = vrsqrt.pop %v203
  %v208 = vmul.f32 %v176, %v204
  %v209 = vmul.f32 %v177, %v205
  %v210 = vmul.f32 %v178, %v206
  %v211 = vmul.f32 %v179, %v207
  %v213 = vlaneseq
  %v214 = vshrl.u32 %v213, 7
  %v215 = vsub.s32 0, %v214
  %v216 = vrot.slane %v156, %v215
  %v218 = vmul.f32 %v208, %v216
  %v219 = vmul.f32 %v209, %v216
  %v220 = vmul.f32 %v210, %v216
  %v221 = vmul.f32 %v211, %v216
  %v223 = vlaneseq
  %v224 = vshrl.u32 %v223, 7
  %v225 = vsub.s32 0, %v224
  %v226 = vrot.slane %v157, %v225
  %v228 = vadd.f32 %v218, %v226
  %v229 = vadd.f32 %v219, %v226
  %v230 = vadd.f32 %v220, %v226
  %v231 = vadd.f32 %v221, %v226
  %232 = vst.msk [vmem:[%s5] sm:$0xff] %vm158, %v228
  %233 = vst.msk [vmem:[%s5 + $0x8] sm:$0xff] %vm158, %v229
  %234 = vst.msk [vmem:[%s5 + $0x10] sm:$0xff] %vm158, %v230
  %235 = vst.msk [vmem:[%s5 + $0x18] sm:$0xff] %vm158, %v231
  // Predicated region
  $region22: #{ae_paired_forward.45} parent=0 // pred_check
    _
  $region23: #{ae_paired_forward.45} parent=0 // pred_check_branch
    %237 = sbr.rel (0) target = $region25
  $region24: #{ae_paired_forward.45} parent=0 // pred_region
    _
  $region25: #{ae_paired_forward.45} parent=0 // pred_fallthru
    _
  // Predicated region
  $region26: #{ae_paired_forward.45} parent=0 // pred_check
    _
  $region27: #{ae_paired_forward.45} parent=0 // pred_check_branch
    %239 = sbr.rel (0) target = $region29
  $region28: #{ae_paired_forward.45} parent=0 // pred_region
    _
  $region29: #{ae_paired_forward.45} parent=0 // pred_fallthru
    _

// kernel: ae_paired_forward.46
$region0: #{ae_paired_forward.46}
  #allocation0 [shape = 'u32[]', space=smem, size = 0x4, offset = 0x4, fixed_abs, tag = 'smem constant byte address 0x4 - core index']
  #allocation1 [shape = 'u32[144,128]{1,0:T(1,128)}', space=vmem, size = 0x12000, scoped, tag = 'internal scratch']
  %s0 = inlined_call_operand.vmem [shape: f32[32,144], index: 0, kind: input, shape index: {}]
  %s1 = inlined_call_operand.vmem [shape: f32[144,16], index: 1, kind: input, shape index: {}]
  %s2 = inlined_call_operand.vmem [shape: f32[1,16], index: 2, kind: input, shape index: {}]
  %s3 = inlined_call_operand.vmem [shape: f32[32,16], index: 3, kind: output, shape index: {}]
  %s4 = sld [smem:[#allocation0]]
  $region22: #{ae_paired_forward.46} parent=0
    _
  %s6 = ssub.s32 1, %s4
  %s7 = scalar_select 0, %s6, %s4
  // Predicated region
  $region2: #{ae_paired_forward.46} parent=0 // pred_check
    _
  $region3: #{ae_paired_forward.46} parent=0 // pred_check_branch
    %9 = sbr.rel (0) target = $region5
  $region4: #{ae_paired_forward.46} parent=0 // pred_region
    _
  $region5: #{ae_paired_forward.46} parent=0 // pred_fallthru
    _
  // Predicated region
  $region6: #{ae_paired_forward.46} parent=0 // pred_check
    _
  $region7: #{ae_paired_forward.46} parent=0 // pred_check_branch
    %11 = sbr.rel (0) target = $region9
  $region8: #{ae_paired_forward.46} parent=0 // pred_region
    _
  $region9: #{ae_paired_forward.46} parent=0 // pred_fallthru
    _
  // Predicated region
  $region10: #{ae_paired_forward.46} parent=0 // pred_check
    _
  $region11: #{ae_paired_forward.46} parent=0 // pred_check_branch
    %13 = sbr.rel (0) target = $region13
  $region12: #{ae_paired_forward.46} parent=0 // pred_region
    _
  $region13: #{ae_paired_forward.46} parent=0 // pred_fallthru
    _
  %v14 = vld [vmem:[%s0] sm:$0xff]
  %v15 = vld [vmem:[%s0 + $0x8] sm:$0xff]
  %v16 = vld [vmem:[%s0 + $0x10] sm:$0xff]
  %v17 = vld [vmem:[%s0 + $0x18] sm:$0xff]
  %v18 = vld [vmem:[%s0 + $0x20] sm:$0xff]
  %v19 = vld [vmem:[%s0 + $0x28] sm:$0xff]
  %v20 = vld [vmem:[%s0 + $0x30] sm:$0xff]
  %v21 = vld [vmem:[%s0 + $0x38] sm:$0xff]
  %v22 = vld [vmem:[%s1] sm:$0xff]
  %v23 = vld [vmem:[%s1 + $0x8] sm:$0xff]
  %v24 = vld [vmem:[%s1 + $0x10] sm:$0xff]
  %v25 = vld [vmem:[%s1 + $0x18] sm:$0xff]
  %v26 = vld [vmem:[%s1 + $0x20] sm:$0xff]
  %v27 = vld [vmem:[%s1 + $0x28] sm:$0xff]
  %v28 = vld [vmem:[%s1 + $0x30] sm:$0xff]
  %v29 = vld [vmem:[%s1 + $0x38] sm:$0xff]
  %v30 = vld [vmem:[%s1 + $0x40] sm:$0xff]
  %v31 = vld [vmem:[%s1 + $0x48] sm:$0xff]
  %v32 = vld [vmem:[%s1 + $0x50] sm:$0xff]
  %v33 = vld [vmem:[%s1 + $0x58] sm:$0xff]
  %v34 = vld [vmem:[%s1 + $0x60] sm:$0xff]
  %v35 = vld [vmem:[%s1 + $0x68] sm:$0xff]
  %v36 = vld [vmem:[%s1 + $0x70] sm:$0xff]
  %v37 = vld [vmem:[%s1 + $0x78] sm:$0xff]
  %v38 = vld [vmem:[%s1 + $0x80] sm:$0xff]
  %v39 = vld [vmem:[%s1 + $0x88] sm:$0xff]
  %v40 = vld [vmem:[%s2] sm:$0x1]
  %v42 = vlaneseq
  %v43 = vshrl.u32 %v42, 7
  %v44 = vsub.s32 0, %v43
  %v45 = vrot.slane %v40, %v44
  %vm47 = vcmask 130048
  %v49 = vsel %vm47, %v15, 0
  %v52 = vsel %vm47, %v17, 0
  %v55 = vsel %vm47, %v19, 0
  %v58 = vsel %vm47, %v21, 0
  %60 = vmatprep.subr.mxu0 0.0
  %61 = vmatpush1.msra.mxu0 %v22
  %62 = vmatprep.subr.mxu0 0.0
  %63 = vmatpush1.msra.mxu0 %v23
  %64 = vmatprep.subr.mxu0 0.0
  %65 = vmatpush1.msra.mxu0 %v24
  %66 = vmatprep.subr.mxu0 0.0
  %67 = vmatpush1.msra.mxu0 %v25
  %68 = vmatprep.subr.mxu0 0.0
  %69 = vmatpush1.msra.mxu0 %v26
  %70 = vmatprep.subr.mxu0 0.0
  %71 = vmatpush1.msra.mxu0 %v27
  %72 = vmatprep.subr.mxu0 0.0
  %73 = vmatpush1.msra.mxu0 %v28
  %74 = vmatprep.subr.mxu0 0.0
  %75 = vmatpush1.msra.mxu0 %v29
  %76 = vmatprep.subr.mxu0 0.0
  %77 = vmatpush1.msra.mxu0 %v30
  %78 = vmatprep.subr.mxu0 0.0
  %79 = vmatpush1.msra.mxu0 %v31
  %80 = vmatprep.subr.mxu0 0.0
  %81 = vmatpush1.msra.mxu0 %v32
  %82 = vmatprep.subr.mxu0 0.0
  %83 = vmatpush1.msra.mxu0 %v33
  %84 = vmatprep.subr.mxu0 0.0
  %85 = vmatpush1.msra.mxu0 %v34
  %86 = vmatprep.subr.mxu0 0.0
  %87 = vmatpush1.msra.mxu0 %v35
  %88 = vmatprep.subr.mxu0 0.0
  %89 = vmatpush1.msra.mxu0 %v36
  %90 = vmatprep.subr.mxu0 0.0
  %91 = vmatpush1.msra.mxu0 %v37
  %92 = vmatprep.subr.mxu0 0.0
  %93 = vmatpush1.msra.mxu0 %v38
  %94 = vmatprep.subr.mxu0 0.0
  %95 = vmatpush1.msra.mxu0 %v39
  %96 = vmatprep.subr.mxu0 0.0
  %97 = vmatpush1.msra.mxu0 0.0
  %98 = vmatprep.subr.mxu0 0.0
  %99 = vmatpush1.msra.mxu0 0.0
  %100 = vmatprep.subr.mxu0 0.0
  %101 = vmatpush1.msra.mxu0 0.0
  %102 = vmatprep.subr.mxu0 0.0
  %103 = vmatpush1.msra.mxu0 0.0
  %104 = vmatprep.subr.mxu0 0.0
  %105 = vmatpush1.msra.mxu0 0.0
  %106 = vmatprep.subr.mxu0 0.0
  %107 = vmatpush1.msra.mxu0 0.0
  %108 = vmatprep.subr.mxu0 0.0
  %109 = vmatpush1.msra.mxu0 0.0
  %110 = vmatprep.subr.mxu0 0.0
  %111 = vmatpush1.msra.mxu0 0.0
  %112 = vmatprep.subr.mxu0 0.0
  %113 = vmatpush1.msra.mxu0 0.0
  %114 = vmatprep.subr.mxu0 0.0
  %115 = vmatpush1.msra.mxu0 0.0
  %116 = vmatprep.subr.mxu0 0.0
  %117 = vmatpush1.msra.mxu0 0.0
  %118 = vmatprep.subr.mxu0 0.0
  %119 = vmatpush1.msra.mxu0 0.0
  %120 = vmatprep.subr.mxu0 0.0
  %121 = vmatpush1.msra.mxu0 0.0
  %122 = vmatprep.subr.mxu0 0.0
  %123 = vmatpush1.msra.mxu0 0.0
  %124 = vmatprep.mubr.f32.mxu0 %v49
  %125 = vmatmul.mubr.f32.gmra.mrb[0].mxu0 %v14
  %v126 = vpop.f32.mrb[0].mxu0
  %v127 = vadd.f32 %v45, %v126
  %v128 = vpop.f32.mrb[0].mxu0
  %129 = vmatprep.mubr.f32.mxu0 %v52
  %130 = vmatmul.mubr.f32.gmra.mrb[0].mxu0 %v16
  %v131 = vpop.f32.mrb[0].mxu0
  %v132 = vadd.f32 %v45, %v131
  %v133 = vpop.f32.mrb[0].mxu0
  %134 = vmatprep.mubr.f32.mxu0 %v55
  %135 = vmatmul.mubr.f32.gmra.mrb[0].mxu0 %v18
  %v136 = vpop.f32.mrb[0].mxu0
  %v137 = vadd.f32 %v45, %v136
  %v138 = vpop.f32.mrb[0].mxu0
  %139 = vmatprep.mubr.f32.mxu0 %v58
  %140 = vmatmul.mubr.f32.gmra.mrb[0].mxu0 %v20
  %v141 = vpop.f32.mrb[0].mxu0
  %v142 = vadd.f32 %v45, %v141
  %v143 = vpop.f32.mrb[0].mxu0
  %144 = vdwg.mxu0
  %v145 = vmax.f32 %v127, 0.0
  %v146 = vmax.f32 %v132, 0.0
  %v147 = vmax.f32 %v137, 0.0
  %v148 = vmax.f32 %v142, 0.0
  %149 = vst.msk [vmem:[%s3] sm:$0xff] %vm47, %v145
  %150 = vst.msk [vmem:[%s3 + $0x8] sm:$0xff] %vm47, %v146
  %151 = vst.msk [vmem:[%s3 + $0x10] sm:$0xff] %vm47, %v147
  %152 = vst.msk [vmem:[%s3 + $0x18] sm:$0xff] %vm47, %v148
  // Predicated region
  $region14: #{ae_paired_forward.46} parent=0 // pred_check
    _
  $region15: #{ae_paired_forward.46} parent=0 // pred_check_branch
    %154 = sbr.rel (0) target = $region17
  $region16: #{ae_paired_forward.46} parent=0 // pred_region
    _
  $region17: #{ae_paired_forward.46} parent=0 // pred_fallthru
    _
  // Predicated region
  $region18: #{ae_paired_forward.46} parent=0 // pred_check
    _
  $region19: #{ae_paired_forward.46} parent=0 // pred_check_branch
    %156 = sbr.rel (0) target = $region21
  $region20: #{ae_paired_forward.46} parent=0 // pred_region
    _
  $region21: #{ae_paired_forward.46} parent=0 // pred_fallthru
    _

// kernel: ae_paired_forward.49
$region0: #{ae_paired_forward.49}
  #allocation0 [shape = 'u32[]', space=smem, size = 0x4, offset = 0x4, fixed_abs, tag = 'smem constant byte address 0x4 - core index']
  #allocation1 [shape = 'u32[144,128]{1,0:T(1,128)}', space=vmem, size = 0x12000, scoped, tag = 'internal scratch']
  %s0 = inlined_call_operand.vmem [shape: f32[32,16], index: 0, kind: input, shape index: {}]
  %s1 = inlined_call_operand.vmem [shape: f32[32,16], index: 1, kind: input, shape index: {}]
  %s2 = inlined_call_operand.vmem [shape: f32[16,16], index: 2, kind: input, shape index: {}]
  %s3 = inlined_call_operand.vmem [shape: f32[16,16], index: 3, kind: input, shape index: {}]
  %s4 = inlined_call_operand.vmem [shape: f32[1,16], index: 4, kind: input, shape index: {}]
  %s5 = inlined_call_operand.vmem [shape: f32[32,16], index: 5, kind: output, shape index: {}]
  %s6 = sld [smem:[#allocation0]]
  $region30: #{ae_paired_forward.49} parent=0
    _
  %s8 = ssub.s32 1, %s6
  %s9 = scalar_select 0, %s8, %s6
  // Predicated region
  $region2: #{ae_paired_forward.49} parent=0 // pred_check
    _
  $region3: #{ae_paired_forward.49} parent=0 // pred_check_branch
    %11 = sbr.rel (0) target = $region5
  $region4: #{ae_paired_forward.49} parent=0 // pred_region
    _
  $region5: #{ae_paired_forward.49} parent=0 // pred_fallthru
    _
  // Predicated region
  $region6: #{ae_paired_forward.49} parent=0 // pred_check
    _
  $region7: #{ae_paired_forward.49} parent=0 // pred_check_branch
    %13 = sbr.rel (0) target = $region9
  $region8: #{ae_paired_forward.49} parent=0 // pred_region
    _
  $region9: #{ae_paired_forward.49} parent=0 // pred_fallthru
    _
  // Predicated region
  $region10: #{ae_paired_forward.49} parent=0 // pred_check
    _
  $region11: #{ae_paired_forward.49} parent=0 // pred_check_branch
    %15 = sbr.rel (0) target = $region13
  $region12: #{ae_paired_forward.49} parent=0 // pred_region
    _
  $region13: #{ae_paired_forward.49} parent=0 // pred_fallthru
    _
  // Predicated region
  $region14: #{ae_paired_forward.49} parent=0 // pred_check
    _
  $region15: #{ae_paired_forward.49} parent=0 // pred_check_branch
    %17 = sbr.rel (0) target = $region17
  $region16: #{ae_paired_forward.49} parent=0 // pred_region
    _
  $region17: #{ae_paired_forward.49} parent=0 // pred_fallthru
    _
  // Predicated region
  $region18: #{ae_paired_forward.49} parent=0 // pred_check
    _
  $region19: #{ae_paired_forward.49} parent=0 // pred_check_branch
    %19 = sbr.rel (0) target = $region21
  $region20: #{ae_paired_forward.49} parent=0 // pred_region
    _
  $region21: #{ae_paired_forward.49} parent=0 // pred_fallthru
    _
  %v20 = vld [vmem:[%s0] sm:$0xff]
  %v21 = vld [vmem:[%s0 + $0x8] sm:$0xff]
  %v22 = vld [vmem:[%s0 + $0x10] sm:$0xff]
  %v23 = vld [vmem:[%s0 + $0x18] sm:$0xff]
  %v24 = vld [vmem:[%s1] sm:$0xff]
  %v25 = vld [vmem:[%s1 + $0x8] sm:$0xff]
  %v26 = vld [vmem:[%s1 + $0x10] sm:$0xff]
  %v27 = vld [vmem:[%s1 + $0x18] sm:$0xff]
  %v28 = vld [vmem:[%s2] sm:$0xff]
  %v29 = vld [vmem:[%s2 + $0x8] sm:$0xff]
  %v30 = vld [vmem:[%s3] sm:$0xff]
  %v31 = vld [vmem:[%s3 + $0x8] sm:$0xff]
  %vm32 = vcmask 130048
  %v34 = vsel %vm32, %v24, 0
  %v37 = vsel %vm32, %v25, 0
  %v40 = vsel %vm32, %v26, 0
  %v43 = vsel %vm32, %v27, 0
  %45 = vmatprep.subr.mxu0 0.0
  %46 = vmatpush1.msra.mxu0 %v30
  %47 = vmatprep.subr.mxu0 0.0
  %48 = vmatpush1.msra.mxu0 %v31
  %49 = vmatprep.subr.mxu0 0.0
  %50 = vmatpush1.msra.mxu0 0.0
  %51 = vmatprep.subr.mxu0 0.0
  %52 = vmatpush1.msra.mxu0 0.0
  %53 = vmatprep.subr.mxu0 0.0
  %54 = vmatpush1.msra.mxu0 0.0
  %55 = vmatprep.subr.mxu0 0.0
  %56 = vmatpush1.msra.mxu0 0.0
  %57 = vmatprep.subr.mxu0 0.0
  %58 = vmatpush1.msra.mxu0 0.0
  %59 = vmatprep.subr.mxu0 0.0
  %60 = vmatpush1.msra.mxu0 0.0
  %61 = vmatprep.subr.mxu0 0.0
  %62 = vmatpush1.msra.mxu0 0.0
  %63 = vmatprep.subr.mxu0 0.0
  %64 = vmatpush1.msra.mxu0 0.0
  %65 = vmatprep.subr.mxu0 0.0
  %66 = vmatpush1.msra.mxu0 0.0
  %67 = vmatprep.subr.mxu0 0.0
  %68 = vmatpush1.msra.mxu0 0.0
  %69 = vmatprep.subr.mxu0 0.0
  %70 = vmatpush1.msra.mxu0 0.0
  %71 = vmatprep.subr.mxu0 0.0
  %72 = vmatpush1.msra.mxu0 0.0
  %73 = vmatprep.subr.mxu0 0.0
  %74 = vmatpush1.msra.mxu0 0.0
  %75 = vmatprep.subr.mxu0 0.0
  %76 = vmatpush1.msra.mxu0 0.0
  %77 = vmatprep.subr.mxu0 0.0
  %78 = vmatpush1.msra.mxu0 0.0
  %79 = vmatprep.subr.mxu0 0.0
  %80 = vmatpush1.msra.mxu0 0.0
  %81 = vmatprep.subr.mxu0 0.0
  %82 = vmatpush1.msra.mxu0 0.0
  %83 = vmatprep.subr.mxu0 0.0
  %84 = vmatpush1.msra.mxu0 0.0
  %85 = vmatprep.subr.mxu0 0.0
  %86 = vmatpush1.msra.mxu0 0.0
  %87 = vmatprep.subr.mxu0 0.0
  %88 = vmatpush1.msra.mxu0 0.0
  %89 = vmatprep.subr.mxu0 0.0
  %90 = vmatpush1.msra.mxu0 0.0
  %91 = vmatprep.subr.mxu0 0.0
  %92 = vmatpush1.msra.mxu0 0.0
  %93 = vmatprep.subr.mxu0 0.0
  %94 = vmatpush1.msra.mxu0 0.0
  %95 = vmatprep.subr.mxu0 0.0
  %96 = vmatpush1.msra.mxu0 0.0
  %97 = vmatprep.subr.mxu0 0.0
  %98 = vmatpush1.msra.mxu0 0.0
  %99 = vmatprep.subr.mxu0 0.0
  %100 = vmatpush1.msra.mxu0 0.0
  %101 = vmatprep.subr.mxu0 0.0
  %102 = vmatpush1.msra.mxu0 0.0
  %103 = vmatprep.subr.mxu0 0.0
  %104 = vmatpush1.msra.mxu0 0.0
  %105 = vmatprep.subr.mxu0 0.0
  %106 = vmatpush1.msra.mxu0 0.0
  %107 = vmatprep.subr.mxu0 0.0
  %108 = vmatpush1.msra.mxu0 0.0
  %109 = vmatprep.mubr.f32.mxu0 0.0
  %110 = vmatmul.mubr.f32.gmra.mrb[0].mxu0 %v34
  %v111 = vpop.f32.mrb[0].mxu0
  %v112 = vadd.f32 0.0, %v111
  %v113 = vpop.f32.mrb[0].mxu0
  %114 = vmatprep.mubr.f32.mxu0 0.0
  %115 = vmatmul.mubr.f32.gmra.mrb[0].mxu0 %v37
  %v116 = vpop.f32.mrb[0].mxu0
  %v117 = vadd.f32 0.0, %v116
  %v118 = vpop.f32.mrb[0].mxu0
  %119 = vmatprep.mubr.f32.mxu0 0.0
  %120 = vmatmul.mubr.f32.gmra.mrb[0].mxu0 %v40
  %v121 = vpop.f32.mrb[0].mxu0
  %v122 = vadd.f32 0.0, %v121
  %v123 = vpop.f32.mrb[0].mxu0
  %124 = vmatprep.mubr.f32.mxu0 0.0
  %125 = vmatmul.mubr.f32.gmra.mrb[0].mxu0 %v43
  %v126 = vpop.f32.mrb[0].mxu0
  %v127 = vadd.f32 0.0, %v126
  %v128 = vpop.f32.mrb[0].mxu0
  %129 = vdwg.mxu0
  %v131 = vsel %vm32, %v20, 0
  %v134 = vsel %vm32, %v21, 0
  %v137 = vsel %vm32, %v22, 0
  %v140 = vsel %vm32, %v23, 0
  %142 = vmatprep.subr.mxu0 0.0
  %143 = vmatpush1.msra.mxu0 %v28
  %144 = vmatprep.subr.mxu0 0.0
  %145 = vmatpush1.msra.mxu0 %v29
  %146 = vmatprep.subr.mxu0 0.0
  %147 = vmatpush1.msra.mxu0 0.0
  %148 = vmatprep.subr.mxu0 0.0
  %149 = vmatpush1.msra.mxu0 0.0
  %150 = vmatprep.subr.mxu0 0.0
  %151 = vmatpush1.msra.mxu0 0.0
  %152 = vmatprep.subr.mxu0 0.0
  %153 = vmatpush1.msra.mxu0 0.0
  %154 = vmatprep.subr.mxu0 0.0
  %155 = vmatpush1.msra.mxu0 0.0
  %156 = vmatprep.subr.mxu0 0.0
  %157 = vmatpush1.msra.mxu0 0.0
  %158 = vmatprep.subr.mxu0 0.0
  %159 = vmatpush1.msra.mxu0 0.0
  %160 = vmatprep.subr.mxu0 0.0
  %161 = vmatpush1.msra.mxu0 0.0
  %162 = vmatprep.subr.mxu0 0.0
  %163 = vmatpush1.msra.mxu0 0.0
  %164 = vmatprep.subr.mxu0 0.0
  %165 = vmatpush1.msra.mxu0 0.0
  %166 = vmatprep.subr.mxu0 0.0
  %167 = vmatpush1.msra.mxu0 0.0
  %168 = vmatprep.subr.mxu0 0.0
  %169 = vmatpush1.msra.mxu0 0.0
  %170 = vmatprep.subr.mxu0 0.0
  %171 = vmatpush1.msra.mxu0 0.0
  %172 = vmatprep.subr.mxu0 0.0
  %173 = vmatpush1.msra.mxu0 0.0
  %174 = vmatprep.subr.mxu0 0.0
  %175 = vmatpush1.msra.mxu0 0.0
  %176 = vmatprep.subr.mxu0 0.0
  %177 = vmatpush1.msra.mxu0 0.0
  %178 = vmatprep.subr.mxu0 0.0
  %179 = vmatpush1.msra.mxu0 0.0
  %180 = vmatprep.subr.mxu0 0.0
  %181 = vmatpush1.msra.mxu0 0.0
  %182 = vmatprep.subr.mxu0 0.0
  %183 = vmatpush1.msra.mxu0 0.0
  %184 = vmatprep.subr.mxu0 0.0
  %185 = vmatpush1.msra.mxu0 0.0
  %186 = vmatprep.subr.mxu0 0.0
  %187 = vmatpush1.msra.mxu0 0.0
  %188 = vmatprep.subr.mxu0 0.0
  %189 = vmatpush1.msra.mxu0 0.0
  %190 = vmatprep.subr.mxu0 0.0
  %191 = vmatpush1.msra.mxu0 0.0
  %192 = vmatprep.subr.mxu0 0.0
  %193 = vmatpush1.msra.mxu0 0.0
  %194 = vmatprep.subr.mxu0 0.0
  %195 = vmatpush1.msra.mxu0 0.0
  %196 = vmatprep.subr.mxu0 0.0
  %197 = vmatpush1.msra.mxu0 0.0
  %198 = vmatprep.subr.mxu0 0.0
  %199 = vmatpush1.msra.mxu0 0.0
  %200 = vmatprep.subr.mxu0 0.0
  %201 = vmatpush1.msra.mxu0 0.0
  %202 = vmatprep.subr.mxu0 0.0
  %203 = vmatpush1.msra.mxu0 0.0
  %204 = vmatprep.subr.mxu0 0.0
  %205 = vmatpush1.msra.mxu0 0.0
  %206 = vmatprep.mubr.f32.mxu0 0.0
  %207 = vmatmul.mubr.f32.gmra.mrb[0].mxu0 %v131
  %v208 = vpop.f32.mrb[0].mxu0
  %v209 = vadd.f32 %v112, %v208
  %v210 = vpop.f32.mrb[0].mxu0
  %211 = vmatprep.mubr.f32.mxu0 0.0
  %212 = vmatmul.mubr.f32.gmra.mrb[0].mxu0 %v134
  %v213 = vpop.f32.mrb[0].mxu0
  %v214 = vadd.f32 %v117, %v213
  %v215 = vpop.f32.mrb[0].mxu0
  %216 = vmatprep.mubr.f32.mxu0 0.0
  %217 = vmatmul.mubr.f32.gmra.mrb[0].mxu0 %v137
  %v218 = vpop.f32.mrb[0].mxu0
  %v219 = vadd.f32 %v122, %v218
  %v220 = vpop.f32.mrb[0].mxu0
  %221 = vmatprep.mubr.f32.mxu0 0.0
  %222 = vmatmul.mubr.f32.gmra.mrb[0].mxu0 %v140
  %v223 = vpop.f32.mrb[0].mxu0
  %v224 = vadd.f32 %v127, %v223
  %v225 = vpop.f32.mrb[0].mxu0
  %226 = vdwg.mxu0
  %v227 = vld [vmem:[%s4] sm:$0x1]
  %v229 = vlaneseq
  %v230 = vshrl.u32 %v229, 7
  %v231 = vsub.s32 0, %v230
  %v232 = vrot.slane %v227, %v231
  %v234 = vadd.f32 %v209, %v232
  %v235 = vadd.f32 %v214, %v232
  %v236 = vadd.f32 %v219, %v232
  %v237 = vadd.f32 %v224, %v232
  %238 = vst.msk [vmem:[%s5] sm:$0xff] %vm32, %v234
  %239 = vst.msk [vmem:[%s5 + $0x8] sm:$0xff] %vm32, %v235
  %240 = vst.msk [vmem:[%s5 + $0x10] sm:$0xff] %vm32, %v236
  %241 = vst.msk [vmem:[%s5 + $0x18] sm:$0xff] %vm32, %v237
  // Predicated region
  $region22: #{ae_paired_forward.49} parent=0 // pred_check
    _
  $region23: #{ae_paired_forward.49} parent=0 // pred_check_branch
    %243 = sbr.rel (0) target = $region25
  $region24: #{ae_paired_forward.49} parent=0 // pred_region
    _
  $region25: #{ae_paired_forward.49} parent=0 // pred_fallthru
    _
  // Predicated region
  $region26: #{ae_paired_forward.49} parent=0 // pred_check
    _
  $region27: #{ae_paired_forward.49} parent=0 // pred_check_branch
    %245 = sbr.rel (0) target = $region29
  $region28: #{ae_paired_forward.49} parent=0 // pred_region
    _
  $region29: #{ae_paired_forward.49} parent=0 // pred_fallthru
    _

// kernel: ae_paired_forward.51
$region0: #{ae_paired_forward.51}
  #allocation0 [shape = 'u32[]', space=smem, size = 0x4, offset = 0x4, fixed_abs, tag = 'smem constant byte address 0x4 - core index']
  #allocation1 [shape = 'u32[144,128]{1,0:T(1,128)}', space=vmem, size = 0x12000, scoped, tag = 'internal scratch']
  %s0 = inlined_call_operand.vmem [shape: f32[128,16], index: 0, kind: input, shape index: {}]
  %s1 = inlined_call_operand.vmem [shape: f32[128,16], index: 1, kind: input, shape index: {}]
  %s2 = inlined_call_operand.hbm [shape: f32[1,1], index: 2, kind: output, shape index: {}]
  %s3 = sld [smem:[#allocation0]]
  $region22: #{ae_paired_forward.51} parent=0
    _
  %s5 = ssub.s32 1, %s3
  %s6 = scalar_select 0, %s5, %s3
  $region1: #{ae_paired_forward.51} parent=0
    #allocation2 [shape = 'u8[512]{0}', space=vmem, size = 0x400, scoped, tag = 'output window, operand 0, single buffered']
    #allocation3 [shape = 's32[1]{0}', space=sflag, size = 0x4, scoped, tag = 'scoped memory for ae_paired_forward.51']
    %7 = vsyncpa [#allocation3], 0
    // Predicated region
    $region2: #{ae_paired_forward.51} parent=1 // pred_check
      _
    $region3: #{ae_paired_forward.51} parent=1 // pred_check_branch
      %9 = sbr.rel (0) target = $region5
    $region4: #{ae_paired_forward.51} parent=1 // pred_region
      _
    $region5: #{ae_paired_forward.51} parent=1 // pred_fallthru
      _
    // Predicated region
    $region6: #{ae_paired_forward.51} parent=1 // pred_check
      _
    $region7: #{ae_paired_forward.51} parent=1 // pred_check_branch
      %11 = sbr.rel (0) target = $region9
    $region8: #{ae_paired_forward.51} parent=1 // pred_region
      _
    $region9: #{ae_paired_forward.51} parent=1 // pred_fallthru
      _
    %p12 = scmp.eq.s32.totalorder 0, 0
    // Predicated region
    $region10: #{ae_paired_forward.51} parent=1 // pred_check
      %p13 = pneg %p12
    $region11: #{ae_paired_forward.51} parent=1 // pred_check_branch
      %15 = sbr.rel (%p13) target = $region13
    $region12: #{ae_paired_forward.51} parent=1 // pred_region
      %vm16 = vcmask 0
      %17 = vst.msk [vmem:[#allocation2] sm:$0x1] %vm16, 0.0
    $region13: #{ae_paired_forward.51} parent=1 // pred_fallthru
      _
    %v18 = vld [vmem:[%s0] sm:$0xff]
    %v19 = vld [vmem:[%s0 + $0x8] sm:$0xff]
    %v20 = vld [vmem:[%s0 + $0x10] sm:$0xff]
    %v21 = vld [vmem:[%s0 + $0x18] sm:$0xff]
    %v22 = vld [vmem:[%s0 + $0x20] sm:$0xff]
    %v23 = vld [vmem:[%s0 + $0x28] sm:$0xff]
    %v24 = vld [vmem:[%s0 + $0x30] sm:$0xff]
    %v25 = vld [vmem:[%s0 + $0x38] sm:$0xff]
    %v26 = vld [vmem:[%s0 + $0x40] sm:$0xff]
    %v27 = vld [vmem:[%s0 + $0x48] sm:$0xff]
    %v28 = vld [vmem:[%s0 + $0x50] sm:$0xff]
    %v29 = vld [vmem:[%s0 + $0x58] sm:$0xff]
    %v30 = vld [vmem:[%s0 + $0x60] sm:$0xff]
    %v31 = vld [vmem:[%s0 + $0x68] sm:$0xff]
    %v32 = vld [vmem:[%s0 + $0x70] sm:$0xff]
    %v33 = vld [vmem:[%s0 + $0x78] sm:$0xff]
    %v34 = vld [vmem:[%s1] sm:$0xff]
    %v35 = vld [vmem:[%s1 + $0x8] sm:$0xff]
    %v36 = vld [vmem:[%s1 + $0x10] sm:$0xff]
    %v37 = vld [vmem:[%s1 + $0x18] sm:$0xff]
    %v38 = vld [vmem:[%s1 + $0x20] sm:$0xff]
    %v39 = vld [vmem:[%s1 + $0x28] sm:$0xff]
    %v40 = vld [vmem:[%s1 + $0x30] sm:$0xff]
    %v41 = vld [vmem:[%s1 + $0x38] sm:$0xff]
    %v42 = vld [vmem:[%s1 + $0x40] sm:$0xff]
    %v43 = vld [vmem:[%s1 + $0x48] sm:$0xff]
    %v44 = vld [vmem:[%s1 + $0x50] sm:$0xff]
    %v45 = vld [vmem:[%s1 + $0x58] sm:$0xff]
    %v46 = vld [vmem:[%s1 + $0x60] sm:$0xff]
    %v47 = vld [vmem:[%s1 + $0x68] sm:$0xff]
    %v48 = vld [vmem:[%s1 + $0x70] sm:$0xff]
    %v49 = vld [vmem:[%s1 + $0x78] sm:$0xff]
    %v50 = vsub.f32 %v18, %v34
    %v51 = vsub.f32 %v19, %v35
    %v52 = vsub.f32 %v20, %v36
    %v53 = vsub.f32 %v21, %v37
    %v54 = vsub.f32 %v22, %v38
    %v55 = vsub.f32 %v23, %v39
    %v56 = vsub.f32 %v24, %v40
    %v57 = vsub.f32 %v25, %v41
    %v58 = vsub.f32 %v26, %v42
    %v59 = vsub.f32 %v27, %v43
    %v60 = vsub.f32 %v28, %v44
    %v61 = vsub.f32 %v29, %v45
    %v62 = vsub.f32 %v30, %v46
    %v63 = vsub.f32 %v31, %v47
    %v64 = vsub.f32 %v32, %v48
    %v65 = vsub.f32 %v33, %v49
    %v66 = vld [vmem:[#allocation2] sm:$0x1]
    %v67 = vmul.f32 %v50, %v50
    %v68 = vmul.f32 %v51, %v51
    %v69 = vmul.f32 %v52, %v52
    %v70 = vmul.f32 %v53, %v53
    %v71 = vmul.f32 %v54, %v54
    %v72 = vmul.f32 %v55, %v55
    %v73 = vmul.f32 %v56, %v56
    %v74 = vmul.f32 %v57, %v57
    %v75 = vmul.f32 %v58, %v58
    %v76 = vmul.f32 %v59, %v59
    %v77 = vmul.f32 %v60, %v60
    %v78 = vmul.f32 %v61, %v61
    %v79 = vmul.f32 %v62, %v62
    %v80 = vmul.f32 %v63, %v63
    %v81 = vmul.f32 %v64, %v64
    %v82 = vmul.f32 %v65, %v65
    %vm83 = vcmask 130048
    %v84 = vsel %vm83, %v67, 0.0
    %v85 = vsel %vm83, %v68, 0.0
    %v86 = vadd.f32 %v84, %v85
    %v87 = vsel %vm83, %v69, 0.0
    %v88 = vadd.f32 %v86, %v87
    %v89 = vsel %vm83, %v70, 0.0
    %v90 = vadd.f32 %v88, %v89
    %v91 = vsel %vm83, %v71, 0.0
    %v92 = vadd.f32 %v90, %v91
    %v93 = vsel %vm83, %v72, 0.0
    %v94 = vadd.f32 %v92, %v93
    %v95 = vsel %vm83, %v73, 0.0
    %v96 = vadd.f32 %v94, %v95
    %v97 = vsel %vm83, %v74, 0.0
    %v98 = vadd.f32 %v96, %v97
    %v99 = vsel %vm83, %v75, 0.0
    %v100 = vadd.f32 %v98, %v99
    %v101 = vsel %vm83, %v76, 0.0
    %v102 = vadd.f32 %v100, %v101
    %v103 = vsel %vm83, %v77, 0.0
    %v104 = vadd.f32 %v102, %v103
    %v105 = vsel %vm83, %v78, 0.0
    %v106 = vadd.f32 %v104, %v105
    %v107 = vsel %vm83, %v79, 0.0
    %v108 = vadd.f32 %v106, %v107
    %v109 = vsel %vm83, %v80, 0.0
    %v110 = vadd.f32 %v108, %v109
    %v111 = vsel %vm83, %v81, 0.0
    %v112 = vadd.f32 %v110, %v111
    %v113 = vsel %vm83, %v82, 0.0
    %v114 = vadd.f32 %v112, %v113
    %115 = vadd.xlane.f32.xlu0 %v114
    %v116 = vpop.xlane.xlu0 %115
    %v117 = vrot.slane %v116, 4
    %v118 = vadd.f32 %v116, %v117
    %v119 = vrot.slane %v118, 2
    %v120 = vadd.f32 %v118, %v119
    %v121 = vrot.slane %v120, 1
    %v122 = vadd.f32 %v120, %v121
    %s123 = vtos %v122
    %v124 = vstv %s123
    %v125 = vadd.f32 %v66, %v124
    %vm126 = vcmask 0
    %127 = vst.msk [vmem:[#allocation2] sm:$0x1] %vm126, %v125
    // Predicated region
    $region14: #{ae_paired_forward.51} parent=1 // pred_check
      _
    $region15: #{ae_paired_forward.51} parent=1 // pred_check_branch
      %129 = sbr.rel (0) target = $region17
    $region16: #{ae_paired_forward.51} parent=1 // pred_region
      %s131 = ssub.s32 16, 16
      %132 = vsyncadd [#allocation3], %s131
      %s134 = sshll.u32 [#allocation2], 4
      %s135 = int_to_ptr.vmem [resolvable:$true] %s134
      %137 = dma.vmem_to_hbm [thread:$0]  %s135, 16, %s2, [#allocation3]
    $region17: #{ae_paired_forward.51} parent=1 // pred_fallthru
      _
    // Predicated region
    $region18: #{ae_paired_forward.51} parent=1 // pred_check
      _
    $region19: #{ae_paired_forward.51} parent=1 // pred_check_branch
      %139 = sbr.rel (0) target = $region21
    $region20: #{ae_paired_forward.51} parent=1 // pred_region
      %140 = dma.done [#allocation3], 16
    $region21: #{ae_paired_forward.51} parent=1 // pred_fallthru
      _
    %141 = vsyncpa [#allocation3], 1

// kernel: ae_paired_forward.36
$region0: #{ae_paired_forward.36}
  #allocation0 [shape = 'u32[]', space=smem, size = 0x4, offset = 0x4, fixed_abs, tag = 'smem constant byte address 0x4 - core index']
  #allocation1 [shape = 'u32[144,128]{1,0:T(1,128)}', space=vmem, size = 0x12000, scoped, tag = 'internal scratch']
  %s0 = inlined_call_operand.vmem [shape: f32[512,256], index: 0, kind: input, shape index: {}]
  %s1 = inlined_call_operand.vmem [shape: f32[256,16], index: 1, kind: input, shape index: {}]
  %s2 = inlined_call_operand.vmem [shape: f32[1,16], index: 2, kind: input, shape index: {}]
  %s3 = inlined_call_operand.vmem [shape: f32[1,16], index: 3, kind: input, shape index: {}]
  %s4 = inlined_call_operand.vmem [shape: f32[1,16], index: 4, kind: input, shape index: {}]
  %s5 = inlined_call_operand.vmem [shape: f32[512,16], index: 5, kind: output, shape index: {}]
  %s6 = sld [smem:[#allocation0]]
  $region53: #{ae_paired_forward.36} parent=0
    _
  %s8 = ssub.s32 1, %s6
  %s9 = scalar_select 0, %s8, %s6
  loop: start=0, step=1, limit=4
  $region2: #{ae_paired_forward.36} parent=0 // loop_pre_header
    _
  $region3: #{ae_paired_forward.36} parent=0 // loop_header
    %s11 = sphi 0, %s15
    %p12 = scmp.ge.s32.totalorder %s11, 4
    %s21 = sphi 0, %s23
    %s24 = sphi 0, %s21
    %s25 = sphi 0, %s24
    %s41 = sphi 0, %s25
    %s45 = sphi 0, %s45
    %s47 = sphi 0, %s45
    %s48 = sphi 0, %s47
    %s62 = sphi 0, %s48
    %s66 = sphi 0, %s66
    %s68 = sphi 0, %s66
    %s69 = sphi 0, %s68
    %s83 = sphi 0, %s69
    %s87 = sphi 0, %s87
    %s89 = sphi 0, %s87
    %s90 = sphi 0, %s89
    %s104 = sphi 0, %s90
    %s108 = sphi 0, %s108
    %s110 = sphi 0, %s108
    %s111 = sphi 0, %s110
    %s125 = sphi 0, %s111
    %s131 = sphi 0, %s133
    %s134 = sphi 0, %s131
    %s135 = sphi 0, %s134
    %s151 = sphi 0, %s135
  $region4: #{ae_paired_forward.36} parent=0 // loop_header_branch
    %14 = sbr.rel (%p12) target = $region8
  $region5: #{ae_paired_forward.36} parent=0 // loop_body
    %s16 = ssub.s32 %s11, 1
    %s17 = ssub.s32 %s11, 2
    %s18 = sadd.s32 %s11, 1
    %s19 = ssub.s32 %s11, %s18
    %p20 = scmp.eq.s32.totalorder %s19, 0
    %s22 = sadd.s32 %s21, 1
    %s23 = scalar_select %p20, %s21, %s22
    %p26 = pneg %p20
    %p27 = scmp.eq.s32.totalorder %s11, 1
    %p28 = por %p26, %p27
    %p29 = scmp.ne.s32.totalorder %s21, %s24
    %p30 = scmp.eq.s32.totalorder %s11, 0
    %p31 = por %p29, %p30
    %p32 = scmp.ne.s32.totalorder %s21, %s24
    %p33 = scmp.eq.s32.totalorder %s16, 1
    %p34 = por %p32, %p33
    %p35 = scmp.ne.s32.totalorder %s24, %s25
    %p36 = scmp.eq.s32.totalorder %s16, 0
    %p37 = por %p35, %p36
    %p38 = scmp.ne.s32.totalorder %s24, %s25
    %p39 = scmp.eq.s32.totalorder %s17, 1
    %p40 = por %p38, %p39
    %p42 = scmp.ne.s32.totalorder %s25, %s41
    %p43 = scmp.eq.s32.totalorder %s17, 0
    %p44 = por %p42, %p43
    %s46 = sadd.s32 %s45, 1
    %p49 = scmp.eq.s32.totalorder %s11, 1
    %p50 = scmp.ne.s32.totalorder %s45, %s47
    %p51 = scmp.eq.s32.totalorder %s11, 0
    %p52 = por %p50, %p51
    %p53 = scmp.ne.s32.totalorder %s45, %s47
    %p54 = scmp.eq.s32.totalorder %s16, 1
    %p55 = por %p53, %p54
    %p56 = scmp.ne.s32.totalorder %s47, %s48
    %p57 = scmp.eq.s32.totalorder %s16, 0
    %p58 = por %p56, %p57
    %p59 = scmp.ne.s32.totalorder %s47, %s48
    %p60 = scmp.eq.s32.totalorder %s17, 1
    %p61 = por %p59, %p60
    %p63 = scmp.ne.s32.totalorder %s48, %s62
    %p64 = scmp.eq.s32.totalorder %s17, 0
    %p65 = por %p63, %p64
    %s67 = sadd.s32 %s66, 1
    %p70 = scmp.eq.s32.totalorder %s11, 1
    %p71 = scmp.ne.s32.totalorder %s66, %s68
    %p72 = scmp.eq.s32.totalorder %s11, 0
    %p73 = por %p71, %p72
    %p74 = scmp.ne.s32.totalorder %s66, %s68
    %p75 = scmp.eq.s32.totalorder %s16, 1
    %p76 = por %p74, %p75
    %p77 = scmp.ne.s32.totalorder %s68, %s69
    %p78 = scmp.eq.s32.totalorder %s16, 0
    %p79 = por %p77, %p78
    %p80 = scmp.ne.s32.totalorder %s68, %s69
    %p81 = scmp.eq.s32.totalorder %s17, 1
    %p82 = por %p80, %p81
    %p84 = scmp.ne.s32.totalorder %s69, %s83
    %p85 = scmp.eq.s32.totalorder %s17, 0
    %p86 = por %p84, %p85
    %s88 = sadd.s32 %s87, 1
    %p91 = scmp.eq.s32.totalorder %s11, 1
    %p92 = scmp.ne.s32.totalorder %s87, %s89
    %p93 = scmp.eq.s32.totalorder %s11, 0
    %p94 = por %p92, %p93
    %p95 = scmp.ne.s32.totalorder %s87, %s89
    %p96 = scmp.eq.s32.totalorder %s16, 1
    %p97 = por %p95, %p96
    %p98 = scmp.ne.s32.totalorder %s89, %s90
    %p99 = scmp.eq.s32.totalorder %s16, 0
    %p100 = por %p98, %p99
    %p101 = scmp.ne.s32.totalorder %s89, %s90
    %p102 = scmp.eq.s32.totalorder %s17, 1
    %p103 = por %p101, %p102
    %p105 = scmp.ne.s32.totalorder %s90, %s104
    %p106 = scmp.eq.s32.totalorder %s17, 0
    %p107 = por %p105, %p106
    %s109 = sadd.s32 %s108, 1
    %p112 = scmp.eq.s32.totalorder %s11, 1
    %p113 = scmp.ne.s32.totalorder %s108, %s110
    %p114 = scmp.eq.s32.totalorder %s11, 0
    %p115 = por %p113, %p114
    %p116 = scmp.ne.s32.totalorder %s108, %s110
    %p117 = scmp.eq.s32.totalorder %s16, 1
    %p118 = por %p116, %p117
    %p119 = scmp.ne.s32.totalorder %s110, %s111
    %p120 = scmp.eq.s32.totalorder %s16, 0
    %p121 = por %p119, %p120
    %p122 = scmp.ne.s32.totalorder %s110, %s111
    %p123 = scmp.eq.s32.totalorder %s17, 1
    %p124 = por %p122, %p123
    %p126 = scmp.ne.s32.totalorder %s111, %s125
    %p127 = scmp.eq.s32.totalorder %s17, 0
    %p128 = por %p126, %p127
    %s129 = ssub.s32 %s11, %s18
    %p130 = scmp.eq.s32.totalorder %s129, 0
    %s132 = sadd.s32 %s131, 1
    %s133 = scalar_select %p130, %s131, %s132
    %p136 = pneg %p130
    %p137 = scmp.eq.s32.totalorder %s11, 1
    %p138 = por %p136, %p137
    %p139 = scmp.ne.s32.totalorder %s131, %s134
    %p140 = scmp.eq.s32.totalorder %s11, 0
    %p141 = por %p139, %p140
    %p142 = scmp.ne.s32.totalorder %s131, %s134
    %p143 = scmp.eq.s32.totalorder %s16, 1
    %p144 = por %p142, %p143
    %p145 = scmp.ne.s32.totalorder %s134, %s135
    %p146 = scmp.eq.s32.totalorder %s16, 0
    %p147 = por %p145, %p146
    %p148 = scmp.ne.s32.totalorder %s134, %s135
    %p149 = scmp.eq.s32.totalorder %s17, 1
    %p150 = por %p148, %p149
    %p152 = scmp.ne.s32.totalorder %s135, %s151
    %p153 = scmp.eq.s32.totalorder %s17, 0
    %p154 = por %p152, %p153
    %p155 = scmp.le.s32.totalorder 1, %s11
    %p156 = scmp.lt.s32.totalorder %s11, 3
    %p157 = pnand %p155, %p156
    %p158 = pneg %p157
    // Predicated region
    $region9: #{ae_paired_forward.36} parent=5 // pred_check
      _
    $region10: #{ae_paired_forward.36} parent=5 // pred_check_branch
      %160 = sbr.rel (%p157) target = $region12
    $region11: #{ae_paired_forward.36} parent=5 // pred_region
      %s161 = ssub.s32 %s11, 1
      // Predicated region
      $region13: #{ae_paired_forward.36} parent=11 // pred_check
        %p162 = pneg %p58
      $region14: #{ae_paired_forward.36} parent=11 // pred_check_branch
        %164 = sbr.rel (%p162) target = $region16
      $region15: #{ae_paired_forward.36} parent=11 // pred_region
        _
      $region16: #{ae_paired_forward.36} parent=11 // pred_fallthru
        _
      // Predicated region
      $region17: #{ae_paired_forward.36} parent=11 // pred_check
        %p165 = pneg %p79
      $region18: #{ae_paired_forward.36} parent=11 // pred_check_branch
        %167 = sbr.rel (%p165) target = $region20
      $region19: #{ae_paired_forward.36} parent=11 // pred_region
        _
      $region20: #{ae_paired_forward.36} parent=11 // pred_fallthru
        _
      // Predicated region
      $region21: #{ae_paired_forward.36} parent=11 // pred_check
        %p168 = pneg %p100
      $region22: #{ae_paired_forward.36} parent=11 // pred_check_branch
        %170 = sbr.rel (%p168) target = $region24
      $region23: #{ae_paired_forward.36} parent=11 // pred_region
        _
      $region24: #{ae_paired_forward.36} parent=11 // pred_fallthru
        _
      // Predicated region
      $region25: #{ae_paired_forward.36} parent=11 // pred_check
        %p171 = pneg %p121
      $region26: #{ae_paired_forward.36} parent=11 // pred_check_branch
        %173 = sbr.rel (%p171) target = $region28
      $region27: #{ae_paired_forward.36} parent=11 // pred_region
        _
      $region28: #{ae_paired_forward.36} parent=11 // pred_fallthru
        _
    $region12: #{ae_paired_forward.36} parent=5 // pred_fallthru
      _
    %p174 = scmp.lt.s32.totalorder %s11, 2
    // Predicated region
    $region29: #{ae_paired_forward.36} parent=5 // pred_check
      %p175 = pneg %p174
    $region30: #{ae_paired_forward.36} parent=5 // pred_check_branch
      %177 = sbr.rel (%p175) target = $region32
    $region31: #{ae_paired_forward.36} parent=5 // pred_region
      // Predicated region
      $region33: #{ae_paired_forward.36} parent=31 // pred_check
        %p178 = pneg %p31
      $region34: #{ae_paired_forward.36} parent=31 // pred_check_branch
        %180 = sbr.rel (%p178) target = $region36
      $region35: #{ae_paired_forward.36} parent=31 // pred_region
        %s181 = smul.u32 32, %s11
        %p182 = scmp.lt.s32.totalorder %s181, 63
        %s183 = scalar_select %p182, %s181, 63
        %s184 = smul.addr %s183, 2
        %s185 = smul.addr %s184, 8
        %s186 = scalar_lea.vmem %s0, %s185
        %s187 = smul.u32 32, %s11
      $region36: #{ae_paired_forward.36} parent=31 // pred_fallthru
        _
    $region32: #{ae_paired_forward.36} parent=5 // pred_fallthru
      _
    %p188 = scmp.le.s32.totalorder 1, %s11
    %p189 = scmp.lt.s32.totalorder %s11, 3
    %p190 = pnand %p188, %p189
    %p191 = pneg %p190
    // Predicated region
    $region37: #{ae_paired_forward.36} parent=5 // pred_check
      _
    $region38: #{ae_paired_forward.36} parent=5 // pred_check_branch
      %193 = sbr.rel (%p190) target = $region40
    $region39: #{ae_paired_forward.36} parent=5 // pred_region
      %s194 = ssub.s32 %s11, 1
      %s195 = smul.u32 32, %s16
      %p196 = scmp.lt.s32.totalorder %s195, 63
      %s197 = scalar_select %p196, %s195, 63
      %s198 = smul.addr %s197, 2
      %s199 = smul.addr %s198, 8
      %s200 = scalar_lea.vmem %s0, %s199
      %p201 = pneg %p37
      %p202 = pneg %p34
      %p203 = pneg %p58
      %p204 = pneg %p55
      %p205 = pneg %p79
      %p206 = pneg %p76
      %p207 = pneg %p100
      %p208 = pneg %p97
      %p209 = pneg %p121
      %p210 = pneg %p118
      %p211 = pneg %p147
      %p212 = pneg %p144
      %s213 = smul.u32 32, %s16
      %p214 = scmp.lt.s32.totalorder %s213, 63
      %s215 = scalar_select %p214, %s213, 63
      %s216 = smul.addr %s215, 8
      %s217 = scalar_lea.vmem %s5, %s216
      %s218 = smul.u32 32, %s16
      %p219 = scmp.lt.s32.totalorder %s218, 63
      %s220 = scalar_select %p219, %s218, 63
      %s221 = smul.addr %s220, 2
      %s222 = smul.addr %s221, 8
      %s223 = scalar_lea.vmem %s0, %s222
      %s224 = smul.u32 32, %s16
      %s225 = smul.u32 32, %s16
      %p226 = scmp.lt.s32.totalorder %s225, 63
      %s227 = scalar_select %p226, %s225, 63
      %s228 = smul.addr %s227, 8
      %s229 = scalar_lea.vmem %s5, %s228
      %s230 = smul.u32 32, %s16
      %v231 = vld [vmem:[%s223] sm:$0xff]
      %v232 = vld [vmem:[%s223 + $0x8] sm:$0xff]
      %v233 = vld [vmem:[%s223 + $0x10] sm:$0xff]
      %v234 = vld [vmem:[%s223 + $0x18] sm:$0xff]
      %v235 = vld [vmem:[%s223 + $0x20] sm:$0xff]
      %v236 = vld [vmem:[%s223 + $0x28] sm:$0xff]
      %v237 = vld [vmem:[%s223 + $0x30] sm:$0xff]
      %v238 = vld [vmem:[%s223 + $0x38] sm:$0xff]
      %v239 = vld [vmem:[%s223 + $0x40] sm:$0xff]
      %v240 = vld [vmem:[%s223 + $0x48] sm:$0xff]
      %v241 = vld [vmem:[%s223 + $0x50] sm:$0xff]
      %v242 = vld [vmem:[%s223 + $0x58] sm:$0xff]
      %v243 = vld [vmem:[%s223 + $0x60] sm:$0xff]
      %v244 = vld [vmem:[%s223 + $0x68] sm:$0xff]
      %v245 = vld [vmem:[%s223 + $0x70] sm:$0xff]
      %v246 = vld [vmem:[%s223 + $0x78] sm:$0xff]
      %v247 = vld [vmem:[%s223 + $0x80] sm:$0xff]
      %v248 = vld [vmem:[%s223 + $0x88] sm:$0xff]
      %v249 = vld [vmem:[%s223 + $0x90] sm:$0xff]
      %v250 = vld [vmem:[%s223 + $0x98] sm:$0xff]
      %v251 = vld [vmem:[%s223 + $0xa0] sm:$0xff]
      %v252 = vld [vmem:[%s223 + $0xa8] sm:$0xff]
      %v253 = vld [vmem:[%s223 + $0xb0] sm:$0xff]
      %v254 = vld [vmem:[%s223 + $0xb8] sm:$0xff]
      %v255 = vld [vmem:[%s223 + $0xc0] sm:$0xff]
      %v256 = vld [vmem:[%s223 + $0xc8] sm:$0xff]
      %v257 = vld [vmem:[%s223 + $0xd0] sm:$0xff]
      %v258 = vld [vmem:[%s223 + $0xd8] sm:$0xff]
      %v259 = vld [vmem:[%s223 + $0xe0] sm:$0xff]
      %v260 = vld [vmem:[%s223 + $0xe8] sm:$0xff]
      %v261 = vld [vmem:[%s223 + $0xf0] sm:$0xff]
      %v262 = vld [vmem:[%s223 + $0xf8] sm:$0xff]
      %v263 = vld [vmem:[%s223 + $0x100] sm:$0xff]
      %v264 = vld [vmem:[%s223 + $0x108] sm:$0xff]
      %v265 = vld [vmem:[%s223 + $0x110] sm:$0xff]
      %v266 = vld [vmem:[%s223 + $0x118] sm:$0xff]
      %v267 = vld [vmem:[%s223 + $0x120] sm:$0xff]
      %v268 = vld [vmem:[%s223 + $0x128] sm:$0xff]
      %v269 = vld [vmem:[%s223 + $0x130] sm:$0xff]
      %v270 = vld [vmem:[%s223 + $0x138] sm:$0xff]
      %v271 = vld [vmem:[%s223 + $0x140] sm:$0xff]
      %v272 = vld [vmem:[%s223 + $0x148] sm:$0xff]
      %v273 = vld [vmem:[%s223 + $0x150] sm:$0xff]
      %v274 = vld [vmem:[%s223 + $0x158] sm:$0xff]
      %v275 = vld [vmem:[%s223 + $0x160] sm:$0xff]
      %v276 = vld [vmem:[%s223 + $0x168] sm:$0xff]
      %v277 = vld [vmem:[%s223 + $0x170] sm:$0xff]
      %v278 = vld [vmem:[%s223 + $0x178] sm:$0xff]
      %v279 = vld [vmem:[%s223 + $0x180] sm:$0xff]
      %v280 = vld [vmem:[%s223 + $0x188] sm:$0xff]
      %v281 = vld [vmem:[%s223 + $0x190] sm:$0xff]
      %v282 = vld [vmem:[%s223 + $0x198] sm:$0xff]
      %v283 = vld [vmem:[%s223 + $0x1a0] sm:$0xff]
      %v284 = vld [vmem:[%s223 + $0x1a8] sm:$0xff]
      %v285 = vld [vmem:[%s223 + $0x1b0] sm:$0xff]
      %v286 = vld [vmem:[%s223 + $0x1b8] sm:$0xff]
      %v287 = vld [vmem:[%s223 + $0x1c0] sm:$0xff]
      %v288 = vld [vmem:[%s223 + $0x1c8] sm:$0xff]
      %v289 = vld [vmem:[%s223 + $0x1d0] sm:$0xff]
      %v290 = vld [vmem:[%s223 + $0x1d8] sm:$0xff]
      %v291 = vld [vmem:[%s223 + $0x1e0] sm:$0xff]
      %v292 = vld [vmem:[%s223 + $0x1e8] sm:$0xff]
      %v293 = vld [vmem:[%s223 + $0x1f0] sm:$0xff]
      %v294 = vld [vmem:[%s223 + $0x1f8] sm:$0xff]
      %v295 = vld [vmem:[%s1] sm:$0xff]
      %v296 = vld [vmem:[%s1 + $0x8] sm:$0xff]
      %v297 = vld [vmem:[%s1 + $0x10] sm:$0xff]
      %v298 = vld [vmem:[%s1 + $0x18] sm:$0xff]
      %v299 = vld [vmem:[%s1 + $0x20] sm:$0xff]
      %v300 = vld [vmem:[%s1 + $0x28] sm:$0xff]
      %v301 = vld [vmem:[%s1 + $0x30] sm:$0xff]
      %v302 = vld [vmem:[%s1 + $0x38] sm:$0xff]
      %v303 = vld [vmem:[%s1 + $0x40] sm:$0xff]
      %v304 = vld [vmem:[%s1 + $0x48] sm:$0xff]
      %v305 = vld [vmem:[%s1 + $0x50] sm:$0xff]
      %v306 = vld [vmem:[%s1 + $0x58] sm:$0xff]
      %v307 = vld [vmem:[%s1 + $0x60] sm:$0xff]
      %v308 = vld [vmem:[%s1 + $0x68] sm:$0xff]
      %v309 = vld [vmem:[%s1 + $0x70] sm:$0xff]
      %v310 = vld [vmem:[%s1 + $0x78] sm:$0xff]
      %v311 = vld [vmem:[%s1 + $0x80] sm:$0xff]
      %v312 = vld [vmem:[%s1 + $0x88] sm:$0xff]
      %v313 = vld [vmem:[%s1 + $0x90] sm:$0xff]
      %v314 = vld [vmem:[%s1 + $0x98] sm:$0xff]
      %v315 = vld [vmem:[%s1 + $0xa0] sm:$0xff]
      %v316 = vld [vmem:[%s1 + $0xa8] sm:$0xff]
      %v317 = vld [vmem:[%s1 + $0xb0] sm:$0xff]
      %v318 = vld [vmem:[%s1 + $0xb8] sm:$0xff]
      %v319 = vld [vmem:[%s1 + $0xc0] sm:$0xff]
      %v320 = vld [vmem:[%s1 + $0xc8] sm:$0xff]
      %v321 = vld [vmem:[%s1 + $0xd0] sm:$0xff]
      %v322 = vld [vmem:[%s1 + $0xd8] sm:$0xff]
      %v323 = vld [vmem:[%s1 + $0xe0] sm:$0xff]
      %v324 = vld [vmem:[%s1 + $0xe8] sm:$0xff]
      %v325 = vld [vmem:[%s1 + $0xf0] sm:$0xff]
      %v326 = vld [vmem:[%s1 + $0xf8] sm:$0xff]
      %v327 = vld [vmem:[%s2] sm:$0x1]
      %v329 = vlaneseq
      %v330 = vshrl.u32 %v329, 7
      %v331 = vsub.s32 0, %v330
      %v332 = vrot.slane %v327, %v331
      %334 = vmatprep.subr.mxu0 0.0
      %335 = vmatpush1.msra.mxu0 %v295
      %336 = vmatprep.subr.mxu0 0.0
      %337 = vmatpush1.msra.mxu0 %v296
      %338 = vmatprep.subr.mxu0 0.0
      %339 = vmatpush1.msra.mxu0 %v297
      %340 = vmatprep.subr.mxu0 0.0
      %341 = vmatpush1.msra.mxu0 %v298
      %342 = vmatprep.subr.mxu0 0.0
      %343 = vmatpush1.msra.mxu0 %v299
      %344 = vmatprep.subr.mxu0 0.0
      %345 = vmatpush1.msra.mxu0 %v300
      %346 = vmatprep.subr.mxu0 0.0
      %347 = vmatpush1.msra.mxu0 %v301
      %348 = vmatprep.subr.mxu0 0.0
      %349 = vmatpush1.msra.mxu0 %v302
      %350 = vmatprep.subr.mxu0 0.0
      %351 = vmatpush1.msra.mxu0 %v303
      %352 = vmatprep.subr.mxu0 0.0
      %353 = vmatpush1.msra.mxu0 %v304
      %354 = vmatprep.subr.mxu0 0.0
      %355 = vmatpush1.msra.mxu0 %v305
      %356 = vmatprep.subr.mxu0 0.0
      %357 = vmatpush1.msra.mxu0 %v306
      %358 = vmatprep.subr.mxu0 0.0
      %359 = vmatpush1.msra.mxu0 %v307
      %360 = vmatprep.subr.mxu0 0.0
      %361 = vmatpush1.msra.mxu0 %v308
      %362 = vmatprep.subr.mxu0 0.0
      %363 = vmatpush1.msra.mxu0 %v309
      %364 = vmatprep.subr.mxu0 0.0
      %365 = vmatpush1.msra.mxu0 %v310
      %366 = vmatprep.subr.mxu0 0.0
      %367 = vmatpush1.msra.mxu0 %v311
      %368 = vmatprep.subr.mxu0 0.0
      %369 = vmatpush1.msra.mxu0 %v312
      %370 = vmatprep.subr.mxu0 0.0
      %371 = vmatpush1.msra.mxu0 %v313
      %372 = vmatprep.subr.mxu0 0.0
      %373 = vmatpush1.msra.mxu0 %v314
      %374 = vmatprep.subr.mxu0 0.0
      %375 = vmatpush1.msra.mxu0 %v315
      %376 = vmatprep.subr.mxu0 0.0
      %377 = vmatpush1.msra.mxu0 %v316
      %378 = vmatprep.subr.mxu0 0.0
      %379 = vmatpush1.msra.mxu0 %v317
      %380 = vmatprep.subr.mxu0 0.0
      %381 = vmatpush1.msra.mxu0 %v318
      %382 = vmatprep.subr.mxu0 0.0
      %383 = vmatpush1.msra.mxu0 %v319
      %384 = vmatprep.subr.mxu0 0.0
      %385 = vmatpush1.msra.mxu0 %v320
      %386 = vmatprep.subr.mxu0 0.0
      %387 = vmatpush1.msra.mxu0 %v321
      %388 = vmatprep.subr.mxu0 0.0
      %389 = vmatpush1.msra.mxu0 %v322
      %390 = vmatprep.subr.mxu0 0.0
      %391 = vmatpush1.msra.mxu0 %v323
      %392 = vmatprep.subr.mxu0 0.0
      %393 = vmatpush1.msra.mxu0 %v324
      %394 = vmatprep.subr.mxu0 0.0
      %395 = vmatpush1.msra.mxu0 %v325
      %396 = vmatprep.subr.mxu0 0.0
      %397 = vmatpush1.msra.mxu0 %v326
      %398 = vmatprep.mubr.f32.mxu0 %v232
      %399 = vmatmul.mubr.f32.gmra.mrb[0].mxu0 %v231
      %v400 = vpop.f32.mrb[0].mxu0
      %v401 = vadd.f32 %v332, %v400
      %v402 = vpop.f32.mrb[0].mxu0
      %403 = vmatprep.mubr.f32.mxu0 %v234
      %404 = vmatmul.mubr.f32.gmra.mrb[0].mxu0 %v233
      %v405 = vpop.f32.mrb[0].mxu0
      %v406 = vadd.f32 %v332, %v405
      %v407 = vpop.f32.mrb[0].mxu0
      %408 = vmatprep.mubr.f32.mxu0 %v236
      %409 = vmatmul.mubr.f32.gmra.mrb[0].mxu0 %v235
      %v410 = vpop.f32.mrb[0].mxu0
      %v411 = vadd.f32 %v332, %v410
      %v412 = vpop.f32.mrb[0].mxu0
      %413 = vmatprep.mubr.f32.mxu0 %v238
      %414 = vmatmul.mubr.f32.gmra.mrb[0].mxu0 %v237
      %v415 = vpop.f32.mrb[0].mxu0
      %v416 = vadd.f32 %v332, %v415
      %v417 = vpop.f32.mrb[0].mxu0
      %418 = vmatprep.mubr.f32.mxu0 %v240
      %419 = vmatmul.mubr.f32.gmra.mrb[0].mxu0 %v239
      %v420 = vpop.f32.mrb[0].mxu0
      %v421 = vadd.f32 %v332, %v420
      %v422 = vpop.f32.mrb[0].mxu0
      %423 = vmatprep.mubr.f32.mxu0 %v242
      %424 = vmatmul.mubr.f32.gmra.mrb[0].mxu0 %v241
      %v425 = vpop.f32.mrb[0].mxu0
      %v426 = vadd.f32 %v332, %v425
      %v427 = vpop.f32.mrb[0].mxu0
      %428 = vmatprep.mubr.f32.mxu0 %v244
      %429 = vmatmul.mubr.f32.gmra.mrb[0].mxu0 %v243
      %v430 = vpop.f32.mrb[0].mxu0
      %v431 = vadd.f32 %v332, %v430
      %v432 = vpop.f32.mrb[0].mxu0
      %433 = vmatprep.mubr.f32.mxu0 %v246
      %434 = vmatmul.mubr.f32.gmra.mrb[0].mxu0 %v245
      %v435 = vpop.f32.mrb[0].mxu0
      %v436 = vadd.f32 %v332, %v435
      %v437 = vpop.f32.mrb[0].mxu0
      %438 = vmatprep.mubr.f32.mxu0 %v248
      %439 = vmatmul.mubr.f32.gmra.mrb[0].mxu0 %v247
      %v440 = vpop.f32.mrb[0].mxu0
      %v441 = vadd.f32 %v332, %v440
      %v442 = vpop.f32.mrb[0].mxu0
      %443 = vmatprep.mubr.f32.mxu0 %v250
      %444 = vmatmul.mubr.f32.gmra.mrb[0].mxu0 %v249
      %v445 = vpop.f32.mrb[0].mxu0
      %v446 = vadd.f32 %v332, %v445
      %v447 = vpop.f32.mrb[0].mxu0
      %448 = vmatprep.mubr.f32.mxu0 %v252
      %449 = vmatmul.mubr.f32.gmra.mrb[0].mxu0 %v251
      %v450 = vpop.f32.mrb[0].mxu0
      %v451 = vadd.f32 %v332, %v450
      %v452 = vpop.f32.mrb[0].mxu0
      %453 = vmatprep.mubr.f32.mxu0 %v254
      %454 = vmatmul.mubr.f32.gmra.mrb[0].mxu0 %v253
      %v455 = vpop.f32.mrb[0].mxu0
      %v456 = vadd.f32 %v332, %v455
      %v457 = vpop.f32.mrb[0].mxu0
      %458 = vmatprep.mubr.f32.mxu0 %v256
      %459 = vmatmul.mubr.f32.gmra.mrb[0].mxu0 %v255
      %v460 = vpop.f32.mrb[0].mxu0
      %v461 = vadd.f32 %v332, %v460
      %v462 = vpop.f32.mrb[0].mxu0
      %463 = vmatprep.mubr.f32.mxu0 %v258
      %464 = vmatmul.mubr.f32.gmra.mrb[0].mxu0 %v257
      %v465 = vpop.f32.mrb[0].mxu0
      %v466 = vadd.f32 %v332, %v465
      %v467 = vpop.f32.mrb[0].mxu0
      %468 = vmatprep.mubr.f32.mxu0 %v260
      %469 = vmatmul.mubr.f32.gmra.mrb[0].mxu0 %v259
      %v470 = vpop.f32.mrb[0].mxu0
      %v471 = vadd.f32 %v332, %v470
      %v472 = vpop.f32.mrb[0].mxu0
      %473 = vmatprep.mubr.f32.mxu0 %v262
      %474 = vmatmul.mubr.f32.gmra.mrb[0].mxu0 %v261
      %v475 = vpop.f32.mrb[0].mxu0
      %v476 = vadd.f32 %v332, %v475
      %v477 = vpop.f32.mrb[0].mxu0
      %478 = vmatprep.mubr.f32.mxu0 %v264
      %479 = vmatmul.mubr.f32.gmra.mrb[0].mxu0 %v263
      %v480 = vpop.f32.mrb[0].mxu0
      %v481 = vadd.f32 %v332, %v480
      %v482 = vpop.f32.mrb[0].mxu0
      %483 = vmatprep.mubr.f32.mxu0 %v266
      %484 = vmatmul.mubr.f32.gmra.mrb[0].mxu0 %v265
      %v485 = vpop.f32.mrb[0].mxu0
      %v486 = vadd.f32 %v332, %v485
      %v487 = vpop.f32.mrb[0].mxu0
      %488 = vmatprep.mubr.f32.mxu0 %v268
      %489 = vmatmul.mubr.f32.gmra.mrb[0].mxu0 %v267
      %v490 = vpop.f32.mrb[0].mxu0
      %v491 = vadd.f32 %v332, %v490
      %v492 = vpop.f32.mrb[0].mxu0
      %493 = vmatprep.mubr.f32.mxu0 %v270
      %494 = vmatmul.mubr.f32.gmra.mrb[0].mxu0 %v269
      %v495 = vpop.f32.mrb[0].mxu0
      %v496 = vadd.f32 %v332, %v495
      %v497 = vpop.f32.mrb[0].mxu0
      %498 = vmatprep.mubr.f32.mxu0 %v272
      %499 = vmatmul.mubr.f32.gmra.mrb[0].mxu0 %v271
      %v500 = vpop.f32.mrb[0].mxu0
      %v501 = vadd.f32 %v332, %v500
      %v502 = vpop.f32.mrb[0].mxu0
      %503 = vmatprep.mubr.f32.mxu0 %v274
      %504 = vmatmul.mubr.f32.gmra.mrb[0].mxu0 %v273
      %v505 = vpop.f32.mrb[0].mxu0
      %v506 = vadd.f32 %v332, %v505
      %v507 = vpop.f32.mrb[0].mxu0
      %508 = vmatprep.mubr.f32.mxu0 %v276
      %509 = vmatmul.mubr.f32.gmra.mrb[0].mxu0 %v275
      %v510 = vpop.f32.mrb[0].mxu0
      %v511 = vadd.f32 %v332, %v510
      %v512 = vpop.f32.mrb[0].mxu0
      %513 = vmatprep.mubr.f32.mxu0 %v278
      %514 = vmatmul.mubr.f32.gmra.mrb[0].mxu0 %v277
      %v515 = vpop.f32.mrb[0].mxu0
      %v516 = vadd.f32 %v332, %v515
      %v517 = vpop.f32.mrb[0].mxu0
      %518 = vmatprep.mubr.f32.mxu0 %v280
      %519 = vmatmul.mubr.f32.gmra.mrb[0].mxu0 %v279
      %v520 = vpop.f32.mrb[0].mxu0
      %v521 = vadd.f32 %v332, %v520
      %v522 = vpop.f32.mrb[0].mxu0
      %523 = vmatprep.mubr.f32.mxu0 %v282
      %524 = vmatmul.mubr.f32.gmra.mrb[0].mxu0 %v281
      %v525 = vpop.f32.mrb[0].mxu0
      %v526 = vadd.f32 %v332, %v525
      %v527 = vpop.f32.mrb[0].mxu0
      %528 = vmatprep.mubr.f32.mxu0 %v284
      %529 = vmatmul.mubr.f32.gmra.mrb[0].mxu0 %v283
      %v530 = vpop.f32.mrb[0].mxu0
      %v531 = vadd.f32 %v332, %v530
      %v532 = vpop.f32.mrb[0].mxu0
      %533 = vmatprep.mubr.f32.mxu0 %v286
      %534 = vmatmul.mubr.f32.gmra.mrb[0].mxu0 %v285
      %v535 = vpop.f32.mrb[0].mxu0
      %v536 = vadd.f32 %v332, %v535
      %v537 = vpop.f32.mrb[0].mxu0
      %538 = vmatprep.mubr.f32.mxu0 %v288
      %539 = vmatmul.mubr.f32.gmra.mrb[0].mxu0 %v287
      %v540 = vpop.f32.mrb[0].mxu0
      %v541 = vadd.f32 %v332, %v540
      %v542 = vpop.f32.mrb[0].mxu0
      %543 = vmatprep.mubr.f32.mxu0 %v290
      %544 = vmatmul.mubr.f32.gmra.mrb[0].mxu0 %v289
      %v545 = vpop.f32.mrb[0].mxu0
      %v546 = vadd.f32 %v332, %v545
      %v547 = vpop.f32.mrb[0].mxu0
      %548 = vmatprep.mubr.f32.mxu0 %v292
      %549 = vmatmul.mubr.f32.gmra.mrb[0].mxu0 %v291
      %v550 = vpop.f32.mrb[0].mxu0
      %v551 = vadd.f32 %v332, %v550
      %v552 = vpop.f32.mrb[0].mxu0
      %553 = vmatprep.mubr.f32.mxu0 %v294
      %554 = vmatmul.mubr.f32.gmra.mrb[0].mxu0 %v293
      %v555 = vpop.f32.mrb[0].mxu0
      %v556 = vadd.f32 %v332, %v555
      %v557 = vpop.f32.mrb[0].mxu0
      %558 = vdwg.mxu0
      %v559 = vmax.f32 %v401, 0.0
      %v560 = vmax.f32 %v406, 0.0
      %v561 = vmax.f32 %v411, 0.0
      %v562 = vmax.f32 %v416, 0.0
      %v563 = vmax.f32 %v421, 0.0
      %v564 = vmax.f32 %v426, 0.0
      %v565 = vmax.f32 %v431, 0.0
      %v566 = vmax.f32 %v436, 0.0
      %v567 = vmax.f32 %v441, 0.0
      %v568 = vmax.f32 %v446, 0.0
      %v569 = vmax.f32 %v451, 0.0
      %v570 = vmax.f32 %v456, 0.0
      %v571 = vmax.f32 %v461, 0.0
      %v572 = vmax.f32 %v466, 0.0
      %v573 = vmax.f32 %v471, 0.0
      %v574 = vmax.f32 %v476, 0.0
      %v575 = vmax.f32 %v481, 0.0
      %v576 = vmax.f32 %v486, 0.0
      %v577 = vmax.f32 %v491, 0.0
      %v578 = vmax.f32 %v496, 0.0
      %v579 = vmax.f32 %v501, 0.0
      %v580 = vmax.f32 %v506, 0.0
      %v581 = vmax.f32 %v511, 0.0
      %v582 = vmax.f32 %v516, 0.0
      %v583 = vmax.f32 %v521, 0.0
      %v584 = vmax.f32 %v526, 0.0
      %v585 = vmax.f32 %v531, 0.0
      %v586 = vmax.f32 %v536, 0.0
      %v587 = vmax.f32 %v541, 0.0
      %v588 = vmax.f32 %v546, 0.0
      %v589 = vmax.f32 %v551, 0.0
      %v590 = vmax.f32 %v556, 0.0
      %v591 = vld [vmem:[%s3] sm:$0x1]
      %v592 = vld [vmem:[%s4] sm:$0x1]
      %vm593 = vcmask 130048
      %v594 = vsel %vm593, %v559, 0.0
      %595 = vadd.xlane.f32.xlu0 %v594
      %v596 = vpop.xlane.xlu0 %595
      %v597 = vsel %vm593, %v560, 0.0
      %598 = vadd.xlane.f32.xlu0 %v597
      %v599 = vpop.xlane.xlu0 %598
      %v600 = vsel %vm593, %v561, 0.0
      %601 = vadd.xlane.f32.xlu0 %v600
      %v602 = vpop.xlane.xlu0 %601
      %v603 = vsel %vm593, %v562, 0.0
      %604 = vadd.xlane.f32.xlu0 %v603
      %v605 = vpop.xlane.xlu0 %604
      %v606 = vsel %vm593, %v563, 0.0
      %607 = vadd.xlane.f32.xlu0 %v606
      %v608 = vpop.xlane.xlu0 %607
      %v609 = vsel %vm593, %v564, 0.0
      %610 = vadd.xlane.f32.xlu0 %v609
      %v611 = vpop.xlane.xlu0 %610
      %v612 = vsel %vm593, %v565, 0.0
      %613 = vadd.xlane.f32.xlu0 %v612
      %v614 = vpop.xlane.xlu0 %613
      %v615 = vsel %vm593, %v566, 0.0
      %616 = vadd.xlane.f32.xlu0 %v615
      %v617 = vpop.xlane.xlu0 %616
      %v618 = vsel %vm593, %v567, 0.0
      %619 = vadd.xlane.f32.xlu0 %v618
      %v620 = vpop.xlane.xlu0 %619
      %v621 = vsel %vm593, %v568, 0.0
      %622 = vadd.xlane.f32.xlu0 %v621
      %v623 = vpop.xlane.xlu0 %622
      %v624 = vsel %vm593, %v569, 0.0
      %625 = vadd.xlane.f32.xlu0 %v624
      %v626 = vpop.xlane.xlu0 %625
      %v627 = vsel %vm593, %v570, 0.0
      %628 = vadd.xlane.f32.xlu0 %v627
      %v629 = vpop.xlane.xlu0 %628
      %v630 = vsel %vm593, %v571, 0.0
      %631 = vadd.xlane.f32.xlu0 %v630
      %v632 = vpop.xlane.xlu0 %631
      %v633 = vsel %vm593, %v572, 0.0
      %634 = vadd.xlane.f32.xlu0 %v633
      %v635 = vpop.xlane.xlu0 %634
      %v636 = vsel %vm593, %v573, 0.0
      %637 = vadd.xlane.f32.xlu0 %v636
      %v638 = vpop.xlane.xlu0 %637
      %v639 = vsel %vm593, %v574, 0.0
      %640 = vadd.xlane.f32.xlu0 %v639
      %v641 = vpop.xlane.xlu0 %640
      %v642 = vsel %vm593, %v575, 0.0
      %643 = vadd.xlane.f32.xlu0 %v642
      %v644 = vpop.xlane.xlu0 %643
      %v645 = vsel %vm593, %v576, 0.0
      %646 = vadd.xlane.f32.xlu0 %v645
      %v647 = vpop.xlane.xlu0 %646
      %v648 = vsel %vm593, %v577, 0.0
      %649 = vadd.xlane.f32.xlu0 %v648
      %v650 = vpop.xlane.xlu0 %649
      %v651 = vsel %vm593, %v578, 0.0
      %652 = vadd.xlane.f32.xlu0 %v651
      %v653 = vpop.xlane.xlu0 %652
      %v654 = vsel %vm593, %v579, 0.0
      %655 = vadd.xlane.f32.xlu0 %v654
      %v656 = vpop.xlane.xlu0 %655
      %v657 = vsel %vm593, %v580, 0.0
      %658 = vadd.xlane.f32.xlu0 %v657
      %v659 = vpop.xlane.xlu0 %658
      %v660 = vsel %vm593, %v581, 0.0
      %661 = vadd.xlane.f32.xlu0 %v660
      %v662 = vpop.xlane.xlu0 %661
      %v663 = vsel %vm593, %v582, 0.0
      %664 = vadd.xlane.f32.xlu0 %v663
      %v665 = vpop.xlane.xlu0 %664
      %v666 = vsel %vm593, %v583, 0.0
      %667 = vadd.xlane.f32.xlu0 %v666
      %v668 = vpop.xlane.xlu0 %667
      %v669 = vsel %vm593, %v584, 0.0
      %670 = vadd.xlane.f32.xlu0 %v669
      %v671 = vpop.xlane.xlu0 %670
      %v672 = vsel %vm593, %v585, 0.0
      %673 = vadd.xlane.f32.xlu0 %v672
      %v674 = vpop.xlane.xlu0 %673
      %v675 = vsel %vm593, %v586, 0.0
      %676 = vadd.xlane.f32.xlu0 %v675
      %v677 = vpop.xlane.xlu0 %676
      %v678 = vsel %vm593, %v587, 0.0
      %679 = vadd.xlane.f32.xlu0 %v678
      %v680 = vpop.xlane.xlu0 %679
      %v681 = vsel %vm593, %v588, 0.0
      %682 = vadd.xlane.f32.xlu0 %v681
      %v683 = vpop.xlane.xlu0 %682
      %v684 = vsel %vm593, %v589, 0.0
      %685 = vadd.xlane.f32.xlu0 %v684
      %v686 = vpop.xlane.xlu0 %685
      %v687 = vsel %vm593, %v590, 0.0
      %688 = vadd.xlane.f32.xlu0 %v687
      %v689 = vpop.xlane.xlu0 %688
      %v690 = vrcp.pop 16.0
      %v691 = vmul.f32 %v596, %v690
      %v692 = vmul.f32 %v599, %v690
      %v693 = vmul.f32 %v602, %v690
      %v694 = vmul.f32 %v605, %v690
      %v695 = vmul.f32 %v608, %v690
      %v696 = vmul.f32 %v611, %v690
      %v697 = vmul.f32 %v614, %v690
      %v698 = vmul.f32 %v617, %v690
      %v699 = vmul.f32 %v620, %v690
      %v700 = vmul.f32 %v623, %v690
      %v701 = vmul.f32 %v626, %v690
      %v702 = vmul.f32 %v629, %v690
      %v703 = vmul.f32 %v632, %v690
      %v704 = vmul.f32 %v635, %v690
      %v705 = vmul.f32 %v638, %v690
      %v706 = vmul.f32 %v641, %v690
      %v707 = vmul.f32 %v644, %v690
      %v708 = vmul.f32 %v647, %v690
      %v709 = vmul.f32 %v650, %v690
      %v710 = vmul.f32 %v653, %v690
      %v711 = vmul.f32 %v656, %v690
      %v712 = vmul.f32 %v659, %v690
      %v713 = vmul.f32 %v662, %v690
      %v714 = vmul.f32 %v665, %v690
      %v715 = vmul.f32 %v668, %v690
      %v716 = vmul.f32 %v671, %v690
      %v717 = vmul.f32 %v674, %v690
      %v718 = vmul.f32 %v677, %v690
      %v719 = vmul.f32 %v680, %v690
      %v720 = vmul.f32 %v683, %v690
      %v721 = vmul.f32 %v686, %v690
      %v722 = vmul.f32 %v689, %v690
      %v723 = vsub.f32 %v559, %v691
      %v724 = vsub.f32 %v560, %v692
      %v725 = vsub.f32 %v561, %v693
      %v726 = vsub.f32 %v562, %v694
      %v727 = vsub.f32 %v563, %v695
      %v728 = vsub.f32 %v564, %v696
      %v729 = vsub.f32 %v565, %v697
      %v730 = vsub.f32 %v566, %v698
      %v731 = vsub.f32 %v567, %v699
      %v732 = vsub.f32 %v568, %v700
      %v733 = vsub.f32 %v569, %v701
      %v734 = vsub.f32 %v570, %v702
      %v735 = vsub.f32 %v571, %v703
      %v736 = vsub.f32 %v572, %v704
      %v737 = vsub.f32 %v573, %v705
      %v738 = vsub.f32 %v574, %v706
      %v739 = vsub.f32 %v575, %v707
      %v740 = vsub.f32 %v576, %v708
      %v741 = vsub.f32 %v577, %v709
      %v742 = vsub.f32 %v578, %v710
      %v743 = vsub.f32 %v579, %v711
      %v744 = vsub.f32 %v580, %v712
      %v745 = vsub.f32 %v581, %v713
      %v746 = vsub.f32 %v582, %v714
      %v747 = vsub.f32 %v583, %v715
      %v748 = vsub.f32 %v584, %v716
      %v749 = vsub.f32 %v585, %v717
      %v750 = vsub.f32 %v586, %v718
      %v751 = vsub.f32 %v587, %v719
      %v752 = vsub.f32 %v588, %v720
      %v753 = vsub.f32 %v589, %v721
      %v754 = vsub.f32 %v590, %v722
      %v755 = vmul.f32 %v723, %v723
      %v756 = vmul.f32 %v724, %v724
      %v757 = vmul.f32 %v725, %v725
      %v758 = vmul.f32 %v726, %v726
      %v759 = vmul.f32 %v727, %v727
      %v760 = vmul.f32 %v728, %v728
      %v761 = vmul.f32 %v729, %v729
      %v762 = vmul.f32 %v730, %v730
      %v763 = vmul.f32 %v731, %v731
      %v764 = vmul.f32 %v732, %v732
      %v765 = vmul.f32 %v733, %v733
      %v766 = vmul.f32 %v734, %v734
      %v767 = vmul.f32 %v735, %v735
      %v768 = vmul.f32 %v736, %v736
      %v769 = vmul.f32 %v737, %v737
      %v770 = vmul.f32 %v738, %v738
      %v771 = vmul.f32 %v739, %v739
      %v772 = vmul.f32 %v740, %v740
      %v773 = vmul.f32 %v741, %v741
      %v774 = vmul.f32 %v742, %v742
      %v775 = vmul.f32 %v743, %v743
      %v776 = vmul.f32 %v744, %v744
      %v777 = vmul.f32 %v745, %v745
      %v778 = vmul.f32 %v746, %v746
      %v779 = vmul.f32 %v747, %v747
      %v780 = vmul.f32 %v748, %v748
      %v781 = vmul.f32 %v749, %v749
      %v782 = vmul.f32 %v750, %v750
      %v783 = vmul.f32 %v751, %v751
      %v784 = vmul.f32 %v752, %v752
      %v785 = vmul.f32 %v753, %v753
      %v786 = vmul.f32 %v754, %v754
      %v787 = vsel %vm593, %v755, 0.0
      %788 = vadd.xlane.f32.xlu0 %v787
      %v789 = vpop.xlane.xlu0 %788
      %v790 = vsel %vm593, %v756, 0.0
      %791 = vadd.xlane.f32.xlu0 %v790
      %v792 = vpop.xlane.xlu0 %791
      %v793 = vsel %vm593, %v757, 0.0
      %794 = vadd.xlane.f32.xlu0 %v793
      %v795 = vpop.xlane.xlu0 %794
      %v796 = vsel %vm593, %v758, 0.0
      %797 = vadd.xlane.f32.xlu0 %v796
      %v798 = vpop.xlane.xlu0 %797
      %v799 = vsel %vm593, %v759, 0.0
      %800 = vadd.xlane.f32.xlu0 %v799
      %v801 = vpop.xlane.xlu0 %800
      %v802 = vsel %vm593, %v760, 0.0
      %803 = vadd.xlane.f32.xlu0 %v802
      %v804 = vpop.xlane.xlu0 %803
      %v805 = vsel %vm593, %v761, 0.0
      %806 = vadd.xlane.f32.xlu0 %v805
      %v807 = vpop.xlane.xlu0 %806
      %v808 = vsel %vm593, %v762, 0.0
      %809 = vadd.xlane.f32.xlu0 %v808
      %v810 = vpop.xlane.xlu0 %809
      %v811 = vsel %vm593, %v763, 0.0
      %812 = vadd.xlane.f32.xlu0 %v811
      %v813 = vpop.xlane.xlu0 %812
      %v814 = vsel %vm593, %v764, 0.0
      %815 = vadd.xlane.f32.xlu0 %v814
      %v816 = vpop.xlane.xlu0 %815
      %v817 = vsel %vm593, %v765, 0.0
      %818 = vadd.xlane.f32.xlu0 %v817
      %v819 = vpop.xlane.xlu0 %818
      %v820 = vsel %vm593, %v766, 0.0
      %821 = vadd.xlane.f32.xlu0 %v820
      %v822 = vpop.xlane.xlu0 %821
      %v823 = vsel %vm593, %v767, 0.0
      %824 = vadd.xlane.f32.xlu0 %v823
      %v825 = vpop.xlane.xlu0 %824
      %v826 = vsel %vm593, %v768, 0.0
      %827 = vadd.xlane.f32.xlu0 %v826
      %v828 = vpop.xlane.xlu0 %827
      %v829 = vsel %vm593, %v769, 0.0
      %830 = vadd.xlane.f32.xlu0 %v829
      %v831 = vpop.xlane.xlu0 %830
      %v832 = vsel %vm593, %v770, 0.0
      %833 = vadd.xlane.f32.xlu0 %v832
      %v834 = vpop.xlane.xlu0 %833
      %v835 = vsel %vm593, %v771, 0.0
      %836 = vadd.xlane.f32.xlu0 %v835
      %v837 = vpop.xlane.xlu0 %836
      %v838 = vsel %vm593, %v772, 0.0
      %839 = vadd.xlane.f32.xlu0 %v838
      %v840 = vpop.xlane.xlu0 %839
      %v841 = vsel %vm593, %v773, 0.0
      %842 = vadd.xlane.f32.xlu0 %v841
      %v843 = vpop.xlane.xlu0 %842
      %v844 = vsel %vm593, %v774, 0.0
      %845 = vadd.xlane.f32.xlu0 %v844
      %v846 = vpop.xlane.xlu0 %845
      %v847 = vsel %vm593, %v775, 0.0
      %848 = vadd.xlane.f32.xlu0 %v847
      %v849 = vpop.xlane.xlu0 %848
      %v850 = vsel %vm593, %v776, 0.0
      %851 = vadd.xlane.f32.xlu0 %v850
      %v852 = vpop.xlane.xlu0 %851
      %v853 = vsel %vm593, %v777, 0.0
      %854 = vadd.xlane.f32.xlu0 %v853
      %v855 = vpop.xlane.xlu0 %854
      %v856 = vsel %vm593, %v778, 0.0
      %857 = vadd.xlane.f32.xlu0 %v856
      %v858 = vpop.xlane.xlu0 %857
      %v859 = vsel %vm593, %v779, 0.0
      %860 = vadd.xlane.f32.xlu0 %v859
      %v861 = vpop.xlane.xlu0 %860
      %v862 = vsel %vm593, %v780, 0.0
      %863 = vadd.xlane.f32.xlu0 %v862
      %v864 = vpop.xlane.xlu0 %863
      %v865 = vsel %vm593, %v781, 0.0
      %866 = vadd.xlane.f32.xlu0 %v865
      %v867 = vpop.xlane.xlu0 %866
      %v868 = vsel %vm593, %v782, 0.0
      %869 = vadd.xlane.f32.xlu0 %v868
      %v870 = vpop.xlane.xlu0 %869
      %v871 = vsel %vm593, %v783, 0.0
      %872 = vadd.xlane.f32.xlu0 %v871
      %v873 = vpop.xlane.xlu0 %872
      %v874 = vsel %vm593, %v784, 0.0
      %875 = vadd.xlane.f32.xlu0 %v874
      %v876 = vpop.xlane.xlu0 %875
      %v877 = vsel %vm593, %v785, 0.0
      %878 = vadd.xlane.f32.xlu0 %v877
      %v879 = vpop.xlane.xlu0 %878
      %v880 = vsel %vm593, %v786, 0.0
      %881 = vadd.xlane.f32.xlu0 %v880
      %v882 = vpop.xlane.xlu0 %881
      %v883 = vmul.f32 %v789, %v690
      %v884 = vmul.f32 %v792, %v690
      %v885 = vmul.f32 %v795, %v690
      %v886 = vmul.f32 %v798, %v690
      %v887 = vmul.f32 %v801, %v690
      %v888 = vmul.f32 %v804, %v690
      %v889 = vmul.f32 %v807, %v690
      %v890 = vmul.f32 %v810, %v690
      %v891 = vmul.f32 %v813, %v690
      %v892 = vmul.f32 %v816, %v690
      %v893 = vmul.f32 %v819, %v690
      %v894 = vmul.f32 %v822, %v690
      %v895 = vmul.f32 %v825, %v690
      %v896 = vmul.f32 %v828, %v690
      %v897 = vmul.f32 %v831, %v690
      %v898 = vmul.f32 %v834, %v690
      %v899 = vmul.f32 %v837, %v690
      %v900 = vmul.f32 %v840, %v690
      %v901 = vmul.f32 %v843, %v690
      %v902 = vmul.f32 %v846, %v690
      %v903 = vmul.f32 %v849, %v690
      %v904 = vmul.f32 %v852, %v690
      %v905 = vmul.f32 %v855, %v690
      %v906 = vmul.f32 %v858, %v690
      %v907 = vmul.f32 %v861, %v690
      %v908 = vmul.f32 %v864, %v690
      %v909 = vmul.f32 %v867, %v690
      %v910 = vmul.f32 %v870, %v690
      %v911 = vmul.f32 %v873, %v690
      %v912 = vmul.f32 %v876, %v690
      %v913 = vmul.f32 %v879, %v690
      %v914 = vmul.f32 %v882, %v690
      %v915 = vadd.f32 %v883, 1e-05
      %v916 = vadd.f32 %v884, 1e-05
      %v917 = vadd.f32 %v885, 1e-05
      %v918 = vadd.f32 %v886, 1e-05
      %v919 = vadd.f32 %v887, 1e-05
      %v920 = vadd.f32 %v888, 1e-05
      %v921 = vadd.f32 %v889, 1e-05
      %v922 = vadd.f32 %v890, 1e-05
      %v923 = vadd.f32 %v891, 1e-05
      %v924 = vadd.f32 %v892, 1e-05
      %v925 = vadd.f32 %v893, 1e-05
      %v926 = vadd.f32 %v894, 1e-05
      %v927 = vadd.f32 %v895, 1e-05
      %v928 = vadd.f32 %v896, 1e-05
      %v929 = vadd.f32 %v897, 1e-05
      %v930 = vadd.f32 %v898, 1e-05
      %v931 = vadd.f32 %v899, 1e-05
      %v932 = vadd.f32 %v900, 1e-05
      %v933 = vadd.f32 %v901, 1e-05
      %v934 = vadd.f32 %v902, 1e-05
      %v935 = vadd.f32 %v903, 1e-05
      %v936 = vadd.f32 %v904, 1e-05
      %v937 = vadd.f32 %v905, 1e-05
      %v938 = vadd.f32 %v906, 1e-05
      %v939 = vadd.f32 %v907, 1e-05
      %v940 = vadd.f32 %v908, 1e-05
      %v941 = vadd.f32 %v909, 1e-05
      %v942 = vadd.f32 %v910, 1e-05
      %v943 = vadd.f32 %v911, 1e-05
      %v944 = vadd.f32 %v912, 1e-05
      %v945 = vadd.f32 %v913, 1e-05
      %v946 = vadd.f32 %v914, 1e-05
      %v947 = vrsqrt.pop %v915
      %v948 = vrsqrt.pop %v916
      %v949 = vrsqrt.pop %v917
      %v950 = vrsqrt.pop %v918
      %v951 = vrsqrt.pop %v919
      %v952 = vrsqrt.pop %v920
      %v953 = vrsqrt.pop %v921
      %v954 = vrsqrt.pop %v922
      %v955 = vrsqrt.pop %v923
      %v956 = vrsqrt.pop %v924
      %v957 = vrsqrt.pop %v925
      %v958 = vrsqrt.pop %v926
      %v959 = vrsqrt.pop %v927
      %v960 = vrsqrt.pop %v928
      %v961 = vrsqrt.pop %v929
      %v962 = vrsqrt.pop %v930
      %v963 = vrsqrt.pop %v931
      %v964 = vrsqrt.pop %v932
      %v965 = vrsqrt.pop %v933
      %v966 = vrsqrt.pop %v934
      %v967 = vrsqrt.pop %v935
      %v968 = vrsqrt.pop %v936
      %v969 = vrsqrt.pop %v937
      %v970 = vrsqrt.pop %v938
      %v971 = vrsqrt.pop %v939
      %v972 = vrsqrt.pop %v940
      %v973 = vrsqrt.pop %v941
      %v974 = vrsqrt.pop %v942
      %v975 = vrsqrt.pop %v943
      %v976 = vrsqrt.pop %v944
      %v977 = vrsqrt.pop %v945
      %v978 = vrsqrt.pop %v946
      %v979 = vmul.f32 %v723, %v947
      %v980 = vmul.f32 %v724, %v948
      %v981 = vmul.f32 %v725, %v949
      %v982 = vmul.f32 %v726, %v950
      %v983 = vmul.f32 %v727, %v951
      %v984 = vmul.f32 %v728, %v952
      %v985 = vmul.f32 %v729, %v953
      %v986 = vmul.f32 %v730, %v954
      %v987 = vmul.f32 %v731, %v955
      %v988 = vmul.f32 %v732, %v956
      %v989 = vmul.f32 %v733, %v957
      %v990 = vmul.f32 %v734, %v958
      %v991 = vmul.f32 %v735, %v959
      %v992 = vmul.f32 %v736, %v960
      %v993 = vmul.f32 %v737, %v961
      %v994 = vmul.f32 %v738, %v962
      %v995 = vmul.f32 %v739, %v963
      %v996 = vmul.f32 %v740, %v964
      %v997 = vmul.f32 %v741, %v965
      %v998 = vmul.f32 %v742, %v966
      %v999 = vmul.f32 %v743, %v967
      %v1000 = vmul.f32 %v744, %v968
      %v1001 = vmul.f32 %v745, %v969
      %v1002 = vmul.f32 %v746, %v970
      %v1003 = vmul.f32 %v747, %v971
      %v1004 = vmul.f32 %v748, %v972
      %v1005 = vmul.f32 %v749, %v973
      %v1006 = vmul.f32 %v750, %v974
      %v1007 = vmul.f32 %v751, %v975
      %v1008 = vmul.f32 %v752, %v976
      %v1009 = vmul.f32 %v753, %v977
      %v1010 = vmul.f32 %v754, %v978
      %v1012 = vlaneseq
      %v1013 = vshrl.u32 %v1012, 7
      %v1014 = vsub.s32 0, %v1013
      %v1015 = vrot.slane %v591, %v1014
      %v1017 = vmul.f32 %v979, %v1015
      %v1018 = vmul.f32 %v980, %v1015
      %v1019 = vmul.f32 %v981, %v1015
      %v1020 = vmul.f32 %v982, %v1015
      %v1021 = vmul.f32 %v983, %v1015
      %v1022 = vmul.f32 %v984, %v1015
      %v1023 = vmul.f32 %v985, %v1015
      %v1024 = vmul.f32 %v986, %v1015
      %v1025 = vmul.f32 %v987, %v1015
      %v1026 = vmul.f32 %v988, %v1015
      %v1027 = vmul.f32 %v989, %v1015
      %v1028 = vmul.f32 %v990, %v1015
      %v1029 = vmul.f32 %v991, %v1015
      %v1030 = vmul.f32 %v992, %v1015
      %v1031 = vmul.f32 %v993, %v1015
      %v1032 = vmul.f32 %v994, %v1015
      %v1033 = vmul.f32 %v995, %v1015
      %v1034 = vmul.f32 %v996, %v1015
      %v1035 = vmul.f32 %v997, %v1015
      %v1036 = vmul.f32 %v998, %v1015
      %v1037 = vmul.f32 %v999, %v1015
      %v1038 = vmul.f32 %v1000, %v1015
      %v1039 = vmul.f32 %v1001, %v1015
      %v1040 = vmul.f32 %v1002, %v1015
      %v1041 = vmul.f32 %v1003, %v1015
      %v1042 = vmul.f32 %v1004, %v1015
      %v1043 = vmul.f32 %v1005, %v1015
      %v1044 = vmul.f32 %v1006, %v1015
      %v1045 = vmul.f32 %v1007, %v1015
      %v1046 = vmul.f32 %v1008, %v1015
      %v1047 = vmul.f32 %v1009, %v1015
      %v1048 = vmul.f32 %v1010, %v1015
      %v1050 = vlaneseq
      %v1051 = vshrl.u32 %v1050, 7
      %v1052 = vsub.s32 0, %v1051
      %v1053 = vrot.slane %v592, %v1052
      %v1055 = vadd.f32 %v1017, %v1053
      %v1056 = vadd.f32 %v1018, %v1053
      %v1057 = vadd.f32 %v1019, %v1053
      %v1058 = vadd.f32 %v1020, %v1053
      %v1059 = vadd.f32 %v1021, %v1053
      %v1060 = vadd.f32 %v1022, %v1053
      %v1061 = vadd.f32 %v1023, %v1053
      %v1062 = vadd.f32 %v1024, %v1053
      %v1063 = vadd.f32 %v1025, %v1053
      %v1064 = vadd.f32 %v1026, %v1053
      %v1065 = vadd.f32 %v1027, %v1053
      %v1066 = vadd.f32 %v1028, %v1053
      %v1067 = vadd.f32 %v1029, %v1053
      %v1068 = vadd.f32 %v1030, %v1053
      %v1069 = vadd.f32 %v1031, %v1053
      %v1070 = vadd.f32 %v1032, %v1053
      %v1071 = vadd.f32 %v1033, %v1053
      %v1072 = vadd.f32 %v1034, %v1053
      %v1073 = vadd.f32 %v1035, %v1053
      %v1074 = vadd.f32 %v1036, %v1053
      %v1075 = vadd.f32 %v1037, %v1053
      %v1076 = vadd.f32 %v1038, %v1053
      %v1077 = vadd.f32 %v1039, %v1053
      %v1078 = vadd.f32 %v1040, %v1053
      %v1079 = vadd.f32 %v1041, %v1053
      %v1080 = vadd.f32 %v1042, %v1053
      %v1081 = vadd.f32 %v1043, %v1053
      %v1082 = vadd.f32 %v1044, %v1053
      %v1083 = vadd.f32 %v1045, %v1053
      %v1084 = vadd.f32 %v1046, %v1053
      %v1085 = vadd.f32 %v1047, %v1053
      %v1086 = vadd.f32 %v1048, %v1053
      %1087 = vst.msk [vmem:[%s229] sm:$0xff] %vm593, %v1055
      %1088 = vst.msk [vmem:[%s229 + $0x8] sm:$0xff] %vm593, %v1056
      %1089 = vst.msk [vmem:[%s229 + $0x10] sm:$0xff] %vm593, %v1057
      %1090 = vst.msk [vmem:[%s229 + $0x18] sm:$0xff] %vm593, %v1058
      %1091 = vst.msk [vmem:[%s229 + $0x20] sm:$0xff] %vm593, %v1059
      %1092 = vst.msk [vmem:[%s229 + $0x28] sm:$0xff] %vm593, %v1060
      %1093 = vst.msk [vmem:[%s229 + $0x30] sm:$0xff] %vm593, %v1061
      %1094 = vst.msk [vmem:[%s229 + $0x38] sm:$0xff] %vm593, %v1062
      %1095 = vst.msk [vmem:[%s229 + $0x40] sm:$0xff] %vm593, %v1063
      %1096 = vst.msk [vmem:[%s229 + $0x48] sm:$0xff] %vm593, %v1064
      %1097 = vst.msk [vmem:[%s229 + $0x50] sm:$0xff] %vm593, %v1065
      %1098 = vst.msk [vmem:[%s229 + $0x58] sm:$0xff] %vm593, %v1066
      %1099 = vst.msk [vmem:[%s229 + $0x60] sm:$0xff] %vm593, %v1067
      %1100 = vst.msk [vmem:[%s229 + $0x68] sm:$0xff] %vm593, %v1068
      %1101 = vst.msk [vmem:[%s229 + $0x70] sm:$0xff] %vm593, %v1069
      %1102 = vst.msk [vmem:[%s229 + $0x78] sm:$0xff] %vm593, %v1070
      %1103 = vst.msk [vmem:[%s229 + $0x80] sm:$0xff] %vm593, %v1071
      %1104 = vst.msk [vmem:[%s229 + $0x88] sm:$0xff] %vm593, %v1072
      %1105 = vst.msk [vmem:[%s229 + $0x90] sm:$0xff] %vm593, %v1073
      %1106 = vst.msk [vmem:[%s229 + $0x98] sm:$0xff] %vm593, %v1074
      %1107 = vst.msk [vmem:[%s229 + $0xa0] sm:$0xff] %vm593, %v1075
      %1108 = vst.msk [vmem:[%s229 + $0xa8] sm:$0xff] %vm593, %v1076
      %1109 = vst.msk [vmem:[%s229 + $0xb0] sm:$0xff] %vm593, %v1077
      %1110 = vst.msk [vmem:[%s229 + $0xb8] sm:$0xff] %vm593, %v1078
      %1111 = vst.msk [vmem:[%s229 + $0xc0] sm:$0xff] %vm593, %v1079
      %1112 = vst.msk [vmem:[%s229 + $0xc8] sm:$0xff] %vm593, %v1080
      %1113 = vst.msk [vmem:[%s229 + $0xd0] sm:$0xff] %vm593, %v1081
      %1114 = vst.msk [vmem:[%s229 + $0xd8] sm:$0xff] %vm593, %v1082
      %1115 = vst.msk [vmem:[%s229 + $0xe0] sm:$0xff] %vm593, %v1083
      %1116 = vst.msk [vmem:[%s229 + $0xe8] sm:$0xff] %vm593, %v1084
      %1117 = vst.msk [vmem:[%s229 + $0xf0] sm:$0xff] %vm593, %v1085
      %1118 = vst.msk [vmem:[%s229 + $0xf8] sm:$0xff] %vm593, %v1086
      %s1119 = smul.u32 32, %s16
      %p1120 = scmp.lt.s32.totalorder %s1119, 63
      %s1121 = scalar_select %p1120, %s1119, 63
      %s1122 = smul.addr %s1121, 8
      %s1123 = scalar_lea.vmem %s5, %s1122
      // Predicated region
      $region41: #{ae_paired_forward.36} parent=39 // pred_check
        %p1124 = pneg %p144
      $region42: #{ae_paired_forward.36} parent=39 // pred_check_branch
        %1126 = sbr.rel (%p1124) target = $region44
      $region43: #{ae_paired_forward.36} parent=39 // pred_region
        %s1127 = smul.u32 32, %s16
      $region44: #{ae_paired_forward.36} parent=39 // pred_fallthru
        _
    $region40: #{ae_paired_forward.36} parent=5 // pred_fallthru
      _
    %p1128 = scmp.le.s32.totalorder 2, %s11
    // Predicated region
    $region45: #{ae_paired_forward.36} parent=5 // pred_check
      %p1129 = pneg %p1128
    $region46: #{ae_paired_forward.36} parent=5 // pred_check_branch
      %1131 = sbr.rel (%p1129) target = $region48
    $region47: #{ae_paired_forward.36} parent=5 // pred_region
      %s1132 = ssub.s32 %s11, 2
      // Predicated region
      $region49: #{ae_paired_forward.36} parent=47 // pred_check
        %p1133 = pneg %p150
      $region50: #{ae_paired_forward.36} parent=47 // pred_check_branch
        %1135 = sbr.rel (%p1133) target = $region52
      $region51: #{ae_paired_forward.36} parent=47 // pred_region
        %s1136 = smul.u32 32, %s17
        %p1137 = scmp.lt.s32.totalorder %s1136, 63
        %s1138 = scalar_select %p1137, %s1136, 63
        %s1139 = smul.addr %s1138, 8
        %s1140 = scalar_lea.vmem %s5, %s1139
      $region52: #{ae_paired_forward.36} parent=47 // pred_fallthru
        _
    $region48: #{ae_paired_forward.36} parent=5 // pred_fallthru
      _
  $region6: #{ae_paired_forward.36} parent=0 // loop_footer
    %s15 = sadd.s32 1, %s11
  $region7: #{ae_paired_forward.36} parent=0 // loop_footer_branch
    %10 = sbr.rel target = $region3
  $region8: #{ae_paired_forward.36} parent=0 // loop_exit
    _

// kernel: ae_paired_forward.38
$region0: #{ae_paired_forward.38}
  #allocation0 [shape = 'u32[]', space=smem, size = 0x4, offset = 0x4, fixed_abs, tag = 'smem constant byte address 0x4 - core index']
  #allocation1 [shape = 'u32[144,128]{1,0:T(1,128)}', space=vmem, size = 0x12000, scoped, tag = 'internal scratch']
  %s0 = inlined_call_operand.vmem [shape: f32[512,144], index: 0, kind: input, shape index: {}]
  %s1 = inlined_call_operand.vmem [shape: f32[144,8], index: 1, kind: input, shape index: {}]
  %s2 = inlined_call_operand.vmem [shape: f32[1,8], index: 2, kind: input, shape index: {}]
  %s3 = inlined_call_operand.vmem [shape: f32[1,8], index: 3, kind: input, shape index: {}]
  %s4 = inlined_call_operand.vmem [shape: f32[1,8], index: 4, kind: input, shape index: {}]
  %s5 = inlined_call_operand.vmem [shape: f32[512,8], index: 5, kind: output, shape index: {}]
  %s6 = sld [smem:[#allocation0]]
  $region53: #{ae_paired_forward.38} parent=0
    _
  %s8 = ssub.s32 1, %s6
  %s9 = scalar_select 0, %s8, %s6
  loop: start=0, step=1, limit=4
  $region2: #{ae_paired_forward.38} parent=0 // loop_pre_header
    _
  $region3: #{ae_paired_forward.38} parent=0 // loop_header
    %s11 = sphi 0, %s15
    %p12 = scmp.ge.s32.totalorder %s11, 4
    %s21 = sphi 0, %s23
    %s24 = sphi 0, %s21
    %s25 = sphi 0, %s24
    %s41 = sphi 0, %s25
    %s45 = sphi 0, %s45
    %s47 = sphi 0, %s45
    %s48 = sphi 0, %s47
    %s62 = sphi 0, %s48
    %s66 = sphi 0, %s66
    %s68 = sphi 0, %s66
    %s69 = sphi 0, %s68
    %s83 = sphi 0, %s69
    %s87 = sphi 0, %s87
    %s89 = sphi 0, %s87
    %s90 = sphi 0, %s89
    %s104 = sphi 0, %s90
    %s108 = sphi 0, %s108
    %s110 = sphi 0, %s108
    %s111 = sphi 0, %s110
    %s125 = sphi 0, %s111
    %s131 = sphi 0, %s133
    %s134 = sphi 0, %s131
    %s135 = sphi 0, %s134
    %s151 = sphi 0, %s135
  $region4: #{ae_paired_forward.38} parent=0 // loop_header_branch
    %14 = sbr.rel (%p12) target = $region8
  $region5: #{ae_paired_forward.38} parent=0 // loop_body
    %s16 = ssub.s32 %s11, 1
    %s17 = ssub.s32 %s11, 2
    %s18 = sadd.s32 %s11, 1
    %s19 = ssub.s32 %s11, %s18
    %p20 = scmp.eq.s32.totalorder %s19, 0
    %s22 = sadd.s32 %s21, 1
    %s23 = scalar_select %p20, %s21, %s22
    %p26 = pneg %p20
    %p27 = scmp.eq.s32.totalorder %s11, 1
    %p28 = por %p26, %p27
    %p29 = scmp.ne.s32.totalorder %s21, %s24
    %p30 = scmp.eq.s32.totalorder %s11, 0
    %p31 = por %p29, %p30
    %p32 = scmp.ne.s32.totalorder %s21, %s24
    %p33 = scmp.eq.s32.totalorder %s16, 1
    %p34 = por %p32, %p33
    %p35 = scmp.ne.s32.totalorder %s24, %s25
    %p36 = scmp.eq.s32.totalorder %s16, 0
    %p37 = por %p35, %p36
    %p38 = scmp.ne.s32.totalorder %s24, %s25
    %p39 = scmp.eq.s32.totalorder %s17, 1
    %p40 = por %p38, %p39
    %p42 = scmp.ne.s32.totalorder %s25, %s41
    %p43 = scmp.eq.s32.totalorder %s17, 0
    %p44 = por %p42, %p43
    %s46 = sadd.s32 %s45, 1
    %p49 = scmp.eq.s32.totalorder %s11, 1
    %p50 = scmp.ne.s32.totalorder %s45, %s47
    %p51 = scmp.eq.s32.totalorder %s11, 0
    %p52 = por %p50, %p51
    %p53 = scmp.ne.s32.totalorder %s45, %s47
    %p54 = scmp.eq.s32.totalorder %s16, 1
    %p55 = por %p53, %p54
    %p56 = scmp.ne.s32.totalorder %s47, %s48
    %p57 = scmp.eq.s32.totalorder %s16, 0
    %p58 = por %p56, %p57
    %p59 = scmp.ne.s32.totalorder %s47, %s48
    %p60 = scmp.eq.s32.totalorder %s17, 1
    %p61 = por %p59, %p60
    %p63 = scmp.ne.s32.totalorder %s48, %s62
    %p64 = scmp.eq.s32.totalorder %s17, 0
    %p65 = por %p63, %p64
    %s67 = sadd.s32 %s66, 1
    %p70 = scmp.eq.s32.totalorder %s11, 1
    %p71 = scmp.ne.s32.totalorder %s66, %s68
    %p72 = scmp.eq.s32.totalorder %s11, 0
    %p73 = por %p71, %p72
    %p74 = scmp.ne.s32.totalorder %s66, %s68
    %p75 = scmp.eq.s32.totalorder %s16, 1
    %p76 = por %p74, %p75
    %p77 = scmp.ne.s32.totalorder %s68, %s69
    %p78 = scmp.eq.s32.totalorder %s16, 0
    %p79 = por %p77, %p78
    %p80 = scmp.ne.s32.totalorder %s68, %s69
    %p81 = scmp.eq.s32.totalorder %s17, 1
    %p82 = por %p80, %p81
    %p84 = scmp.ne.s32.totalorder %s69, %s83
    %p85 = scmp.eq.s32.totalorder %s17, 0
    %p86 = por %p84, %p85
    %s88 = sadd.s32 %s87, 1
    %p91 = scmp.eq.s32.totalorder %s11, 1
    %p92 = scmp.ne.s32.totalorder %s87, %s89
    %p93 = scmp.eq.s32.totalorder %s11, 0
    %p94 = por %p92, %p93
    %p95 = scmp.ne.s32.totalorder %s87, %s89
    %p96 = scmp.eq.s32.totalorder %s16, 1
    %p97 = por %p95, %p96
    %p98 = scmp.ne.s32.totalorder %s89, %s90
    %p99 = scmp.eq.s32.totalorder %s16, 0
    %p100 = por %p98, %p99
    %p101 = scmp.ne.s32.totalorder %s89, %s90
    %p102 = scmp.eq.s32.totalorder %s17, 1
    %p103 = por %p101, %p102
    %p105 = scmp.ne.s32.totalorder %s90, %s104
    %p106 = scmp.eq.s32.totalorder %s17, 0
    %p107 = por %p105, %p106
    %s109 = sadd.s32 %s108, 1
    %p112 = scmp.eq.s32.totalorder %s11, 1
    %p113 = scmp.ne.s32.totalorder %s108, %s110
    %p114 = scmp.eq.s32.totalorder %s11, 0
    %p115 = por %p113, %p114
    %p116 = scmp.ne.s32.totalorder %s108, %s110
    %p117 = scmp.eq.s32.totalorder %s16, 1
    %p118 = por %p116, %p117
    %p119 = scmp.ne.s32.totalorder %s110, %s111
    %p120 = scmp.eq.s32.totalorder %s16, 0
    %p121 = por %p119, %p120
    %p122 = scmp.ne.s32.totalorder %s110, %s111
    %p123 = scmp.eq.s32.totalorder %s17, 1
    %p124 = por %p122, %p123
    %p126 = scmp.ne.s32.totalorder %s111, %s125
    %p127 = scmp.eq.s32.totalorder %s17, 0
    %p128 = por %p126, %p127
    %s129 = ssub.s32 %s11, %s18
    %p130 = scmp.eq.s32.totalorder %s129, 0
    %s132 = sadd.s32 %s131, 1
    %s133 = scalar_select %p130, %s131, %s132
    %p136 = pneg %p130
    %p137 = scmp.eq.s32.totalorder %s11, 1
    %p138 = por %p136, %p137
    %p139 = scmp.ne.s32.totalorder %s131, %s134
    %p140 = scmp.eq.s32.totalorder %s11, 0
    %p141 = por %p139, %p140
    %p142 = scmp.ne.s32.totalorder %s131, %s134
    %p143 = scmp.eq.s32.totalorder %s16, 1
    %p144 = por %p142, %p143
    %p145 = scmp.ne.s32.totalorder %s134, %s135
    %p146 = scmp.eq.s32.totalorder %s16, 0
    %p147 = por %p145, %p146
    %p148 = scmp.ne.s32.totalorder %s134, %s135
    %p149 = scmp.eq.s32.totalorder %s17, 1
    %p150 = por %p148, %p149
    %p152 = scmp.ne.s32.totalorder %s135, %s151
    %p153 = scmp.eq.s32.totalorder %s17, 0
    %p154 = por %p152, %p153
    %p155 = scmp.le.s32.totalorder 1, %s11
    %p156 = scmp.lt.s32.totalorder %s11, 3
    %p157 = pnand %p155, %p156
    %p158 = pneg %p157
    // Predicated region
    $region9: #{ae_paired_forward.38} parent=5 // pred_check
      _
    $region10: #{ae_paired_forward.38} parent=5 // pred_check_branch
      %160 = sbr.rel (%p157) target = $region12
    $region11: #{ae_paired_forward.38} parent=5 // pred_region
      %s161 = ssub.s32 %s11, 1
      // Predicated region
      $region13: #{ae_paired_forward.38} parent=11 // pred_check
        %p162 = pneg %p58
      $region14: #{ae_paired_forward.38} parent=11 // pred_check_branch
        %164 = sbr.rel (%p162) target = $region16
      $region15: #{ae_paired_forward.38} parent=11 // pred_region
        _
      $region16: #{ae_paired_forward.38} parent=11 // pred_fallthru
        _
      // Predicated region
      $region17: #{ae_paired_forward.38} parent=11 // pred_check
        %p165 = pneg %p79
      $region18: #{ae_paired_forward.38} parent=11 // pred_check_branch
        %167 = sbr.rel (%p165) target = $region20
      $region19: #{ae_paired_forward.38} parent=11 // pred_region
        _
      $region20: #{ae_paired_forward.38} parent=11 // pred_fallthru
        _
      // Predicated region
      $region21: #{ae_paired_forward.38} parent=11 // pred_check
        %p168 = pneg %p100
      $region22: #{ae_paired_forward.38} parent=11 // pred_check_branch
        %170 = sbr.rel (%p168) target = $region24
      $region23: #{ae_paired_forward.38} parent=11 // pred_region
        _
      $region24: #{ae_paired_forward.38} parent=11 // pred_fallthru
        _
      // Predicated region
      $region25: #{ae_paired_forward.38} parent=11 // pred_check
        %p171 = pneg %p121
      $region26: #{ae_paired_forward.38} parent=11 // pred_check_branch
        %173 = sbr.rel (%p171) target = $region28
      $region27: #{ae_paired_forward.38} parent=11 // pred_region
        _
      $region28: #{ae_paired_forward.38} parent=11 // pred_fallthru
        _
    $region12: #{ae_paired_forward.38} parent=5 // pred_fallthru
      _
    %p174 = scmp.lt.s32.totalorder %s11, 2
    // Predicated region
    $region29: #{ae_paired_forward.38} parent=5 // pred_check
      %p175 = pneg %p174
    $region30: #{ae_paired_forward.38} parent=5 // pred_check_branch
      %177 = sbr.rel (%p175) target = $region32
    $region31: #{ae_paired_forward.38} parent=5 // pred_region
      // Predicated region
      $region33: #{ae_paired_forward.38} parent=31 // pred_check
        %p178 = pneg %p31
      $region34: #{ae_paired_forward.38} parent=31 // pred_check_branch
        %180 = sbr.rel (%p178) target = $region36
      $region35: #{ae_paired_forward.38} parent=31 // pred_region
        %s181 = smul.u32 32, %s11
        %p182 = scmp.lt.s32.totalorder %s181, 63
        %s183 = scalar_select %p182, %s181, 63
        %s184 = smul.addr %s183, 2
        %s185 = smul.addr %s184, 8
        %s186 = scalar_lea.vmem %s0, %s185
        %s187 = smul.u32 32, %s11
      $region36: #{ae_paired_forward.38} parent=31 // pred_fallthru
        _
    $region32: #{ae_paired_forward.38} parent=5 // pred_fallthru
      _
    %p188 = scmp.le.s32.totalorder 1, %s11
    %p189 = scmp.lt.s32.totalorder %s11, 3
    %p190 = pnand %p188, %p189
    %p191 = pneg %p190
    // Predicated region
    $region37: #{ae_paired_forward.38} parent=5 // pred_check
      _
    $region38: #{ae_paired_forward.38} parent=5 // pred_check_branch
      %193 = sbr.rel (%p190) target = $region40
    $region39: #{ae_paired_forward.38} parent=5 // pred_region
      %s194 = ssub.s32 %s11, 1
      %s195 = smul.u32 32, %s16
      %p196 = scmp.lt.s32.totalorder %s195, 63
      %s197 = scalar_select %p196, %s195, 63
      %s198 = smul.addr %s197, 2
      %s199 = smul.addr %s198, 8
      %s200 = scalar_lea.vmem %s0, %s199
      %p201 = pneg %p37
      %p202 = pneg %p34
      %p203 = pneg %p58
      %p204 = pneg %p55
      %p205 = pneg %p79
      %p206 = pneg %p76
      %p207 = pneg %p100
      %p208 = pneg %p97
      %p209 = pneg %p121
      %p210 = pneg %p118
      %p211 = pneg %p147
      %p212 = pneg %p144
      %s213 = smul.u32 32, %s16
      %p214 = scmp.lt.s32.totalorder %s213, 63
      %s215 = scalar_select %p214, %s213, 63
      %s216 = smul.addr %s215, 8
      %s217 = scalar_lea.vmem %s5, %s216
      %s218 = smul.u32 32, %s16
      %p219 = scmp.lt.s32.totalorder %s218, 63
      %s220 = scalar_select %p219, %s218, 63
      %s221 = smul.addr %s220, 2
      %s222 = smul.addr %s221, 8
      %s223 = scalar_lea.vmem %s0, %s222
      %s224 = smul.u32 32, %s16
      %s225 = smul.u32 32, %s16
      %p226 = scmp.lt.s32.totalorder %s225, 63
      %s227 = scalar_select %p226, %s225, 63
      %s228 = smul.addr %s227, 8
      %s229 = scalar_lea.vmem %s5, %s228
      %s230 = smul.u32 32, %s16
      %v231 = vld [vmem:[%s223] sm:$0xff]
      %v232 = vld [vmem:[%s223 + $0x8] sm:$0xff]
      %v233 = vld [vmem:[%s223 + $0x10] sm:$0xff]
      %v234 = vld [vmem:[%s223 + $0x18] sm:$0xff]
      %v235 = vld [vmem:[%s223 + $0x20] sm:$0xff]
      %v236 = vld [vmem:[%s223 + $0x28] sm:$0xff]
      %v237 = vld [vmem:[%s223 + $0x30] sm:$0xff]
      %v238 = vld [vmem:[%s223 + $0x38] sm:$0xff]
      %v239 = vld [vmem:[%s223 + $0x40] sm:$0xff]
      %v240 = vld [vmem:[%s223 + $0x48] sm:$0xff]
      %v241 = vld [vmem:[%s223 + $0x50] sm:$0xff]
      %v242 = vld [vmem:[%s223 + $0x58] sm:$0xff]
      %v243 = vld [vmem:[%s223 + $0x60] sm:$0xff]
      %v244 = vld [vmem:[%s223 + $0x68] sm:$0xff]
      %v245 = vld [vmem:[%s223 + $0x70] sm:$0xff]
      %v246 = vld [vmem:[%s223 + $0x78] sm:$0xff]
      %v247 = vld [vmem:[%s223 + $0x80] sm:$0xff]
      %v248 = vld [vmem:[%s223 + $0x88] sm:$0xff]
      %v249 = vld [vmem:[%s223 + $0x90] sm:$0xff]
      %v250 = vld [vmem:[%s223 + $0x98] sm:$0xff]
      %v251 = vld [vmem:[%s223 + $0xa0] sm:$0xff]
      %v252 = vld [vmem:[%s223 + $0xa8] sm:$0xff]
      %v253 = vld [vmem:[%s223 + $0xb0] sm:$0xff]
      %v254 = vld [vmem:[%s223 + $0xb8] sm:$0xff]
      %v255 = vld [vmem:[%s223 + $0xc0] sm:$0xff]
      %v256 = vld [vmem:[%s223 + $0xc8] sm:$0xff]
      %v257 = vld [vmem:[%s223 + $0xd0] sm:$0xff]
      %v258 = vld [vmem:[%s223 + $0xd8] sm:$0xff]
      %v259 = vld [vmem:[%s223 + $0xe0] sm:$0xff]
      %v260 = vld [vmem:[%s223 + $0xe8] sm:$0xff]
      %v261 = vld [vmem:[%s223 + $0xf0] sm:$0xff]
      %v262 = vld [vmem:[%s223 + $0xf8] sm:$0xff]
      %v263 = vld [vmem:[%s223 + $0x100] sm:$0xff]
      %v264 = vld [vmem:[%s223 + $0x108] sm:$0xff]
      %v265 = vld [vmem:[%s223 + $0x110] sm:$0xff]
      %v266 = vld [vmem:[%s223 + $0x118] sm:$0xff]
      %v267 = vld [vmem:[%s223 + $0x120] sm:$0xff]
      %v268 = vld [vmem:[%s223 + $0x128] sm:$0xff]
      %v269 = vld [vmem:[%s223 + $0x130] sm:$0xff]
      %v270 = vld [vmem:[%s223 + $0x138] sm:$0xff]
      %v271 = vld [vmem:[%s223 + $0x140] sm:$0xff]
      %v272 = vld [vmem:[%s223 + $0x148] sm:$0xff]
      %v273 = vld [vmem:[%s223 + $0x150] sm:$0xff]
      %v274 = vld [vmem:[%s223 + $0x158] sm:$0xff]
      %v275 = vld [vmem:[%s223 + $0x160] sm:$0xff]
      %v276 = vld [vmem:[%s223 + $0x168] sm:$0xff]
      %v277 = vld [vmem:[%s223 + $0x170] sm:$0xff]
      %v278 = vld [vmem:[%s223 + $0x178] sm:$0xff]
      %v279 = vld [vmem:[%s223 + $0x180] sm:$0xff]
      %v280 = vld [vmem:[%s223 + $0x188] sm:$0xff]
      %v281 = vld [vmem:[%s223 + $0x190] sm:$0xff]
      %v282 = vld [vmem:[%s223 + $0x198] sm:$0xff]
      %v283 = vld [vmem:[%s223 + $0x1a0] sm:$0xff]
      %v284 = vld [vmem:[%s223 + $0x1a8] sm:$0xff]
      %v285 = vld [vmem:[%s223 + $0x1b0] sm:$0xff]
      %v286 = vld [vmem:[%s223 + $0x1b8] sm:$0xff]
      %v287 = vld [vmem:[%s223 + $0x1c0] sm:$0xff]
      %v288 = vld [vmem:[%s223 + $0x1c8] sm:$0xff]
      %v289 = vld [vmem:[%s223 + $0x1d0] sm:$0xff]
      %v290 = vld [vmem:[%s223 + $0x1d8] sm:$0xff]
      %v291 = vld [vmem:[%s223 + $0x1e0] sm:$0xff]
      %v292 = vld [vmem:[%s223 + $0x1e8] sm:$0xff]
      %v293 = vld [vmem:[%s223 + $0x1f0] sm:$0xff]
      %v294 = vld [vmem:[%s223 + $0x1f8] sm:$0xff]
      %v295 = vld [vmem:[%s1] sm:$0xff]
      %v296 = vld [vmem:[%s1 + $0x8] sm:$0xff]
      %v297 = vld [vmem:[%s1 + $0x10] sm:$0xff]
      %v298 = vld [vmem:[%s1 + $0x18] sm:$0xff]
      %v299 = vld [vmem:[%s1 + $0x20] sm:$0xff]
      %v300 = vld [vmem:[%s1 + $0x28] sm:$0xff]
      %v301 = vld [vmem:[%s1 + $0x30] sm:$0xff]
      %v302 = vld [vmem:[%s1 + $0x38] sm:$0xff]
      %v303 = vld [vmem:[%s1 + $0x40] sm:$0xff]
      %v304 = vld [vmem:[%s1 + $0x48] sm:$0xff]
      %v305 = vld [vmem:[%s1 + $0x50] sm:$0xff]
      %v306 = vld [vmem:[%s1 + $0x58] sm:$0xff]
      %v307 = vld [vmem:[%s1 + $0x60] sm:$0xff]
      %v308 = vld [vmem:[%s1 + $0x68] sm:$0xff]
      %v309 = vld [vmem:[%s1 + $0x70] sm:$0xff]
      %v310 = vld [vmem:[%s1 + $0x78] sm:$0xff]
      %v311 = vld [vmem:[%s1 + $0x80] sm:$0xff]
      %v312 = vld [vmem:[%s1 + $0x88] sm:$0xff]
      %v313 = vld [vmem:[%s2] sm:$0x1]
      %v315 = vlaneseq
      %v316 = vshrl.u32 %v315, 7
      %v317 = vsub.s32 0, %v316
      %v318 = vrot.slane %v313, %v317
      %vm320 = vcmask 130048
      %v322 = vsel %vm320, %v232, 0
      %v325 = vsel %vm320, %v234, 0
      %v328 = vsel %vm320, %v236, 0
      %v331 = vsel %vm320, %v238, 0
      %v334 = vsel %vm320, %v240, 0
      %v337 = vsel %vm320, %v242, 0
      %v340 = vsel %vm320, %v244, 0
      %v343 = vsel %vm320, %v246, 0
      %v346 = vsel %vm320, %v248, 0
      %v349 = vsel %vm320, %v250, 0
      %v352 = vsel %vm320, %v252, 0
      %v355 = vsel %vm320, %v254, 0
      %v358 = vsel %vm320, %v256, 0
      %v361 = vsel %vm320, %v258, 0
      %v364 = vsel %vm320, %v260, 0
      %v367 = vsel %vm320, %v262, 0
      %v370 = vsel %vm320, %v264, 0
      %v373 = vsel %vm320, %v266, 0
      %v376 = vsel %vm320, %v268, 0
      %v379 = vsel %vm320, %v270, 0
      %v382 = vsel %vm320, %v272, 0
      %v385 = vsel %vm320, %v274, 0
      %v388 = vsel %vm320, %v276, 0
      %v391 = vsel %vm320, %v278, 0
      %v394 = vsel %vm320, %v280, 0
      %v397 = vsel %vm320, %v282, 0
      %v400 = vsel %vm320, %v284, 0
      %v403 = vsel %vm320, %v286, 0
      %v406 = vsel %vm320, %v288, 0
      %v409 = vsel %vm320, %v290, 0
      %v412 = vsel %vm320, %v292, 0
      %v415 = vsel %vm320, %v294, 0
      %417 = vmatprep.subr.mxu0 0.0
      %418 = vmatpush1.msra.mxu0 %v295
      %419 = vmatprep.subr.mxu0 0.0
      %420 = vmatpush1.msra.mxu0 %v296
      %421 = vmatprep.subr.mxu0 0.0
      %422 = vmatpush1.msra.mxu0 %v297
      %423 = vmatprep.subr.mxu0 0.0
      %424 = vmatpush1.msra.mxu0 %v298
      %425 = vmatprep.subr.mxu0 0.0
      %426 = vmatpush1.msra.mxu0 %v299
      %427 = vmatprep.subr.mxu0 0.0
      %428 = vmatpush1.msra.mxu0 %v300
      %429 = vmatprep.subr.mxu0 0.0
      %430 = vmatpush1.msra.mxu0 %v301
      %431 = vmatprep.subr.mxu0 0.0
      %432 = vmatpush1.msra.mxu0 %v302
      %433 = vmatprep.subr.mxu0 0.0
      %434 = vmatpush1.msra.mxu0 %v303
      %435 = vmatprep.subr.mxu0 0.0
      %436 = vmatpush1.msra.mxu0 %v304
      %437 = vmatprep.subr.mxu0 0.0
      %438 = vmatpush1.msra.mxu0 %v305
      %439 = vmatprep.subr.mxu0 0.0
      %440 = vmatpush1.msra.mxu0 %v306
      %441 = vmatprep.subr.mxu0 0.0
      %442 = vmatpush1.msra.mxu0 %v307
      %443 = vmatprep.subr.mxu0 0.0
      %444 = vmatpush1.msra.mxu0 %v308
      %445 = vmatprep.subr.mxu0 0.0
      %446 = vmatpush1.msra.mxu0 %v309
      %447 = vmatprep.subr.mxu0 0.0
      %448 = vmatpush1.msra.mxu0 %v310
      %449 = vmatprep.subr.mxu0 0.0
      %450 = vmatpush1.msra.mxu0 %v311
      %451 = vmatprep.subr.mxu0 0.0
      %452 = vmatpush1.msra.mxu0 %v312
      %453 = vmatprep.subr.mxu0 0.0
      %454 = vmatpush1.msra.mxu0 0.0
      %455 = vmatprep.subr.mxu0 0.0
      %456 = vmatpush1.msra.mxu0 0.0
      %457 = vmatprep.subr.mxu0 0.0
      %458 = vmatpush1.msra.mxu0 0.0
      %459 = vmatprep.subr.mxu0 0.0
      %460 = vmatpush1.msra.mxu0 0.0
      %461 = vmatprep.subr.mxu0 0.0
      %462 = vmatpush1.msra.mxu0 0.0
      %463 = vmatprep.subr.mxu0 0.0
      %464 = vmatpush1.msra.mxu0 0.0
      %465 = vmatprep.subr.mxu0 0.0
      %466 = vmatpush1.msra.mxu0 0.0
      %467 = vmatprep.subr.mxu0 0.0
      %468 = vmatpush1.msra.mxu0 0.0
      %469 = vmatprep.subr.mxu0 0.0
      %470 = vmatpush1.msra.mxu0 0.0
      %471 = vmatprep.subr.mxu0 0.0
      %472 = vmatpush1.msra.mxu0 0.0
      %473 = vmatprep.subr.mxu0 0.0
      %474 = vmatpush1.msra.mxu0 0.0
      %475 = vmatprep.subr.mxu0 0.0
      %476 = vmatpush1.msra.mxu0 0.0
      %477 = vmatprep.subr.mxu0 0.0
      %478 = vmatpush1.msra.mxu0 0.0
      %479 = vmatprep.subr.mxu0 0.0
      %480 = vmatpush1.msra.mxu0 0.0
      %481 = vmatprep.mubr.f32.mxu0 %v322
      %482 = vmatmul.mubr.f32.gmra.mrb[0].mxu0 %v231
      %v483 = vpop.f32.mrb[0].mxu0
      %v484 = vadd.f32 %v318, %v483
      %v485 = vpop.f32.mrb[0].mxu0
      %486 = vmatprep.mubr.f32.mxu0 %v325
      %487 = vmatmul.mubr.f32.gmra.mrb[0].mxu0 %v233
      %v488 = vpop.f32.mrb[0].mxu0
      %v489 = vadd.f32 %v318, %v488
      %v490 = vpop.f32.mrb[0].mxu0
      %491 = vmatprep.mubr.f32.mxu0 %v328
      %492 = vmatmul.mubr.f32.gmra.mrb[0].mxu0 %v235
      %v493 = vpop.f32.mrb[0].mxu0
      %v494 = vadd.f32 %v318, %v493
      %v495 = vpop.f32.mrb[0].mxu0
      %496 = vmatprep.mubr.f32.mxu0 %v331
      %497 = vmatmul.mubr.f32.gmra.mrb[0].mxu0 %v237
      %v498 = vpop.f32.mrb[0].mxu0
      %v499 = vadd.f32 %v318, %v498
      %v500 = vpop.f32.mrb[0].mxu0
      %501 = vmatprep.mubr.f32.mxu0 %v334
      %502 = vmatmul.mubr.f32.gmra.mrb[0].mxu0 %v239
      %v503 = vpop.f32.mrb[0].mxu0
      %v504 = vadd.f32 %v318, %v503
      %v505 = vpop.f32.mrb[0].mxu0
      %506 = vmatprep.mubr.f32.mxu0 %v337
      %507 = vmatmul.mubr.f32.gmra.mrb[0].mxu0 %v241
      %v508 = vpop.f32.mrb[0].mxu0
      %v509 = vadd.f32 %v318, %v508
      %v510 = vpop.f32.mrb[0].mxu0
      %511 = vmatprep.mubr.f32.mxu0 %v340
      %512 = vmatmul.mubr.f32.gmra.mrb[0].mxu0 %v243
      %v513 = vpop.f32.mrb[0].mxu0
      %v514 = vadd.f32 %v318, %v513
      %v515 = vpop.f32.mrb[0].mxu0
      %516 = vmatprep.mubr.f32.mxu0 %v343
      %517 = vmatmul.mubr.f32.gmra.mrb[0].mxu0 %v245
      %v518 = vpop.f32.mrb[0].mxu0
      %v519 = vadd.f32 %v318, %v518
      %v520 = vpop.f32.mrb[0].mxu0
      %521 = vmatprep.mubr.f32.mxu0 %v346
      %522 = vmatmul.mubr.f32.gmra.mrb[0].mxu0 %v247
      %v523 = vpop.f32.mrb[0].mxu0
      %v524 = vadd.f32 %v318, %v523
      %v525 = vpop.f32.mrb[0].mxu0
      %526 = vmatprep.mubr.f32.mxu0 %v349
      %527 = vmatmul.mubr.f32.gmra.mrb[0].mxu0 %v249
      %v528 = vpop.f32.mrb[0].mxu0
      %v529 = vadd.f32 %v318, %v528
      %v530 = vpop.f32.mrb[0].mxu0
      %531 = vmatprep.mubr.f32.mxu0 %v352
      %532 = vmatmul.mubr.f32.gmra.mrb[0].mxu0 %v251
      %v533 = vpop.f32.mrb[0].mxu0
      %v534 = vadd.f32 %v318, %v533
      %v535 = vpop.f32.mrb[0].mxu0
      %536 = vmatprep.mubr.f32.mxu0 %v355
      %537 = vmatmul.mubr.f32.gmra.mrb[0].mxu0 %v253
      %v538 = vpop.f32.mrb[0].mxu0
      %v539 = vadd.f32 %v318, %v538
      %v540 = vpop.f32.mrb[0].mxu0
      %541 = vmatprep.mubr.f32.mxu0 %v358
      %542 = vmatmul.mubr.f32.gmra.mrb[0].mxu0 %v255
      %v543 = vpop.f32.mrb[0].mxu0
      %v544 = vadd.f32 %v318, %v543
      %v545 = vpop.f32.mrb[0].mxu0
      %546 = vmatprep.mubr.f32.mxu0 %v361
      %547 = vmatmul.mubr.f32.gmra.mrb[0].mxu0 %v257
      %v548 = vpop.f32.mrb[0].mxu0
      %v549 = vadd.f32 %v318, %v548
      %v550 = vpop.f32.mrb[0].mxu0
      %551 = vmatprep.mubr.f32.mxu0 %v364
      %552 = vmatmul.mubr.f32.gmra.mrb[0].mxu0 %v259
      %v553 = vpop.f32.mrb[0].mxu0
      %v554 = vadd.f32 %v318, %v553
      %v555 = vpop.f32.mrb[0].mxu0
      %556 = vmatprep.mubr.f32.mxu0 %v367
      %557 = vmatmul.mubr.f32.gmra.mrb[0].mxu0 %v261
      %v558 = vpop.f32.mrb[0].mxu0
      %v559 = vadd.f32 %v318, %v558
      %v560 = vpop.f32.mrb[0].mxu0
      %561 = vmatprep.mubr.f32.mxu0 %v370
      %562 = vmatmul.mubr.f32.gmra.mrb[0].mxu0 %v263
      %v563 = vpop.f32.mrb[0].mxu0
      %v564 = vadd.f32 %v318, %v563
      %v565 = vpop.f32.mrb[0].mxu0
      %566 = vmatprep.mubr.f32.mxu0 %v373
      %567 = vmatmul.mubr.f32.gmra.mrb[0].mxu0 %v265
      %v568 = vpop.f32.mrb[0].mxu0
      %v569 = vadd.f32 %v318, %v568
      %v570 = vpop.f32.mrb[0].mxu0
      %571 = vmatprep.mubr.f32.mxu0 %v376
      %572 = vmatmul.mubr.f32.gmra.mrb[0].mxu0 %v267
      %v573 = vpop.f32.mrb[0].mxu0
      %v574 = vadd.f32 %v318, %v573
      %v575 = vpop.f32.mrb[0].mxu0
      %576 = vmatprep.mubr.f32.mxu0 %v379
      %577 = vmatmul.mubr.f32.gmra.mrb[0].mxu0 %v269
      %v578 = vpop.f32.mrb[0].mxu0
      %v579 = vadd.f32 %v318, %v578
      %v580 = vpop.f32.mrb[0].mxu0
      %581 = vmatprep.mubr.f32.mxu0 %v382
      %582 = vmatmul.mubr.f32.gmra.mrb[0].mxu0 %v271
      %v583 = vpop.f32.mrb[0].mxu0
      %v584 = vadd.f32 %v318, %v583
      %v585 = vpop.f32.mrb[0].mxu0
      %586 = vmatprep.mubr.f32.mxu0 %v385
      %587 = vmatmul.mubr.f32.gmra.mrb[0].mxu0 %v273
      %v588 = vpop.f32.mrb[0].mxu0
      %v589 = vadd.f32 %v318, %v588
      %v590 = vpop.f32.mrb[0].mxu0
      %591 = vmatprep.mubr.f32.mxu0 %v388
      %592 = vmatmul.mubr.f32.gmra.mrb[0].mxu0 %v275
      %v593 = vpop.f32.mrb[0].mxu0
      %v594 = vadd.f32 %v318, %v593
      %v595 = vpop.f32.mrb[0].mxu0
      %596 = vmatprep.mubr.f32.mxu0 %v391
      %597 = vmatmul.mubr.f32.gmra.mrb[0].mxu0 %v277
      %v598 = vpop.f32.mrb[0].mxu0
      %v599 = vadd.f32 %v318, %v598
      %v600 = vpop.f32.mrb[0].mxu0
      %601 = vmatprep.mubr.f32.mxu0 %v394
      %602 = vmatmul.mubr.f32.gmra.mrb[0].mxu0 %v279
      %v603 = vpop.f32.mrb[0].mxu0
      %v604 = vadd.f32 %v318, %v603
      %v605 = vpop.f32.mrb[0].mxu0
      %606 = vmatprep.mubr.f32.mxu0 %v397
      %607 = vmatmul.mubr.f32.gmra.mrb[0].mxu0 %v281
      %v608 = vpop.f32.mrb[0].mxu0
      %v609 = vadd.f32 %v318, %v608
      %v610 = vpop.f32.mrb[0].mxu0
      %611 = vmatprep.mubr.f32.mxu0 %v400
      %612 = vmatmul.mubr.f32.gmra.mrb[0].mxu0 %v283
      %v613 = vpop.f32.mrb[0].mxu0
      %v614 = vadd.f32 %v318, %v613
      %v615 = vpop.f32.mrb[0].mxu0
      %616 = vmatprep.mubr.f32.mxu0 %v403
      %617 = vmatmul.mubr.f32.gmra.mrb[0].mxu0 %v285
      %v618 = vpop.f32.mrb[0].mxu0
      %v619 = vadd.f32 %v318, %v618
      %v620 = vpop.f32.mrb[0].mxu0
      %621 = vmatprep.mubr.f32.mxu0 %v406
      %622 = vmatmul.mubr.f32.gmra.mrb[0].mxu0 %v287
      %v623 = vpop.f32.mrb[0].mxu0
      %v624 = vadd.f32 %v318, %v623
      %v625 = vpop.f32.mrb[0].mxu0
      %626 = vmatprep.mubr.f32.mxu0 %v409
      %627 = vmatmul.mubr.f32.gmra.mrb[0].mxu0 %v289
      %v628 = vpop.f32.mrb[0].mxu0
      %v629 = vadd.f32 %v318, %v628
      %v630 = vpop.f32.mrb[0].mxu0
      %631 = vmatprep.mubr.f32.mxu0 %v412
      %632 = vmatmul.mubr.f32.gmra.mrb[0].mxu0 %v291
      %v633 = vpop.f32.mrb[0].mxu0
      %v634 = vadd.f32 %v318, %v633
      %v635 = vpop.f32.mrb[0].mxu0
      %636 = vmatprep.mubr.f32.mxu0 %v415
      %637 = vmatmul.mubr.f32.gmra.mrb[0].mxu0 %v293
      %v638 = vpop.f32.mrb[0].mxu0
      %v639 = vadd.f32 %v318, %v638
      %v640 = vpop.f32.mrb[0].mxu0
      %641 = vdwg.mxu0
      %v642 = vmax.f32 %v484, 0.0
      %v643 = vmax.f32 %v489, 0.0
      %v644 = vmax.f32 %v494, 0.0
      %v645 = vmax.f32 %v499, 0.0
      %v646 = vmax.f32 %v504, 0.0
      %v647 = vmax.f32 %v509, 0.0
      %v648 = vmax.f32 %v514, 0.0
      %v649 = vmax.f32 %v519, 0.0
      %v650 = vmax.f32 %v524, 0.0
      %v651 = vmax.f32 %v529, 0.0
      %v652 = vmax.f32 %v534, 0.0
      %v653 = vmax.f32 %v539, 0.0
      %v654 = vmax.f32 %v544, 0.0
      %v655 = vmax.f32 %v549, 0.0
      %v656 = vmax.f32 %v554, 0.0
      %v657 = vmax.f32 %v559, 0.0
      %v658 = vmax.f32 %v564, 0.0
      %v659 = vmax.f32 %v569, 0.0
      %v660 = vmax.f32 %v574, 0.0
      %v661 = vmax.f32 %v579, 0.0
      %v662 = vmax.f32 %v584, 0.0
      %v663 = vmax.f32 %v589, 0.0
      %v664 = vmax.f32 %v594, 0.0
      %v665 = vmax.f32 %v599, 0.0
      %v666 = vmax.f32 %v604, 0.0
      %v667 = vmax.f32 %v609, 0.0
      %v668 = vmax.f32 %v614, 0.0
      %v669 = vmax.f32 %v619, 0.0
      %v670 = vmax.f32 %v624, 0.0
      %v671 = vmax.f32 %v629, 0.0
      %v672 = vmax.f32 %v634, 0.0
      %v673 = vmax.f32 %v639, 0.0
      %v674 = vld [vmem:[%s3] sm:$0x1]
      %v675 = vld [vmem:[%s4] sm:$0x1]
      %vm676 = vcmask 64512
      %v677 = vsel %vm676, %v642, 0.0
      %678 = vadd.xlane.f32.xlu0 %v677
      %v679 = vpop.xlane.xlu0 %678
      %v680 = vsel %vm676, %v643, 0.0
      %681 = vadd.xlane.f32.xlu0 %v680
      %v682 = vpop.xlane.xlu0 %681
      %v683 = vsel %vm676, %v644, 0.0
      %684 = vadd.xlane.f32.xlu0 %v683
      %v685 = vpop.xlane.xlu0 %684
      %v686 = vsel %vm676, %v645, 0.0
      %687 = vadd.xlane.f32.xlu0 %v686
      %v688 = vpop.xlane.xlu0 %687
      %v689 = vsel %vm676, %v646, 0.0
      %690 = vadd.xlane.f32.xlu0 %v689
      %v691 = vpop.xlane.xlu0 %690
      %v692 = vsel %vm676, %v647, 0.0
      %693 = vadd.xlane.f32.xlu0 %v692
      %v694 = vpop.xlane.xlu0 %693
      %v695 = vsel %vm676, %v648, 0.0
      %696 = vadd.xlane.f32.xlu0 %v695
      %v697 = vpop.xlane.xlu0 %696
      %v698 = vsel %vm676, %v649, 0.0
      %699 = vadd.xlane.f32.xlu0 %v698
      %v700 = vpop.xlane.xlu0 %699
      %v701 = vsel %vm676, %v650, 0.0
      %702 = vadd.xlane.f32.xlu0 %v701
      %v703 = vpop.xlane.xlu0 %702
      %v704 = vsel %vm676, %v651, 0.0
      %705 = vadd.xlane.f32.xlu0 %v704
      %v706 = vpop.xlane.xlu0 %705
      %v707 = vsel %vm676, %v652, 0.0
      %708 = vadd.xlane.f32.xlu0 %v707
      %v709 = vpop.xlane.xlu0 %708
      %v710 = vsel %vm676, %v653, 0.0
      %711 = vadd.xlane.f32.xlu0 %v710
      %v712 = vpop.xlane.xlu0 %711
      %v713 = vsel %vm676, %v654, 0.0
      %714 = vadd.xlane.f32.xlu0 %v713
      %v715 = vpop.xlane.xlu0 %714
      %v716 = vsel %vm676, %v655, 0.0
      %717 = vadd.xlane.f32.xlu0 %v716
      %v718 = vpop.xlane.xlu0 %717
      %v719 = vsel %vm676, %v656, 0.0
      %720 = vadd.xlane.f32.xlu0 %v719
      %v721 = vpop.xlane.xlu0 %720
      %v722 = vsel %vm676, %v657, 0.0
      %723 = vadd.xlane.f32.xlu0 %v722
      %v724 = vpop.xlane.xlu0 %723
      %v725 = vsel %vm676, %v658, 0.0
      %726 = vadd.xlane.f32.xlu0 %v725
      %v727 = vpop.xlane.xlu0 %726
      %v728 = vsel %vm676, %v659, 0.0
      %729 = vadd.xlane.f32.xlu0 %v728
      %v730 = vpop.xlane.xlu0 %729
      %v731 = vsel %vm676, %v660, 0.0
      %732 = vadd.xlane.f32.xlu0 %v731
      %v733 = vpop.xlane.xlu0 %732
      %v734 = vsel %vm676, %v661, 0.0
      %735 = vadd.xlane.f32.xlu0 %v734
      %v736 = vpop.xlane.xlu0 %735
      %v737 = vsel %vm676, %v662, 0.0
      %738 = vadd.xlane.f32.xlu0 %v737
      %v739 = vpop.xlane.xlu0 %738
      %v740 = vsel %vm676, %v663, 0.0
      %741 = vadd.xlane.f32.xlu0 %v740
      %v742 = vpop.xlane.xlu0 %741
      %v743 = vsel %vm676, %v664, 0.0
      %744 = vadd.xlane.f32.xlu0 %v743
      %v745 = vpop.xlane.xlu0 %744
      %v746 = vsel %vm676, %v665, 0.0
      %747 = vadd.xlane.f32.xlu0 %v746
      %v748 = vpop.xlane.xlu0 %747
      %v749 = vsel %vm676, %v666, 0.0
      %750 = vadd.xlane.f32.xlu0 %v749
      %v751 = vpop.xlane.xlu0 %750
      %v752 = vsel %vm676, %v667, 0.0
      %753 = vadd.xlane.f32.xlu0 %v752
      %v754 = vpop.xlane.xlu0 %753
      %v755 = vsel %vm676, %v668, 0.0
      %756 = vadd.xlane.f32.xlu0 %v755
      %v757 = vpop.xlane.xlu0 %756
      %v758 = vsel %vm676, %v669, 0.0
      %759 = vadd.xlane.f32.xlu0 %v758
      %v760 = vpop.xlane.xlu0 %759
      %v761 = vsel %vm676, %v670, 0.0
      %762 = vadd.xlane.f32.xlu0 %v761
      %v763 = vpop.xlane.xlu0 %762
      %v764 = vsel %vm676, %v671, 0.0
      %765 = vadd.xlane.f32.xlu0 %v764
      %v766 = vpop.xlane.xlu0 %765
      %v767 = vsel %vm676, %v672, 0.0
      %768 = vadd.xlane.f32.xlu0 %v767
      %v769 = vpop.xlane.xlu0 %768
      %v770 = vsel %vm676, %v673, 0.0
      %771 = vadd.xlane.f32.xlu0 %v770
      %v772 = vpop.xlane.xlu0 %771
      %v773 = vrcp.pop 8.0
      %v774 = vmul.f32 %v679, %v773
      %v775 = vmul.f32 %v682, %v773
      %v776 = vmul.f32 %v685, %v773
      %v777 = vmul.f32 %v688, %v773
      %v778 = vmul.f32 %v691, %v773
      %v779 = vmul.f32 %v694, %v773
      %v780 = vmul.f32 %v697, %v773
      %v781 = vmul.f32 %v700, %v773
      %v782 = vmul.f32 %v703, %v773
      %v783 = vmul.f32 %v706, %v773
      %v784 = vmul.f32 %v709, %v773
      %v785 = vmul.f32 %v712, %v773
      %v786 = vmul.f32 %v715, %v773
      %v787 = vmul.f32 %v718, %v773
      %v788 = vmul.f32 %v721, %v773
      %v789 = vmul.f32 %v724, %v773
      %v790 = vmul.f32 %v727, %v773
      %v791 = vmul.f32 %v730, %v773
      %v792 = vmul.f32 %v733, %v773
      %v793 = vmul.f32 %v736, %v773
      %v794 = vmul.f32 %v739, %v773
      %v795 = vmul.f32 %v742, %v773
      %v796 = vmul.f32 %v745, %v773
      %v797 = vmul.f32 %v748, %v773
      %v798 = vmul.f32 %v751, %v773
      %v799 = vmul.f32 %v754, %v773
      %v800 = vmul.f32 %v757, %v773
      %v801 = vmul.f32 %v760, %v773
      %v802 = vmul.f32 %v763, %v773
      %v803 = vmul.f32 %v766, %v773
      %v804 = vmul.f32 %v769, %v773
      %v805 = vmul.f32 %v772, %v773
      %v806 = vsub.f32 %v642, %v774
      %v807 = vsub.f32 %v643, %v775
      %v808 = vsub.f32 %v644, %v776
      %v809 = vsub.f32 %v645, %v777
      %v810 = vsub.f32 %v646, %v778
      %v811 = vsub.f32 %v647, %v779
      %v812 = vsub.f32 %v648, %v780
      %v813 = vsub.f32 %v649, %v781
      %v814 = vsub.f32 %v650, %v782
      %v815 = vsub.f32 %v651, %v783
      %v816 = vsub.f32 %v652, %v784
      %v817 = vsub.f32 %v653, %v785
      %v818 = vsub.f32 %v654, %v786
      %v819 = vsub.f32 %v655, %v787
      %v820 = vsub.f32 %v656, %v788
      %v821 = vsub.f32 %v657, %v789
      %v822 = vsub.f32 %v658, %v790
      %v823 = vsub.f32 %v659, %v791
      %v824 = vsub.f32 %v660, %v792
      %v825 = vsub.f32 %v661, %v793
      %v826 = vsub.f32 %v662, %v794
      %v827 = vsub.f32 %v663, %v795
      %v828 = vsub.f32 %v664, %v796
      %v829 = vsub.f32 %v665, %v797
      %v830 = vsub.f32 %v666, %v798
      %v831 = vsub.f32 %v667, %v799
      %v832 = vsub.f32 %v668, %v800
      %v833 = vsub.f32 %v669, %v801
      %v834 = vsub.f32 %v670, %v802
      %v835 = vsub.f32 %v671, %v803
      %v836 = vsub.f32 %v672, %v804
      %v837 = vsub.f32 %v673, %v805
      %v838 = vmul.f32 %v806, %v806
      %v839 = vmul.f32 %v807, %v807
      %v840 = vmul.f32 %v808, %v808
      %v841 = vmul.f32 %v809, %v809
      %v842 = vmul.f32 %v810, %v810
      %v843 = vmul.f32 %v811, %v811
      %v844 = vmul.f32 %v812, %v812
      %v845 = vmul.f32 %v813, %v813
      %v846 = vmul.f32 %v814, %v814
      %v847 = vmul.f32 %v815, %v815
      %v848 = vmul.f32 %v816, %v816
      %v849 = vmul.f32 %v817, %v817
      %v850 = vmul.f32 %v818, %v818
      %v851 = vmul.f32 %v819, %v819
      %v852 = vmul.f32 %v820, %v820
      %v853 = vmul.f32 %v821, %v821
      %v854 = vmul.f32 %v822, %v822
      %v855 = vmul.f32 %v823, %v823
      %v856 = vmul.f32 %v824, %v824
      %v857 = vmul.f32 %v825, %v825
      %v858 = vmul.f32 %v826, %v826
      %v859 = vmul.f32 %v827, %v827
      %v860 = vmul.f32 %v828, %v828
      %v861 = vmul.f32 %v829, %v829
      %v862 = vmul.f32 %v830, %v830
      %v863 = vmul.f32 %v831, %v831
      %v864 = vmul.f32 %v832, %v832
      %v865 = vmul.f32 %v833, %v833
      %v866 = vmul.f32 %v834, %v834
      %v867 = vmul.f32 %v835, %v835
      %v868 = vmul.f32 %v836, %v836
      %v869 = vmul.f32 %v837, %v837
      %v870 = vsel %vm676, %v838, 0.0
      %871 = vadd.xlane.f32.xlu0 %v870
      %v872 = vpop.xlane.xlu0 %871
      %v873 = vsel %vm676, %v839, 0.0
      %874 = vadd.xlane.f32.xlu0 %v873
      %v875 = vpop.xlane.xlu0 %874
      %v876 = vsel %vm676, %v840, 0.0
      %877 = vadd.xlane.f32.xlu0 %v876
      %v878 = vpop.xlane.xlu0 %877
      %v879 = vsel %vm676, %v841, 0.0
      %880 = vadd.xlane.f32.xlu0 %v879
      %v881 = vpop.xlane.xlu0 %880
      %v882 = vsel %vm676, %v842, 0.0
      %883 = vadd.xlane.f32.xlu0 %v882
      %v884 = vpop.xlane.xlu0 %883
      %v885 = vsel %vm676, %v843, 0.0
      %886 = vadd.xlane.f32.xlu0 %v885
      %v887 = vpop.xlane.xlu0 %886
      %v888 = vsel %vm676, %v844, 0.0
      %889 = vadd.xlane.f32.xlu0 %v888
      %v890 = vpop.xlane.xlu0 %889
      %v891 = vsel %vm676, %v845, 0.0
      %892 = vadd.xlane.f32.xlu0 %v891
      %v893 = vpop.xlane.xlu0 %892
      %v894 = vsel %vm676, %v846, 0.0
      %895 = vadd.xlane.f32.xlu0 %v894
      %v896 = vpop.xlane.xlu0 %895
      %v897 = vsel %vm676, %v847, 0.0
      %898 = vadd.xlane.f32.xlu0 %v897
      %v899 = vpop.xlane.xlu0 %898
      %v900 = vsel %vm676, %v848, 0.0
      %901 = vadd.xlane.f32.xlu0 %v900
      %v902 = vpop.xlane.xlu0 %901
      %v903 = vsel %vm676, %v849, 0.0
      %904 = vadd.xlane.f32.xlu0 %v903
      %v905 = vpop.xlane.xlu0 %904
      %v906 = vsel %vm676, %v850, 0.0
      %907 = vadd.xlane.f32.xlu0 %v906
      %v908 = vpop.xlane.xlu0 %907
      %v909 = vsel %vm676, %v851, 0.0
      %910 = vadd.xlane.f32.xlu0 %v909
      %v911 = vpop.xlane.xlu0 %910
      %v912 = vsel %vm676, %v852, 0.0
      %913 = vadd.xlane.f32.xlu0 %v912
      %v914 = vpop.xlane.xlu0 %913
      %v915 = vsel %vm676, %v853, 0.0
      %916 = vadd.xlane.f32.xlu0 %v915
      %v917 = vpop.xlane.xlu0 %916
      %v918 = vsel %vm676, %v854, 0.0
      %919 = vadd.xlane.f32.xlu0 %v918
      %v920 = vpop.xlane.xlu0 %919
      %v921 = vsel %vm676, %v855, 0.0
      %922 = vadd.xlane.f32.xlu0 %v921
      %v923 = vpop.xlane.xlu0 %922
      %v924 = vsel %vm676, %v856, 0.0
      %925 = vadd.xlane.f32.xlu0 %v924
      %v926 = vpop.xlane.xlu0 %925
      %v927 = vsel %vm676, %v857, 0.0
      %928 = vadd.xlane.f32.xlu0 %v927
      %v929 = vpop.xlane.xlu0 %928
      %v930 = vsel %vm676, %v858, 0.0
      %931 = vadd.xlane.f32.xlu0 %v930
      %v932 = vpop.xlane.xlu0 %931
      %v933 = vsel %vm676, %v859, 0.0
      %934 = vadd.xlane.f32.xlu0 %v933
      %v935 = vpop.xlane.xlu0 %934
      %v936 = vsel %vm676, %v860, 0.0
      %937 = vadd.xlane.f32.xlu0 %v936
      %v938 = vpop.xlane.xlu0 %937
      %v939 = vsel %vm676, %v861, 0.0
      %940 = vadd.xlane.f32.xlu0 %v939
      %v941 = vpop.xlane.xlu0 %940
      %v942 = vsel %vm676, %v862, 0.0
      %943 = vadd.xlane.f32.xlu0 %v942
      %v944 = vpop.xlane.xlu0 %943
      %v945 = vsel %vm676, %v863, 0.0
      %946 = vadd.xlane.f32.xlu0 %v945
      %v947 = vpop.xlane.xlu0 %946
      %v948 = vsel %vm676, %v864, 0.0
      %949 = vadd.xlane.f32.xlu0 %v948
      %v950 = vpop.xlane.xlu0 %949
      %v951 = vsel %vm676, %v865, 0.0
      %952 = vadd.xlane.f32.xlu0 %v951
      %v953 = vpop.xlane.xlu0 %952
      %v954 = vsel %vm676, %v866, 0.0
      %955 = vadd.xlane.f32.xlu0 %v954
      %v956 = vpop.xlane.xlu0 %955
      %v957 = vsel %vm676, %v867, 0.0
      %958 = vadd.xlane.f32.xlu0 %v957
      %v959 = vpop.xlane.xlu0 %958
      %v960 = vsel %vm676, %v868, 0.0
      %961 = vadd.xlane.f32.xlu0 %v960
      %v962 = vpop.xlane.xlu0 %961
      %v963 = vsel %vm676, %v869, 0.0
      %964 = vadd.xlane.f32.xlu0 %v963
      %v965 = vpop.xlane.xlu0 %964
      %v966 = vmul.f32 %v872, %v773
      %v967 = vmul.f32 %v875, %v773
      %v968 = vmul.f32 %v878, %v773
      %v969 = vmul.f32 %v881, %v773
      %v970 = vmul.f32 %v884, %v773
      %v971 = vmul.f32 %v887, %v773
      %v972 = vmul.f32 %v890, %v773
      %v973 = vmul.f32 %v893, %v773
      %v974 = vmul.f32 %v896, %v773
      %v975 = vmul.f32 %v899, %v773
      %v976 = vmul.f32 %v902, %v773
      %v977 = vmul.f32 %v905, %v773
      %v978 = vmul.f32 %v908, %v773
      %v979 = vmul.f32 %v911, %v773
      %v980 = vmul.f32 %v914, %v773
      %v981 = vmul.f32 %v917, %v773
      %v982 = vmul.f32 %v920, %v773
      %v983 = vmul.f32 %v923, %v773
      %v984 = vmul.f32 %v926, %v773
      %v985 = vmul.f32 %v929, %v773
      %v986 = vmul.f32 %v932, %v773
      %v987 = vmul.f32 %v935, %v773
      %v988 = vmul.f32 %v938, %v773
      %v989 = vmul.f32 %v941, %v773
      %v990 = vmul.f32 %v944, %v773
      %v991 = vmul.f32 %v947, %v773
      %v992 = vmul.f32 %v950, %v773
      %v993 = vmul.f32 %v953, %v773
      %v994 = vmul.f32 %v956, %v773
      %v995 = vmul.f32 %v959, %v773
      %v996 = vmul.f32 %v962, %v773
      %v997 = vmul.f32 %v965, %v773
      %v998 = vadd.f32 %v966, 1e-05
      %v999 = vadd.f32 %v967, 1e-05
      %v1000 = vadd.f32 %v968, 1e-05
      %v1001 = vadd.f32 %v969, 1e-05
      %v1002 = vadd.f32 %v970, 1e-05
      %v1003 = vadd.f32 %v971, 1e-05
      %v1004 = vadd.f32 %v972, 1e-05
      %v1005 = vadd.f32 %v973, 1e-05
      %v1006 = vadd.f32 %v974, 1e-05
      %v1007 = vadd.f32 %v975, 1e-05
      %v1008 = vadd.f32 %v976, 1e-05
      %v1009 = vadd.f32 %v977, 1e-05
      %v1010 = vadd.f32 %v978, 1e-05
      %v1011 = vadd.f32 %v979, 1e-05
      %v1012 = vadd.f32 %v980, 1e-05
      %v1013 = vadd.f32 %v981, 1e-05
      %v1014 = vadd.f32 %v982, 1e-05
      %v1015 = vadd.f32 %v983, 1e-05
      %v1016 = vadd.f32 %v984, 1e-05
      %v1017 = vadd.f32 %v985, 1e-05
      %v1018 = vadd.f32 %v986, 1e-05
      %v1019 = vadd.f32 %v987, 1e-05
      %v1020 = vadd.f32 %v988, 1e-05
      %v1021 = vadd.f32 %v989, 1e-05
      %v1022 = vadd.f32 %v990, 1e-05
      %v1023 = vadd.f32 %v991, 1e-05
      %v1024 = vadd.f32 %v992, 1e-05
      %v1025 = vadd.f32 %v993, 1e-05
      %v1026 = vadd.f32 %v994, 1e-05
      %v1027 = vadd.f32 %v995, 1e-05
      %v1028 = vadd.f32 %v996, 1e-05
      %v1029 = vadd.f32 %v997, 1e-05
      %v1030 = vrsqrt.pop %v998
      %v1031 = vrsqrt.pop %v999
      %v1032 = vrsqrt.pop %v1000
      %v1033 = vrsqrt.pop %v1001
      %v1034 = vrsqrt.pop %v1002
      %v1035 = vrsqrt.pop %v1003
      %v1036 = vrsqrt.pop %v1004
      %v1037 = vrsqrt.pop %v1005
      %v1038 = vrsqrt.pop %v1006
      %v1039 = vrsqrt.pop %v1007
      %v1040 = vrsqrt.pop %v1008
      %v1041 = vrsqrt.pop %v1009
      %v1042 = vrsqrt.pop %v1010
      %v1043 = vrsqrt.pop %v1011
      %v1044 = vrsqrt.pop %v1012
      %v1045 = vrsqrt.pop %v1013
      %v1046 = vrsqrt.pop %v1014
      %v1047 = vrsqrt.pop %v1015
      %v1048 = vrsqrt.pop %v1016
      %v1049 = vrsqrt.pop %v1017
      %v1050 = vrsqrt.pop %v1018
      %v1051 = vrsqrt.pop %v1019
      %v1052 = vrsqrt.pop %v1020
      %v1053 = vrsqrt.pop %v1021
      %v1054 = vrsqrt.pop %v1022
      %v1055 = vrsqrt.pop %v1023
      %v1056 = vrsqrt.pop %v1024
      %v1057 = vrsqrt.pop %v1025
      %v1058 = vrsqrt.pop %v1026
      %v1059 = vrsqrt.pop %v1027
      %v1060 = vrsqrt.pop %v1028
      %v1061 = vrsqrt.pop %v1029
      %v1062 = vmul.f32 %v806, %v1030
      %v1063 = vmul.f32 %v807, %v1031
      %v1064 = vmul.f32 %v808, %v1032
      %v1065 = vmul.f32 %v809, %v1033
      %v1066 = vmul.f32 %v810, %v1034
      %v1067 = vmul.f32 %v811, %v1035
      %v1068 = vmul.f32 %v812, %v1036
      %v1069 = vmul.f32 %v813, %v1037
      %v1070 = vmul.f32 %v814, %v1038
      %v1071 = vmul.f32 %v815, %v1039
      %v1072 = vmul.f32 %v816, %v1040
      %v1073 = vmul.f32 %v817, %v1041
      %v1074 = vmul.f32 %v818, %v1042
      %v1075 = vmul.f32 %v819, %v1043
      %v1076 = vmul.f32 %v820, %v1044
      %v1077 = vmul.f32 %v821, %v1045
      %v1078 = vmul.f32 %v822, %v1046
      %v1079 = vmul.f32 %v823, %v1047
      %v1080 = vmul.f32 %v824, %v1048
      %v1081 = vmul.f32 %v825, %v1049
      %v1082 = vmul.f32 %v826, %v1050
      %v1083 = vmul.f32 %v827, %v1051
      %v1084 = vmul.f32 %v828, %v1052
      %v1085 = vmul.f32 %v829, %v1053
      %v1086 = vmul.f32 %v830, %v1054
      %v1087 = vmul.f32 %v831, %v1055
      %v1088 = vmul.f32 %v832, %v1056
      %v1089 = vmul.f32 %v833, %v1057
      %v1090 = vmul.f32 %v834, %v1058
      %v1091 = vmul.f32 %v835, %v1059
      %v1092 = vmul.f32 %v836, %v1060
      %v1093 = vmul.f32 %v837, %v1061
      %v1095 = vlaneseq
      %v1096 = vshrl.u32 %v1095, 7
      %v1097 = vsub.s32 0, %v1096
      %v1098 = vrot.slane %v674, %v1097
      %v1100 = vmul.f32 %v1062, %v1098
      %v1101 = vmul.f32 %v1063, %v1098
      %v1102 = vmul.f32 %v1064, %v1098
      %v1103 = vmul.f32 %v1065, %v1098
      %v1104 = vmul.f32 %v1066, %v1098
      %v1105 = vmul.f32 %v1067, %v1098
      %v1106 = vmul.f32 %v1068, %v1098
      %v1107 = vmul.f32 %v1069, %v1098
      %v1108 = vmul.f32 %v1070, %v1098
      %v1109 = vmul.f32 %v1071, %v1098
      %v1110 = vmul.f32 %v1072, %v1098
      %v1111 = vmul.f32 %v1073, %v1098
      %v1112 = vmul.f32 %v1074, %v1098
      %v1113 = vmul.f32 %v1075, %v1098
      %v1114 = vmul.f32 %v1076, %v1098
      %v1115 = vmul.f32 %v1077, %v1098
      %v1116 = vmul.f32 %v1078, %v1098
      %v1117 = vmul.f32 %v1079, %v1098
      %v1118 = vmul.f32 %v1080, %v1098
      %v1119 = vmul.f32 %v1081, %v1098
      %v1120 = vmul.f32 %v1082, %v1098
      %v1121 = vmul.f32 %v1083, %v1098
      %v1122 = vmul.f32 %v1084, %v1098
      %v1123 = vmul.f32 %v1085, %v1098
      %v1124 = vmul.f32 %v1086, %v1098
      %v1125 = vmul.f32 %v1087, %v1098
      %v1126 = vmul.f32 %v1088, %v1098
      %v1127 = vmul.f32 %v1089, %v1098
      %v1128 = vmul.f32 %v1090, %v1098
      %v1129 = vmul.f32 %v1091, %v1098
      %v1130 = vmul.f32 %v1092, %v1098
      %v1131 = vmul.f32 %v1093, %v1098
      %v1133 = vlaneseq
      %v1134 = vshrl.u32 %v1133, 7
      %v1135 = vsub.s32 0, %v1134
      %v1136 = vrot.slane %v675, %v1135
      %v1138 = vadd.f32 %v1100, %v1136
      %v1139 = vadd.f32 %v1101, %v1136
      %v1140 = vadd.f32 %v1102, %v1136
      %v1141 = vadd.f32 %v1103, %v1136
      %v1142 = vadd.f32 %v1104, %v1136
      %v1143 = vadd.f32 %v1105, %v1136
      %v1144 = vadd.f32 %v1106, %v1136
      %v1145 = vadd.f32 %v1107, %v1136
      %v1146 = vadd.f32 %v1108, %v1136
      %v1147 = vadd.f32 %v1109, %v1136
      %v1148 = vadd.f32 %v1110, %v1136
      %v1149 = vadd.f32 %v1111, %v1136
      %v1150 = vadd.f32 %v1112, %v1136
      %v1151 = vadd.f32 %v1113, %v1136
      %v1152 = vadd.f32 %v1114, %v1136
      %v1153 = vadd.f32 %v1115, %v1136
      %v1154 = vadd.f32 %v1116, %v1136
      %v1155 = vadd.f32 %v1117, %v1136
      %v1156 = vadd.f32 %v1118, %v1136
      %v1157 = vadd.f32 %v1119, %v1136
      %v1158 = vadd.f32 %v1120, %v1136
      %v1159 = vadd.f32 %v1121, %v1136
      %v1160 = vadd.f32 %v1122, %v1136
      %v1161 = vadd.f32 %v1123, %v1136
      %v1162 = vadd.f32 %v1124, %v1136
      %v1163 = vadd.f32 %v1125, %v1136
      %v1164 = vadd.f32 %v1126, %v1136
      %v1165 = vadd.f32 %v1127, %v1136
      %v1166 = vadd.f32 %v1128, %v1136
      %v1167 = vadd.f32 %v1129, %v1136
      %v1168 = vadd.f32 %v1130, %v1136
      %v1169 = vadd.f32 %v1131, %v1136
      %1170 = vst.msk [vmem:[%s229] sm:$0xff] %vm676, %v1138
      %1171 = vst.msk [vmem:[%s229 + $0x8] sm:$0xff] %vm676, %v1139
      %1172 = vst.msk [vmem:[%s229 + $0x10] sm:$0xff] %vm676, %v1140
      %1173 = vst.msk [vmem:[%s229 + $0x18] sm:$0xff] %vm676, %v1141
      %1174 = vst.msk [vmem:[%s229 + $0x20] sm:$0xff] %vm676, %v1142
      %1175 = vst.msk [vmem:[%s229 + $0x28] sm:$0xff] %vm676, %v1143
      %1176 = vst.msk [vmem:[%s229 + $0x30] sm:$0xff] %vm676, %v1144
      %1177 = vst.msk [vmem:[%s229 + $0x38] sm:$0xff] %vm676, %v1145
      %1178 = vst.msk [vmem:[%s229 + $0x40] sm:$0xff] %vm676, %v1146
      %1179 = vst.msk [vmem:[%s229 + $0x48] sm:$0xff] %vm676, %v1147
      %1180 = vst.msk [vmem:[%s229 + $0x50] sm:$0xff] %vm676, %v1148
      %1181 = vst.msk [vmem:[%s229 + $0x58] sm:$0xff] %vm676, %v1149
      %1182 = vst.msk [vmem:[%s229 + $0x60] sm:$0xff] %vm676, %v1150
      %1183 = vst.msk [vmem:[%s229 + $0x68] sm:$0xff] %vm676, %v1151
      %1184 = vst.msk [vmem:[%s229 + $0x70] sm:$0xff] %vm676, %v1152
      %1185 = vst.msk [vmem:[%s229 + $0x78] sm:$0xff] %vm676, %v1153
      %1186 = vst.msk [vmem:[%s229 + $0x80] sm:$0xff] %vm676, %v1154
      %1187 = vst.msk [vmem:[%s229 + $0x88] sm:$0xff] %vm676, %v1155
      %1188 = vst.msk [vmem:[%s229 + $0x90] sm:$0xff] %vm676, %v1156
      %1189 = vst.msk [vmem:[%s229 + $0x98] sm:$0xff] %vm676, %v1157
      %1190 = vst.msk [vmem:[%s229 + $0xa0] sm:$0xff] %vm676, %v1158
      %1191 = vst.msk [vmem:[%s229 + $0xa8] sm:$0xff] %vm676, %v1159
      %1192 = vst.msk [vmem:[%s229 + $0xb0] sm:$0xff] %vm676, %v1160
      %1193 = vst.msk [vmem:[%s229 + $0xb8] sm:$0xff] %vm676, %v1161
      %1194 = vst.msk [vmem:[%s229 + $0xc0] sm:$0xff] %vm676, %v1162
      %1195 = vst.msk [vmem:[%s229 + $0xc8] sm:$0xff] %vm676, %v1163
      %1196 = vst.msk [vmem:[%s229 + $0xd0] sm:$0xff] %vm676, %v1164
      %1197 = vst.msk [vmem:[%s229 + $0xd8] sm:$0xff] %vm676, %v1165
      %1198 = vst.msk [vmem:[%s229 + $0xe0] sm:$0xff] %vm676, %v1166
      %1199 = vst.msk [vmem:[%s229 + $0xe8] sm:$0xff] %vm676, %v1167
      %1200 = vst.msk [vmem:[%s229 + $0xf0] sm:$0xff] %vm676, %v1168
      %1201 = vst.msk [vmem:[%s229 + $0xf8] sm:$0xff] %vm676, %v1169
      %s1202 = smul.u32 32, %s16
      %p1203 = scmp.lt.s32.totalorder %s1202, 63
      %s1204 = scalar_select %p1203, %s1202, 63
      %s1205 = smul.addr %s1204, 8
      %s1206 = scalar_lea.vmem %s5, %s1205
      // Predicated region
      $region41: #{ae_paired_forward.38} parent=39 // pred_check
        %p1207 = pneg %p144
      $region42: #{ae_paired_forward.38} parent=39 // pred_check_branch
        %1209 = sbr.rel (%p1207) target = $region44
      $region43: #{ae_paired_forward.38} parent=39 // pred_region
        %s1210 = smul.u32 32, %s16
      $region44: #{ae_paired_forward.38} parent=39 // pred_fallthru
        _
    $region40: #{ae_paired_forward.38} parent=5 // pred_fallthru
      _
    %p1211 = scmp.le.s32.totalorder 2, %s11
    // Predicated region
    $region45: #{ae_paired_forward.38} parent=5 // pred_check
      %p1212 = pneg %p1211
    $region46: #{ae_paired_forward.38} parent=5 // pred_check_branch
      %1214 = sbr.rel (%p1212) target = $region48
    $region47: #{ae_paired_forward.38} parent=5 // pred_region
      %s1215 = ssub.s32 %s11, 2
      // Predicated region
      $region49: #{ae_paired_forward.38} parent=47 // pred_check
        %p1216 = pneg %p150
      $region50: #{ae_paired_forward.38} parent=47 // pred_check_branch
        %1218 = sbr.rel (%p1216) target = $region52
      $region51: #{ae_paired_forward.38} parent=47 // pred_region
        %s1219 = smul.u32 32, %s17
        %p1220 = scmp.lt.s32.totalorder %s1219, 63
        %s1221 = scalar_select %p1220, %s1219, 63
        %s1222 = smul.addr %s1221, 8
        %s1223 = scalar_lea.vmem %s5, %s1222
      $region52: #{ae_paired_forward.38} parent=47 // pred_fallthru
        _
    $region48: #{ae_paired_forward.38} parent=5 // pred_fallthru
      _
  $region6: #{ae_paired_forward.38} parent=0 // loop_footer
    %s15 = sadd.s32 1, %s11
  $region7: #{ae_paired_forward.38} parent=0 // loop_footer_branch
    %10 = sbr.rel target = $region3
  $region8: #{ae_paired_forward.38} parent=0 // loop_exit
    _

// kernel: ae_paired_forward.39
$region0: #{ae_paired_forward.39}
  #allocation0 [shape = 'u32[]', space=smem, size = 0x4, offset = 0x4, fixed_abs, tag = 'smem constant byte address 0x4 - core index']
  #allocation1 [shape = 'u32[144,128]{1,0:T(1,128)}', space=vmem, size = 0x12000, scoped, tag = 'internal scratch']
  %s0 = inlined_call_operand.vmem [shape: f32[512,8], index: 0, kind: input, shape index: {}]
  %s1 = inlined_call_operand.vmem [shape: f32[8,3], index: 1, kind: input, shape index: {}]
  %s2 = inlined_call_operand.vmem [shape: f32[1,3], index: 2, kind: input, shape index: {}]
  %s3 = inlined_call_operand.vmem [shape: f32[512,3], index: 3, kind: output, shape index: {}]
  %s4 = sld [smem:[#allocation0]]
  $region45: #{ae_paired_forward.39} parent=0
    _
  %s6 = ssub.s32 1, %s4
  %s7 = scalar_select 0, %s6, %s4
  loop: start=0, step=1, limit=4
  $region2: #{ae_paired_forward.39} parent=0 // loop_pre_header
    _
  $region3: #{ae_paired_forward.39} parent=0 // loop_header
    %s9 = sphi 0, %s13
    %p10 = scmp.ge.s32.totalorder %s9, 4
    %s19 = sphi 0, %s21
    %s22 = sphi 0, %s19
    %s23 = sphi 0, %s22
    %s39 = sphi 0, %s23
    %s43 = sphi 0, %s43
    %s45 = sphi 0, %s43
    %s46 = sphi 0, %s45
    %s60 = sphi 0, %s46
    %s64 = sphi 0, %s64
    %s66 = sphi 0, %s64
    %s67 = sphi 0, %s66
    %s81 = sphi 0, %s67
    %s87 = sphi 0, %s89
    %s90 = sphi 0, %s87
    %s91 = sphi 0, %s90
    %s107 = sphi 0, %s91
  $region4: #{ae_paired_forward.39} parent=0 // loop_header_branch
    %12 = sbr.rel (%p10) target = $region8
  $region5: #{ae_paired_forward.39} parent=0 // loop_body
    %s14 = ssub.s32 %s9, 1
    %s15 = ssub.s32 %s9, 2
    %s16 = sadd.s32 %s9, 1
    %s17 = ssub.s32 %s9, %s16
    %p18 = scmp.eq.s32.totalorder %s17, 0
    %s20 = sadd.s32 %s19, 1
    %s21 = scalar_select %p18, %s19, %s20
    %p24 = pneg %p18
    %p25 = scmp.eq.s32.totalorder %s9, 1
    %p26 = por %p24, %p25
    %p27 = scmp.ne.s32.totalorder %s19, %s22
    %p28 = scmp.eq.s32.totalorder %s9, 0
    %p29 = por %p27, %p28
    %p30 = scmp.ne.s32.totalorder %s19, %s22
    %p31 = scmp.eq.s32.totalorder %s14, 1
    %p32 = por %p30, %p31
    %p33 = scmp.ne.s32.totalorder %s22, %s23
    %p34 = scmp.eq.s32.totalorder %s14, 0
    %p35 = por %p33, %p34
    %p36 = scmp.ne.s32.totalorder %s22, %s23
    %p37 = scmp.eq.s32.totalorder %s15, 1
    %p38 = por %p36, %p37
    %p40 = scmp.ne.s32.totalorder %s23, %s39
    %p41 = scmp.eq.s32.totalorder %s15, 0
    %p42 = por %p40, %p41
    %s44 = sadd.s32 %s43, 1
    %p47 = scmp.eq.s32.totalorder %s9, 1
    %p48 = scmp.ne.s32.totalorder %s43, %s45
    %p49 = scmp.eq.s32.totalorder %s9, 0
    %p50 = por %p48, %p49
    %p51 = scmp.ne.s32.totalorder %s43, %s45
    %p52 = scmp.eq.s32.totalorder %s14, 1
    %p53 = por %p51, %p52
    %p54 = scmp.ne.s32.totalorder %s45, %s46
    %p55 = scmp.eq.s32.totalorder %s14, 0
    %p56 = por %p54, %p55
    %p57 = scmp.ne.s32.totalorder %s45, %s46
    %p58 = scmp.eq.s32.totalorder %s15, 1
    %p59 = por %p57, %p58
    %p61 = scmp.ne.s32.totalorder %s46, %s60
    %p62 = scmp.eq.s32.totalorder %s15, 0
    %p63 = por %p61, %p62
    %s65 = sadd.s32 %s64, 1
    %p68 = scmp.eq.s32.totalorder %s9, 1
    %p69 = scmp.ne.s32.totalorder %s64, %s66
    %p70 = scmp.eq.s32.totalorder %s9, 0
    %p71 = por %p69, %p70
    %p72 = scmp.ne.s32.totalorder %s64, %s66
    %p73 = scmp.eq.s32.totalorder %s14, 1
    %p74 = por %p72, %p73
    %p75 = scmp.ne.s32.totalorder %s66, %s67
    %p76 = scmp.eq.s32.totalorder %s14, 0
    %p77 = por %p75, %p76
    %p78 = scmp.ne.s32.totalorder %s66, %s67
    %p79 = scmp.eq.s32.totalorder %s15, 1
    %p80 = por %p78, %p79
    %p82 = scmp.ne.s32.totalorder %s67, %s81
    %p83 = scmp.eq.s32.totalorder %s15, 0
    %p84 = por %p82, %p83
    %s85 = ssub.s32 %s9, %s16
    %p86 = scmp.eq.s32.totalorder %s85, 0
    %s88 = sadd.s32 %s87, 1
    %s89 = scalar_select %p86, %s87, %s88
    %p92 = pneg %p86
    %p93 = scmp.eq.s32.totalorder %s9, 1
    %p94 = por %p92, %p93
    %p95 = scmp.ne.s32.totalorder %s87, %s90
    %p96 = scmp.eq.s32.totalorder %s9, 0
    %p97 = por %p95, %p96
    %p98 = scmp.ne.s32.totalorder %s87, %s90
    %p99 = scmp.eq.s32.totalorder %s14, 1
    %p100 = por %p98, %p99
    %p101 = scmp.ne.s32.totalorder %s90, %s91
    %p102 = scmp.eq.s32.totalorder %s14, 0
    %p103 = por %p101, %p102
    %p104 = scmp.ne.s32.totalorder %s90, %s91
    %p105 = scmp.eq.s32.totalorder %s15, 1
    %p106 = por %p104, %p105
    %p108 = scmp.ne.s32.totalorder %s91, %s107
    %p109 = scmp.eq.s32.totalorder %s15, 0
    %p110 = por %p108, %p109
    %p111 = scmp.le.s32.totalorder 1, %s9
    %p112 = scmp.lt.s32.totalorder %s9, 3
    %p113 = pnand %p111, %p112
    %p114 = pneg %p113
    // Predicated region
    $region9: #{ae_paired_forward.39} parent=5 // pred_check
      _
    $region10: #{ae_paired_forward.39} parent=5 // pred_check_branch
      %116 = sbr.rel (%p113) target = $region12
    $region11: #{ae_paired_forward.39} parent=5 // pred_region
      %s117 = ssub.s32 %s9, 1
      // Predicated region
      $region13: #{ae_paired_forward.39} parent=11 // pred_check
        %p118 = pneg %p56
      $region14: #{ae_paired_forward.39} parent=11 // pred_check_branch
        %120 = sbr.rel (%p118) target = $region16
      $region15: #{ae_paired_forward.39} parent=11 // pred_region
        _
      $region16: #{ae_paired_forward.39} parent=11 // pred_fallthru
        _
      // Predicated region
      $region17: #{ae_paired_forward.39} parent=11 // pred_check
        %p121 = pneg %p77
      $region18: #{ae_paired_forward.39} parent=11 // pred_check_branch
        %123 = sbr.rel (%p121) target = $region20
      $region19: #{ae_paired_forward.39} parent=11 // pred_region
        _
      $region20: #{ae_paired_forward.39} parent=11 // pred_fallthru
        _
    $region12: #{ae_paired_forward.39} parent=5 // pred_fallthru
      _
    %p124 = scmp.lt.s32.totalorder %s9, 2
    // Predicated region
    $region21: #{ae_paired_forward.39} parent=5 // pred_check
      %p125 = pneg %p124
    $region22: #{ae_paired_forward.39} parent=5 // pred_check_branch
      %127 = sbr.rel (%p125) target = $region24
    $region23: #{ae_paired_forward.39} parent=5 // pred_region
      // Predicated region
      $region25: #{ae_paired_forward.39} parent=23 // pred_check
        %p128 = pneg %p29
      $region26: #{ae_paired_forward.39} parent=23 // pred_check_branch
        %130 = sbr.rel (%p128) target = $region28
      $region27: #{ae_paired_forward.39} parent=23 // pred_region
        %s131 = smul.u32 32, %s9
        %p132 = scmp.lt.s32.totalorder %s131, 63
        %s133 = scalar_select %p132, %s131, 63
        %s134 = smul.addr %s133, 8
        %s135 = scalar_lea.vmem %s0, %s134
        %s136 = smul.u32 32, %s9
      $region28: #{ae_paired_forward.39} parent=23 // pred_fallthru
        _
    $region24: #{ae_paired_forward.39} parent=5 // pred_fallthru
      _
    %p137 = scmp.le.s32.totalorder 1, %s9
    %p138 = scmp.lt.s32.totalorder %s9, 3
    %p139 = pnand %p137, %p138
    %p140 = pneg %p139
    // Predicated region
    $region29: #{ae_paired_forward.39} parent=5 // pred_check
      _
    $region30: #{ae_paired_forward.39} parent=5 // pred_check_branch
      %142 = sbr.rel (%p139) target = $region32
    $region31: #{ae_paired_forward.39} parent=5 // pred_region
      %s143 = ssub.s32 %s9, 1
      %s144 = smul.u32 32, %s14
      %p145 = scmp.lt.s32.totalorder %s144, 63
      %s146 = scalar_select %p145, %s144, 63
      %s147 = smul.addr %s146, 8
      %s148 = scalar_lea.vmem %s0, %s147
      %p149 = pneg %p35
      %p150 = pneg %p32
      %p151 = pneg %p56
      %p152 = pneg %p53
      %p153 = pneg %p77
      %p154 = pneg %p74
      %p155 = pneg %p103
      %p156 = pneg %p100
      %s157 = smul.u32 32, %s14
      %p158 = scmp.lt.s32.totalorder %s157, 63
      %s159 = scalar_select %p158, %s157, 63
      %s160 = smul.addr %s159, 8
      %s161 = scalar_lea.vmem %s3, %s160
      %s162 = smul.u32 32, %s14
      %p163 = scmp.lt.s32.totalorder %s162, 63
      %s164 = scalar_select %p163, %s162, 63
      %s165 = smul.addr %s164, 8
      %s166 = scalar_lea.vmem %s0, %s165
      %s167 = smul.u32 32, %s14
      %s168 = smul.u32 32, %s14
      %p169 = scmp.lt.s32.totalorder %s168, 63
      %s170 = scalar_select %p169, %s168, 63
      %s171 = smul.addr %s170, 8
      %s172 = scalar_lea.vmem %s3, %s171
      %s173 = smul.u32 32, %s14
      %v174 = vld [vmem:[%s166] sm:$0xff]
      %v175 = vld [vmem:[%s166 + $0x8] sm:$0xff]
      %v176 = vld [vmem:[%s166 + $0x10] sm:$0xff]
      %v177 = vld [vmem:[%s166 + $0x18] sm:$0xff]
      %v178 = vld [vmem:[%s166 + $0x20] sm:$0xff]
      %v179 = vld [vmem:[%s166 + $0x28] sm:$0xff]
      %v180 = vld [vmem:[%s166 + $0x30] sm:$0xff]
      %v181 = vld [vmem:[%s166 + $0x38] sm:$0xff]
      %v182 = vld [vmem:[%s166 + $0x40] sm:$0xff]
      %v183 = vld [vmem:[%s166 + $0x48] sm:$0xff]
      %v184 = vld [vmem:[%s166 + $0x50] sm:$0xff]
      %v185 = vld [vmem:[%s166 + $0x58] sm:$0xff]
      %v186 = vld [vmem:[%s166 + $0x60] sm:$0xff]
      %v187 = vld [vmem:[%s166 + $0x68] sm:$0xff]
      %v188 = vld [vmem:[%s166 + $0x70] sm:$0xff]
      %v189 = vld [vmem:[%s166 + $0x78] sm:$0xff]
      %v190 = vld [vmem:[%s166 + $0x80] sm:$0xff]
      %v191 = vld [vmem:[%s166 + $0x88] sm:$0xff]
      %v192 = vld [vmem:[%s166 + $0x90] sm:$0xff]
      %v193 = vld [vmem:[%s166 + $0x98] sm:$0xff]
      %v194 = vld [vmem:[%s166 + $0xa0] sm:$0xff]
      %v195 = vld [vmem:[%s166 + $0xa8] sm:$0xff]
      %v196 = vld [vmem:[%s166 + $0xb0] sm:$0xff]
      %v197 = vld [vmem:[%s166 + $0xb8] sm:$0xff]
      %v198 = vld [vmem:[%s166 + $0xc0] sm:$0xff]
      %v199 = vld [vmem:[%s166 + $0xc8] sm:$0xff]
      %v200 = vld [vmem:[%s166 + $0xd0] sm:$0xff]
      %v201 = vld [vmem:[%s166 + $0xd8] sm:$0xff]
      %v202 = vld [vmem:[%s166 + $0xe0] sm:$0xff]
      %v203 = vld [vmem:[%s166 + $0xe8] sm:$0xff]
      %v204 = vld [vmem:[%s166 + $0xf0] sm:$0xff]
      %v205 = vld [vmem:[%s166 + $0xf8] sm:$0xff]
      %v206 = vld [vmem:[%s1] sm:$0xff]
      %v207 = vld [vmem:[%s2] sm:$0x1]
      %v209 = vlaneseq
      %v210 = vshrl.u32 %v209, 7
      %v211 = vsub.s32 0, %v210
      %v212 = vrot.slane %v207, %v211
      %vm214 = vcmask 64512
      %v216 = vsel %vm214, %v174, 0
      %v219 = vsel %vm214, %v175, 0
      %v222 = vsel %vm214, %v176, 0
      %v225 = vsel %vm214, %v177, 0
      %v228 = vsel %vm214, %v178, 0
      %v231 = vsel %vm214, %v179, 0
      %v234 = vsel %vm214, %v180, 0
      %v237 = vsel %vm214, %v181, 0
      %v240 = vsel %vm214, %v182, 0
      %v243 = vsel %vm214, %v183, 0
      %v246 = vsel %vm214, %v184, 0
      %v249 = vsel %vm214, %v185, 0
      %v252 = vsel %vm214, %v186, 0
      %v255 = vsel %vm214, %v187, 0
      %v258 = vsel %vm214, %v188, 0
      %v261 = vsel %vm214, %v189, 0
      %v264 = vsel %vm214, %v190, 0
      %v267 = vsel %vm214, %v191, 0
      %v270 = vsel %vm214, %v192, 0
      %v273 = vsel %vm214, %v193, 0
      %v276 = vsel %vm214, %v194, 0
      %v279 = vsel %vm214, %v195, 0
      %v282 = vsel %vm214, %v196, 0
      %v285 = vsel %vm214, %v197, 0
      %v288 = vsel %vm214, %v198, 0
      %v291 = vsel %vm214, %v199, 0
      %v294 = vsel %vm214, %v200, 0
      %v297 = vsel %vm214, %v201, 0
      %v300 = vsel %vm214, %v202, 0
      %v303 = vsel %vm214, %v203, 0
      %v306 = vsel %vm214, %v204, 0
      %v309 = vsel %vm214, %v205, 0
      %311 = vmatprep.subr.mxu0 0.0
      %312 = vmatpush1.msra.mxu0 %v206
      %313 = vmatprep.subr.mxu0 0.0
      %314 = vmatpush1.msra.mxu0 0.0
      %315 = vmatprep.subr.mxu0 0.0
      %316 = vmatpush1.msra.mxu0 0.0
      %317 = vmatprep.subr.mxu0 0.0
      %318 = vmatpush1.msra.mxu0 0.0
      %319 = vmatprep.subr.mxu0 0.0
      %320 = vmatpush1.msra.mxu0 0.0
      %321 = vmatprep.subr.mxu0 0.0
      %322 = vmatpush1.msra.mxu0 0.0
      %323 = vmatprep.subr.mxu0 0.0
      %324 = vmatpush1.msra.mxu0 0.0
      %325 = vmatprep.subr.mxu0 0.0
      %326 = vmatpush1.msra.mxu0 0.0
      %327 = vmatprep.subr.mxu0 0.0
      %328 = vmatpush1.msra.mxu0 0.0
      %329 = vmatprep.subr.mxu0 0.0
      %330 = vmatpush1.msra.mxu0 0.0
      %331 = vmatprep.subr.mxu0 0.0
      %332 = vmatpush1.msra.mxu0 0.0
      %333 = vmatprep.subr.mxu0 0.0
      %334 = vmatpush1.msra.mxu0 0.0
      %335 = vmatprep.subr.mxu0 0.0
      %336 = vmatpush1.msra.mxu0 0.0
      %337 = vmatprep.subr.mxu0 0.0
      %338 = vmatpush1.msra.mxu0 0.0
      %339 = vmatprep.subr.mxu0 0.0
      %340 = vmatpush1.msra.mxu0 0.0
      %341 = vmatprep.subr.mxu0 0.0
      %342 = vmatpush1.msra.mxu0 0.0
      %343 = vmatprep.subr.mxu0 0.0
      %344 = vmatpush1.msra.mxu0 0.0
      %345 = vmatprep.subr.mxu0 0.0
      %346 = vmatpush1.msra.mxu0 0.0
      %347 = vmatprep.subr.mxu0 0.0
      %348 = vmatpush1.msra.mxu0 0.0
      %349 = vmatprep.subr.mxu0 0.0
      %350 = vmatpush1.msra.mxu0 0.0
      %351 = vmatprep.subr.mxu0 0.0
      %352 = vmatpush1.msra.mxu0 0.0
      %353 = vmatprep.subr.mxu0 0.0
      %354 = vmatpush1.msra.mxu0 0.0
      %355 = vmatprep.subr.mxu0 0.0
      %356 = vmatpush1.msra.mxu0 0.0
      %357 = vmatprep.subr.mxu0 0.0
      %358 = vmatpush1.msra.mxu0 0.0
      %359 = vmatprep.subr.mxu0 0.0
      %360 = vmatpush1.msra.mxu0 0.0
      %361 = vmatprep.subr.mxu0 0.0
      %362 = vmatpush1.msra.mxu0 0.0
      %363 = vmatprep.subr.mxu0 0.0
      %364 = vmatpush1.msra.mxu0 0.0
      %365 = vmatprep.subr.mxu0 0.0
      %366 = vmatpush1.msra.mxu0 0.0
      %367 = vmatprep.subr.mxu0 0.0
      %368 = vmatpush1.msra.mxu0 0.0
      %369 = vmatprep.subr.mxu0 0.0
      %370 = vmatpush1.msra.mxu0 0.0
      %371 = vmatprep.subr.mxu0 0.0
      %372 = vmatpush1.msra.mxu0 0.0
      %373 = vmatprep.subr.mxu0 0.0
      %374 = vmatpush1.msra.mxu0 0.0
      %375 = vmatprep.mubr.f32.mxu0 0.0
      %376 = vmatmul.mubr.f32.gmra.mrb[0].mxu0 %v216
      %v377 = vpop.f32.mrb[0].mxu0
      %v378 = vadd.f32 %v212, %v377
      %v379 = vpop.f32.mrb[0].mxu0
      %380 = vmatprep.mubr.f32.mxu0 0.0
      %381 = vmatmul.mubr.f32.gmra.mrb[0].mxu0 %v219
      %v382 = vpop.f32.mrb[0].mxu0
      %v383 = vadd.f32 %v212, %v382
      %v384 = vpop.f32.mrb[0].mxu0
      %385 = vmatprep.mubr.f32.mxu0 0.0
      %386 = vmatmul.mubr.f32.gmra.mrb[0].mxu0 %v222
      %v387 = vpop.f32.mrb[0].mxu0
      %v388 = vadd.f32 %v212, %v387
      %v389 = vpop.f32.mrb[0].mxu0
      %390 = vmatprep.mubr.f32.mxu0 0.0
      %391 = vmatmul.mubr.f32.gmra.mrb[0].mxu0 %v225
      %v392 = vpop.f32.mrb[0].mxu0
      %v393 = vadd.f32 %v212, %v392
      %v394 = vpop.f32.mrb[0].mxu0
      %395 = vmatprep.mubr.f32.mxu0 0.0
      %396 = vmatmul.mubr.f32.gmra.mrb[0].mxu0 %v228
      %v397 = vpop.f32.mrb[0].mxu0
      %v398 = vadd.f32 %v212, %v397
      %v399 = vpop.f32.mrb[0].mxu0
      %400 = vmatprep.mubr.f32.mxu0 0.0
      %401 = vmatmul.mubr.f32.gmra.mrb[0].mxu0 %v231
      %v402 = vpop.f32.mrb[0].mxu0
      %v403 = vadd.f32 %v212, %v402
      %v404 = vpop.f32.mrb[0].mxu0
      %405 = vmatprep.mubr.f32.mxu0 0.0
      %406 = vmatmul.mubr.f32.gmra.mrb[0].mxu0 %v234
      %v407 = vpop.f32.mrb[0].mxu0
      %v408 = vadd.f32 %v212, %v407
      %v409 = vpop.f32.mrb[0].mxu0
      %410 = vmatprep.mubr.f32.mxu0 0.0
      %411 = vmatmul.mubr.f32.gmra.mrb[0].mxu0 %v237
      %v412 = vpop.f32.mrb[0].mxu0
      %v413 = vadd.f32 %v212, %v412
      %v414 = vpop.f32.mrb[0].mxu0
      %415 = vmatprep.mubr.f32.mxu0 0.0
      %416 = vmatmul.mubr.f32.gmra.mrb[0].mxu0 %v240
      %v417 = vpop.f32.mrb[0].mxu0
      %v418 = vadd.f32 %v212, %v417
      %v419 = vpop.f32.mrb[0].mxu0
      %420 = vmatprep.mubr.f32.mxu0 0.0
      %421 = vmatmul.mubr.f32.gmra.mrb[0].mxu0 %v243
      %v422 = vpop.f32.mrb[0].mxu0
      %v423 = vadd.f32 %v212, %v422
      %v424 = vpop.f32.mrb[0].mxu0
      %425 = vmatprep.mubr.f32.mxu0 0.0
      %426 = vmatmul.mubr.f32.gmra.mrb[0].mxu0 %v246
      %v427 = vpop.f32.mrb[0].mxu0
      %v428 = vadd.f32 %v212, %v427
      %v429 = vpop.f32.mrb[0].mxu0
      %430 = vmatprep.mubr.f32.mxu0 0.0
      %431 = vmatmul.mubr.f32.gmra.mrb[0].mxu0 %v249
      %v432 = vpop.f32.mrb[0].mxu0
      %v433 = vadd.f32 %v212, %v432
      %v434 = vpop.f32.mrb[0].mxu0
      %435 = vmatprep.mubr.f32.mxu0 0.0
      %436 = vmatmul.mubr.f32.gmra.mrb[0].mxu0 %v252
      %v437 = vpop.f32.mrb[0].mxu0
      %v438 = vadd.f32 %v212, %v437
      %v439 = vpop.f32.mrb[0].mxu0
      %440 = vmatprep.mubr.f32.mxu0 0.0
      %441 = vmatmul.mubr.f32.gmra.mrb[0].mxu0 %v255
      %v442 = vpop.f32.mrb[0].mxu0
      %v443 = vadd.f32 %v212, %v442
      %v444 = vpop.f32.mrb[0].mxu0
      %445 = vmatprep.mubr.f32.mxu0 0.0
      %446 = vmatmul.mubr.f32.gmra.mrb[0].mxu0 %v258
      %v447 = vpop.f32.mrb[0].mxu0
      %v448 = vadd.f32 %v212, %v447
      %v449 = vpop.f32.mrb[0].mxu0
      %450 = vmatprep.mubr.f32.mxu0 0.0
      %451 = vmatmul.mubr.f32.gmra.mrb[0].mxu0 %v261
      %v452 = vpop.f32.mrb[0].mxu0
      %v453 = vadd.f32 %v212, %v452
      %v454 = vpop.f32.mrb[0].mxu0
      %455 = vmatprep.mubr.f32.mxu0 0.0
      %456 = vmatmul.mubr.f32.gmra.mrb[0].mxu0 %v264
      %v457 = vpop.f32.mrb[0].mxu0
      %v458 = vadd.f32 %v212, %v457
      %v459 = vpop.f32.mrb[0].mxu0
      %460 = vmatprep.mubr.f32.mxu0 0.0
      %461 = vmatmul.mubr.f32.gmra.mrb[0].mxu0 %v267
      %v462 = vpop.f32.mrb[0].mxu0
      %v463 = vadd.f32 %v212, %v462
      %v464 = vpop.f32.mrb[0].mxu0
      %465 = vmatprep.mubr.f32.mxu0 0.0
      %466 = vmatmul.mubr.f32.gmra.mrb[0].mxu0 %v270
      %v467 = vpop.f32.mrb[0].mxu0
      %v468 = vadd.f32 %v212, %v467
      %v469 = vpop.f32.mrb[0].mxu0
      %470 = vmatprep.mubr.f32.mxu0 0.0
      %471 = vmatmul.mubr.f32.gmra.mrb[0].mxu0 %v273
      %v472 = vpop.f32.mrb[0].mxu0
      %v473 = vadd.f32 %v212, %v472
      %v474 = vpop.f32.mrb[0].mxu0
      %475 = vmatprep.mubr.f32.mxu0 0.0
      %476 = vmatmul.mubr.f32.gmra.mrb[0].mxu0 %v276
      %v477 = vpop.f32.mrb[0].mxu0
      %v478 = vadd.f32 %v212, %v477
      %v479 = vpop.f32.mrb[0].mxu0
      %480 = vmatprep.mubr.f32.mxu0 0.0
      %481 = vmatmul.mubr.f32.gmra.mrb[0].mxu0 %v279
      %v482 = vpop.f32.mrb[0].mxu0
      %v483 = vadd.f32 %v212, %v482
      %v484 = vpop.f32.mrb[0].mxu0
      %485 = vmatprep.mubr.f32.mxu0 0.0
      %486 = vmatmul.mubr.f32.gmra.mrb[0].mxu0 %v282
      %v487 = vpop.f32.mrb[0].mxu0
      %v488 = vadd.f32 %v212, %v487
      %v489 = vpop.f32.mrb[0].mxu0
      %490 = vmatprep.mubr.f32.mxu0 0.0
      %491 = vmatmul.mubr.f32.gmra.mrb[0].mxu0 %v285
      %v492 = vpop.f32.mrb[0].mxu0
      %v493 = vadd.f32 %v212, %v492
      %v494 = vpop.f32.mrb[0].mxu0
      %495 = vmatprep.mubr.f32.mxu0 0.0
      %496 = vmatmul.mubr.f32.gmra.mrb[0].mxu0 %v288
      %v497 = vpop.f32.mrb[0].mxu0
      %v498 = vadd.f32 %v212, %v497
      %v499 = vpop.f32.mrb[0].mxu0
      %500 = vmatprep.mubr.f32.mxu0 0.0
      %501 = vmatmul.mubr.f32.gmra.mrb[0].mxu0 %v291
      %v502 = vpop.f32.mrb[0].mxu0
      %v503 = vadd.f32 %v212, %v502
      %v504 = vpop.f32.mrb[0].mxu0
      %505 = vmatprep.mubr.f32.mxu0 0.0
      %506 = vmatmul.mubr.f32.gmra.mrb[0].mxu0 %v294
      %v507 = vpop.f32.mrb[0].mxu0
      %v508 = vadd.f32 %v212, %v507
      %v509 = vpop.f32.mrb[0].mxu0
      %510 = vmatprep.mubr.f32.mxu0 0.0
      %511 = vmatmul.mubr.f32.gmra.mrb[0].mxu0 %v297
      %v512 = vpop.f32.mrb[0].mxu0
      %v513 = vadd.f32 %v212, %v512
      %v514 = vpop.f32.mrb[0].mxu0
      %515 = vmatprep.mubr.f32.mxu0 0.0
      %516 = vmatmul.mubr.f32.gmra.mrb[0].mxu0 %v300
      %v517 = vpop.f32.mrb[0].mxu0
      %v518 = vadd.f32 %v212, %v517
      %v519 = vpop.f32.mrb[0].mxu0
      %520 = vmatprep.mubr.f32.mxu0 0.0
      %521 = vmatmul.mubr.f32.gmra.mrb[0].mxu0 %v303
      %v522 = vpop.f32.mrb[0].mxu0
      %v523 = vadd.f32 %v212, %v522
      %v524 = vpop.f32.mrb[0].mxu0
      %525 = vmatprep.mubr.f32.mxu0 0.0
      %526 = vmatmul.mubr.f32.gmra.mrb[0].mxu0 %v306
      %v527 = vpop.f32.mrb[0].mxu0
      %v528 = vadd.f32 %v212, %v527
      %v529 = vpop.f32.mrb[0].mxu0
      %530 = vmatprep.mubr.f32.mxu0 0.0
      %531 = vmatmul.mubr.f32.gmra.mrb[0].mxu0 %v309
      %v532 = vpop.f32.mrb[0].mxu0
      %v533 = vadd.f32 %v212, %v532
      %v534 = vpop.f32.mrb[0].mxu0
      %535 = vdwg.mxu0
      %vm536 = vcmask 23552
      %537 = vst.msk [vmem:[%s172] sm:$0xff] %vm536, %v378
      %538 = vst.msk [vmem:[%s172 + $0x8] sm:$0xff] %vm536, %v383
      %539 = vst.msk [vmem:[%s172 + $0x10] sm:$0xff] %vm536, %v388
      %540 = vst.msk [vmem:[%s172 + $0x18] sm:$0xff] %vm536, %v393
      %541 = vst.msk [vmem:[%s172 + $0x20] sm:$0xff] %vm536, %v398
      %542 = vst.msk [vmem:[%s172 + $0x28] sm:$0xff] %vm536, %v403
      %543 = vst.msk [vmem:[%s172 + $0x30] sm:$0xff] %vm536, %v408
      %544 = vst.msk [vmem:[%s172 + $0x38] sm:$0xff] %vm536, %v413
      %545 = vst.msk [vmem:[%s172 + $0x40] sm:$0xff] %vm536, %v418
      %546 = vst.msk [vmem:[%s172 + $0x48] sm:$0xff] %vm536, %v423
      %547 = vst.msk [vmem:[%s172 + $0x50] sm:$0xff] %vm536, %v428
      %548 = vst.msk [vmem:[%s172 + $0x58] sm:$0xff] %vm536, %v433
      %549 = vst.msk [vmem:[%s172 + $0x60] sm:$0xff] %vm536, %v438
      %550 = vst.msk [vmem:[%s172 + $0x68] sm:$0xff] %vm536, %v443
      %551 = vst.msk [vmem:[%s172 + $0x70] sm:$0xff] %vm536, %v448
      %552 = vst.msk [vmem:[%s172 + $0x78] sm:$0xff] %vm536, %v453
      %553 = vst.msk [vmem:[%s172 + $0x80] sm:$0xff] %vm536, %v458
      %554 = vst.msk [vmem:[%s172 + $0x88] sm:$0xff] %vm536, %v463
      %555 = vst.msk [vmem:[%s172 + $0x90] sm:$0xff] %vm536, %v468
      %556 = vst.msk [vmem:[%s172 + $0x98] sm:$0xff] %vm536, %v473
      %557 = vst.msk [vmem:[%s172 + $0xa0] sm:$0xff] %vm536, %v478
      %558 = vst.msk [vmem:[%s172 + $0xa8] sm:$0xff] %vm536, %v483
      %559 = vst.msk [vmem:[%s172 + $0xb0] sm:$0xff] %vm536, %v488
      %560 = vst.msk [vmem:[%s172 + $0xb8] sm:$0xff] %vm536, %v493
      %561 = vst.msk [vmem:[%s172 + $0xc0] sm:$0xff] %vm536, %v498
      %562 = vst.msk [vmem:[%s172 + $0xc8] sm:$0xff] %vm536, %v503
      %563 = vst.msk [vmem:[%s172 + $0xd0] sm:$0xff] %vm536, %v508
      %564 = vst.msk [vmem:[%s172 + $0xd8] sm:$0xff] %vm536, %v513
      %565 = vst.msk [vmem:[%s172 + $0xe0] sm:$0xff] %vm536, %v518
      %566 = vst.msk [vmem:[%s172 + $0xe8] sm:$0xff] %vm536, %v523
      %567 = vst.msk [vmem:[%s172 + $0xf0] sm:$0xff] %vm536, %v528
      %568 = vst.msk [vmem:[%s172 + $0xf8] sm:$0xff] %vm536, %v533
      %s569 = smul.u32 32, %s14
      %p570 = scmp.lt.s32.totalorder %s569, 63
      %s571 = scalar_select %p570, %s569, 63
      %s572 = smul.addr %s571, 8
      %s573 = scalar_lea.vmem %s3, %s572
      // Predicated region
      $region33: #{ae_paired_forward.39} parent=31 // pred_check
        %p574 = pneg %p100
      $region34: #{ae_paired_forward.39} parent=31 // pred_check_branch
        %576 = sbr.rel (%p574) target = $region36
      $region35: #{ae_paired_forward.39} parent=31 // pred_region
        %s577 = smul.u32 32, %s14
      $region36: #{ae_paired_forward.39} parent=31 // pred_fallthru
        _
    $region32: #{ae_paired_forward.39} parent=5 // pred_fallthru
      _
    %p578 = scmp.le.s32.totalorder 2, %s9
    // Predicated region
    $region37: #{ae_paired_forward.39} parent=5 // pred_check
      %p579 = pneg %p578
    $region38: #{ae_paired_forward.39} parent=5 // pred_check_branch
      %581 = sbr.rel (%p579) target = $region40
    $region39: #{ae_paired_forward.39} parent=5 // pred_region
      %s582 = ssub.s32 %s9, 2
      // Predicated region
      $region41: #{ae_paired_forward.39} parent=39 // pred_check
        %p583 = pneg %p106
      $region42: #{ae_paired_forward.39} parent=39 // pred_check_branch
        %585 = sbr.rel (%p583) target = $region44
      $region43: #{ae_paired_forward.39} parent=39 // pred_region
        %s586 = smul.u32 32, %s15
        %p587 = scmp.lt.s32.totalorder %s586, 63
        %s588 = scalar_select %p587, %s586, 63
        %s589 = smul.addr %s588, 8
        %s590 = scalar_lea.vmem %s3, %s589
      $region44: #{ae_paired_forward.39} parent=39 // pred_fallthru
        _
    $region40: #{ae_paired_forward.39} parent=5 // pred_fallthru
      _
  $region6: #{ae_paired_forward.39} parent=0 // loop_footer
    %s13 = sadd.s32 1, %s9
  $region7: #{ae_paired_forward.39} parent=0 // loop_footer_branch
    %8 = sbr.rel target = $region3
  $region8: #{ae_paired_forward.39} parent=0 // loop_exit
    _

// kernel: ae_paired_forward.40
$region0: #{ae_paired_forward.40}
  #allocation0 [shape = 'u32[]', space=smem, size = 0x4, offset = 0x4, fixed_abs, tag = 'smem constant byte address 0x4 - core index']
  #allocation1 [shape = 'u32[144,128]{1,0:T(1,128)}', space=vmem, size = 0x12000, scoped, tag = 'internal scratch']
  %s0 = inlined_call_operand.vmem [shape: f32[512,3], index: 0, kind: input, shape index: {}]
  %s1 = inlined_call_operand.vmem [shape: f32[512,3], index: 1, kind: input, shape index: {}]
  %s2 = inlined_call_operand.hbm [shape: f32[1,1], index: 2, kind: output, shape index: {}]
  %s3 = sld [smem:[#allocation0]]
  $region45: #{ae_paired_forward.40} parent=0
    _
  %s5 = ssub.s32 1, %s3
  %s6 = scalar_select 0, %s5, %s3
  $region1: #{ae_paired_forward.40} parent=0
    #allocation2 [shape = 'u8[512]{0}', space=vmem, size = 0x400, scoped, tag = 'output window, operand 0, single buffered']
    #allocation3 [shape = 's32[2]{0}', space=sflag, size = 0x8, scoped, tag = 'scoped memory for ae_paired_forward.40']
    %7 = vsyncpa [#allocation3], 0
    loop: start=0, step=1, limit=4
    $region2: #{ae_paired_forward.40} parent=1 // loop_pre_header
      _
    $region3: #{ae_paired_forward.40} parent=1 // loop_header
      %s9 = sphi 0, %s13
      %p10 = scmp.ge.s32.totalorder %s9, 4
      %s19 = sphi 0, %s21
      %s22 = sphi 0, %s19
      %s23 = sphi 0, %s22
      %s39 = sphi 0, %s23
      %s45 = sphi 0, %s47
      %s48 = sphi 0, %s45
      %s49 = sphi 0, %s48
      %s65 = sphi 0, %s49
      %s69 = sphi 0, %s69
      %s71 = sphi 0, %s69
      %s72 = sphi 0, %s71
      %s86 = sphi 0, %s72
    $region4: #{ae_paired_forward.40} parent=1 // loop_header_branch
      %12 = sbr.rel (%p10) target = $region8
    $region5: #{ae_paired_forward.40} parent=1 // loop_body
      %s14 = ssub.s32 %s9, 1
      %s15 = ssub.s32 %s9, 2
      %s16 = sadd.s32 %s9, 1
      %s17 = ssub.s32 %s9, %s16
      %p18 = scmp.eq.s32.totalorder %s17, 0
      %s20 = sadd.s32 %s19, 1
      %s21 = scalar_select %p18, %s19, %s20
      %p24 = pneg %p18
      %p25 = scmp.eq.s32.totalorder %s9, 1
      %p26 = por %p24, %p25
      %p27 = scmp.ne.s32.totalorder %s19, %s22
      %p28 = scmp.eq.s32.totalorder %s9, 0
      %p29 = por %p27, %p28
      %p30 = scmp.ne.s32.totalorder %s19, %s22
      %p31 = scmp.eq.s32.totalorder %s14, 1
      %p32 = por %p30, %p31
      %p33 = scmp.ne.s32.totalorder %s22, %s23
      %p34 = scmp.eq.s32.totalorder %s14, 0
      %p35 = por %p33, %p34
      %p36 = scmp.ne.s32.totalorder %s22, %s23
      %p37 = scmp.eq.s32.totalorder %s15, 1
      %p38 = por %p36, %p37
      %p40 = scmp.ne.s32.totalorder %s23, %s39
      %p41 = scmp.eq.s32.totalorder %s15, 0
      %p42 = por %p40, %p41
      %s43 = ssub.s32 %s9, %s16
      %p44 = scmp.eq.s32.totalorder %s43, 0
      %s46 = sadd.s32 %s45, 1
      %s47 = scalar_select %p44, %s45, %s46
      %p50 = pneg %p44
      %p51 = scmp.eq.s32.totalorder %s9, 1
      %p52 = por %p50, %p51
      %p53 = scmp.ne.s32.totalorder %s45, %s48
      %p54 = scmp.eq.s32.totalorder %s9, 0
      %p55 = por %p53, %p54
      %p56 = scmp.ne.s32.totalorder %s45, %s48
      %p57 = scmp.eq.s32.totalorder %s14, 1
      %p58 = por %p56, %p57
      %p59 = scmp.ne.s32.totalorder %s48, %s49
      %p60 = scmp.eq.s32.totalorder %s14, 0
      %p61 = por %p59, %p60
      %p62 = scmp.ne.s32.totalorder %s48, %s49
      %p63 = scmp.eq.s32.totalorder %s15, 1
      %p64 = por %p62, %p63
      %p66 = scmp.ne.s32.totalorder %s49, %s65
      %p67 = scmp.eq.s32.totalorder %s15, 0
      %p68 = por %p66, %p67
      %s70 = sadd.s32 %s69, 1
      %p73 = scmp.eq.s32.totalorder %s9, 1
      %p74 = scmp.ne.s32.totalorder %s69, %s71
      %p75 = scmp.eq.s32.totalorder %s9, 0
      %p76 = por %p74, %p75
      %p77 = scmp.ne.s32.totalorder %s69, %s71
      %p78 = scmp.eq.s32.totalorder %s14, 1
      %p79 = por %p77, %p78
      %p80 = scmp.ne.s32.totalorder %s71, %s72
      %p81 = scmp.eq.s32.totalorder %s14, 0
      %p82 = por %p80, %p81
      %p83 = scmp.ne.s32.totalorder %s71, %s72
      %p84 = scmp.eq.s32.totalorder %s15, 1
      %p85 = por %p83, %p84
      %p87 = scmp.ne.s32.totalorder %s72, %s86
      %p88 = scmp.eq.s32.totalorder %s15, 0
      %p89 = por %p87, %p88
      %p90 = scmp.le.s32.totalorder 1, %s9
      %p91 = scmp.lt.s32.totalorder %s9, 3
      %p92 = pnand %p90, %p91
      %p93 = pneg %p92
      // Predicated region
      $region9: #{ae_paired_forward.40} parent=5 // pred_check
        _
      $region10: #{ae_paired_forward.40} parent=5 // pred_check_branch
        %95 = sbr.rel (%p92) target = $region12
      $region11: #{ae_paired_forward.40} parent=5 // pred_region
        %s96 = ssub.s32 %s9, 1
      $region12: #{ae_paired_forward.40} parent=5 // pred_fallthru
        _
      %p97 = scmp.lt.s32.totalorder %s9, 2
      // Predicated region
      $region13: #{ae_paired_forward.40} parent=5 // pred_check
        %p98 = pneg %p97
      $region14: #{ae_paired_forward.40} parent=5 // pred_check_branch
        %100 = sbr.rel (%p98) target = $region16
      $region15: #{ae_paired_forward.40} parent=5 // pred_region
        // Predicated region
        $region17: #{ae_paired_forward.40} parent=15 // pred_check
          %p101 = pneg %p29
        $region18: #{ae_paired_forward.40} parent=15 // pred_check_branch
          %103 = sbr.rel (%p101) target = $region20
        $region19: #{ae_paired_forward.40} parent=15 // pred_region
          %s104 = smul.u32 32, %s9
          %p105 = scmp.lt.s32.totalorder %s104, 63
          %s106 = scalar_select %p105, %s104, 63
          %s107 = smul.addr %s106, 8
          %s108 = scalar_lea.vmem %s0, %s107
          %s109 = smul.u32 32, %s9
        $region20: #{ae_paired_forward.40} parent=15 // pred_fallthru
          _
        // Predicated region
        $region21: #{ae_paired_forward.40} parent=15 // pred_check
          %p110 = pneg %p55
        $region22: #{ae_paired_forward.40} parent=15 // pred_check_branch
          %112 = sbr.rel (%p110) target = $region24
        $region23: #{ae_paired_forward.40} parent=15 // pred_region
          %s113 = smul.u32 32, %s9
          %p114 = scmp.lt.s32.totalorder %s113, 63
          %s115 = scalar_select %p114, %s113, 63
          %s116 = smul.addr %s115, 8
          %s117 = scalar_lea.vmem %s1, %s116
          %s118 = smul.u32 32, %s9
        $region24: #{ae_paired_forward.40} parent=15 // pred_fallthru
          _
      $region16: #{ae_paired_forward.40} parent=5 // pred_fallthru
        _
      %p119 = scmp.le.s32.totalorder 1, %s9
      %p120 = scmp.lt.s32.totalorder %s9, 3
      %p121 = pnand %p119, %p120
      %p122 = pneg %p121
      // Predicated region
      $region25: #{ae_paired_forward.40} parent=5 // pred_check
        _
      $region26: #{ae_paired_forward.40} parent=5 // pred_check_branch
        %124 = sbr.rel (%p121) target = $region28
      $region27: #{ae_paired_forward.40} parent=5 // pred_region
        %s125 = ssub.s32 %s9, 1
        %s126 = smul.u32 32, %s14
        %p127 = scmp.lt.s32.totalorder %s126, 63
        %s128 = scalar_select %p127, %s126, 63
        %s129 = smul.addr %s128, 8
        %s130 = scalar_lea.vmem %s0, %s129
        %p131 = pneg %p35
        %p132 = pneg %p32
        %s133 = smul.u32 32, %s14
        %p134 = scmp.lt.s32.totalorder %s133, 63
        %s135 = scalar_select %p134, %s133, 63
        %s136 = smul.addr %s135, 8
        %s137 = scalar_lea.vmem %s1, %s136
        %p138 = pneg %p61
        %p139 = pneg %p58
        %p140 = pneg %p82
        %p141 = pneg %p79
        %s142 = smul.u32 32, %s14
        %p143 = scmp.lt.s32.totalorder %s142, 63
        %s144 = scalar_select %p143, %s142, 63
        %s145 = smul.addr %s144, 8
        %s146 = scalar_lea.vmem %s0, %s145
        %s147 = smul.u32 32, %s14
        %s148 = smul.u32 32, %s14
        %p149 = scmp.lt.s32.totalorder %s148, 63
        %s150 = scalar_select %p149, %s148, 63
        %s151 = smul.addr %s150, 8
        %s152 = scalar_lea.vmem %s1, %s151
        %s153 = smul.u32 32, %s14
        %p154 = scmp.eq.s32.totalorder %s14, 0
        // Predicated region
        $region29: #{ae_paired_forward.40} parent=27 // pred_check
          %p155 = pneg %p154
        $region30: #{ae_paired_forward.40} parent=27 // pred_check_branch
          %157 = sbr.rel (%p155) target = $region32
        $region31: #{ae_paired_forward.40} parent=27 // pred_region
          %vm158 = vcmask 0
          %159 = vst.msk [vmem:[#allocation2] sm:$0x1] %vm158, 0.0
        $region32: #{ae_paired_forward.40} parent=27 // pred_fallthru
          _
        %v160 = vld [vmem:[%s146] sm:$0xff]
        %v161 = vld [vmem:[%s146 + $0x8] sm:$0xff]
        %v162 = vld [vmem:[%s146 + $0x10] sm:$0xff]
        %v163 = vld [vmem:[%s146 + $0x18] sm:$0xff]
        %v164 = vld [vmem:[%s146 + $0x20] sm:$0xff]
        %v165 = vld [vmem:[%s146 + $0x28] sm:$0xff]
        %v166 = vld [vmem:[%s146 + $0x30] sm:$0xff]
        %v167 = vld [vmem:[%s146 + $0x38] sm:$0xff]
        %v168 = vld [vmem:[%s146 + $0x40] sm:$0xff]
        %v169 = vld [vmem:[%s146 + $0x48] sm:$0xff]
        %v170 = vld [vmem:[%s146 + $0x50] sm:$0xff]
        %v171 = vld [vmem:[%s146 + $0x58] sm:$0xff]
        %v172 = vld [vmem:[%s146 + $0x60] sm:$0xff]
        %v173 = vld [vmem:[%s146 + $0x68] sm:$0xff]
        %v174 = vld [vmem:[%s146 + $0x70] sm:$0xff]
        %v175 = vld [vmem:[%s146 + $0x78] sm:$0xff]
        %v176 = vld [vmem:[%s146 + $0x80] sm:$0xff]
        %v177 = vld [vmem:[%s146 + $0x88] sm:$0xff]
        %v178 = vld [vmem:[%s146 + $0x90] sm:$0xff]
        %v179 = vld [vmem:[%s146 + $0x98] sm:$0xff]
        %v180 = vld [vmem:[%s146 + $0xa0] sm:$0xff]
        %v181 = vld [vmem:[%s146 + $0xa8] sm:$0xff]
        %v182 = vld [vmem:[%s146 + $0xb0] sm:$0xff]
        %v183 = vld [vmem:[%s146 + $0xb8] sm:$0xff]
        %v184 = vld [vmem:[%s146 + $0xc0] sm:$0xff]
        %v185 = vld [vmem:[%s146 + $0xc8] sm:$0xff]
        %v186 = vld [vmem:[%s146 + $0xd0] sm:$0xff]
        %v187 = vld [vmem:[%s146 + $0xd8] sm:$0xff]
        %v188 = vld [vmem:[%s146 + $0xe0] sm:$0xff]
        %v189 = vld [vmem:[%s146 + $0xe8] sm:$0xff]
        %v190 = vld [vmem:[%s146 + $0xf0] sm:$0xff]
        %v191 = vld [vmem:[%s146 + $0xf8] sm:$0xff]
        %v192 = vld [vmem:[%s152] sm:$0xff]
        %v193 = vld [vmem:[%s152 + $0x8] sm:$0xff]
        %v194 = vld [vmem:[%s152 + $0x10] sm:$0xff]
        %v195 = vld [vmem:[%s152 + $0x18] sm:$0xff]
        %v196 = vld [vmem:[%s152 + $0x20] sm:$0xff]
        %v197 = vld [vmem:[%s152 + $0x28] sm:$0xff]
        %v198 = vld [vmem:[%s152 + $0x30] sm:$0xff]
        %v199 = vld [vmem:[%s152 + $0x38] sm:$0xff]
        %v200 = vld [vmem:[%s152 + $0x40] sm:$0xff]
        %v201 = vld [vmem:[%s152 + $0x48] sm:$0xff]
        %v202 = vld [vmem:[%s152 + $0x50] sm:$0xff]
        %v203 = vld [vmem:[%s152 + $0x58] sm:$0xff]
        %v204 = vld [vmem:[%s152 + $0x60] sm:$0xff]
        %v205 = vld [vmem:[%s152 + $0x68] sm:$0xff]
        %v206 = vld [vmem:[%s152 + $0x70] sm:$0xff]
        %v207 = vld [vmem:[%s152 + $0x78] sm:$0xff]
        %v208 = vld [vmem:[%s152 + $0x80] sm:$0xff]
        %v209 = vld [vmem:[%s152 + $0x88] sm:$0xff]
        %v210 = vld [vmem:[%s152 + $0x90] sm:$0xff]
        %v211 = vld [vmem:[%s152 + $0x98] sm:$0xff]
        %v212 = vld [vmem:[%s152 + $0xa0] sm:$0xff]
        %v213 = vld [vmem:[%s152 + $0xa8] sm:$0xff]
        %v214 = vld [vmem:[%s152 + $0xb0] sm:$0xff]
        %v215 = vld [vmem:[%s152 + $0xb8] sm:$0xff]
        %v216 = vld [vmem:[%s152 + $0xc0] sm:$0xff]
        %v217 = vld [vmem:[%s152 + $0xc8] sm:$0xff]
        %v218 = vld [vmem:[%s152 + $0xd0] sm:$0xff]
        %v219 = vld [vmem:[%s152 + $0xd8] sm:$0xff]
        %v220 = vld [vmem:[%s152 + $0xe0] sm:$0xff]
        %v221 = vld [vmem:[%s152 + $0xe8] sm:$0xff]
        %v222 = vld [vmem:[%s152 + $0xf0] sm:$0xff]
        %v223 = vld [vmem:[%s152 + $0xf8] sm:$0xff]
        %v224 = vsub.f32 %v160, %v192
        %v225 = vsub.f32 %v161, %v193
        %v226 = vsub.f32 %v162, %v194
        %v227 = vsub.f32 %v163, %v195
        %v228 = vsub.f32 %v164, %v196
        %v229 = vsub.f32 %v165, %v197
        %v230 = vsub.f32 %v166, %v198
        %v231 = vsub.f32 %v167, %v199
        %v232 = vsub.f32 %v168, %v200
        %v233 = vsub.f32 %v169, %v201
        %v234 = vsub.f32 %v170, %v202
        %v235 = vsub.f32 %v171, %v203
        %v236 = vsub.f32 %v172, %v204
        %v237 = vsub.f32 %v173, %v205
        %v238 = vsub.f32 %v174, %v206
        %v239 = vsub.f32 %v175, %v207
        %v240 = vsub.f32 %v176, %v208
        %v241 = vsub.f32 %v177, %v209
        %v242 = vsub.f32 %v178, %v210
        %v243 = vsub.f32 %v179, %v211
        %v244 = vsub.f32 %v180, %v212
        %v245 = vsub.f32 %v181, %v213
        %v246 = vsub.f32 %v182, %v214
        %v247 = vsub.f32 %v183, %v215
        %v248 = vsub.f32 %v184, %v216
        %v249 = vsub.f32 %v185, %v217
        %v250 = vsub.f32 %v186, %v218
        %v251 = vsub.f32 %v187, %v219
        %v252 = vsub.f32 %v188, %v220
        %v253 = vsub.f32 %v189, %v221
        %v254 = vsub.f32 %v190, %v222
        %v255 = vsub.f32 %v191, %v223
        %v256 = vld [vmem:[#allocation2] sm:$0x1]
        %v257 = vmul.f32 %v224, %v224
        %v258 = vmul.f32 %v225, %v225
        %v259 = vmul.f32 %v226, %v226
        %v260 = vmul.f32 %v227, %v227
        %v261 = vmul.f32 %v228, %v228
        %v262 = vmul.f32 %v229, %v229
        %v263 = vmul.f32 %v230, %v230
        %v264 = vmul.f32 %v231, %v231
        %v265 = vmul.f32 %v232, %v232
        %v266 = vmul.f32 %v233, %v233
        %v267 = vmul.f32 %v234, %v234
        %v268 = vmul.f32 %v235, %v235
        %v269 = vmul.f32 %v236, %v236
        %v270 = vmul.f32 %v237, %v237
        %v271 = vmul.f32 %v238, %v238
        %v272 = vmul.f32 %v239, %v239
        %v273 = vmul.f32 %v240, %v240
        %v274 = vmul.f32 %v241, %v241
        %v275 = vmul.f32 %v242, %v242
        %v276 = vmul.f32 %v243, %v243
        %v277 = vmul.f32 %v244, %v244
        %v278 = vmul.f32 %v245, %v245
        %v279 = vmul.f32 %v246, %v246
        %v280 = vmul.f32 %v247, %v247
        %v281 = vmul.f32 %v248, %v248
        %v282 = vmul.f32 %v249, %v249
        %v283 = vmul.f32 %v250, %v250
        %v284 = vmul.f32 %v251, %v251
        %v285 = vmul.f32 %v252, %v252
        %v286 = vmul.f32 %v253, %v253
        %v287 = vmul.f32 %v254, %v254
        %v288 = vmul.f32 %v255, %v255
        %vm289 = vcmask 23552
        %v290 = vsel %vm289, %v257, 0.0
        %v291 = vsel %vm289, %v258, 0.0
        %v292 = vadd.f32 %v290, %v291
        %v293 = vsel %vm289, %v259, 0.0
        %v294 = vadd.f32 %v292, %v293
        %v295 = vsel %vm289, %v260, 0.0
        %v296 = vadd.f32 %v294, %v295
        %v297 = vsel %vm289, %v261, 0.0
        %v298 = vadd.f32 %v296, %v297
        %v299 = vsel %vm289, %v262, 0.0
        %v300 = vadd.f32 %v298, %v299
        %v301 = vsel %vm289, %v263, 0.0
        %v302 = vadd.f32 %v300, %v301
        %v303 = vsel %vm289, %v264, 0.0
        %v304 = vadd.f32 %v302, %v303
        %v305 = vsel %vm289, %v265, 0.0
        %v306 = vadd.f32 %v304, %v305
        %v307 = vsel %vm289, %v266, 0.0
        %v308 = vadd.f32 %v306, %v307
        %v309 = vsel %vm289, %v267, 0.0
        %v310 = vadd.f32 %v308, %v309
        %v311 = vsel %vm289, %v268, 0.0
        %v312 = vadd.f32 %v310, %v311
        %v313 = vsel %vm289, %v269, 0.0
        %v314 = vadd.f32 %v312, %v313
        %v315 = vsel %vm289, %v270, 0.0
        %v316 = vadd.f32 %v314, %v315
        %v317 = vsel %vm289, %v271, 0.0
        %v318 = vadd.f32 %v316, %v317
        %v319 = vsel %vm289, %v272, 0.0
        %v320 = vadd.f32 %v318, %v319
        %v321 = vsel %vm289, %v273, 0.0
        %v322 = vadd.f32 %v320, %v321
        %v323 = vsel %vm289, %v274, 0.0
        %v324 = vadd.f32 %v322, %v323
        %v325 = vsel %vm289, %v275, 0.0
        %v326 = vadd.f32 %v324, %v325
        %v327 = vsel %vm289, %v276, 0.0
        %v328 = vadd.f32 %v326, %v327
        %v329 = vsel %vm289, %v277, 0.0
        %v330 = vadd.f32 %v328, %v329
        %v331 = vsel %vm289, %v278, 0.0
        %v332 = vadd.f32 %v330, %v331
        %v333 = vsel %vm289, %v279, 0.0
        %v334 = vadd.f32 %v332, %v333
        %v335 = vsel %vm289, %v280, 0.0
        %v336 = vadd.f32 %v334, %v335
        %v337 = vsel %vm289, %v281, 0.0
        %v338 = vadd.f32 %v336, %v337
        %v339 = vsel %vm289, %v282, 0.0
        %v340 = vadd.f32 %v338, %v339
        %v341 = vsel %vm289, %v283, 0.0
        %v342 = vadd.f32 %v340, %v341
        %v343 = vsel %vm289, %v284, 0.0
        %v344 = vadd.f32 %v342, %v343
        %v345 = vsel %vm289, %v285, 0.0
        %v346 = vadd.f32 %v344, %v345
        %v347 = vsel %vm289, %v286, 0.0
        %v348 = vadd.f32 %v346, %v347
        %v349 = vsel %vm289, %v287, 0.0
        %v350 = vadd.f32 %v348, %v349
        %v351 = vsel %vm289, %v288, 0.0
        %v352 = vadd.f32 %v350, %v351
        %353 = vadd.xlane.f32.xlu0 %v352
        %v354 = vpop.xlane.xlu0 %353
        %v355 = vrot.slane %v354, 4
        %v356 = vadd.f32 %v354, %v355
        %v357 = vrot.slane %v356, 2
        %v358 = vadd.f32 %v356, %v357
        %v359 = vrot.slane %v358, 1
        %v360 = vadd.f32 %v358, %v359
        %s361 = vtos %v360
        %v362 = vstv %s361
        %v363 = vadd.f32 %v256, %v362
        %vm364 = vcmask 0
        %365 = vst.msk [vmem:[#allocation2] sm:$0x1] %vm364, %v363
        // Predicated region
        $region33: #{ae_paired_forward.40} parent=27 // pred_check
          %p366 = pneg %p79
        $region34: #{ae_paired_forward.40} parent=27 // pred_check_branch
          %368 = sbr.rel (%p366) target = $region36
        $region35: #{ae_paired_forward.40} parent=27 // pred_region
          %s370 = ssub.s32 16, 16
          %371 = vsyncadd [#allocation3], %s370
          %s373 = sshll.u32 [#allocation2], 4
          %s374 = int_to_ptr.vmem [resolvable:$true] %s373
          %376 = dma.vmem_to_hbm [thread:$0]  %s374, 16, %s2, [#allocation3]
        $region36: #{ae_paired_forward.40} parent=27 // pred_fallthru
          _
        // Predicated region
        $region37: #{ae_paired_forward.40} parent=27 // pred_check
          %p377 = pneg %p79
        $region38: #{ae_paired_forward.40} parent=27 // pred_check_branch
          %379 = sbr.rel (%p377) target = $region40
        $region39: #{ae_paired_forward.40} parent=27 // pred_region
          %380 = dma.done [#allocation3], 16
        $region40: #{ae_paired_forward.40} parent=27 // pred_fallthru
          _
      $region28: #{ae_paired_forward.40} parent=5 // pred_fallthru
        _
      %p381 = scmp.le.s32.totalorder 2, %s9
      // Predicated region
      $region41: #{ae_paired_forward.40} parent=5 // pred_check
        %p382 = pneg %p381
      $region42: #{ae_paired_forward.40} parent=5 // pred_check_branch
        %384 = sbr.rel (%p382) target = $region44
      $region43: #{ae_paired_forward.40} parent=5 // pred_region
        %s385 = ssub.s32 %s9, 2
      $region44: #{ae_paired_forward.40} parent=5 // pred_fallthru
        _
    $region6: #{ae_paired_forward.40} parent=1 // loop_footer
      %s13 = sadd.s32 1, %s9
    $region7: #{ae_paired_forward.40} parent=1 // loop_footer_branch
      %8 = sbr.rel target = $region3
    $region8: #{ae_paired_forward.40} parent=1 // loop_exit
      _
    %386 = vsyncpa [#allocation3], 1
    %s387 = scalar_lea.sflag [#allocation3], 1
    %388 = vsyncpa %s387, 1

</llo_original>
